<compile_context>
chip_gen: v7x
topology: tpu7x:2x2x1
jax: 0.10.0
libtpu: 0.0.40
codegen_flags: <defaults>
</compile_context>

<pallas_src>
import functools

import jax
import jax.numpy as jnp
from jax.experimental import pallas as pl
from jax.experimental.pallas import tpu as pltpu

BN_EPS = 1e-5    # torch.nn.BatchNorm1d default
LN_EPS = 1e-5    # torch.nn.LayerNorm default
NEG_INF = -1e30

NODE_OH_W = 12   # node one-hot width padded (7 real classes)
PE_W = 20        # positional-encoding feature width (fixed by the module)
FEAT_W = NODE_OH_W + PE_W   # 32: fused embedding contraction width
EDGE_OH_W = 16   # edge one-hot width padded (11 real classes)


# ----------------------------- in-kernel helpers -----------------------------

def _bn_train(x, w, b):
    """BatchNorm1d, training mode. Fused single pass: var = E[x^2] - mean^2."""
    mean = jnp.mean(x, axis=0, keepdims=True)
    msq = jnp.mean(x * x, axis=0, keepdims=True)
    var = msq - mean * mean
    return (x - mean) * jax.lax.rsqrt(var + BN_EPS) * w + b
    # TODO(synk): running-mean/var buffer updates are module state, not part of
    # the functional forward output, so they are not emitted here.


def _ln(x, w, b):
    mean = jnp.mean(x, axis=-1, keepdims=True)
    msq = jnp.mean(x * x, axis=-1, keepdims=True)
    var = msq - mean * mean
    return (x - mean) * jax.lax.rsqrt(var + LN_EPS) * w + b


def _mm(a, b):
    return jnp.dot(a, b, preferred_element_type=jnp.float32)


def _mm_nt(a, b):
    """a [M,D] x b [N,D] contracted on both last dims -> [M,N] (no b.T)."""
    return jax.lax.dot_general(a, b, (((1,), (1,)), ((), ())),
                               preferred_element_type=jnp.float32)


# --------------------------------- kernel ------------------------------------

def gps_fused_kernel(
        # graph data
        node_oh_ref, pe_ref, bcol_ref, brow_ref, edge_oh_ref, src_oh_ref, dstT_ref,
        # packed parameter slabs
        emb_w_ref,   # [FEAT_W+EDGE_OH_W, C]
        misc_ref,    # [3, 128]  (pe_bn / head-MLP vectors)
        wc_ref,      # [L, C, 8C]  (qkv_w | g_w1 | g_w2 | out_w | m_w1)
        w2_ref,      # [L, 2C, C]  (m_w2)
        lvec_ref,    # [L, 4, 128] (all per-layer bias / BN vectors)
        headw_ref,   # [C + C/2 + C/4, 128] (h_w1 | h_w2 | h_w3 padded)
        # output
        y_ref,
        # scratch
        cat_ref,     # [N, max(FEAT_W, C)] lane-assembly tile
        *, num_layers, heads, channels):
    c = channels
    dh = c // heads
    c2, c4 = c // 2, c // 4

    mv = misc_ref[...]
    ew = emb_w_ref[...]

    # ---- within-graph attention bias from the O(N) batch-id vectors ----
    bias = jnp.where(bcol_ref[...] == brow_ref[...], 0.0, NEG_INF)     # [N, N]

    # ---- embeddings: BN(pe), assemble [node_oh | pe] in scratch, one matmul ----
    x_pe = _bn_train(pe_ref[...], mv[0:1, 0:PE_W], mv[0:1, 32:32 + PE_W])
    cat_ref[:, 0:NODE_OH_W] = node_oh_ref[...]
    cat_ref[:, NODE_OH_W:FEAT_W] = x_pe
    x = _mm(cat_ref[:, 0:FEAT_W], ew[0:FEAT_W, :]) + mv[0:1, 64:64 + c]   # [N, C]
    e = _mm(edge_oh_ref[...], ew[FEAT_W:FEAT_W + EDGE_OH_W, :])           # [E, C]

    src_oh = src_oh_ref[...]
    dst_t = dstT_ref[...]

    for l in range(num_layers):
        lw = wc_ref[l]                                    # [C, 8C]
        lv = lvec_ref[l]                                  # [4, 128]
        qkv_w = lw[:, 0:3 * c]
        g_w1 = lw[:, 3 * c:4 * c]
        g_w2 = lw[:, 4 * c:5 * c]
        out_w = lw[:, 5 * c:6 * c]
        m_w1 = lw[:, 6 * c:8 * c]
        m_w2 = w2_ref[l]                                  # [2C, C]

        g_b1 = lv[0:1, 0:c]
        g_b2 = lv[0:1, c:2 * c]
        bn1_w = lv[0:1, 2 * c:3 * c]
        bn1_b = lv[0:1, 3 * c:4 * c]
        qkv_b = lv[1:2, 0:3 * c]
        out_b = lv[1:2, 3 * c:4 * c]
        bn2_w = lv[2:3, 0:c]
        bn2_b = lv[2:3, c:2 * c]
        m_b1 = lv[2:3, 2 * c:4 * c]
        m_b2 = lv[3:4, 0:c]
        bn3_w = lv[3:4, c:2 * c]
        bn3_b = lv[3:4, 2 * c:3 * c]

        # ---- local GINEConv (eps=0): nn(x_i + sum_j relu(x_j + e_ji)) ----
        x_src = _mm(src_oh, x)                            # gather x_j   [E, C]
        msg = jnp.maximum(x_src + e, 0.0)
        agg = _mm(dst_t, msg)                             # scatter-add  [N, C]
        h = jnp.maximum(_mm(x + agg, g_w1) + g_b1, 0.0)
        h = _mm(h, g_w2) + g_b2
        h_local = _bn_train(h + x, bn1_w, bn1_b)

        # ---- global masked MHA: fused qkv matmul, per-head lane slices ----
        qkv = _mm(x, qkv_w) + qkv_b                       # [N, 3C]; q pre-scaled
        for hd in range(heads):
            q = qkv[:, hd * dh:(hd + 1) * dh]
            k = qkv[:, c + hd * dh:c + (hd + 1) * dh]
            v = qkv[:, 2 * c + hd * dh:2 * c + (hd + 1) * dh]
            s = _mm_nt(q, k) + bias                       # [N, N]
            s = s - jnp.max(s, axis=-1, keepdims=True)
            p = jnp.exp(s)
            p = p * pl.reciprocal(jnp.sum(p, axis=-1, keepdims=True), approx=True)
            cat_ref[:, hd * dh:(hd + 1) * dh] = _mm(p, v)  # place head context
        attn = _mm(cat_ref[:, 0:c], out_w) + out_b        # single out-projection
        h_attn = _bn_train(attn + x, bn2_w, bn2_b)

        # ---- combine + feed-forward MLP + residual + norm ----
        out = h_local + h_attn
        m = jnp.maximum(_mm(out, m_w1) + m_b1, 0.0)
        m = _mm(m, m_w2) + m_b2
        x = _bn_train(out + m, bn3_w, bn3_b)

    # ---- head MLP: Linear -> LN -> ReLU -> Linear -> LN -> ReLU -> Linear(3, padded)
    hw = headw_ref[...]
    h = _mm(x, hw[0:c, 0:c2]) + mv[1:2, 0:c2]
    h = jnp.maximum(_ln(h, mv[1:2, c2:2 * c2], mv[1:2, 2 * c2:3 * c2]), 0.0)
    h = _mm(h, hw[c:c + c2, 0:c4]) + mv[1:2, 3 * c2:3 * c2 + c4]
    h = jnp.maximum(_ln(h, mv[1:2, 3 * c2 + c4:3 * c2 + 2 * c4],
                        mv[1:2, 3 * c2 + 2 * c4:3 * c2 + 3 * c4]), 0.0)
    y_ref[...] = _mm(h, hw[c + c2:c + c2 + c4, :]) + mv[2:3, :]   # dense [N,128] store


# ----------------------------- parameter setup --------------------------------
# Weights are stored [in_features, out_features] (transpose of torch layout) so
# the kernel can use them directly as x @ W; semantics are identical.

def init_gps_params(key, channels=32, pe_dim=8, num_layers=2, heads=4):
    keys = iter(jax.random.split(key, 128))
    f32 = jnp.float32

    def lin(fan_in, fan_out):
        s = 1.0 / (fan_in ** 0.5)
        w = jax.random.uniform(next(keys), (fan_in, fan_out), f32, -s, s)
        b = jax.random.uniform(next(keys), (1, fan_out), f32, -s, s)
        return w, b

    p = {}
    p["node_emb"] = jax.random.normal(next(keys), (7, channels - pe_dim), f32)
    p["edge_emb"] = jax.random.normal(next(keys), (11, channels), f32)
    p["pe_lin_w"], p["pe_lin_b"] = lin(20, pe_dim)
    p["pe_bn_w"] = jnp.ones((1, 20), f32)
    p["pe_bn_b"] = jnp.zeros((1, 20), f32)

    layers = []
    for _ in range(num_layers):
        lp = {}
        lp["g_w1"], lp["g_b1"] = lin(channels, channels)        # GINE nn: Linear
        lp["g_w2"], lp["g_b2"] = lin(channels, channels)        # GINE nn: Linear
        lp["bn1_w"] = jnp.ones((1, channels), f32)
        lp["bn1_b"] = jnp.zeros((1, channels), f32)
        lp["qkv_w"], lp["qkv_b"] = lin(channels, 3 * channels)  # MHA in_proj
        lp["out_w"], lp["out_b"] = lin(channels, channels)      # MHA out_proj
        lp["bn2_w"] = jnp.ones((1, channels), f32)
        lp["bn2_b"] = jnp.zeros((1, channels), f32)
        lp["m_w1"], lp["m_b1"] = lin(channels, 2 * channels)    # GPSConv FFN
        lp["m_w2"], lp["m_b2"] = lin(2 * channels, channels)
        lp["bn3_w"] = jnp.ones((1, channels), f32)
        lp["bn3_b"] = jnp.zeros((1, channels), f32)
        layers.append(lp)
    p["layers"] = layers

    c2, c4 = channels // 2, channels // 4
    p["h_w1"], p["h_b1"] = lin(channels, c2)
    p["ln1_w"] = jnp.ones((1, c2), f32)
    p["ln1_b"] = jnp.zeros((1, c2), f32)
    p["h_w2"], p["h_b2"] = lin(c2, c4)
    p["ln2_w"] = jnp.ones((1, c4), f32)
    p["ln2_b"] = jnp.zeros((1, c4), f32)
    p["h_w3"], p["h_b3"] = lin(c4, 3)
    return p


def prepare_params(p, *, channels, pe_dim, heads):
    """One-time packing of all parameters into a handful of VMEM slabs."""
    f32 = jnp.float32
    c = channels
    dh = c // heads
    c2, c4 = c // 2, c // 4
    layers = p["layers"]
    kp = {}

    # Fused embedding matrix: rows 0:FEAT_W map [node_oh | BN(pe)] -> x,
    # rows FEAT_W:FEAT_W+EDGE_OH_W map the edge one-hot -> edge embedding.
    emb_w = jnp.zeros((FEAT_W + EDGE_OH_W, c), f32)
    emb_w = emb_w.at[0:7, 0:c - pe_dim].set(p["node_emb"])
    emb_w = emb_w.at[NODE_OH_W:FEAT_W, c - pe_dim:].set(p["pe_lin_w"])
    emb_w = emb_w.at[FEAT_W:FEAT_W + 11, :].set(p["edge_emb"])
    kp["emb_w"] = emb_w

    # Misc vector slab [3, 128]: row0 pe-BN + embedding bias, row1 head-MLP
    # vectors, row2 final bias padded to 128 lanes.
    misc = jnp.zeros((3, 128), f32)
    misc = misc.at[0, 0:PE_W].set(p["pe_bn_w"][0])
    misc = misc.at[0, 32:32 + PE_W].set(p["pe_bn_b"][0])
    misc = misc.at[0, 64 + c - pe_dim:64 + c].set(p["pe_lin_b"][0])
    misc = misc.at[1, 0:c2].set(p["h_b1"][0])
    misc = misc.at[1, c2:2 * c2].set(p["ln1_w"][0])
    misc = misc.at[1, 2 * c2:3 * c2].set(p["ln1_b"][0])
    misc = misc.at[1, 3 * c2:3 * c2 + c4].set(p["h_b2"][0])
    misc = misc.at[1, 3 * c2 + c4:3 * c2 + 2 * c4].set(p["ln2_w"][0])
    misc = misc.at[1, 3 * c2 + 2 * c4:3 * c2 + 3 * c4].set(p["ln2_b"][0])
    misc = misc.at[2, 0:3].set(p["h_b3"][0])
    kp["misc_vec"] = misc

    # Per-layer slabs. 1/sqrt(dh) is folded into the q columns of qkv.
    scale = 1.0 / (dh ** 0.5)
    wc, w2, lvec = [], [], []
    for lp in layers:
        qkv_w = lp["qkv_w"].at[:, :c].multiply(scale)
        qkv_b = lp["qkv_b"].at[:, :c].multiply(scale)
        mat = jnp.zeros((c, 8 * c), f32)
        mat = mat.at[:, 0:3 * c].set(qkv_w)
        mat = mat.at[:, 3 * c:4 * c].set(lp["g_w1"])
        mat = mat.at[:, 4 * c:5 * c].set(lp["g_w2"])
        mat = mat.at[:, 5 * c:6 * c].set(lp["out_w"])
        mat = mat.at[:, 6 * c:8 * c].set(lp["m_w1"])
        wc.append(mat)
        w2.append(lp["m_w2"])

        vec = jnp.zeros((4, 128), f32)
        vec = vec.at[0, 0:c].set(lp["g_b1"][0])
        vec = vec.at[0, c:2 * c].set(lp["g_b2"][0])
        vec = vec.at[0, 2 * c:3 * c].set(lp["bn1_w"][0])
        vec = vec.at[0, 3 * c:4 * c].set(lp["bn1_b"][0])
        vec = vec.at[1, 0:3 * c].set(qkv_b[0])
        vec = vec.at[1, 3 * c:4 * c].set(lp["out_b"][0])
        vec = vec.at[2, 0:c].set(lp["bn2_w"][0])
        vec = vec.at[2, c:2 * c].set(lp["bn2_b"][0])
        vec = vec.at[2, 2 * c:4 * c].set(lp["m_b1"][0])
        vec = vec.at[3, 0:c].set(lp["m_b2"][0])
        vec = vec.at[3, c:2 * c].set(lp["bn3_w"][0])
        vec = vec.at[3, 2 * c:3 * c].set(lp["bn3_b"][0])
        lvec.append(vec)
    kp["layer_wc"] = jnp.stack(wc)        # [L, C, 8C]
    kp["layer_w2"] = jnp.stack(w2)        # [L, 2C, C]
    kp["layer_vec"] = jnp.stack(lvec)     # [L, 4, 128]

    # Head-MLP matrix slab; final projection zero-padded to 128 output lanes.
    hw = jnp.zeros((c + c2 + c4, 128), f32)
    hw = hw.at[0:c, 0:c2].set(p["h_w1"])
    hw = hw.at[c:c + c2, 0:c4].set(p["h_w2"])
    hw = hw.at[c + c2:c + c2 + c4, 0:3].set(p["h_w3"])
    kp["head_w"] = hw
    return kp


# ------------------------------- forward glue ---------------------------------

def _gps_forward(kp, node_idx, pe, edge_index, edge_attr, batch, *, heads):
    f32 = jnp.float32
    n = pe.shape[0]
    num_layers, c = kp["layer_wc"].shape[0], kp["layer_wc"].shape[1]

    # Glue: gather/scatter as dense one-hots (small graphs); the within-graph
    # attention mask is built in-kernel from these O(N) batch-id vectors.
    node_oh = jax.nn.one_hot(node_idx[:, 0], NODE_OH_W, dtype=f32)   # [N, 12]
    edge_oh = jax.nn.one_hot(edge_attr, EDGE_OH_W, dtype=f32)        # [E, 16]
    src_oh = jax.nn.one_hot(edge_index[0], n, dtype=f32)             # [E, N]
    dst_t = jax.nn.one_hot(edge_index[1], n, dtype=f32).T            # [N, E]
    bcol = batch.astype(f32)[:, None]                                # [N, 1]
    brow = batch.astype(f32)[None, :]                                # [1, N]

    args = (node_oh, pe, bcol, brow, edge_oh, src_oh, dst_t,
            kp["emb_w"], kp["misc_vec"], kp["layer_wc"], kp["layer_w2"],
            kp["layer_vec"], kp["head_w"])
    vmem = pl.BlockSpec(memory_space=pltpu.MemorySpace.VMEM)
    y_pad = pl.pallas_call(
        functools.partial(gps_fused_kernel, num_layers=num_layers,
                          heads=heads, channels=c),
        out_shape=jax.ShapeDtypeStruct((n, 128), f32),
        in_specs=[vmem] * len(args),
        out_specs=vmem,
        scratch_shapes=[pltpu.VMEM((n, max(FEAT_W, c)), jnp.float32)],
    )(*args)
    return y_pad[:, :3]


gps_forward = jax.jit(_gps_forward, static_argnames=("heads",))


# ----------------------------------- main --------------------------------------

if __name__ == "__main__":
    key = jax.random.PRNGKey(0)
    k_param, k_x, k_pe, k_eattr = jax.random.split(key, 4)

    channels, pe_dim, num_layers, heads = 32, 8, 2, 4
    # 16 graphs of 8 nodes each -> N = 128 nodes: fills the 128-lane vregs and
    # amortizes the fixed per-call overheads (per review).
    n_graphs, nodes_per_graph = 16, 8
    n_nodes = n_graphs * nodes_per_graph

    raw_params = init_gps_params(k_param, channels, pe_dim, num_layers, heads)
    kp = prepare_params(raw_params, channels=channels, pe_dim=pe_dim, heads=heads)

    x_idx = jax.random.randint(k_x, (n_nodes, 1), 0, 7, dtype=jnp.int32)
    pe = jax.random.normal(k_pe, (n_nodes, 20), jnp.float32)

    # bidirectional ring edges inside each graph -> E = 16 * 16 = 256
    src, dst = [], []
    for g in range(n_graphs):
        base = g * nodes_per_graph
        for i in range(nodes_per_graph):
            j = (i + 1) % nodes_per_graph
            src += [base + i, base + j]
            dst += [base + j, base + i]
    edge_index = jnp.array([src, dst], dtype=jnp.int32)             # [2, 256]
    n_edges = edge_index.shape[1]
    edge_attr = jax.random.randint(k_eattr, (n_edges,), 0, 11, dtype=jnp.int32)
    batch = jnp.repeat(jnp.arange(n_graphs, dtype=jnp.int32), nodes_per_graph)

    out = gps_forward(kp, x_idx, pe, edge_index, edge_attr, batch, heads=heads)
    out = jax.block_until_ready(out)
    assert out.shape == (n_nodes, 3) and out.dtype == jnp.float32
    assert bool(jnp.all(jnp.isfinite(out)))
    print("KERNEL_OK")
</pallas_src>

<mosaic_0001>
module attributes {stable_mosaic.version = 11 : i64} {
  func.func @gps_fused_kernel(%arg0: memref<128x12xf32, #tpu.memory_space<vmem>>, %arg1: memref<128x20xf32, #tpu.memory_space<vmem>>, %arg2: memref<128x1xf32, #tpu.memory_space<vmem>>, %arg3: memref<1x128xf32, #tpu.memory_space<vmem>>, %arg4: memref<256x16xf32, #tpu.memory_space<vmem>>, %arg5: memref<256x128xf32, #tpu.memory_space<vmem>>, %arg6: memref<128x256xf32, #tpu.memory_space<vmem>>, %arg7: memref<48x32xf32, #tpu.memory_space<vmem>>, %arg8: memref<3x128xf32, #tpu.memory_space<vmem>>, %arg9: memref<2x32x256xf32, #tpu.memory_space<vmem>>, %arg10: memref<2x64x32xf32, #tpu.memory_space<vmem>>, %arg11: memref<2x4x128xf32, #tpu.memory_space<vmem>>, %arg12: memref<56x128xf32, #tpu.memory_space<vmem>>, %arg13: memref<128x128xf32, #tpu.memory_space<vmem>>, %arg14: memref<128x32xf32, #tpu.memory_space<vmem>>) attributes {dimension_semantics = [], scalar_prefetch = 0 : i64, scratch_operands = 1 : i64, tpu.core_type = #tpu.core_type<tc>} {
    %c0 = arith.constant 0 : index
    %c0_0 = arith.constant 0 : index
    %0 = vector.load %arg8[%c0, %c0_0] : memref<3x128xf32, #tpu.memory_space<vmem>>, vector<3x128xf32>
    %c0_1 = arith.constant 0 : index
    %c0_2 = arith.constant 0 : index
    %1 = vector.load %arg7[%c0_1, %c0_2] : memref<48x32xf32, #tpu.memory_space<vmem>>, vector<48x32xf32>
    %c0_3 = arith.constant 0 : index
    %c0_4 = arith.constant 0 : index
    %2 = vector.load %arg2[%c0_3, %c0_4] : memref<128x1xf32, #tpu.memory_space<vmem>>, vector<128x1xf32>
    %c0_5 = arith.constant 0 : index
    %c0_6 = arith.constant 0 : index
    %3 = vector.load %arg3[%c0_5, %c0_6] : memref<1x128xf32, #tpu.memory_space<vmem>>, vector<1x128xf32>
    %4 = vector.broadcast %2 : vector<128x1xf32> to vector<128x128xf32>
    %5 = vector.broadcast %3 : vector<1x128xf32> to vector<128x128xf32>
    %6 = arith.cmpf oeq, %4, %5 : vector<128x128xf32>
    %cst = arith.constant 0.000000e+00 : f32
    %cst_7 = arith.constant -1.000000e+30 : f32
    %7 = vector.broadcast %cst : f32 to vector<128x128xf32>
    %8 = vector.broadcast %cst_7 : f32 to vector<128x128xf32>
    %9 = arith.select %6, %7, %8 : vector<128x128xi1>, vector<128x128xf32>
    %c0_8 = arith.constant 0 : index
    %c0_9 = arith.constant 0 : index
    %10 = vector.load %arg1[%c0_8, %c0_9] : memref<128x20xf32, #tpu.memory_space<vmem>>, vector<128x20xf32>
    %11 = vector.extract_strided_slice %0 {offsets = [0, 0], sizes = [1, 20], strides = [1, 1]} : vector<3x128xf32> to vector<1x20xf32>
    %12 = vector.extract_strided_slice %0 {offsets = [0, 32], sizes = [1, 20], strides = [1, 1]} : vector<3x128xf32> to vector<1x20xf32>
    %cst_10 = arith.constant dense<0.000000e+00> : vector<20xf32>
    %13 = vector.multi_reduction <add>, %10, %cst_10 [0] : vector<128x20xf32> to vector<20xf32>
    %14 = vector.shape_cast %13 : vector<20xf32> to vector<1x20xf32>
    %cst_11 = arith.constant 1.280000e+02 : f32
    %15 = vector.broadcast %cst_11 : f32 to vector<1x20xf32>
    %16 = arith.divf %14, %15 : vector<1x20xf32>
    %17 = arith.mulf %10, %10 : vector<128x20xf32>
    %cst_12 = arith.constant dense<0.000000e+00> : vector<20xf32>
    %18 = vector.multi_reduction <add>, %17, %cst_12 [0] : vector<128x20xf32> to vector<20xf32>
    %19 = vector.shape_cast %18 : vector<20xf32> to vector<1x20xf32>
    %cst_13 = arith.constant 1.280000e+02 : f32
    %20 = vector.broadcast %cst_13 : f32 to vector<1x20xf32>
    %21 = arith.divf %19, %20 : vector<1x20xf32>
    %22 = arith.mulf %16, %16 : vector<1x20xf32>
    %23 = arith.subf %21, %22 : vector<1x20xf32>
    %24 = vector.broadcast %16 : vector<1x20xf32> to vector<128x20xf32>
    %25 = arith.subf %10, %24 : vector<128x20xf32>
    %cst_14 = arith.constant 9.99999974E-6 : f32
    %26 = vector.broadcast %cst_14 : f32 to vector<1x20xf32>
    %27 = arith.addf %23, %26 : vector<1x20xf32>
    %28 = math.rsqrt %27 : vector<1x20xf32>
    %29 = vector.broadcast %28 : vector<1x20xf32> to vector<128x20xf32>
    %30 = arith.mulf %25, %29 : vector<128x20xf32>
    %31 = vector.broadcast %11 : vector<1x20xf32> to vector<128x20xf32>
    %32 = arith.mulf %30, %31 : vector<128x20xf32>
    %33 = vector.broadcast %12 : vector<1x20xf32> to vector<128x20xf32>
    %34 = arith.addf %32, %33 : vector<128x20xf32>
    %c0_15 = arith.constant 0 : index
    %c0_16 = arith.constant 0 : index
    %35 = vector.load %arg0[%c0_15, %c0_16] : memref<128x12xf32, #tpu.memory_space<vmem>>, vector<128x12xf32>
    %c0_17 = arith.constant 0 : index
    %c0_18 = arith.constant 0 : index
    %36 = vector.load %arg14[%c0_17, %c0_18] : memref<128x32xf32, #tpu.memory_space<vmem>>, vector<128x12xf32>
    tpu.vector_store %arg14[%c0_17, %c0_18], %35 {strides = array<i32>} : memref<128x32xf32, #tpu.memory_space<vmem>>, vector<128x12xf32>,
    %c0_19 = arith.constant 0 : index
    %c12 = arith.constant 12 : index
    %37 = vector.load %arg14[%c0_19, %c12] : memref<128x32xf32, #tpu.memory_space<vmem>>, vector<128x20xf32>
    tpu.vector_store %arg14[%c0_19, %c12], %34 {strides = array<i32>} : memref<128x32xf32, #tpu.memory_space<vmem>>, vector<128x20xf32>,
    %c0_20 = arith.constant 0 : index
    %c0_21 = arith.constant 0 : index
    %38 = vector.load %arg14[%c0_20, %c0_21] : memref<128x32xf32, #tpu.memory_space<vmem>>, vector<128x32xf32>
    %39 = vector.extract_strided_slice %1 {offsets = [0, 0], sizes = [32, 32], strides = [1, 1]} : vector<48x32xf32> to vector<32x32xf32>
    %cst_22 = arith.constant dense<0.000000e+00> : vector<128x32xf32>
    %40 = tpu.matmul %38, %39, %cst_22 {dimension_numbers = #tpu.dot_dimension_numbers<[1], [0], [0], [1], [0, 0, 1, 1], [], []>} : vector<128x32xf32>, vector<32x32xf32>, vector<128x32xf32> -> vector<128x32xf32>
    %41 = vector.extract_strided_slice %0 {offsets = [0, 64], sizes = [1, 32], strides = [1, 1]} : vector<3x128xf32> to vector<1x32xf32>
    %42 = vector.broadcast %41 : vector<1x32xf32> to vector<128x32xf32>
    %43 = arith.addf %40, %42 : vector<128x32xf32>
    %c0_23 = arith.constant 0 : index
    %c0_24 = arith.constant 0 : index
    %44 = vector.load %arg4[%c0_23, %c0_24] : memref<256x16xf32, #tpu.memory_space<vmem>>, vector<256x16xf32>
    %45 = vector.extract_strided_slice %1 {offsets = [32, 0], sizes = [16, 32], strides = [1, 1]} : vector<48x32xf32> to vector<16x32xf32>
    %cst_25 = arith.constant dense<0.000000e+00> : vector<256x32xf32>
    %46 = tpu.matmul %44, %45, %cst_25 {dimension_numbers = #tpu.dot_dimension_numbers<[1], [0], [0], [1], [0, 0, 1, 1], [], []>} : vector<256x16xf32>, vector<16x32xf32>, vector<256x32xf32> -> vector<256x32xf32>
    %c0_26 = arith.constant 0 : index
    %c0_27 = arith.constant 0 : index
    %47 = vector.load %arg5[%c0_26, %c0_27] : memref<256x128xf32, #tpu.memory_space<vmem>>, vector<256x128xf32>
    %c0_28 = arith.constant 0 : index
    %c0_29 = arith.constant 0 : index
    %48 = vector.load %arg6[%c0_28, %c0_29] : memref<128x256xf32, #tpu.memory_space<vmem>>, vector<128x256xf32>
    %c0_30 = arith.constant 0 : index
    %c0_31 = arith.constant 0 : index
    %c0_32 = arith.constant 0 : index
    %49 = vector.load %arg9[%c0_30, %c0_31, %c0_32] : memref<2x32x256xf32, #tpu.memory_space<vmem>>, vector<1x32x256xf32>
    %50 = vector.shape_cast %49 : vector<1x32x256xf32> to vector<32x256xf32>
    %c0_33 = arith.constant 0 : index
    %c0_34 = arith.constant 0 : index
    %c0_35 = arith.constant 0 : index
    %51 = vector.load %arg11[%c0_33, %c0_34, %c0_35] : memref<2x4x128xf32, #tpu.memory_space<vmem>>, vector<1x4x128xf32>
    %52 = vector.shape_cast %51 : vector<1x4x128xf32> to vector<4x128xf32>
    %53 = vector.extract_strided_slice %50 {offsets = [0, 0], sizes = [32, 96], strides = [1, 1]} : vector<32x256xf32> to vector<32x96xf32>
    %54 = vector.extract_strided_slice %50 {offsets = [0, 96], sizes = [32, 32], strides = [1, 1]} : vector<32x256xf32> to vector<32x32xf32>
    %55 = vector.extract_strided_slice %50 {offsets = [0, 128], sizes = [32, 32], strides = [1, 1]} : vector<32x256xf32> to vector<32x32xf32>
    %56 = vector.extract_strided_slice %50 {offsets = [0, 160], sizes = [32, 32], strides = [1, 1]} : vector<32x256xf32> to vector<32x32xf32>
    %57 = vector.extract_strided_slice %50 {offsets = [0, 192], sizes = [32, 64], strides = [1, 1]} : vector<32x256xf32> to vector<32x64xf32>
    %c0_36 = arith.constant 0 : index
    %c0_37 = arith.constant 0 : index
    %c0_38 = arith.constant 0 : index
    %58 = vector.load %arg10[%c0_36, %c0_37, %c0_38] : memref<2x64x32xf32, #tpu.memory_space<vmem>>, vector<1x64x32xf32>
    %59 = vector.shape_cast %58 : vector<1x64x32xf32> to vector<64x32xf32>
    %60 = vector.extract_strided_slice %52 {offsets = [0, 0], sizes = [1, 32], strides = [1, 1]} : vector<4x128xf32> to vector<1x32xf32>
    %61 = vector.extract_strided_slice %52 {offsets = [0, 32], sizes = [1, 32], strides = [1, 1]} : vector<4x128xf32> to vector<1x32xf32>
    %62 = vector.extract_strided_slice %52 {offsets = [0, 64], sizes = [1, 32], strides = [1, 1]} : vector<4x128xf32> to vector<1x32xf32>
    %63 = vector.extract_strided_slice %52 {offsets = [0, 96], sizes = [1, 32], strides = [1, 1]} : vector<4x128xf32> to vector<1x32xf32>
    %64 = vector.extract_strided_slice %52 {offsets = [1, 0], sizes = [1, 96], strides = [1, 1]} : vector<4x128xf32> to vector<1x96xf32>
    %65 = vector.extract_strided_slice %52 {offsets = [1, 96], sizes = [1, 32], strides = [1, 1]} : vector<4x128xf32> to vector<1x32xf32>
    %66 = vector.extract_strided_slice %52 {offsets = [2, 0], sizes = [1, 32], strides = [1, 1]} : vector<4x128xf32> to vector<1x32xf32>
    %67 = vector.extract_strided_slice %52 {offsets = [2, 32], sizes = [1, 32], strides = [1, 1]} : vector<4x128xf32> to vector<1x32xf32>
    %68 = vector.extract_strided_slice %52 {offsets = [2, 64], sizes = [1, 64], strides = [1, 1]} : vector<4x128xf32> to vector<1x64xf32>
    %69 = vector.extract_strided_slice %52 {offsets = [3, 0], sizes = [1, 32], strides = [1, 1]} : vector<4x128xf32> to vector<1x32xf32>
    %70 = vector.extract_strided_slice %52 {offsets = [3, 32], sizes = [1, 32], strides = [1, 1]} : vector<4x128xf32> to vector<1x32xf32>
    %71 = vector.extract_strided_slice %52 {offsets = [3, 64], sizes = [1, 32], strides = [1, 1]} : vector<4x128xf32> to vector<1x32xf32>
    %cst_39 = arith.constant dense<0.000000e+00> : vector<256x32xf32>
    %72 = tpu.matmul %47, %43, %cst_39 {dimension_numbers = #tpu.dot_dimension_numbers<[1], [0], [0], [1], [0, 0, 1, 1], [], []>} : vector<256x128xf32>, vector<128x32xf32>, vector<256x32xf32> -> vector<256x32xf32>
    %73 = arith.addf %72, %46 : vector<256x32xf32>
    %cst_40 = arith.constant 0.000000e+00 : f32
    %74 = vector.broadcast %cst_40 : f32 to vector<256x32xf32>
    %75 = arith.maximumf %73, %74 : vector<256x32xf32>
    %cst_41 = arith.constant dense<0.000000e+00> : vector<128x32xf32>
    %76 = tpu.matmul %48, %75, %cst_41 {dimension_numbers = #tpu.dot_dimension_numbers<[1], [0], [0], [1], [0, 0, 1, 1], [], []>} : vector<128x256xf32>, vector<256x32xf32>, vector<128x32xf32> -> vector<128x32xf32>
    %77 = arith.addf %43, %76 : vector<128x32xf32>
    %cst_42 = arith.constant dense<0.000000e+00> : vector<128x32xf32>
    %78 = tpu.matmul %77, %54, %cst_42 {dimension_numbers = #tpu.dot_dimension_numbers<[1], [0], [0], [1], [0, 0, 1, 1], [], []>} : vector<128x32xf32>, vector<32x32xf32>, vector<128x32xf32> -> vector<128x32xf32>
    %79 = vector.broadcast %60 : vector<1x32xf32> to vector<128x32xf32>
    %80 = arith.addf %78, %79 : vector<128x32xf32>
    %cst_43 = arith.constant 0.000000e+00 : f32
    %81 = vector.broadcast %cst_43 : f32 to vector<128x32xf32>
    %82 = arith.maximumf %80, %81 : vector<128x32xf32>
    %cst_44 = arith.constant dense<0.000000e+00> : vector<128x32xf32>
    %83 = tpu.matmul %82, %55, %cst_44 {dimension_numbers = #tpu.dot_dimension_numbers<[1], [0], [0], [1], [0, 0, 1, 1], [], []>} : vector<128x32xf32>, vector<32x32xf32>, vector<128x32xf32> -> vector<128x32xf32>
    %84 = vector.broadcast %61 : vector<1x32xf32> to vector<128x32xf32>
    %85 = arith.addf %83, %84 : vector<128x32xf32>
    %86 = arith.addf %85, %43 : vector<128x32xf32>
    %cst_45 = arith.constant dense<0.000000e+00> : vector<32xf32>
    %87 = vector.multi_reduction <add>, %86, %cst_45 [0] : vector<128x32xf32> to vector<32xf32>
    %88 = vector.shape_cast %87 : vector<32xf32> to vector<1x32xf32>
    %cst_46 = arith.constant 1.280000e+02 : f32
    %89 = vector.broadcast %cst_46 : f32 to vector<1x32xf32>
    %90 = arith.divf %88, %89 : vector<1x32xf32>
    %91 = arith.mulf %86, %86 : vector<128x32xf32>
    %cst_47 = arith.constant dense<0.000000e+00> : vector<32xf32>
    %92 = vector.multi_reduction <add>, %91, %cst_47 [0] : vector<128x32xf32> to vector<32xf32>
    %93 = vector.shape_cast %92 : vector<32xf32> to vector<1x32xf32>
    %cst_48 = arith.constant 1.280000e+02 : f32
    %94 = vector.broadcast %cst_48 : f32 to vector<1x32xf32>
    %95 = arith.divf %93, %94 : vector<1x32xf32>
    %96 = arith.mulf %90, %90 : vector<1x32xf32>
    %97 = arith.subf %95, %96 : vector<1x32xf32>
    %98 = vector.broadcast %90 : vector<1x32xf32> to vector<128x32xf32>
    %99 = arith.subf %86, %98 : vector<128x32xf32>
    %cst_49 = arith.constant 9.99999974E-6 : f32
    %100 = vector.broadcast %cst_49 : f32 to vector<1x32xf32>
    %101 = arith.addf %97, %100 : vector<1x32xf32>
    %102 = math.rsqrt %101 : vector<1x32xf32>
    %103 = vector.broadcast %102 : vector<1x32xf32> to vector<128x32xf32>
    %104 = arith.mulf %99, %103 : vector<128x32xf32>
    %105 = vector.broadcast %62 : vector<1x32xf32> to vector<128x32xf32>
    %106 = arith.mulf %104, %105 : vector<128x32xf32>
    %107 = vector.broadcast %63 : vector<1x32xf32> to vector<128x32xf32>
    %108 = arith.addf %106, %107 : vector<128x32xf32>
    %cst_50 = arith.constant dense<0.000000e+00> : vector<128x96xf32>
    %109 = tpu.matmul %43, %53, %cst_50 {dimension_numbers = #tpu.dot_dimension_numbers<[1], [0], [0], [1], [0, 0, 1, 1], [], []>} : vector<128x32xf32>, vector<32x96xf32>, vector<128x96xf32> -> vector<128x96xf32>
    %110 = vector.broadcast %64 : vector<1x96xf32> to vector<128x96xf32>
    %111 = arith.addf %109, %110 : vector<128x96xf32>
    %112 = vector.extract_strided_slice %111 {offsets = [0, 0], sizes = [128, 8], strides = [1, 1]} : vector<128x96xf32> to vector<128x8xf32>
    %113 = vector.extract_strided_slice %111 {offsets = [0, 32], sizes = [128, 8], strides = [1, 1]} : vector<128x96xf32> to vector<128x8xf32>
    %114 = vector.extract_strided_slice %111 {offsets = [0, 64], sizes = [128, 8], strides = [1, 1]} : vector<128x96xf32> to vector<128x8xf32>
    %cst_51 = arith.constant dense<0.000000e+00> : vector<128x128xf32>
    %115 = tpu.matmul %112, %113, %cst_51 {dimension_numbers = #tpu.dot_dimension_numbers<[1], [1], [0], [0], [0, 0, 1, 0], [], []>} : vector<128x8xf32>, vector<128x8xf32>, vector<128x128xf32> -> vector<128x128xf32>
    %116 = arith.addf %115, %9 : vector<128x128xf32>
    %cst_52 = arith.constant dense<0xFF800000> : vector<128xf32>
    %117 = vector.multi_reduction <maximumf>, %116, %cst_52 [1] : vector<128x128xf32> to vector<128xf32>
    %118 = vector.shape_cast %117 : vector<128xf32> to vector<128x1xf32>
    %119 = vector.broadcast %118 : vector<128x1xf32> to vector<128x128xf32>
    %120 = arith.subf %116, %119 : vector<128x128xf32>
    %121 = math.exp %120 : vector<128x128xf32>
    %cst_53 = arith.constant dense<0.000000e+00> : vector<128xf32>
    %122 = vector.multi_reduction <add>, %121, %cst_53 [1] : vector<128x128xf32> to vector<128xf32>
    %123 = vector.shape_cast %122 : vector<128xf32> to vector<128x1xf32>
    %124 = tpu.reciprocal %123 {approx = true} : vector<128x1xf32> -> vector<128x1xf32>
    %125 = vector.broadcast %124 : vector<128x1xf32> to vector<128x128xf32>
    %126 = arith.mulf %121, %125 : vector<128x128xf32>
    %cst_54 = arith.constant dense<0.000000e+00> : vector<128x8xf32>
    %127 = tpu.matmul %126, %114, %cst_54 {dimension_numbers = #tpu.dot_dimension_numbers<[1], [0], [0], [1], [0, 0, 1, 1], [], []>} : vector<128x128xf32>, vector<128x8xf32>, vector<128x8xf32> -> vector<128x8xf32>
    %c0_55 = arith.constant 0 : index
    %c0_56 = arith.constant 0 : index
    %128 = vector.load %arg14[%c0_55, %c0_56] : memref<128x32xf32, #tpu.memory_space<vmem>>, vector<128x8xf32>
    tpu.vector_store %arg14[%c0_55, %c0_56], %127 {strides = array<i32>} : memref<128x32xf32, #tpu.memory_space<vmem>>, vector<128x8xf32>,
    %129 = vector.extract_strided_slice %111 {offsets = [0, 8], sizes = [128, 8], strides = [1, 1]} : vector<128x96xf32> to vector<128x8xf32>
    %130 = vector.extract_strided_slice %111 {offsets = [0, 40], sizes = [128, 8], strides = [1, 1]} : vector<128x96xf32> to vector<128x8xf32>
    %131 = vector.extract_strided_slice %111 {offsets = [0, 72], sizes = [128, 8], strides = [1, 1]} : vector<128x96xf32> to vector<128x8xf32>
    %cst_57 = arith.constant dense<0.000000e+00> : vector<128x128xf32>
    %132 = tpu.matmul %129, %130, %cst_57 {dimension_numbers = #tpu.dot_dimension_numbers<[1], [1], [0], [0], [0, 0, 1, 0], [], []>} : vector<128x8xf32>, vector<128x8xf32>, vector<128x128xf32> -> vector<128x128xf32>
    %133 = arith.addf %132, %9 : vector<128x128xf32>
    %cst_58 = arith.constant dense<0xFF800000> : vector<128xf32>
    %134 = vector.multi_reduction <maximumf>, %133, %cst_58 [1] : vector<128x128xf32> to vector<128xf32>
    %135 = vector.shape_cast %134 : vector<128xf32> to vector<128x1xf32>
    %136 = vector.broadcast %135 : vector<128x1xf32> to vector<128x128xf32>
    %137 = arith.subf %133, %136 : vector<128x128xf32>
    %138 = math.exp %137 : vector<128x128xf32>
    %cst_59 = arith.constant dense<0.000000e+00> : vector<128xf32>
    %139 = vector.multi_reduction <add>, %138, %cst_59 [1] : vector<128x128xf32> to vector<128xf32>
    %140 = vector.shape_cast %139 : vector<128xf32> to vector<128x1xf32>
    %141 = tpu.reciprocal %140 {approx = true} : vector<128x1xf32> -> vector<128x1xf32>
    %142 = vector.broadcast %141 : vector<128x1xf32> to vector<128x128xf32>
    %143 = arith.mulf %138, %142 : vector<128x128xf32>
    %cst_60 = arith.constant dense<0.000000e+00> : vector<128x8xf32>
    %144 = tpu.matmul %143, %131, %cst_60 {dimension_numbers = #tpu.dot_dimension_numbers<[1], [0], [0], [1], [0, 0, 1, 1], [], []>} : vector<128x128xf32>, vector<128x8xf32>, vector<128x8xf32> -> vector<128x8xf32>
    %c0_61 = arith.constant 0 : index
    %c8 = arith.constant 8 : index
    %145 = vector.load %arg14[%c0_61, %c8] : memref<128x32xf32, #tpu.memory_space<vmem>>, vector<128x8xf32>
    tpu.vector_store %arg14[%c0_61, %c8], %144 {strides = array<i32>} : memref<128x32xf32, #tpu.memory_space<vmem>>, vector<128x8xf32>,
    %146 = vector.extract_strided_slice %111 {offsets = [0, 16], sizes = [128, 8], strides = [1, 1]} : vector<128x96xf32> to vector<128x8xf32>
    %147 = vector.extract_strided_slice %111 {offsets = [0, 48], sizes = [128, 8], strides = [1, 1]} : vector<128x96xf32> to vector<128x8xf32>
    %148 = vector.extract_strided_slice %111 {offsets = [0, 80], sizes = [128, 8], strides = [1, 1]} : vector<128x96xf32> to vector<128x8xf32>
    %cst_62 = arith.constant dense<0.000000e+00> : vector<128x128xf32>
    %149 = tpu.matmul %146, %147, %cst_62 {dimension_numbers = #tpu.dot_dimension_numbers<[1], [1], [0], [0], [0, 0, 1, 0], [], []>} : vector<128x8xf32>, vector<128x8xf32>, vector<128x128xf32> -> vector<128x128xf32>
    %150 = arith.addf %149, %9 : vector<128x128xf32>
    %cst_63 = arith.constant dense<0xFF800000> : vector<128xf32>
    %151 = vector.multi_reduction <maximumf>, %150, %cst_63 [1] : vector<128x128xf32> to vector<128xf32>
    %152 = vector.shape_cast %151 : vector<128xf32> to vector<128x1xf32>
    %153 = vector.broadcast %152 : vector<128x1xf32> to vector<128x128xf32>
    %154 = arith.subf %150, %153 : vector<128x128xf32>
    %155 = math.exp %154 : vector<128x128xf32>
    %cst_64 = arith.constant dense<0.000000e+00> : vector<128xf32>
    %156 = vector.multi_reduction <add>, %155, %cst_64 [1] : vector<128x128xf32> to vector<128xf32>
    %157 = vector.shape_cast %156 : vector<128xf32> to vector<128x1xf32>
    %158 = tpu.reciprocal %157 {approx = true} : vector<128x1xf32> -> vector<128x1xf32>
    %159 = vector.broadcast %158 : vector<128x1xf32> to vector<128x128xf32>
    %160 = arith.mulf %155, %159 : vector<128x128xf32>
    %cst_65 = arith.constant dense<0.000000e+00> : vector<128x8xf32>
    %161 = tpu.matmul %160, %148, %cst_65 {dimension_numbers = #tpu.dot_dimension_numbers<[1], [0], [0], [1], [0, 0, 1, 1], [], []>} : vector<128x128xf32>, vector<128x8xf32>, vector<128x8xf32> -> vector<128x8xf32>
    %c0_66 = arith.constant 0 : index
    %c16 = arith.constant 16 : index
    %162 = vector.load %arg14[%c0_66, %c16] : memref<128x32xf32, #tpu.memory_space<vmem>>, vector<128x8xf32>
    tpu.vector_store %arg14[%c0_66, %c16], %161 {strides = array<i32>} : memref<128x32xf32, #tpu.memory_space<vmem>>, vector<128x8xf32>,
    %163 = vector.extract_strided_slice %111 {offsets = [0, 24], sizes = [128, 8], strides = [1, 1]} : vector<128x96xf32> to vector<128x8xf32>
    %164 = vector.extract_strided_slice %111 {offsets = [0, 56], sizes = [128, 8], strides = [1, 1]} : vector<128x96xf32> to vector<128x8xf32>
    %165 = vector.extract_strided_slice %111 {offsets = [0, 88], sizes = [128, 8], strides = [1, 1]} : vector<128x96xf32> to vector<128x8xf32>
    %cst_67 = arith.constant dense<0.000000e+00> : vector<128x128xf32>
    %166 = tpu.matmul %163, %164, %cst_67 {dimension_numbers = #tpu.dot_dimension_numbers<[1], [1], [0], [0], [0, 0, 1, 0], [], []>} : vector<128x8xf32>, vector<128x8xf32>, vector<128x128xf32> -> vector<128x128xf32>
    %167 = arith.addf %166, %9 : vector<128x128xf32>
    %cst_68 = arith.constant dense<0xFF800000> : vector<128xf32>
    %168 = vector.multi_reduction <maximumf>, %167, %cst_68 [1] : vector<128x128xf32> to vector<128xf32>
    %169 = vector.shape_cast %168 : vector<128xf32> to vector<128x1xf32>
    %170 = vector.broadcast %169 : vector<128x1xf32> to vector<128x128xf32>
    %171 = arith.subf %167, %170 : vector<128x128xf32>
    %172 = math.exp %171 : vector<128x128xf32>
    %cst_69 = arith.constant dense<0.000000e+00> : vector<128xf32>
    %173 = vector.multi_reduction <add>, %172, %cst_69 [1] : vector<128x128xf32> to vector<128xf32>
    %174 = vector.shape_cast %173 : vector<128xf32> to vector<128x1xf32>
    %175 = tpu.reciprocal %174 {approx = true} : vector<128x1xf32> -> vector<128x1xf32>
    %176 = vector.broadcast %175 : vector<128x1xf32> to vector<128x128xf32>
    %177 = arith.mulf %172, %176 : vector<128x128xf32>
    %cst_70 = arith.constant dense<0.000000e+00> : vector<128x8xf32>
    %178 = tpu.matmul %177, %165, %cst_70 {dimension_numbers = #tpu.dot_dimension_numbers<[1], [0], [0], [1], [0, 0, 1, 1], [], []>} : vector<128x128xf32>, vector<128x8xf32>, vector<128x8xf32> -> vector<128x8xf32>
    %c0_71 = arith.constant 0 : index
    %c24 = arith.constant 24 : index
    %179 = vector.load %arg14[%c0_71, %c24] : memref<128x32xf32, #tpu.memory_space<vmem>>, vector<128x8xf32>
    tpu.vector_store %arg14[%c0_71, %c24], %178 {strides = array<i32>} : memref<128x32xf32, #tpu.memory_space<vmem>>, vector<128x8xf32>,
    %c0_72 = arith.constant 0 : index
    %c0_73 = arith.constant 0 : index
    %180 = vector.load %arg14[%c0_72, %c0_73] : memref<128x32xf32, #tpu.memory_space<vmem>>, vector<128x32xf32>
    %cst_74 = arith.constant dense<0.000000e+00> : vector<128x32xf32>
    %181 = tpu.matmul %180, %56, %cst_74 {dimension_numbers = #tpu.dot_dimension_numbers<[1], [0], [0], [1], [0, 0, 1, 1], [], []>} : vector<128x32xf32>, vector<32x32xf32>, vector<128x32xf32> -> vector<128x32xf32>
    %182 = vector.broadcast %65 : vector<1x32xf32> to vector<128x32xf32>
    %183 = arith.addf %181, %182 : vector<128x32xf32>
    %184 = arith.addf %183, %43 : vector<128x32xf32>
    %cst_75 = arith.constant dense<0.000000e+00> : vector<32xf32>
    %185 = vector.multi_reduction <add>, %184, %cst_75 [0] : vector<128x32xf32> to vector<32xf32>
    %186 = vector.shape_cast %185 : vector<32xf32> to vector<1x32xf32>
    %cst_76 = arith.constant 1.280000e+02 : f32
    %187 = vector.broadcast %cst_76 : f32 to vector<1x32xf32>
    %188 = arith.divf %186, %187 : vector<1x32xf32>
    %189 = arith.mulf %184, %184 : vector<128x32xf32>
    %cst_77 = arith.constant dense<0.000000e+00> : vector<32xf32>
    %190 = vector.multi_reduction <add>, %189, %cst_77 [0] : vector<128x32xf32> to vector<32xf32>
    %191 = vector.shape_cast %190 : vector<32xf32> to vector<1x32xf32>
    %cst_78 = arith.constant 1.280000e+02 : f32
    %192 = vector.broadcast %cst_78 : f32 to vector<1x32xf32>
    %193 = arith.divf %191, %192 : vector<1x32xf32>
    %194 = arith.mulf %188, %188 : vector<1x32xf32>
    %195 = arith.subf %193, %194 : vector<1x32xf32>
    %196 = vector.broadcast %188 : vector<1x32xf32> to vector<128x32xf32>
    %197 = arith.subf %184, %196 : vector<128x32xf32>
    %cst_79 = arith.constant 9.99999974E-6 : f32
    %198 = vector.broadcast %cst_79 : f32 to vector<1x32xf32>
    %199 = arith.addf %195, %198 : vector<1x32xf32>
    %200 = math.rsqrt %199 : vector<1x32xf32>
    %201 = vector.broadcast %200 : vector<1x32xf32> to vector<128x32xf32>
    %202 = arith.mulf %197, %201 : vector<128x32xf32>
    %203 = vector.broadcast %66 : vector<1x32xf32> to vector<128x32xf32>
    %204 = arith.mulf %202, %203 : vector<128x32xf32>
    %205 = vector.broadcast %67 : vector<1x32xf32> to vector<128x32xf32>
    %206 = arith.addf %204, %205 : vector<128x32xf32>
    %207 = arith.addf %108, %206 : vector<128x32xf32>
    %cst_80 = arith.constant dense<0.000000e+00> : vector<128x64xf32>
    %208 = tpu.matmul %207, %57, %cst_80 {dimension_numbers = #tpu.dot_dimension_numbers<[1], [0], [0], [1], [0, 0, 1, 1], [], []>} : vector<128x32xf32>, vector<32x64xf32>, vector<128x64xf32> -> vector<128x64xf32>
    %209 = vector.broadcast %68 : vector<1x64xf32> to vector<128x64xf32>
    %210 = arith.addf %208, %209 : vector<128x64xf32>
    %cst_81 = arith.constant 0.000000e+00 : f32
    %211 = vector.broadcast %cst_81 : f32 to vector<128x64xf32>
    %212 = arith.maximumf %210, %211 : vector<128x64xf32>
    %cst_82 = arith.constant dense<0.000000e+00> : vector<128x32xf32>
    %213 = tpu.matmul %212, %59, %cst_82 {dimension_numbers = #tpu.dot_dimension_numbers<[1], [0], [0], [1], [0, 0, 1, 1], [], []>} : vector<128x64xf32>, vector<64x32xf32>, vector<128x32xf32> -> vector<128x32xf32>
    %214 = vector.broadcast %69 : vector<1x32xf32> to vector<128x32xf32>
    %215 = arith.addf %213, %214 : vector<128x32xf32>
    %216 = arith.addf %207, %215 : vector<128x32xf32>
    %cst_83 = arith.constant dense<0.000000e+00> : vector<32xf32>
    %217 = vector.multi_reduction <add>, %216, %cst_83 [0] : vector<128x32xf32> to vector<32xf32>
    %218 = vector.shape_cast %217 : vector<32xf32> to vector<1x32xf32>
    %cst_84 = arith.constant 1.280000e+02 : f32
    %219 = vector.broadcast %cst_84 : f32 to vector<1x32xf32>
    %220 = arith.divf %218, %219 : vector<1x32xf32>
    %221 = arith.mulf %216, %216 : vector<128x32xf32>
    %cst_85 = arith.constant dense<0.000000e+00> : vector<32xf32>
    %222 = vector.multi_reduction <add>, %221, %cst_85 [0] : vector<128x32xf32> to vector<32xf32>
    %223 = vector.shape_cast %222 : vector<32xf32> to vector<1x32xf32>
    %cst_86 = arith.constant 1.280000e+02 : f32
    %224 = vector.broadcast %cst_86 : f32 to vector<1x32xf32>
    %225 = arith.divf %223, %224 : vector<1x32xf32>
    %226 = arith.mulf %220, %220 : vector<1x32xf32>
    %227 = arith.subf %225, %226 : vector<1x32xf32>
    %228 = vector.broadcast %220 : vector<1x32xf32> to vector<128x32xf32>
    %229 = arith.subf %216, %228 : vector<128x32xf32>
    %cst_87 = arith.constant 9.99999974E-6 : f32
    %230 = vector.broadcast %cst_87 : f32 to vector<1x32xf32>
    %231 = arith.addf %227, %230 : vector<1x32xf32>
    %232 = math.rsqrt %231 : vector<1x32xf32>
    %233 = vector.broadcast %232 : vector<1x32xf32> to vector<128x32xf32>
    %234 = arith.mulf %229, %233 : vector<128x32xf32>
    %235 = vector.broadcast %70 : vector<1x32xf32> to vector<128x32xf32>
    %236 = arith.mulf %234, %235 : vector<128x32xf32>
    %237 = vector.broadcast %71 : vector<1x32xf32> to vector<128x32xf32>
    %238 = arith.addf %236, %237 : vector<128x32xf32>
    %c1 = arith.constant 1 : index
    %c0_88 = arith.constant 0 : index
    %c0_89 = arith.constant 0 : index
    %239 = vector.load %arg9[%c1, %c0_88, %c0_89] : memref<2x32x256xf32, #tpu.memory_space<vmem>>, vector<1x32x256xf32>
    %240 = vector.shape_cast %239 : vector<1x32x256xf32> to vector<32x256xf32>
    %c1_90 = arith.constant 1 : index
    %c0_91 = arith.constant 0 : index
    %c0_92 = arith.constant 0 : index
    %241 = vector.load %arg11[%c1_90, %c0_91, %c0_92] : memref<2x4x128xf32, #tpu.memory_space<vmem>>, vector<1x4x128xf32>
    %242 = vector.shape_cast %241 : vector<1x4x128xf32> to vector<4x128xf32>
    %243 = vector.extract_strided_slice %240 {offsets = [0, 0], sizes = [32, 96], strides = [1, 1]} : vector<32x256xf32> to vector<32x96xf32>
    %244 = vector.extract_strided_slice %240 {offsets = [0, 96], sizes = [32, 32], strides = [1, 1]} : vector<32x256xf32> to vector<32x32xf32>
    %245 = vector.extract_strided_slice %240 {offsets = [0, 128], sizes = [32, 32], strides = [1, 1]} : vector<32x256xf32> to vector<32x32xf32>
    %246 = vector.extract_strided_slice %240 {offsets = [0, 160], sizes = [32, 32], strides = [1, 1]} : vector<32x256xf32> to vector<32x32xf32>
    %247 = vector.extract_strided_slice %240 {offsets = [0, 192], sizes = [32, 64], strides = [1, 1]} : vector<32x256xf32> to vector<32x64xf32>
    %c1_93 = arith.constant 1 : index
    %c0_94 = arith.constant 0 : index
    %c0_95 = arith.constant 0 : index
    %248 = vector.load %arg10[%c1_93, %c0_94, %c0_95] : memref<2x64x32xf32, #tpu.memory_space<vmem>>, vector<1x64x32xf32>
    %249 = vector.shape_cast %248 : vector<1x64x32xf32> to vector<64x32xf32>
    %250 = vector.extract_strided_slice %242 {offsets = [0, 0], sizes = [1, 32], strides = [1, 1]} : vector<4x128xf32> to vector<1x32xf32>
    %251 = vector.extract_strided_slice %242 {offsets = [0, 32], sizes = [1, 32], strides = [1, 1]} : vector<4x128xf32> to vector<1x32xf32>
    %252 = vector.extract_strided_slice %242 {offsets = [0, 64], sizes = [1, 32], strides = [1, 1]} : vector<4x128xf32> to vector<1x32xf32>
    %253 = vector.extract_strided_slice %242 {offsets = [0, 96], sizes = [1, 32], strides = [1, 1]} : vector<4x128xf32> to vector<1x32xf32>
    %254 = vector.extract_strided_slice %242 {offsets = [1, 0], sizes = [1, 96], strides = [1, 1]} : vector<4x128xf32> to vector<1x96xf32>
    %255 = vector.extract_strided_slice %242 {offsets = [1, 96], sizes = [1, 32], strides = [1, 1]} : vector<4x128xf32> to vector<1x32xf32>
    %256 = vector.extract_strided_slice %242 {offsets = [2, 0], sizes = [1, 32], strides = [1, 1]} : vector<4x128xf32> to vector<1x32xf32>
    %257 = vector.extract_strided_slice %242 {offsets = [2, 32], sizes = [1, 32], strides = [1, 1]} : vector<4x128xf32> to vector<1x32xf32>
    %258 = vector.extract_strided_slice %242 {offsets = [2, 64], sizes = [1, 64], strides = [1, 1]} : vector<4x128xf32> to vector<1x64xf32>
    %259 = vector.extract_strided_slice %242 {offsets = [3, 0], sizes = [1, 32], strides = [1, 1]} : vector<4x128xf32> to vector<1x32xf32>
    %260 = vector.extract_strided_slice %242 {offsets = [3, 32], sizes = [1, 32], strides = [1, 1]} : vector<4x128xf32> to vector<1x32xf32>
    %261 = vector.extract_strided_slice %242 {offsets = [3, 64], sizes = [1, 32], strides = [1, 1]} : vector<4x128xf32> to vector<1x32xf32>
    %cst_96 = arith.constant dense<0.000000e+00> : vector<256x32xf32>
    %262 = tpu.matmul %47, %238, %cst_96 {dimension_numbers = #tpu.dot_dimension_numbers<[1], [0], [0], [1], [0, 0, 1, 1], [], []>} : vector<256x128xf32>, vector<128x32xf32>, vector<256x32xf32> -> vector<256x32xf32>
    %263 = arith.addf %262, %46 : vector<256x32xf32>
    %cst_97 = arith.constant 0.000000e+00 : f32
    %264 = vector.broadcast %cst_97 : f32 to vector<256x32xf32>
    %265 = arith.maximumf %263, %264 : vector<256x32xf32>
    %cst_98 = arith.constant dense<0.000000e+00> : vector<128x32xf32>
    %266 = tpu.matmul %48, %265, %cst_98 {dimension_numbers = #tpu.dot_dimension_numbers<[1], [0], [0], [1], [0, 0, 1, 1], [], []>} : vector<128x256xf32>, vector<256x32xf32>, vector<128x32xf32> -> vector<128x32xf32>
    %267 = arith.addf %238, %266 : vector<128x32xf32>
    %cst_99 = arith.constant dense<0.000000e+00> : vector<128x32xf32>
    %268 = tpu.matmul %267, %244, %cst_99 {dimension_numbers = #tpu.dot_dimension_numbers<[1], [0], [0], [1], [0, 0, 1, 1], [], []>} : vector<128x32xf32>, vector<32x32xf32>, vector<128x32xf32> -> vector<128x32xf32>
    %269 = vector.broadcast %250 : vector<1x32xf32> to vector<128x32xf32>
    %270 = arith.addf %268, %269 : vector<128x32xf32>
    %cst_100 = arith.constant 0.000000e+00 : f32
    %271 = vector.broadcast %cst_100 : f32 to vector<128x32xf32>
    %272 = arith.maximumf %270, %271 : vector<128x32xf32>
    %cst_101 = arith.constant dense<0.000000e+00> : vector<128x32xf32>
    %273 = tpu.matmul %272, %245, %cst_101 {dimension_numbers = #tpu.dot_dimension_numbers<[1], [0], [0], [1], [0, 0, 1, 1], [], []>} : vector<128x32xf32>, vector<32x32xf32>, vector<128x32xf32> -> vector<128x32xf32>
    %274 = vector.broadcast %251 : vector<1x32xf32> to vector<128x32xf32>
    %275 = arith.addf %273, %274 : vector<128x32xf32>
    %276 = arith.addf %275, %238 : vector<128x32xf32>
    %cst_102 = arith.constant dense<0.000000e+00> : vector<32xf32>
    %277 = vector.multi_reduction <add>, %276, %cst_102 [0] : vector<128x32xf32> to vector<32xf32>
    %278 = vector.shape_cast %277 : vector<32xf32> to vector<1x32xf32>
    %cst_103 = arith.constant 1.280000e+02 : f32
    %279 = vector.broadcast %cst_103 : f32 to vector<1x32xf32>
    %280 = arith.divf %278, %279 : vector<1x32xf32>
    %281 = arith.mulf %276, %276 : vector<128x32xf32>
    %cst_104 = arith.constant dense<0.000000e+00> : vector<32xf32>
    %282 = vector.multi_reduction <add>, %281, %cst_104 [0] : vector<128x32xf32> to vector<32xf32>
    %283 = vector.shape_cast %282 : vector<32xf32> to vector<1x32xf32>
    %cst_105 = arith.constant 1.280000e+02 : f32
    %284 = vector.broadcast %cst_105 : f32 to vector<1x32xf32>
    %285 = arith.divf %283, %284 : vector<1x32xf32>
    %286 = arith.mulf %280, %280 : vector<1x32xf32>
    %287 = arith.subf %285, %286 : vector<1x32xf32>
    %288 = vector.broadcast %280 : vector<1x32xf32> to vector<128x32xf32>
    %289 = arith.subf %276, %288 : vector<128x32xf32>
    %cst_106 = arith.constant 9.99999974E-6 : f32
    %290 = vector.broadcast %cst_106 : f32 to vector<1x32xf32>
    %291 = arith.addf %287, %290 : vector<1x32xf32>
    %292 = math.rsqrt %291 : vector<1x32xf32>
    %293 = vector.broadcast %292 : vector<1x32xf32> to vector<128x32xf32>
    %294 = arith.mulf %289, %293 : vector<128x32xf32>
    %295 = vector.broadcast %252 : vector<1x32xf32> to vector<128x32xf32>
    %296 = arith.mulf %294, %295 : vector<128x32xf32>
    %297 = vector.broadcast %253 : vector<1x32xf32> to vector<128x32xf32>
    %298 = arith.addf %296, %297 : vector<128x32xf32>
    %cst_107 = arith.constant dense<0.000000e+00> : vector<128x96xf32>
    %299 = tpu.matmul %238, %243, %cst_107 {dimension_numbers = #tpu.dot_dimension_numbers<[1], [0], [0], [1], [0, 0, 1, 1], [], []>} : vector<128x32xf32>, vector<32x96xf32>, vector<128x96xf32> -> vector<128x96xf32>
    %300 = vector.broadcast %254 : vector<1x96xf32> to vector<128x96xf32>
    %301 = arith.addf %299, %300 : vector<128x96xf32>
    %302 = vector.extract_strided_slice %301 {offsets = [0, 0], sizes = [128, 8], strides = [1, 1]} : vector<128x96xf32> to vector<128x8xf32>
    %303 = vector.extract_strided_slice %301 {offsets = [0, 32], sizes = [128, 8], strides = [1, 1]} : vector<128x96xf32> to vector<128x8xf32>
    %304 = vector.extract_strided_slice %301 {offsets = [0, 64], sizes = [128, 8], strides = [1, 1]} : vector<128x96xf32> to vector<128x8xf32>
    %cst_108 = arith.constant dense<0.000000e+00> : vector<128x128xf32>
    %305 = tpu.matmul %302, %303, %cst_108 {dimension_numbers = #tpu.dot_dimension_numbers<[1], [1], [0], [0], [0, 0, 1, 0], [], []>} : vector<128x8xf32>, vector<128x8xf32>, vector<128x128xf32> -> vector<128x128xf32>
    %306 = arith.addf %305, %9 : vector<128x128xf32>
    %cst_109 = arith.constant dense<0xFF800000> : vector<128xf32>
    %307 = vector.multi_reduction <maximumf>, %306, %cst_109 [1] : vector<128x128xf32> to vector<128xf32>
    %308 = vector.shape_cast %307 : vector<128xf32> to vector<128x1xf32>
    %309 = vector.broadcast %308 : vector<128x1xf32> to vector<128x128xf32>
    %310 = arith.subf %306, %309 : vector<128x128xf32>
    %311 = math.exp %310 : vector<128x128xf32>
    %cst_110 = arith.constant dense<0.000000e+00> : vector<128xf32>
    %312 = vector.multi_reduction <add>, %311, %cst_110 [1] : vector<128x128xf32> to vector<128xf32>
    %313 = vector.shape_cast %312 : vector<128xf32> to vector<128x1xf32>
    %314 = tpu.reciprocal %313 {approx = true} : vector<128x1xf32> -> vector<128x1xf32>
    %315 = vector.broadcast %314 : vector<128x1xf32> to vector<128x128xf32>
    %316 = arith.mulf %311, %315 : vector<128x128xf32>
    %cst_111 = arith.constant dense<0.000000e+00> : vector<128x8xf32>
    %317 = tpu.matmul %316, %304, %cst_111 {dimension_numbers = #tpu.dot_dimension_numbers<[1], [0], [0], [1], [0, 0, 1, 1], [], []>} : vector<128x128xf32>, vector<128x8xf32>, vector<128x8xf32> -> vector<128x8xf32>
    %c0_112 = arith.constant 0 : index
    %c0_113 = arith.constant 0 : index
    %318 = vector.load %arg14[%c0_112, %c0_113] : memref<128x32xf32, #tpu.memory_space<vmem>>, vector<128x8xf32>
    tpu.vector_store %arg14[%c0_112, %c0_113], %317 {strides = array<i32>} : memref<128x32xf32, #tpu.memory_space<vmem>>, vector<128x8xf32>,
    %319 = vector.extract_strided_slice %301 {offsets = [0, 8], sizes = [128, 8], strides = [1, 1]} : vector<128x96xf32> to vector<128x8xf32>
    %320 = vector.extract_strided_slice %301 {offsets = [0, 40], sizes = [128, 8], strides = [1, 1]} : vector<128x96xf32> to vector<128x8xf32>
    %321 = vector.extract_strided_slice %301 {offsets = [0, 72], sizes = [128, 8], strides = [1, 1]} : vector<128x96xf32> to vector<128x8xf32>
    %cst_114 = arith.constant dense<0.000000e+00> : vector<128x128xf32>
    %322 = tpu.matmul %319, %320, %cst_114 {dimension_numbers = #tpu.dot_dimension_numbers<[1], [1], [0], [0], [0, 0, 1, 0], [], []>} : vector<128x8xf32>, vector<128x8xf32>, vector<128x128xf32> -> vector<128x128xf32>
    %323 = arith.addf %322, %9 : vector<128x128xf32>
    %cst_115 = arith.constant dense<0xFF800000> : vector<128xf32>
    %324 = vector.multi_reduction <maximumf>, %323, %cst_115 [1] : vector<128x128xf32> to vector<128xf32>
    %325 = vector.shape_cast %324 : vector<128xf32> to vector<128x1xf32>
    %326 = vector.broadcast %325 : vector<128x1xf32> to vector<128x128xf32>
    %327 = arith.subf %323, %326 : vector<128x128xf32>
    %328 = math.exp %327 : vector<128x128xf32>
    %cst_116 = arith.constant dense<0.000000e+00> : vector<128xf32>
    %329 = vector.multi_reduction <add>, %328, %cst_116 [1] : vector<128x128xf32> to vector<128xf32>
    %330 = vector.shape_cast %329 : vector<128xf32> to vector<128x1xf32>
    %331 = tpu.reciprocal %330 {approx = true} : vector<128x1xf32> -> vector<128x1xf32>
    %332 = vector.broadcast %331 : vector<128x1xf32> to vector<128x128xf32>
    %333 = arith.mulf %328, %332 : vector<128x128xf32>
    %cst_117 = arith.constant dense<0.000000e+00> : vector<128x8xf32>
    %334 = tpu.matmul %333, %321, %cst_117 {dimension_numbers = #tpu.dot_dimension_numbers<[1], [0], [0], [1], [0, 0, 1, 1], [], []>} : vector<128x128xf32>, vector<128x8xf32>, vector<128x8xf32> -> vector<128x8xf32>
    %c0_118 = arith.constant 0 : index
    %c8_119 = arith.constant 8 : index
    %335 = vector.load %arg14[%c0_118, %c8_119] : memref<128x32xf32, #tpu.memory_space<vmem>>, vector<128x8xf32>
    tpu.vector_store %arg14[%c0_118, %c8_119], %334 {strides = array<i32>} : memref<128x32xf32, #tpu.memory_space<vmem>>, vector<128x8xf32>,
    %336 = vector.extract_strided_slice %301 {offsets = [0, 16], sizes = [128, 8], strides = [1, 1]} : vector<128x96xf32> to vector<128x8xf32>
    %337 = vector.extract_strided_slice %301 {offsets = [0, 48], sizes = [128, 8], strides = [1, 1]} : vector<128x96xf32> to vector<128x8xf32>
    %338 = vector.extract_strided_slice %301 {offsets = [0, 80], sizes = [128, 8], strides = [1, 1]} : vector<128x96xf32> to vector<128x8xf32>
    %cst_120 = arith.constant dense<0.000000e+00> : vector<128x128xf32>
    %339 = tpu.matmul %336, %337, %cst_120 {dimension_numbers = #tpu.dot_dimension_numbers<[1], [1], [0], [0], [0, 0, 1, 0], [], []>} : vector<128x8xf32>, vector<128x8xf32>, vector<128x128xf32> -> vector<128x128xf32>
    %340 = arith.addf %339, %9 : vector<128x128xf32>
    %cst_121 = arith.constant dense<0xFF800000> : vector<128xf32>
    %341 = vector.multi_reduction <maximumf>, %340, %cst_121 [1] : vector<128x128xf32> to vector<128xf32>
    %342 = vector.shape_cast %341 : vector<128xf32> to vector<128x1xf32>
    %343 = vector.broadcast %342 : vector<128x1xf32> to vector<128x128xf32>
    %344 = arith.subf %340, %343 : vector<128x128xf32>
    %345 = math.exp %344 : vector<128x128xf32>
    %cst_122 = arith.constant dense<0.000000e+00> : vector<128xf32>
    %346 = vector.multi_reduction <add>, %345, %cst_122 [1] : vector<128x128xf32> to vector<128xf32>
    %347 = vector.shape_cast %346 : vector<128xf32> to vector<128x1xf32>
    %348 = tpu.reciprocal %347 {approx = true} : vector<128x1xf32> -> vector<128x1xf32>
    %349 = vector.broadcast %348 : vector<128x1xf32> to vector<128x128xf32>
    %350 = arith.mulf %345, %349 : vector<128x128xf32>
    %cst_123 = arith.constant dense<0.000000e+00> : vector<128x8xf32>
    %351 = tpu.matmul %350, %338, %cst_123 {dimension_numbers = #tpu.dot_dimension_numbers<[1], [0], [0], [1], [0, 0, 1, 1], [], []>} : vector<128x128xf32>, vector<128x8xf32>, vector<128x8xf32> -> vector<128x8xf32>
    %c0_124 = arith.constant 0 : index
    %c16_125 = arith.constant 16 : index
    %352 = vector.load %arg14[%c0_124, %c16_125] : memref<128x32xf32, #tpu.memory_space<vmem>>, vector<128x8xf32>
    tpu.vector_store %arg14[%c0_124, %c16_125], %351 {strides = array<i32>} : memref<128x32xf32, #tpu.memory_space<vmem>>, vector<128x8xf32>,
    %353 = vector.extract_strided_slice %301 {offsets = [0, 24], sizes = [128, 8], strides = [1, 1]} : vector<128x96xf32> to vector<128x8xf32>
    %354 = vector.extract_strided_slice %301 {offsets = [0, 56], sizes = [128, 8], strides = [1, 1]} : vector<128x96xf32> to vector<128x8xf32>
    %355 = vector.extract_strided_slice %301 {offsets = [0, 88], sizes = [128, 8], strides = [1, 1]} : vector<128x96xf32> to vector<128x8xf32>
    %cst_126 = arith.constant dense<0.000000e+00> : vector<128x128xf32>
    %356 = tpu.matmul %353, %354, %cst_126 {dimension_numbers = #tpu.dot_dimension_numbers<[1], [1], [0], [0], [0, 0, 1, 0], [], []>} : vector<128x8xf32>, vector<128x8xf32>, vector<128x128xf32> -> vector<128x128xf32>
    %357 = arith.addf %356, %9 : vector<128x128xf32>
    %cst_127 = arith.constant dense<0xFF800000> : vector<128xf32>
    %358 = vector.multi_reduction <maximumf>, %357, %cst_127 [1] : vector<128x128xf32> to vector<128xf32>
    %359 = vector.shape_cast %358 : vector<128xf32> to vector<128x1xf32>
    %360 = vector.broadcast %359 : vector<128x1xf32> to vector<128x128xf32>
    %361 = arith.subf %357, %360 : vector<128x128xf32>
    %362 = math.exp %361 : vector<128x128xf32>
    %cst_128 = arith.constant dense<0.000000e+00> : vector<128xf32>
    %363 = vector.multi_reduction <add>, %362, %cst_128 [1] : vector<128x128xf32> to vector<128xf32>
    %364 = vector.shape_cast %363 : vector<128xf32> to vector<128x1xf32>
    %365 = tpu.reciprocal %364 {approx = true} : vector<128x1xf32> -> vector<128x1xf32>
    %366 = vector.broadcast %365 : vector<128x1xf32> to vector<128x128xf32>
    %367 = arith.mulf %362, %366 : vector<128x128xf32>
    %cst_129 = arith.constant dense<0.000000e+00> : vector<128x8xf32>
    %368 = tpu.matmul %367, %355, %cst_129 {dimension_numbers = #tpu.dot_dimension_numbers<[1], [0], [0], [1], [0, 0, 1, 1], [], []>} : vector<128x128xf32>, vector<128x8xf32>, vector<128x8xf32> -> vector<128x8xf32>
    %c0_130 = arith.constant 0 : index
    %c24_131 = arith.constant 24 : index
    %369 = vector.load %arg14[%c0_130, %c24_131] : memref<128x32xf32, #tpu.memory_space<vmem>>, vector<128x8xf32>
    tpu.vector_store %arg14[%c0_130, %c24_131], %368 {strides = array<i32>} : memref<128x32xf32, #tpu.memory_space<vmem>>, vector<128x8xf32>,
    %c0_132 = arith.constant 0 : index
    %c0_133 = arith.constant 0 : index
    %370 = vector.load %arg14[%c0_132, %c0_133] : memref<128x32xf32, #tpu.memory_space<vmem>>, vector<128x32xf32>
    %cst_134 = arith.constant dense<0.000000e+00> : vector<128x32xf32>
    %371 = tpu.matmul %370, %246, %cst_134 {dimension_numbers = #tpu.dot_dimension_numbers<[1], [0], [0], [1], [0, 0, 1, 1], [], []>} : vector<128x32xf32>, vector<32x32xf32>, vector<128x32xf32> -> vector<128x32xf32>
    %372 = vector.broadcast %255 : vector<1x32xf32> to vector<128x32xf32>
    %373 = arith.addf %371, %372 : vector<128x32xf32>
    %374 = arith.addf %373, %238 : vector<128x32xf32>
    %cst_135 = arith.constant dense<0.000000e+00> : vector<32xf32>
    %375 = vector.multi_reduction <add>, %374, %cst_135 [0] : vector<128x32xf32> to vector<32xf32>
    %376 = vector.shape_cast %375 : vector<32xf32> to vector<1x32xf32>
    %cst_136 = arith.constant 1.280000e+02 : f32
    %377 = vector.broadcast %cst_136 : f32 to vector<1x32xf32>
    %378 = arith.divf %376, %377 : vector<1x32xf32>
    %379 = arith.mulf %374, %374 : vector<128x32xf32>
    %cst_137 = arith.constant dense<0.000000e+00> : vector<32xf32>
    %380 = vector.multi_reduction <add>, %379, %cst_137 [0] : vector<128x32xf32> to vector<32xf32>
    %381 = vector.shape_cast %380 : vector<32xf32> to vector<1x32xf32>
    %cst_138 = arith.constant 1.280000e+02 : f32
    %382 = vector.broadcast %cst_138 : f32 to vector<1x32xf32>
    %383 = arith.divf %381, %382 : vector<1x32xf32>
    %384 = arith.mulf %378, %378 : vector<1x32xf32>
    %385 = arith.subf %383, %384 : vector<1x32xf32>
    %386 = vector.broadcast %378 : vector<1x32xf32> to vector<128x32xf32>
    %387 = arith.subf %374, %386 : vector<128x32xf32>
    %cst_139 = arith.constant 9.99999974E-6 : f32
    %388 = vector.broadcast %cst_139 : f32 to vector<1x32xf32>
    %389 = arith.addf %385, %388 : vector<1x32xf32>
    %390 = math.rsqrt %389 : vector<1x32xf32>
    %391 = vector.broadcast %390 : vector<1x32xf32> to vector<128x32xf32>
    %392 = arith.mulf %387, %391 : vector<128x32xf32>
    %393 = vector.broadcast %256 : vector<1x32xf32> to vector<128x32xf32>
    %394 = arith.mulf %392, %393 : vector<128x32xf32>
    %395 = vector.broadcast %257 : vector<1x32xf32> to vector<128x32xf32>
    %396 = arith.addf %394, %395 : vector<128x32xf32>
    %397 = arith.addf %298, %396 : vector<128x32xf32>
    %cst_140 = arith.constant dense<0.000000e+00> : vector<128x64xf32>
    %398 = tpu.matmul %397, %247, %cst_140 {dimension_numbers = #tpu.dot_dimension_numbers<[1], [0], [0], [1], [0, 0, 1, 1], [], []>} : vector<128x32xf32>, vector<32x64xf32>, vector<128x64xf32> -> vector<128x64xf32>
    %399 = vector.broadcast %258 : vector<1x64xf32> to vector<128x64xf32>
    %400 = arith.addf %398, %399 : vector<128x64xf32>
    %cst_141 = arith.constant 0.000000e+00 : f32
    %401 = vector.broadcast %cst_141 : f32 to vector<128x64xf32>
    %402 = arith.maximumf %400, %401 : vector<128x64xf32>
    %cst_142 = arith.constant dense<0.000000e+00> : vector<128x32xf32>
    %403 = tpu.matmul %402, %249, %cst_142 {dimension_numbers = #tpu.dot_dimension_numbers<[1], [0], [0], [1], [0, 0, 1, 1], [], []>} : vector<128x64xf32>, vector<64x32xf32>, vector<128x32xf32> -> vector<128x32xf32>
    %404 = vector.broadcast %259 : vector<1x32xf32> to vector<128x32xf32>
    %405 = arith.addf %403, %404 : vector<128x32xf32>
    %406 = arith.addf %397, %405 : vector<128x32xf32>
    %cst_143 = arith.constant dense<0.000000e+00> : vector<32xf32>
    %407 = vector.multi_reduction <add>, %406, %cst_143 [0] : vector<128x32xf32> to vector<32xf32>
    %408 = vector.shape_cast %407 : vector<32xf32> to vector<1x32xf32>
    %cst_144 = arith.constant 1.280000e+02 : f32
    %409 = vector.broadcast %cst_144 : f32 to vector<1x32xf32>
    %410 = arith.divf %408, %409 : vector<1x32xf32>
    %411 = arith.mulf %406, %406 : vector<128x32xf32>
    %cst_145 = arith.constant dense<0.000000e+00> : vector<32xf32>
    %412 = vector.multi_reduction <add>, %411, %cst_145 [0] : vector<128x32xf32> to vector<32xf32>
    %413 = vector.shape_cast %412 : vector<32xf32> to vector<1x32xf32>
    %cst_146 = arith.constant 1.280000e+02 : f32
    %414 = vector.broadcast %cst_146 : f32 to vector<1x32xf32>
    %415 = arith.divf %413, %414 : vector<1x32xf32>
    %416 = arith.mulf %410, %410 : vector<1x32xf32>
    %417 = arith.subf %415, %416 : vector<1x32xf32>
    %418 = vector.broadcast %410 : vector<1x32xf32> to vector<128x32xf32>
    %419 = arith.subf %406, %418 : vector<128x32xf32>
    %cst_147 = arith.constant 9.99999974E-6 : f32
    %420 = vector.broadcast %cst_147 : f32 to vector<1x32xf32>
    %421 = arith.addf %417, %420 : vector<1x32xf32>
    %422 = math.rsqrt %421 : vector<1x32xf32>
    %423 = vector.broadcast %422 : vector<1x32xf32> to vector<128x32xf32>
    %424 = arith.mulf %419, %423 : vector<128x32xf32>
    %425 = vector.broadcast %260 : vector<1x32xf32> to vector<128x32xf32>
    %426 = arith.mulf %424, %425 : vector<128x32xf32>
    %427 = vector.broadcast %261 : vector<1x32xf32> to vector<128x32xf32>
    %428 = arith.addf %426, %427 : vector<128x32xf32>
    %c0_148 = arith.constant 0 : index
    %c0_149 = arith.constant 0 : index
    %429 = vector.load %arg12[%c0_148, %c0_149] : memref<56x128xf32, #tpu.memory_space<vmem>>, vector<56x128xf32>
    %430 = vector.extract_strided_slice %429 {offsets = [0, 0], sizes = [32, 16], strides = [1, 1]} : vector<56x128xf32> to vector<32x16xf32>
    %cst_150 = arith.constant dense<0.000000e+00> : vector<128x16xf32>
    %431 = tpu.matmul %428, %430, %cst_150 {dimension_numbers = #tpu.dot_dimension_numbers<[1], [0], [0], [1], [0, 0, 1, 1], [], []>} : vector<128x32xf32>, vector<32x16xf32>, vector<128x16xf32> -> vector<128x16xf32>
    %432 = vector.extract_strided_slice %0 {offsets = [1, 0], sizes = [1, 16], strides = [1, 1]} : vector<3x128xf32> to vector<1x16xf32>
    %433 = vector.broadcast %432 : vector<1x16xf32> to vector<128x16xf32>
    %434 = arith.addf %431, %433 : vector<128x16xf32>
    %435 = vector.extract_strided_slice %0 {offsets = [1, 16], sizes = [1, 16], strides = [1, 1]} : vector<3x128xf32> to vector<1x16xf32>
    %436 = vector.extract_strided_slice %0 {offsets = [1, 32], sizes = [1, 16], strides = [1, 1]} : vector<3x128xf32> to vector<1x16xf32>
    %cst_151 = arith.constant dense<0.000000e+00> : vector<128xf32>
    %437 = vector.multi_reduction <add>, %434, %cst_151 [1] : vector<128x16xf32> to vector<128xf32>
    %438 = vector.shape_cast %437 : vector<128xf32> to vector<128x1xf32>
    %cst_152 = arith.constant 1.600000e+01 : f32
    %439 = vector.broadcast %cst_152 : f32 to vector<128x1xf32>
    %440 = arith.divf %438, %439 : vector<128x1xf32>
    %441 = arith.mulf %434, %434 : vector<128x16xf32>
    %cst_153 = arith.constant dense<0.000000e+00> : vector<128xf32>
    %442 = vector.multi_reduction <add>, %441, %cst_153 [1] : vector<128x16xf32> to vector<128xf32>
    %443 = vector.shape_cast %442 : vector<128xf32> to vector<128x1xf32>
    %cst_154 = arith.constant 1.600000e+01 : f32
    %444 = vector.broadcast %cst_154 : f32 to vector<128x1xf32>
    %445 = arith.divf %443, %444 : vector<128x1xf32>
    %446 = arith.mulf %440, %440 : vector<128x1xf32>
    %447 = arith.subf %445, %446 : vector<128x1xf32>
    %448 = vector.broadcast %440 : vector<128x1xf32> to vector<128x16xf32>
    %449 = arith.subf %434, %448 : vector<128x16xf32>
    %cst_155 = arith.constant 9.99999974E-6 : f32
    %450 = vector.broadcast %cst_155 : f32 to vector<128x1xf32>
    %451 = arith.addf %447, %450 : vector<128x1xf32>
    %452 = math.rsqrt %451 : vector<128x1xf32>
    %453 = vector.broadcast %452 : vector<128x1xf32> to vector<128x16xf32>
    %454 = arith.mulf %449, %453 : vector<128x16xf32>
    %455 = vector.broadcast %435 : vector<1x16xf32> to vector<128x16xf32>
    %456 = arith.mulf %454, %455 : vector<128x16xf32>
    %457 = vector.broadcast %436 : vector<1x16xf32> to vector<128x16xf32>
    %458 = arith.addf %456, %457 : vector<128x16xf32>
    %cst_156 = arith.constant 0.000000e+00 : f32
    %459 = vector.broadcast %cst_156 : f32 to vector<128x16xf32>
    %460 = arith.maximumf %458, %459 : vector<128x16xf32>
    %461 = vector.extract_strided_slice %429 {offsets = [32, 0], sizes = [16, 8], strides = [1, 1]} : vector<56x128xf32> to vector<16x8xf32>
    %cst_157 = arith.constant dense<0.000000e+00> : vector<128x8xf32>
    %462 = tpu.matmul %460, %461, %cst_157 {dimension_numbers = #tpu.dot_dimension_numbers<[1], [0], [0], [1], [0, 0, 1, 1], [], []>} : vector<128x16xf32>, vector<16x8xf32>, vector<128x8xf32> -> vector<128x8xf32>
    %463 = vector.extract_strided_slice %0 {offsets = [1, 48], sizes = [1, 8], strides = [1, 1]} : vector<3x128xf32> to vector<1x8xf32>
    %464 = vector.broadcast %463 : vector<1x8xf32> to vector<128x8xf32>
    %465 = arith.addf %462, %464 : vector<128x8xf32>
    %466 = vector.extract_strided_slice %0 {offsets = [1, 56], sizes = [1, 8], strides = [1, 1]} : vector<3x128xf32> to vector<1x8xf32>
    %467 = vector.extract_strided_slice %0 {offsets = [1, 64], sizes = [1, 8], strides = [1, 1]} : vector<3x128xf32> to vector<1x8xf32>
    %cst_158 = arith.constant dense<0.000000e+00> : vector<128xf32>
    %468 = vector.multi_reduction <add>, %465, %cst_158 [1] : vector<128x8xf32> to vector<128xf32>
    %469 = vector.shape_cast %468 : vector<128xf32> to vector<128x1xf32>
    %cst_159 = arith.constant 8.000000e+00 : f32
    %470 = vector.broadcast %cst_159 : f32 to vector<128x1xf32>
    %471 = arith.divf %469, %470 : vector<128x1xf32>
    %472 = arith.mulf %465, %465 : vector<128x8xf32>
    %cst_160 = arith.constant dense<0.000000e+00> : vector<128xf32>
    %473 = vector.multi_reduction <add>, %472, %cst_160 [1] : vector<128x8xf32> to vector<128xf32>
    %474 = vector.shape_cast %473 : vector<128xf32> to vector<128x1xf32>
    %cst_161 = arith.constant 8.000000e+00 : f32
    %475 = vector.broadcast %cst_161 : f32 to vector<128x1xf32>
    %476 = arith.divf %474, %475 : vector<128x1xf32>
    %477 = arith.mulf %471, %471 : vector<128x1xf32>
    %478 = arith.subf %476, %477 : vector<128x1xf32>
    %479 = vector.broadcast %471 : vector<128x1xf32> to vector<128x8xf32>
    %480 = arith.subf %465, %479 : vector<128x8xf32>
    %cst_162 = arith.constant 9.99999974E-6 : f32
    %481 = vector.broadcast %cst_162 : f32 to vector<128x1xf32>
    %482 = arith.addf %478, %481 : vector<128x1xf32>
    %483 = math.rsqrt %482 : vector<128x1xf32>
    %484 = vector.broadcast %483 : vector<128x1xf32> to vector<128x8xf32>
    %485 = arith.mulf %480, %484 : vector<128x8xf32>
    %486 = vector.broadcast %466 : vector<1x8xf32> to vector<128x8xf32>
    %487 = arith.mulf %485, %486 : vector<128x8xf32>
    %488 = vector.broadcast %467 : vector<1x8xf32> to vector<128x8xf32>
    %489 = arith.addf %487, %488 : vector<128x8xf32>
    %cst_163 = arith.constant 0.000000e+00 : f32
    %490 = vector.broadcast %cst_163 : f32 to vector<128x8xf32>
    %491 = arith.maximumf %489, %490 : vector<128x8xf32>
    %492 = vector.extract_strided_slice %429 {offsets = [48, 0], sizes = [8, 128], strides = [1, 1]} : vector<56x128xf32> to vector<8x128xf32>
    %cst_164 = arith.constant dense<0.000000e+00> : vector<128x128xf32>
    %493 = tpu.matmul %491, %492, %cst_164 {dimension_numbers = #tpu.dot_dimension_numbers<[1], [0], [0], [1], [0, 0, 1, 1], [], []>} : vector<128x8xf32>, vector<8x128xf32>, vector<128x128xf32> -> vector<128x128xf32>
    %494 = vector.extract_strided_slice %0 {offsets = [2, 0], sizes = [1, 128], strides = [1, 1]} : vector<3x128xf32> to vector<1x128xf32>
    %495 = vector.broadcast %494 : vector<1x128xf32> to vector<128x128xf32>
    %496 = arith.addf %493, %495 : vector<128x128xf32>
    %c0_165 = arith.constant 0 : index
    %c0_166 = arith.constant 0 : index
    %497 = vector.load %arg13[%c0_165, %c0_166] : memref<128x128xf32, #tpu.memory_space<vmem>>, vector<128x128xf32>
    tpu.vector_store %arg13[%c0_165, %c0_166], %496 {strides = array<i32>} : memref<128x128xf32, #tpu.memory_space<vmem>>, vector<128x128xf32>,
    return
  }
}

</mosaic_0001>

<llo_original>
// kernel: _gps_forward.1
$region0: #{_gps_forward.1}
  #allocation0 [shape = 'u32[]', space=smem, size = 0x4, offset = 0x4, fixed_abs, tag = 'smem constant byte address 0x4 - core index']
  #allocation1 [shape = 'u32[144,128]{1,0:T(1,128)}', space=vmem, size = 0x12000, scoped, tag = 'internal scratch']
  #allocation2 [shape = 'f32[128,32]{1,0:T(8,128)}', space=vmem, size = 0x10000, scoped, tag = 'scratch operand']
  %s0 = inlined_call_operand.vmem [shape: f32[128,12], index: 0, kind: input, shape index: {}]
  %s1 = inlined_call_operand.vmem [shape: f32[128,20], index: 1, kind: input, shape index: {}]
  %s2 = inlined_call_operand.vmem [shape: f32[128,1], index: 2, kind: input, shape index: {}]
  %s3 = inlined_call_operand.vmem [shape: f32[1,128], index: 3, kind: input, shape index: {}]
  %s4 = inlined_call_operand.vmem [shape: f32[256,16], index: 4, kind: input, shape index: {}]
  %s5 = inlined_call_operand.vmem [shape: f32[256,128], index: 5, kind: input, shape index: {}]
  %s6 = inlined_call_operand.vmem [shape: f32[128,256], index: 6, kind: input, shape index: {}]
  %s7 = inlined_call_operand.vmem [shape: f32[48,32], index: 7, kind: input, shape index: {}]
  %s8 = inlined_call_operand.vmem [shape: f32[3,128], index: 8, kind: input, shape index: {}]
  %s9 = inlined_call_operand.vmem [shape: f32[2,32,256], index: 9, kind: input, shape index: {}]
  %s10 = inlined_call_operand.vmem [shape: f32[2,64,32], index: 10, kind: input, shape index: {}]
  %s11 = inlined_call_operand.vmem [shape: f32[2,4,128], index: 11, kind: input, shape index: {}]
  %s12 = inlined_call_operand.vmem [shape: f32[56,128], index: 12, kind: input, shape index: {}]
  %s13 = inlined_call_operand.vmem [shape: f32[128,128], index: 13, kind: output, shape index: {}]
  %s14 = sld [smem:[#allocation0]]
  $region62: #{_gps_forward.1} parent=0
    _
  %s16 = ssub.s32 1, %s14
  %s17 = scalar_select 0, %s16, %s14
  // Predicated region
  $region2: #{_gps_forward.1} parent=0 // pred_check
    _
  $region3: #{_gps_forward.1} parent=0 // pred_check_branch
    %19 = sbr.rel (0) target = $region5
  $region4: #{_gps_forward.1} parent=0 // pred_region
    _
  $region5: #{_gps_forward.1} parent=0 // pred_fallthru
    _
  // Predicated region
  $region6: #{_gps_forward.1} parent=0 // pred_check
    _
  $region7: #{_gps_forward.1} parent=0 // pred_check_branch
    %21 = sbr.rel (0) target = $region9
  $region8: #{_gps_forward.1} parent=0 // pred_region
    _
  $region9: #{_gps_forward.1} parent=0 // pred_fallthru
    _
  // Predicated region
  $region10: #{_gps_forward.1} parent=0 // pred_check
    _
  $region11: #{_gps_forward.1} parent=0 // pred_check_branch
    %23 = sbr.rel (0) target = $region13
  $region12: #{_gps_forward.1} parent=0 // pred_region
    _
  $region13: #{_gps_forward.1} parent=0 // pred_fallthru
    _
  // Predicated region
  $region14: #{_gps_forward.1} parent=0 // pred_check
    _
  $region15: #{_gps_forward.1} parent=0 // pred_check_branch
    %25 = sbr.rel (0) target = $region17
  $region16: #{_gps_forward.1} parent=0 // pred_region
    _
  $region17: #{_gps_forward.1} parent=0 // pred_fallthru
    _
  // Predicated region
  $region18: #{_gps_forward.1} parent=0 // pred_check
    _
  $region19: #{_gps_forward.1} parent=0 // pred_check_branch
    %27 = sbr.rel (0) target = $region21
  $region20: #{_gps_forward.1} parent=0 // pred_region
    _
  $region21: #{_gps_forward.1} parent=0 // pred_fallthru
    _
  // Predicated region
  $region22: #{_gps_forward.1} parent=0 // pred_check
    _
  $region23: #{_gps_forward.1} parent=0 // pred_check_branch
    %29 = sbr.rel (0) target = $region25
  $region24: #{_gps_forward.1} parent=0 // pred_region
    _
  $region25: #{_gps_forward.1} parent=0 // pred_fallthru
    _
  // Predicated region
  $region26: #{_gps_forward.1} parent=0 // pred_check
    _
  $region27: #{_gps_forward.1} parent=0 // pred_check_branch
    %31 = sbr.rel (0) target = $region29
  $region28: #{_gps_forward.1} parent=0 // pred_region
    _
  $region29: #{_gps_forward.1} parent=0 // pred_fallthru
    _
  // Predicated region
  $region30: #{_gps_forward.1} parent=0 // pred_check
    _
  $region31: #{_gps_forward.1} parent=0 // pred_check_branch
    %33 = sbr.rel (0) target = $region33
  $region32: #{_gps_forward.1} parent=0 // pred_region
    _
  $region33: #{_gps_forward.1} parent=0 // pred_fallthru
    _
  // Predicated region
  $region34: #{_gps_forward.1} parent=0 // pred_check
    _
  $region35: #{_gps_forward.1} parent=0 // pred_check_branch
    %35 = sbr.rel (0) target = $region37
  $region36: #{_gps_forward.1} parent=0 // pred_region
    _
  $region37: #{_gps_forward.1} parent=0 // pred_fallthru
    _
  // Predicated region
  $region38: #{_gps_forward.1} parent=0 // pred_check
    _
  $region39: #{_gps_forward.1} parent=0 // pred_check_branch
    %37 = sbr.rel (0) target = $region41
  $region40: #{_gps_forward.1} parent=0 // pred_region
    _
  $region41: #{_gps_forward.1} parent=0 // pred_fallthru
    _
  // Predicated region
  $region42: #{_gps_forward.1} parent=0 // pred_check
    _
  $region43: #{_gps_forward.1} parent=0 // pred_check_branch
    %39 = sbr.rel (0) target = $region45
  $region44: #{_gps_forward.1} parent=0 // pred_region
    _
  $region45: #{_gps_forward.1} parent=0 // pred_fallthru
    _
  // Predicated region
  $region46: #{_gps_forward.1} parent=0 // pred_check
    _
  $region47: #{_gps_forward.1} parent=0 // pred_check_branch
    %41 = sbr.rel (0) target = $region49
  $region48: #{_gps_forward.1} parent=0 // pred_region
    _
  $region49: #{_gps_forward.1} parent=0 // pred_fallthru
    _
  // Predicated region
  $region50: #{_gps_forward.1} parent=0 // pred_check
    _
  $region51: #{_gps_forward.1} parent=0 // pred_check_branch
    %43 = sbr.rel (0) target = $region53
  $region52: #{_gps_forward.1} parent=0 // pred_region
    _
  $region53: #{_gps_forward.1} parent=0 // pred_fallthru
    _
  %v44 = vld [vmem:[%s8] sm:$0x7]
  %v45 = vld [vmem:[%s7] sm:$0xff]
  %v46 = vld [vmem:[%s7 + $0x8] sm:$0xff]
  %v47 = vld [vmem:[%s7 + $0x10] sm:$0xff]
  %v48 = vld [vmem:[%s7 + $0x18] sm:$0xff]
  %v49 = vld [vmem:[%s7 + $0x20] sm:$0xff]
  %v50 = vld [vmem:[%s7 + $0x28] sm:$0xff]
  %v51 = vld [vmem:[%s2] sm:$0xff]
  %v52 = vld [vmem:[%s2 + $0x8] sm:$0xff]
  %v53 = vld [vmem:[%s2 + $0x10] sm:$0xff]
  %v54 = vld [vmem:[%s2 + $0x18] sm:$0xff]
  %v55 = vld [vmem:[%s2 + $0x20] sm:$0xff]
  %v56 = vld [vmem:[%s2 + $0x28] sm:$0xff]
  %v57 = vld [vmem:[%s2 + $0x30] sm:$0xff]
  %v58 = vld [vmem:[%s2 + $0x38] sm:$0xff]
  %v59 = vld [vmem:[%s2 + $0x40] sm:$0xff]
  %v60 = vld [vmem:[%s2 + $0x48] sm:$0xff]
  %v61 = vld [vmem:[%s2 + $0x50] sm:$0xff]
  %v62 = vld [vmem:[%s2 + $0x58] sm:$0xff]
  %v63 = vld [vmem:[%s2 + $0x60] sm:$0xff]
  %v64 = vld [vmem:[%s2 + $0x68] sm:$0xff]
  %v65 = vld [vmem:[%s2 + $0x70] sm:$0xff]
  %v66 = vld [vmem:[%s2 + $0x78] sm:$0xff]
  %v67 = vld [vmem:[%s3] sm:$0x1]
  %69 = vset.pattern.permute.xlu0 0
  %70 = vperm.xlu0 %69, %v51
  %v71 = vpop.permute.xlu0 %70
  %74 = vset.pattern.permute.xlu0 0
  %75 = vperm.xlu0 %74, %v52
  %v76 = vpop.permute.xlu0 %75
  %79 = vset.pattern.permute.xlu0 0
  %80 = vperm.xlu0 %79, %v53
  %v81 = vpop.permute.xlu0 %80
  %84 = vset.pattern.permute.xlu0 0
  %85 = vperm.xlu0 %84, %v54
  %v86 = vpop.permute.xlu0 %85
  %89 = vset.pattern.permute.xlu0 0
  %90 = vperm.xlu0 %89, %v55
  %v91 = vpop.permute.xlu0 %90
  %94 = vset.pattern.permute.xlu0 0
  %95 = vperm.xlu0 %94, %v56
  %v96 = vpop.permute.xlu0 %95
  %99 = vset.pattern.permute.xlu0 0
  %100 = vperm.xlu0 %99, %v57
  %v101 = vpop.permute.xlu0 %100
  %104 = vset.pattern.permute.xlu0 0
  %105 = vperm.xlu0 %104, %v58
  %v106 = vpop.permute.xlu0 %105
  %109 = vset.pattern.permute.xlu0 0
  %110 = vperm.xlu0 %109, %v59
  %v111 = vpop.permute.xlu0 %110
  %114 = vset.pattern.permute.xlu0 0
  %115 = vperm.xlu0 %114, %v60
  %v116 = vpop.permute.xlu0 %115
  %119 = vset.pattern.permute.xlu0 0
  %120 = vperm.xlu0 %119, %v61
  %v121 = vpop.permute.xlu0 %120
  %124 = vset.pattern.permute.xlu0 0
  %125 = vperm.xlu0 %124, %v62
  %v126 = vpop.permute.xlu0 %125
  %129 = vset.pattern.permute.xlu0 0
  %130 = vperm.xlu0 %129, %v63
  %v131 = vpop.permute.xlu0 %130
  %134 = vset.pattern.permute.xlu0 0
  %135 = vperm.xlu0 %134, %v64
  %v136 = vpop.permute.xlu0 %135
  %139 = vset.pattern.permute.xlu0 0
  %140 = vperm.xlu0 %139, %v65
  %v141 = vpop.permute.xlu0 %140
  %144 = vset.pattern.permute.xlu0 0
  %145 = vperm.xlu0 %144, %v66
  %v146 = vpop.permute.xlu0 %145
  %v149 = vlaneseq
  %v150 = vshrl.u32 %v149, 7
  %v151 = vsub.s32 0, %v150
  %v152 = vrot.slane %v67, %v151
  %vm154 = vcmp.eq.f32.partialorder %v71, %v152
  %vm155 = vcmp.eq.f32.partialorder %v76, %v152
  %vm156 = vcmp.eq.f32.partialorder %v81, %v152
  %vm157 = vcmp.eq.f32.partialorder %v86, %v152
  %vm158 = vcmp.eq.f32.partialorder %v91, %v152
  %vm159 = vcmp.eq.f32.partialorder %v96, %v152
  %vm160 = vcmp.eq.f32.partialorder %v101, %v152
  %vm161 = vcmp.eq.f32.partialorder %v106, %v152
  %vm162 = vcmp.eq.f32.partialorder %v111, %v152
  %vm163 = vcmp.eq.f32.partialorder %v116, %v152
  %vm164 = vcmp.eq.f32.partialorder %v121, %v152
  %vm165 = vcmp.eq.f32.partialorder %v126, %v152
  %vm166 = vcmp.eq.f32.partialorder %v131, %v152
  %vm167 = vcmp.eq.f32.partialorder %v136, %v152
  %vm168 = vcmp.eq.f32.partialorder %v141, %v152
  %vm169 = vcmp.eq.f32.partialorder %v146, %v152
  %v170 = vsel %vm154, 0.0, -1e+30
  %v171 = vsel %vm155, 0.0, -1e+30
  %v172 = vsel %vm156, 0.0, -1e+30
  %v173 = vsel %vm157, 0.0, -1e+30
  %v174 = vsel %vm158, 0.0, -1e+30
  %v175 = vsel %vm159, 0.0, -1e+30
  %v176 = vsel %vm160, 0.0, -1e+30
  %v177 = vsel %vm161, 0.0, -1e+30
  %v178 = vsel %vm162, 0.0, -1e+30
  %v179 = vsel %vm163, 0.0, -1e+30
  %v180 = vsel %vm164, 0.0, -1e+30
  %v181 = vsel %vm165, 0.0, -1e+30
  %v182 = vsel %vm166, 0.0, -1e+30
  %v183 = vsel %vm167, 0.0, -1e+30
  %v184 = vsel %vm168, 0.0, -1e+30
  %v185 = vsel %vm169, 0.0, -1e+30
  %v186 = vld [vmem:[%s1] sm:$0xff]
  %v187 = vld [vmem:[%s1 + $0x8] sm:$0xff]
  %v188 = vld [vmem:[%s1 + $0x10] sm:$0xff]
  %v189 = vld [vmem:[%s1 + $0x18] sm:$0xff]
  %v190 = vld [vmem:[%s1 + $0x20] sm:$0xff]
  %v191 = vld [vmem:[%s1 + $0x28] sm:$0xff]
  %v192 = vld [vmem:[%s1 + $0x30] sm:$0xff]
  %v193 = vld [vmem:[%s1 + $0x38] sm:$0xff]
  %v194 = vld [vmem:[%s1 + $0x40] sm:$0xff]
  %v195 = vld [vmem:[%s1 + $0x48] sm:$0xff]
  %v196 = vld [vmem:[%s1 + $0x50] sm:$0xff]
  %v197 = vld [vmem:[%s1 + $0x58] sm:$0xff]
  %v198 = vld [vmem:[%s1 + $0x60] sm:$0xff]
  %v199 = vld [vmem:[%s1 + $0x68] sm:$0xff]
  %v200 = vld [vmem:[%s1 + $0x70] sm:$0xff]
  %v201 = vld [vmem:[%s1 + $0x78] sm:$0xff]
  %vm202 = vcmask 162816
  %v203 = vsel %vm202, %v186, 0.0
  %v204 = vsel %vm202, %v187, 0.0
  %v205 = vadd.f32 %v203, %v204
  %v206 = vsel %vm202, %v188, 0.0
  %v207 = vadd.f32 %v205, %v206
  %v208 = vsel %vm202, %v189, 0.0
  %v209 = vadd.f32 %v207, %v208
  %v210 = vsel %vm202, %v190, 0.0
  %v211 = vadd.f32 %v209, %v210
  %v212 = vsel %vm202, %v191, 0.0
  %v213 = vadd.f32 %v211, %v212
  %v214 = vsel %vm202, %v192, 0.0
  %v215 = vadd.f32 %v213, %v214
  %v216 = vsel %vm202, %v193, 0.0
  %v217 = vadd.f32 %v215, %v216
  %v218 = vsel %vm202, %v194, 0.0
  %v219 = vadd.f32 %v217, %v218
  %v220 = vsel %vm202, %v195, 0.0
  %v221 = vadd.f32 %v219, %v220
  %v222 = vsel %vm202, %v196, 0.0
  %v223 = vadd.f32 %v221, %v222
  %v224 = vsel %vm202, %v197, 0.0
  %v225 = vadd.f32 %v223, %v224
  %v226 = vsel %vm202, %v198, 0.0
  %v227 = vadd.f32 %v225, %v226
  %v228 = vsel %vm202, %v199, 0.0
  %v229 = vadd.f32 %v227, %v228
  %v230 = vsel %vm202, %v200, 0.0
  %v231 = vadd.f32 %v229, %v230
  %v232 = vsel %vm202, %v201, 0.0
  %v233 = vadd.f32 %v231, %v232
  %v234 = vrot.slane %v233, 4
  %v235 = vadd.f32 %v233, %v234
  %v236 = vrot.slane %v235, 2
  %v237 = vadd.f32 %v235, %v236
  %v238 = vrot.slane %v237, 1
  %v239 = vadd.f32 %v237, %v238
  %v240 = vrcp.pop 128.0
  %v241 = vmul.f32 %v239, %v240
  %v242 = vmul.f32 %v186, %v186
  %v243 = vmul.f32 %v187, %v187
  %v244 = vmul.f32 %v188, %v188
  %v245 = vmul.f32 %v189, %v189
  %v246 = vmul.f32 %v190, %v190
  %v247 = vmul.f32 %v191, %v191
  %v248 = vmul.f32 %v192, %v192
  %v249 = vmul.f32 %v193, %v193
  %v250 = vmul.f32 %v194, %v194
  %v251 = vmul.f32 %v195, %v195
  %v252 = vmul.f32 %v196, %v196
  %v253 = vmul.f32 %v197, %v197
  %v254 = vmul.f32 %v198, %v198
  %v255 = vmul.f32 %v199, %v199
  %v256 = vmul.f32 %v200, %v200
  %v257 = vmul.f32 %v201, %v201
  %v258 = vsel %vm202, %v242, 0.0
  %v259 = vsel %vm202, %v243, 0.0
  %v260 = vadd.f32 %v258, %v259
  %v261 = vsel %vm202, %v244, 0.0
  %v262 = vadd.f32 %v260, %v261
  %v263 = vsel %vm202, %v245, 0.0
  %v264 = vadd.f32 %v262, %v263
  %v265 = vsel %vm202, %v246, 0.0
  %v266 = vadd.f32 %v264, %v265
  %v267 = vsel %vm202, %v247, 0.0
  %v268 = vadd.f32 %v266, %v267
  %v269 = vsel %vm202, %v248, 0.0
  %v270 = vadd.f32 %v268, %v269
  %v271 = vsel %vm202, %v249, 0.0
  %v272 = vadd.f32 %v270, %v271
  %v273 = vsel %vm202, %v250, 0.0
  %v274 = vadd.f32 %v272, %v273
  %v275 = vsel %vm202, %v251, 0.0
  %v276 = vadd.f32 %v274, %v275
  %v277 = vsel %vm202, %v252, 0.0
  %v278 = vadd.f32 %v276, %v277
  %v279 = vsel %vm202, %v253, 0.0
  %v280 = vadd.f32 %v278, %v279
  %v281 = vsel %vm202, %v254, 0.0
  %v282 = vadd.f32 %v280, %v281
  %v283 = vsel %vm202, %v255, 0.0
  %v284 = vadd.f32 %v282, %v283
  %v285 = vsel %vm202, %v256, 0.0
  %v286 = vadd.f32 %v284, %v285
  %v287 = vsel %vm202, %v257, 0.0
  %v288 = vadd.f32 %v286, %v287
  %v289 = vrot.slane %v288, 4
  %v290 = vadd.f32 %v288, %v289
  %v291 = vrot.slane %v290, 2
  %v292 = vadd.f32 %v290, %v291
  %v293 = vrot.slane %v292, 1
  %v294 = vadd.f32 %v292, %v293
  %v295 = vmul.f32 %v294, %v240
  %v296 = vmul.f32 %v241, %v241
  %v297 = vsub.f32 %v295, %v296
  %v298 = vsub.f32 %v186, %v241
  %v299 = vsub.f32 %v187, %v241
  %v300 = vsub.f32 %v188, %v241
  %v301 = vsub.f32 %v189, %v241
  %v302 = vsub.f32 %v190, %v241
  %v303 = vsub.f32 %v191, %v241
  %v304 = vsub.f32 %v192, %v241
  %v305 = vsub.f32 %v193, %v241
  %v306 = vsub.f32 %v194, %v241
  %v307 = vsub.f32 %v195, %v241
  %v308 = vsub.f32 %v196, %v241
  %v309 = vsub.f32 %v197, %v241
  %v310 = vsub.f32 %v198, %v241
  %v311 = vsub.f32 %v199, %v241
  %v312 = vsub.f32 %v200, %v241
  %v313 = vsub.f32 %v201, %v241
  %v314 = vadd.f32 %v297, 1e-05
  %v315 = vrsqrt.pop %v314
  %v316 = vmul.f32 %v298, %v315
  %v317 = vmul.f32 %v299, %v315
  %v318 = vmul.f32 %v300, %v315
  %v319 = vmul.f32 %v301, %v315
  %v320 = vmul.f32 %v302, %v315
  %v321 = vmul.f32 %v303, %v315
  %v322 = vmul.f32 %v304, %v315
  %v323 = vmul.f32 %v305, %v315
  %v324 = vmul.f32 %v306, %v315
  %v325 = vmul.f32 %v307, %v315
  %v326 = vmul.f32 %v308, %v315
  %v327 = vmul.f32 %v309, %v315
  %v328 = vmul.f32 %v310, %v315
  %v329 = vmul.f32 %v311, %v315
  %v330 = vmul.f32 %v312, %v315
  %v331 = vmul.f32 %v313, %v315
  %v332 = vlaneseq
  %v333 = vshrl.u32 %v332, 7
  %v334 = vsub.s32 0, %v333
  %v335 = vrot.slane %v44, %v334
  %v336 = vmul.f32 %v316, %v335
  %v337 = vmul.f32 %v317, %v335
  %v338 = vmul.f32 %v318, %v335
  %v339 = vmul.f32 %v319, %v335
  %v340 = vmul.f32 %v320, %v335
  %v341 = vmul.f32 %v321, %v335
  %v342 = vmul.f32 %v322, %v335
  %v343 = vmul.f32 %v323, %v335
  %v344 = vmul.f32 %v324, %v335
  %v345 = vmul.f32 %v325, %v335
  %v346 = vmul.f32 %v326, %v335
  %v347 = vmul.f32 %v327, %v335
  %v348 = vmul.f32 %v328, %v335
  %v349 = vmul.f32 %v329, %v335
  %v350 = vmul.f32 %v330, %v335
  %v351 = vmul.f32 %v331, %v335
  %353 = vrot.lane.b32.xlu0 %v335, 96
  %v354 = vpop.permute.xlu0 %353
  %v356 = vadd.f32 %v336, %v354
  %v357 = vadd.f32 %v337, %v354
  %v358 = vadd.f32 %v338, %v354
  %v359 = vadd.f32 %v339, %v354
  %v360 = vadd.f32 %v340, %v354
  %v361 = vadd.f32 %v341, %v354
  %v362 = vadd.f32 %v342, %v354
  %v363 = vadd.f32 %v343, %v354
  %v364 = vadd.f32 %v344, %v354
  %v365 = vadd.f32 %v345, %v354
  %v366 = vadd.f32 %v346, %v354
  %v367 = vadd.f32 %v347, %v354
  %v368 = vadd.f32 %v348, %v354
  %v369 = vadd.f32 %v349, %v354
  %v370 = vadd.f32 %v350, %v354
  %v371 = vadd.f32 %v351, %v354
  %v372 = vld [vmem:[%s0] sm:$0xff]
  %v373 = vld [vmem:[%s0 + $0x8] sm:$0xff]
  %v374 = vld [vmem:[%s0 + $0x10] sm:$0xff]
  %v375 = vld [vmem:[%s0 + $0x18] sm:$0xff]
  %v376 = vld [vmem:[%s0 + $0x20] sm:$0xff]
  %v377 = vld [vmem:[%s0 + $0x28] sm:$0xff]
  %v378 = vld [vmem:[%s0 + $0x30] sm:$0xff]
  %v379 = vld [vmem:[%s0 + $0x38] sm:$0xff]
  %v380 = vld [vmem:[%s0 + $0x40] sm:$0xff]
  %v381 = vld [vmem:[%s0 + $0x48] sm:$0xff]
  %v382 = vld [vmem:[%s0 + $0x50] sm:$0xff]
  %v383 = vld [vmem:[%s0 + $0x58] sm:$0xff]
  %v384 = vld [vmem:[%s0 + $0x60] sm:$0xff]
  %v385 = vld [vmem:[%s0 + $0x68] sm:$0xff]
  %v386 = vld [vmem:[%s0 + $0x70] sm:$0xff]
  %v387 = vld [vmem:[%s0 + $0x78] sm:$0xff]
  %vm388 = vcmask 97280
  %389 = vst.msk [vmem:[#allocation2] sm:$0xff] %vm388, %v372
  %390 = vst.msk [vmem:[#allocation2 + $0x8] sm:$0xff] %vm388, %v373
  %391 = vst.msk [vmem:[#allocation2 + $0x10] sm:$0xff] %vm388, %v374
  %392 = vst.msk [vmem:[#allocation2 + $0x18] sm:$0xff] %vm388, %v375
  %393 = vst.msk [vmem:[#allocation2 + $0x20] sm:$0xff] %vm388, %v376
  %394 = vst.msk [vmem:[#allocation2 + $0x28] sm:$0xff] %vm388, %v377
  %395 = vst.msk [vmem:[#allocation2 + $0x30] sm:$0xff] %vm388, %v378
  %396 = vst.msk [vmem:[#allocation2 + $0x38] sm:$0xff] %vm388, %v379
  %397 = vst.msk [vmem:[#allocation2 + $0x40] sm:$0xff] %vm388, %v380
  %398 = vst.msk [vmem:[#allocation2 + $0x48] sm:$0xff] %vm388, %v381
  %399 = vst.msk [vmem:[#allocation2 + $0x50] sm:$0xff] %vm388, %v382
  %400 = vst.msk [vmem:[#allocation2 + $0x58] sm:$0xff] %vm388, %v383
  %401 = vst.msk [vmem:[#allocation2 + $0x60] sm:$0xff] %vm388, %v384
  %402 = vst.msk [vmem:[#allocation2 + $0x68] sm:$0xff] %vm388, %v385
  %403 = vst.msk [vmem:[#allocation2 + $0x70] sm:$0xff] %vm388, %v386
  %404 = vst.msk [vmem:[#allocation2 + $0x78] sm:$0xff] %vm388, %v387
  %421 = vrot.lane.b32.xlu0 %v356, 12
  %v422 = vpop.permute.xlu0 %421
  %423 = vrot.lane.b32.xlu0 %v357, 12
  %v424 = vpop.permute.xlu0 %423
  %425 = vrot.lane.b32.xlu0 %v358, 12
  %v426 = vpop.permute.xlu0 %425
  %427 = vrot.lane.b32.xlu0 %v359, 12
  %v428 = vpop.permute.xlu0 %427
  %429 = vrot.lane.b32.xlu0 %v360, 12
  %v430 = vpop.permute.xlu0 %429
  %431 = vrot.lane.b32.xlu0 %v361, 12
  %v432 = vpop.permute.xlu0 %431
  %433 = vrot.lane.b32.xlu0 %v362, 12
  %v434 = vpop.permute.xlu0 %433
  %435 = vrot.lane.b32.xlu0 %v363, 12
  %v436 = vpop.permute.xlu0 %435
  %437 = vrot.lane.b32.xlu0 %v364, 12
  %v438 = vpop.permute.xlu0 %437
  %439 = vrot.lane.b32.xlu0 %v365, 12
  %v440 = vpop.permute.xlu0 %439
  %441 = vrot.lane.b32.xlu0 %v366, 12
  %v442 = vpop.permute.xlu0 %441
  %443 = vrot.lane.b32.xlu0 %v367, 12
  %v444 = vpop.permute.xlu0 %443
  %445 = vrot.lane.b32.xlu0 %v368, 12
  %v446 = vpop.permute.xlu0 %445
  %447 = vrot.lane.b32.xlu0 %v369, 12
  %v448 = vpop.permute.xlu0 %447
  %449 = vrot.lane.b32.xlu0 %v370, 12
  %v450 = vpop.permute.xlu0 %449
  %451 = vrot.lane.b32.xlu0 %v371, 12
  %v452 = vpop.permute.xlu0 %451
  %vm469 = vcmask 261216
  %470 = vst.msk [vmem:[#allocation2] sm:$0xff] %vm469, %v422
  %471 = vst.msk [vmem:[#allocation2 + $0x8] sm:$0xff] %vm469, %v424
  %472 = vst.msk [vmem:[#allocation2 + $0x10] sm:$0xff] %vm469, %v426
  %473 = vst.msk [vmem:[#allocation2 + $0x18] sm:$0xff] %vm469, %v428
  %474 = vst.msk [vmem:[#allocation2 + $0x20] sm:$0xff] %vm469, %v430
  %475 = vst.msk [vmem:[#allocation2 + $0x28] sm:$0xff] %vm469, %v432
  %476 = vst.msk [vmem:[#allocation2 + $0x30] sm:$0xff] %vm469, %v434
  %477 = vst.msk [vmem:[#allocation2 + $0x38] sm:$0xff] %vm469, %v436
  %478 = vst.msk [vmem:[#allocation2 + $0x40] sm:$0xff] %vm469, %v438
  %479 = vst.msk [vmem:[#allocation2 + $0x48] sm:$0xff] %vm469, %v440
  %480 = vst.msk [vmem:[#allocation2 + $0x50] sm:$0xff] %vm469, %v442
  %481 = vst.msk [vmem:[#allocation2 + $0x58] sm:$0xff] %vm469, %v444
  %482 = vst.msk [vmem:[#allocation2 + $0x60] sm:$0xff] %vm469, %v446
  %483 = vst.msk [vmem:[#allocation2 + $0x68] sm:$0xff] %vm469, %v448
  %484 = vst.msk [vmem:[#allocation2 + $0x70] sm:$0xff] %vm469, %v450
  %485 = vst.msk [vmem:[#allocation2 + $0x78] sm:$0xff] %vm469, %v452
  %v486 = vld [vmem:[#allocation2] sm:$0xff]
  %v487 = vld [vmem:[#allocation2 + $0x8] sm:$0xff]
  %v488 = vld [vmem:[#allocation2 + $0x10] sm:$0xff]
  %v489 = vld [vmem:[#allocation2 + $0x18] sm:$0xff]
  %v490 = vld [vmem:[#allocation2 + $0x20] sm:$0xff]
  %v491 = vld [vmem:[#allocation2 + $0x28] sm:$0xff]
  %v492 = vld [vmem:[#allocation2 + $0x30] sm:$0xff]
  %v493 = vld [vmem:[#allocation2 + $0x38] sm:$0xff]
  %v494 = vld [vmem:[#allocation2 + $0x40] sm:$0xff]
  %v495 = vld [vmem:[#allocation2 + $0x48] sm:$0xff]
  %v496 = vld [vmem:[#allocation2 + $0x50] sm:$0xff]
  %v497 = vld [vmem:[#allocation2 + $0x58] sm:$0xff]
  %v498 = vld [vmem:[#allocation2 + $0x60] sm:$0xff]
  %v499 = vld [vmem:[#allocation2 + $0x68] sm:$0xff]
  %v500 = vld [vmem:[#allocation2 + $0x70] sm:$0xff]
  %v501 = vld [vmem:[#allocation2 + $0x78] sm:$0xff]
  %502 = vrot.lane.b32.xlu0 %v335, 64
  %v503 = vpop.permute.xlu0 %502
  %vm505 = vcmask 261120
  %v507 = vsel %vm505, %v486, 0
  %v510 = vsel %vm505, %v487, 0
  %v513 = vsel %vm505, %v488, 0
  %v516 = vsel %vm505, %v489, 0
  %v519 = vsel %vm505, %v490, 0
  %v522 = vsel %vm505, %v491, 0
  %v525 = vsel %vm505, %v492, 0
  %v528 = vsel %vm505, %v493, 0
  %v531 = vsel %vm505, %v494, 0
  %v534 = vsel %vm505, %v495, 0
  %v537 = vsel %vm505, %v496, 0
  %v540 = vsel %vm505, %v497, 0
  %v543 = vsel %vm505, %v498, 0
  %v546 = vsel %vm505, %v499, 0
  %v549 = vsel %vm505, %v500, 0
  %v552 = vsel %vm505, %v501, 0
  %554 = vmatprep.subr.mxu0 0.0
  %555 = vmatpush1.msra.mxu0 %v45
  %556 = vmatprep.subr.mxu0 0.0
  %557 = vmatpush1.msra.mxu0 %v46
  %558 = vmatprep.subr.mxu0 0.0
  %559 = vmatpush1.msra.mxu0 %v47
  %560 = vmatprep.subr.mxu0 0.0
  %561 = vmatpush1.msra.mxu0 %v48
  %562 = vmatprep.subr.mxu0 0.0
  %563 = vmatpush1.msra.mxu0 0.0
  %564 = vmatprep.subr.mxu0 0.0
  %565 = vmatpush1.msra.mxu0 0.0
  %566 = vmatprep.subr.mxu0 0.0
  %567 = vmatpush1.msra.mxu0 0.0
  %568 = vmatprep.subr.mxu0 0.0
  %569 = vmatpush1.msra.mxu0 0.0
  %570 = vmatprep.subr.mxu0 0.0
  %571 = vmatpush1.msra.mxu0 0.0
  %572 = vmatprep.subr.mxu0 0.0
  %573 = vmatpush1.msra.mxu0 0.0
  %574 = vmatprep.subr.mxu0 0.0
  %575 = vmatpush1.msra.mxu0 0.0
  %576 = vmatprep.subr.mxu0 0.0
  %577 = vmatpush1.msra.mxu0 0.0
  %578 = vmatprep.subr.mxu0 0.0
  %579 = vmatpush1.msra.mxu0 0.0
  %580 = vmatprep.subr.mxu0 0.0
  %581 = vmatpush1.msra.mxu0 0.0
  %582 = vmatprep.subr.mxu0 0.0
  %583 = vmatpush1.msra.mxu0 0.0
  %584 = vmatprep.subr.mxu0 0.0
  %585 = vmatpush1.msra.mxu0 0.0
  %586 = vmatprep.subr.mxu0 0.0
  %587 = vmatpush1.msra.mxu0 0.0
  %588 = vmatprep.subr.mxu0 0.0
  %589 = vmatpush1.msra.mxu0 0.0
  %590 = vmatprep.subr.mxu0 0.0
  %591 = vmatpush1.msra.mxu0 0.0
  %592 = vmatprep.subr.mxu0 0.0
  %593 = vmatpush1.msra.mxu0 0.0
  %594 = vmatprep.subr.mxu0 0.0
  %595 = vmatpush1.msra.mxu0 0.0
  %596 = vmatprep.subr.mxu0 0.0
  %597 = vmatpush1.msra.mxu0 0.0
  %598 = vmatprep.subr.mxu0 0.0
  %599 = vmatpush1.msra.mxu0 0.0
  %600 = vmatprep.subr.mxu0 0.0
  %601 = vmatpush1.msra.mxu0 0.0
  %602 = vmatprep.subr.mxu0 0.0
  %603 = vmatpush1.msra.mxu0 0.0
  %604 = vmatprep.subr.mxu0 0.0
  %605 = vmatpush1.msra.mxu0 0.0
  %606 = vmatprep.subr.mxu0 0.0
  %607 = vmatpush1.msra.mxu0 0.0
  %608 = vmatprep.subr.mxu0 0.0
  %609 = vmatpush1.msra.mxu0 0.0
  %610 = vmatprep.subr.mxu0 0.0
  %611 = vmatpush1.msra.mxu0 0.0
  %612 = vmatprep.subr.mxu0 0.0
  %613 = vmatpush1.msra.mxu0 0.0
  %614 = vmatprep.subr.mxu0 0.0
  %615 = vmatpush1.msra.mxu0 0.0
  %616 = vmatprep.subr.mxu0 0.0
  %617 = vmatpush1.msra.mxu0 0.0
  %618 = vmatprep.mubr.f32.mxu0 0.0
  %619 = vmatmul.mubr.f32.gmra.mrb[0].mxu0 %v507
  %v620 = vpop.f32.mrb[0].mxu0
  %v621 = vadd.f32 %v503, %v620
  %v622 = vpop.f32.mrb[0].mxu0
  %623 = vmatprep.mubr.f32.mxu0 0.0
  %624 = vmatmul.mubr.f32.gmra.mrb[0].mxu0 %v510
  %v625 = vpop.f32.mrb[0].mxu0
  %v626 = vadd.f32 %v503, %v625
  %v627 = vpop.f32.mrb[0].mxu0
  %628 = vmatprep.mubr.f32.mxu0 0.0
  %629 = vmatmul.mubr.f32.gmra.mrb[0].mxu0 %v513
  %v630 = vpop.f32.mrb[0].mxu0
  %v631 = vadd.f32 %v503, %v630
  %v632 = vpop.f32.mrb[0].mxu0
  %633 = vmatprep.mubr.f32.mxu0 0.0
  %634 = vmatmul.mubr.f32.gmra.mrb[0].mxu0 %v516
  %v635 = vpop.f32.mrb[0].mxu0
  %v636 = vadd.f32 %v503, %v635
  %v637 = vpop.f32.mrb[0].mxu0
  %638 = vmatprep.mubr.f32.mxu0 0.0
  %639 = vmatmul.mubr.f32.gmra.mrb[0].mxu0 %v519
  %v640 = vpop.f32.mrb[0].mxu0
  %v641 = vadd.f32 %v503, %v640
  %v642 = vpop.f32.mrb[0].mxu0
  %643 = vmatprep.mubr.f32.mxu0 0.0
  %644 = vmatmul.mubr.f32.gmra.mrb[0].mxu0 %v522
  %v645 = vpop.f32.mrb[0].mxu0
  %v646 = vadd.f32 %v503, %v645
  %v647 = vpop.f32.mrb[0].mxu0
  %648 = vmatprep.mubr.f32.mxu0 0.0
  %649 = vmatmul.mubr.f32.gmra.mrb[0].mxu0 %v525
  %v650 = vpop.f32.mrb[0].mxu0
  %v651 = vadd.f32 %v503, %v650
  %v652 = vpop.f32.mrb[0].mxu0
  %653 = vmatprep.mubr.f32.mxu0 0.0
  %654 = vmatmul.mubr.f32.gmra.mrb[0].mxu0 %v528
  %v655 = vpop.f32.mrb[0].mxu0
  %v656 = vadd.f32 %v503, %v655
  %v657 = vpop.f32.mrb[0].mxu0
  %658 = vmatprep.mubr.f32.mxu0 0.0
  %659 = vmatmul.mubr.f32.gmra.mrb[0].mxu0 %v531
  %v660 = vpop.f32.mrb[0].mxu0
  %v661 = vadd.f32 %v503, %v660
  %v662 = vpop.f32.mrb[0].mxu0
  %663 = vmatprep.mubr.f32.mxu0 0.0
  %664 = vmatmul.mubr.f32.gmra.mrb[0].mxu0 %v534
  %v665 = vpop.f32.mrb[0].mxu0
  %v666 = vadd.f32 %v503, %v665
  %v667 = vpop.f32.mrb[0].mxu0
  %668 = vmatprep.mubr.f32.mxu0 0.0
  %669 = vmatmul.mubr.f32.gmra.mrb[0].mxu0 %v537
  %v670 = vpop.f32.mrb[0].mxu0
  %v671 = vadd.f32 %v503, %v670
  %v672 = vpop.f32.mrb[0].mxu0
  %673 = vmatprep.mubr.f32.mxu0 0.0
  %674 = vmatmul.mubr.f32.gmra.mrb[0].mxu0 %v540
  %v675 = vpop.f32.mrb[0].mxu0
  %v676 = vadd.f32 %v503, %v675
  %v677 = vpop.f32.mrb[0].mxu0
  %678 = vmatprep.mubr.f32.mxu0 0.0
  %679 = vmatmul.mubr.f32.gmra.mrb[0].mxu0 %v543
  %v680 = vpop.f32.mrb[0].mxu0
  %v681 = vadd.f32 %v503, %v680
  %v682 = vpop.f32.mrb[0].mxu0
  %683 = vmatprep.mubr.f32.mxu0 0.0
  %684 = vmatmul.mubr.f32.gmra.mrb[0].mxu0 %v546
  %v685 = vpop.f32.mrb[0].mxu0
  %v686 = vadd.f32 %v503, %v685
  %v687 = vpop.f32.mrb[0].mxu0
  %688 = vmatprep.mubr.f32.mxu0 0.0
  %689 = vmatmul.mubr.f32.gmra.mrb[0].mxu0 %v549
  %v690 = vpop.f32.mrb[0].mxu0
  %v691 = vadd.f32 %v503, %v690
  %v692 = vpop.f32.mrb[0].mxu0
  %693 = vmatprep.mubr.f32.mxu0 0.0
  %694 = vmatmul.mubr.f32.gmra.mrb[0].mxu0 %v552
  %v695 = vpop.f32.mrb[0].mxu0
  %v696 = vadd.f32 %v503, %v695
  %v697 = vpop.f32.mrb[0].mxu0
  %698 = vdwg.mxu0
  %v699 = vld [vmem:[%s4] sm:$0xff]
  %v700 = vld [vmem:[%s4 + $0x8] sm:$0xff]
  %v701 = vld [vmem:[%s4 + $0x10] sm:$0xff]
  %v702 = vld [vmem:[%s4 + $0x18] sm:$0xff]
  %v703 = vld [vmem:[%s4 + $0x20] sm:$0xff]
  %v704 = vld [vmem:[%s4 + $0x28] sm:$0xff]
  %v705 = vld [vmem:[%s4 + $0x30] sm:$0xff]
  %v706 = vld [vmem:[%s4 + $0x38] sm:$0xff]
  %v707 = vld [vmem:[%s4 + $0x40] sm:$0xff]
  %v708 = vld [vmem:[%s4 + $0x48] sm:$0xff]
  %v709 = vld [vmem:[%s4 + $0x50] sm:$0xff]
  %v710 = vld [vmem:[%s4 + $0x58] sm:$0xff]
  %v711 = vld [vmem:[%s4 + $0x60] sm:$0xff]
  %v712 = vld [vmem:[%s4 + $0x68] sm:$0xff]
  %v713 = vld [vmem:[%s4 + $0x70] sm:$0xff]
  %v714 = vld [vmem:[%s4 + $0x78] sm:$0xff]
  %v715 = vld [vmem:[%s4 + $0x80] sm:$0xff]
  %v716 = vld [vmem:[%s4 + $0x88] sm:$0xff]
  %v717 = vld [vmem:[%s4 + $0x90] sm:$0xff]
  %v718 = vld [vmem:[%s4 + $0x98] sm:$0xff]
  %v719 = vld [vmem:[%s4 + $0xa0] sm:$0xff]
  %v720 = vld [vmem:[%s4 + $0xa8] sm:$0xff]
  %v721 = vld [vmem:[%s4 + $0xb0] sm:$0xff]
  %v722 = vld [vmem:[%s4 + $0xb8] sm:$0xff]
  %v723 = vld [vmem:[%s4 + $0xc0] sm:$0xff]
  %v724 = vld [vmem:[%s4 + $0xc8] sm:$0xff]
  %v725 = vld [vmem:[%s4 + $0xd0] sm:$0xff]
  %v726 = vld [vmem:[%s4 + $0xd8] sm:$0xff]
  %v727 = vld [vmem:[%s4 + $0xe0] sm:$0xff]
  %v728 = vld [vmem:[%s4 + $0xe8] sm:$0xff]
  %v729 = vld [vmem:[%s4 + $0xf0] sm:$0xff]
  %v730 = vld [vmem:[%s4 + $0xf8] sm:$0xff]
  %vm731 = vcmask 130048
  %v733 = vsel %vm731, %v699, 0
  %v736 = vsel %vm731, %v700, 0
  %v739 = vsel %vm731, %v701, 0
  %v742 = vsel %vm731, %v702, 0
  %v745 = vsel %vm731, %v703, 0
  %v748 = vsel %vm731, %v704, 0
  %v751 = vsel %vm731, %v705, 0
  %v754 = vsel %vm731, %v706, 0
  %v757 = vsel %vm731, %v707, 0
  %v760 = vsel %vm731, %v708, 0
  %v763 = vsel %vm731, %v709, 0
  %v766 = vsel %vm731, %v710, 0
  %v769 = vsel %vm731, %v711, 0
  %v772 = vsel %vm731, %v712, 0
  %v775 = vsel %vm731, %v713, 0
  %v778 = vsel %vm731, %v714, 0
  %v781 = vsel %vm731, %v715, 0
  %v784 = vsel %vm731, %v716, 0
  %v787 = vsel %vm731, %v717, 0
  %v790 = vsel %vm731, %v718, 0
  %v793 = vsel %vm731, %v719, 0
  %v796 = vsel %vm731, %v720, 0
  %v799 = vsel %vm731, %v721, 0
  %v802 = vsel %vm731, %v722, 0
  %v805 = vsel %vm731, %v723, 0
  %v808 = vsel %vm731, %v724, 0
  %v811 = vsel %vm731, %v725, 0
  %v814 = vsel %vm731, %v726, 0
  %v817 = vsel %vm731, %v727, 0
  %v820 = vsel %vm731, %v728, 0
  %v823 = vsel %vm731, %v729, 0
  %v826 = vsel %vm731, %v730, 0
  %828 = vmatprep.subr.mxu0 0.0
  %829 = vmatpush1.msra.mxu0 %v49
  %830 = vmatprep.subr.mxu0 0.0
  %831 = vmatpush1.msra.mxu0 %v50
  %832 = vmatprep.subr.mxu0 0.0
  %833 = vmatpush1.msra.mxu0 0.0
  %834 = vmatprep.subr.mxu0 0.0
  %835 = vmatpush1.msra.mxu0 0.0
  %836 = vmatprep.subr.mxu0 0.0
  %837 = vmatpush1.msra.mxu0 0.0
  %838 = vmatprep.subr.mxu0 0.0
  %839 = vmatpush1.msra.mxu0 0.0
  %840 = vmatprep.subr.mxu0 0.0
  %841 = vmatpush1.msra.mxu0 0.0
  %842 = vmatprep.subr.mxu0 0.0
  %843 = vmatpush1.msra.mxu0 0.0
  %844 = vmatprep.subr.mxu0 0.0
  %845 = vmatpush1.msra.mxu0 0.0
  %846 = vmatprep.subr.mxu0 0.0
  %847 = vmatpush1.msra.mxu0 0.0
  %848 = vmatprep.subr.mxu0 0.0
  %849 = vmatpush1.msra.mxu0 0.0
  %850 = vmatprep.subr.mxu0 0.0
  %851 = vmatpush1.msra.mxu0 0.0
  %852 = vmatprep.subr.mxu0 0.0
  %853 = vmatpush1.msra.mxu0 0.0
  %854 = vmatprep.subr.mxu0 0.0
  %855 = vmatpush1.msra.mxu0 0.0
  %856 = vmatprep.subr.mxu0 0.0
  %857 = vmatpush1.msra.mxu0 0.0
  %858 = vmatprep.subr.mxu0 0.0
  %859 = vmatpush1.msra.mxu0 0.0
  %860 = vmatprep.subr.mxu0 0.0
  %861 = vmatpush1.msra.mxu0 0.0
  %862 = vmatprep.subr.mxu0 0.0
  %863 = vmatpush1.msra.mxu0 0.0
  %864 = vmatprep.subr.mxu0 0.0
  %865 = vmatpush1.msra.mxu0 0.0
  %866 = vmatprep.subr.mxu0 0.0
  %867 = vmatpush1.msra.mxu0 0.0
  %868 = vmatprep.subr.mxu0 0.0
  %869 = vmatpush1.msra.mxu0 0.0
  %870 = vmatprep.subr.mxu0 0.0
  %871 = vmatpush1.msra.mxu0 0.0
  %872 = vmatprep.subr.mxu0 0.0
  %873 = vmatpush1.msra.mxu0 0.0
  %874 = vmatprep.subr.mxu0 0.0
  %875 = vmatpush1.msra.mxu0 0.0
  %876 = vmatprep.subr.mxu0 0.0
  %877 = vmatpush1.msra.mxu0 0.0
  %878 = vmatprep.subr.mxu0 0.0
  %879 = vmatpush1.msra.mxu0 0.0
  %880 = vmatprep.subr.mxu0 0.0
  %881 = vmatpush1.msra.mxu0 0.0
  %882 = vmatprep.subr.mxu0 0.0
  %883 = vmatpush1.msra.mxu0 0.0
  %884 = vmatprep.subr.mxu0 0.0
  %885 = vmatpush1.msra.mxu0 0.0
  %886 = vmatprep.subr.mxu0 0.0
  %887 = vmatpush1.msra.mxu0 0.0
  %888 = vmatprep.subr.mxu0 0.0
  %889 = vmatpush1.msra.mxu0 0.0
  %890 = vmatprep.subr.mxu0 0.0
  %891 = vmatpush1.msra.mxu0 0.0
  %892 = vmatprep.mubr.f32.mxu0 0.0
  %893 = vmatmul.mubr.f32.gmra.mrb[0].mxu0 %v733
  %v894 = vpop.f32.mrb[0].mxu0
  %v895 = vadd.f32 0.0, %v894
  %v896 = vpop.f32.mrb[0].mxu0
  %897 = vmatprep.mubr.f32.mxu0 0.0
  %898 = vmatmul.mubr.f32.gmra.mrb[0].mxu0 %v736
  %v899 = vpop.f32.mrb[0].mxu0
  %v900 = vadd.f32 0.0, %v899
  %v901 = vpop.f32.mrb[0].mxu0
  %902 = vmatprep.mubr.f32.mxu0 0.0
  %903 = vmatmul.mubr.f32.gmra.mrb[0].mxu0 %v739
  %v904 = vpop.f32.mrb[0].mxu0
  %v905 = vadd.f32 0.0, %v904
  %v906 = vpop.f32.mrb[0].mxu0
  %907 = vmatprep.mubr.f32.mxu0 0.0
  %908 = vmatmul.mubr.f32.gmra.mrb[0].mxu0 %v742
  %v909 = vpop.f32.mrb[0].mxu0
  %v910 = vadd.f32 0.0, %v909
  %v911 = vpop.f32.mrb[0].mxu0
  %912 = vmatprep.mubr.f32.mxu0 0.0
  %913 = vmatmul.mubr.f32.gmra.mrb[0].mxu0 %v745
  %v914 = vpop.f32.mrb[0].mxu0
  %v915 = vadd.f32 0.0, %v914
  %v916 = vpop.f32.mrb[0].mxu0
  %917 = vmatprep.mubr.f32.mxu0 0.0
  %918 = vmatmul.mubr.f32.gmra.mrb[0].mxu0 %v748
  %v919 = vpop.f32.mrb[0].mxu0
  %v920 = vadd.f32 0.0, %v919
  %v921 = vpop.f32.mrb[0].mxu0
  %922 = vmatprep.mubr.f32.mxu0 0.0
  %923 = vmatmul.mubr.f32.gmra.mrb[0].mxu0 %v751
  %v924 = vpop.f32.mrb[0].mxu0
  %v925 = vadd.f32 0.0, %v924
  %v926 = vpop.f32.mrb[0].mxu0
  %927 = vmatprep.mubr.f32.mxu0 0.0
  %928 = vmatmul.mubr.f32.gmra.mrb[0].mxu0 %v754
  %v929 = vpop.f32.mrb[0].mxu0
  %v930 = vadd.f32 0.0, %v929
  %v931 = vpop.f32.mrb[0].mxu0
  %932 = vmatprep.mubr.f32.mxu0 0.0
  %933 = vmatmul.mubr.f32.gmra.mrb[0].mxu0 %v757
  %v934 = vpop.f32.mrb[0].mxu0
  %v935 = vadd.f32 0.0, %v934
  %v936 = vpop.f32.mrb[0].mxu0
  %937 = vmatprep.mubr.f32.mxu0 0.0
  %938 = vmatmul.mubr.f32.gmra.mrb[0].mxu0 %v760
  %v939 = vpop.f32.mrb[0].mxu0
  %v940 = vadd.f32 0.0, %v939
  %v941 = vpop.f32.mrb[0].mxu0
  %942 = vmatprep.mubr.f32.mxu0 0.0
  %943 = vmatmul.mubr.f32.gmra.mrb[0].mxu0 %v763
  %v944 = vpop.f32.mrb[0].mxu0
  %v945 = vadd.f32 0.0, %v944
  %v946 = vpop.f32.mrb[0].mxu0
  %947 = vmatprep.mubr.f32.mxu0 0.0
  %948 = vmatmul.mubr.f32.gmra.mrb[0].mxu0 %v766
  %v949 = vpop.f32.mrb[0].mxu0
  %v950 = vadd.f32 0.0, %v949
  %v951 = vpop.f32.mrb[0].mxu0
  %952 = vmatprep.mubr.f32.mxu0 0.0
  %953 = vmatmul.mubr.f32.gmra.mrb[0].mxu0 %v769
  %v954 = vpop.f32.mrb[0].mxu0
  %v955 = vadd.f32 0.0, %v954
  %v956 = vpop.f32.mrb[0].mxu0
  %957 = vmatprep.mubr.f32.mxu0 0.0
  %958 = vmatmul.mubr.f32.gmra.mrb[0].mxu0 %v772
  %v959 = vpop.f32.mrb[0].mxu0
  %v960 = vadd.f32 0.0, %v959
  %v961 = vpop.f32.mrb[0].mxu0
  %962 = vmatprep.mubr.f32.mxu0 0.0
  %963 = vmatmul.mubr.f32.gmra.mrb[0].mxu0 %v775
  %v964 = vpop.f32.mrb[0].mxu0
  %v965 = vadd.f32 0.0, %v964
  %v966 = vpop.f32.mrb[0].mxu0
  %967 = vmatprep.mubr.f32.mxu0 0.0
  %968 = vmatmul.mubr.f32.gmra.mrb[0].mxu0 %v778
  %v969 = vpop.f32.mrb[0].mxu0
  %v970 = vadd.f32 0.0, %v969
  %v971 = vpop.f32.mrb[0].mxu0
  %972 = vmatprep.mubr.f32.mxu0 0.0
  %973 = vmatmul.mubr.f32.gmra.mrb[0].mxu0 %v781
  %v974 = vpop.f32.mrb[0].mxu0
  %v975 = vadd.f32 0.0, %v974
  %v976 = vpop.f32.mrb[0].mxu0
  %977 = vmatprep.mubr.f32.mxu0 0.0
  %978 = vmatmul.mubr.f32.gmra.mrb[0].mxu0 %v784
  %v979 = vpop.f32.mrb[0].mxu0
  %v980 = vadd.f32 0.0, %v979
  %v981 = vpop.f32.mrb[0].mxu0
  %982 = vmatprep.mubr.f32.mxu0 0.0
  %983 = vmatmul.mubr.f32.gmra.mrb[0].mxu0 %v787
  %v984 = vpop.f32.mrb[0].mxu0
  %v985 = vadd.f32 0.0, %v984
  %v986 = vpop.f32.mrb[0].mxu0
  %987 = vmatprep.mubr.f32.mxu0 0.0
  %988 = vmatmul.mubr.f32.gmra.mrb[0].mxu0 %v790
  %v989 = vpop.f32.mrb[0].mxu0
  %v990 = vadd.f32 0.0, %v989
  %v991 = vpop.f32.mrb[0].mxu0
  %992 = vmatprep.mubr.f32.mxu0 0.0
  %993 = vmatmul.mubr.f32.gmra.mrb[0].mxu0 %v793
  %v994 = vpop.f32.mrb[0].mxu0
  %v995 = vadd.f32 0.0, %v994
  %v996 = vpop.f32.mrb[0].mxu0
  %997 = vmatprep.mubr.f32.mxu0 0.0
  %998 = vmatmul.mubr.f32.gmra.mrb[0].mxu0 %v796
  %v999 = vpop.f32.mrb[0].mxu0
  %v1000 = vadd.f32 0.0, %v999
  %v1001 = vpop.f32.mrb[0].mxu0
  %1002 = vmatprep.mubr.f32.mxu0 0.0
  %1003 = vmatmul.mubr.f32.gmra.mrb[0].mxu0 %v799
  %v1004 = vpop.f32.mrb[0].mxu0
  %v1005 = vadd.f32 0.0, %v1004
  %v1006 = vpop.f32.mrb[0].mxu0
  %1007 = vmatprep.mubr.f32.mxu0 0.0
  %1008 = vmatmul.mubr.f32.gmra.mrb[0].mxu0 %v802
  %v1009 = vpop.f32.mrb[0].mxu0
  %v1010 = vadd.f32 0.0, %v1009
  %v1011 = vpop.f32.mrb[0].mxu0
  %1012 = vmatprep.mubr.f32.mxu0 0.0
  %1013 = vmatmul.mubr.f32.gmra.mrb[0].mxu0 %v805
  %v1014 = vpop.f32.mrb[0].mxu0
  %v1015 = vadd.f32 0.0, %v1014
  %v1016 = vpop.f32.mrb[0].mxu0
  %1017 = vmatprep.mubr.f32.mxu0 0.0
  %1018 = vmatmul.mubr.f32.gmra.mrb[0].mxu0 %v808
  %v1019 = vpop.f32.mrb[0].mxu0
  %v1020 = vadd.f32 0.0, %v1019
  %v1021 = vpop.f32.mrb[0].mxu0
  %1022 = vmatprep.mubr.f32.mxu0 0.0
  %1023 = vmatmul.mubr.f32.gmra.mrb[0].mxu0 %v811
  %v1024 = vpop.f32.mrb[0].mxu0
  %v1025 = vadd.f32 0.0, %v1024
  %v1026 = vpop.f32.mrb[0].mxu0
  %1027 = vmatprep.mubr.f32.mxu0 0.0
  %1028 = vmatmul.mubr.f32.gmra.mrb[0].mxu0 %v814
  %v1029 = vpop.f32.mrb[0].mxu0
  %v1030 = vadd.f32 0.0, %v1029
  %v1031 = vpop.f32.mrb[0].mxu0
  %1032 = vmatprep.mubr.f32.mxu0 0.0
  %1033 = vmatmul.mubr.f32.gmra.mrb[0].mxu0 %v817
  %v1034 = vpop.f32.mrb[0].mxu0
  %v1035 = vadd.f32 0.0, %v1034
  %v1036 = vpop.f32.mrb[0].mxu0
  %1037 = vmatprep.mubr.f32.mxu0 0.0
  %1038 = vmatmul.mubr.f32.gmra.mrb[0].mxu0 %v820
  %v1039 = vpop.f32.mrb[0].mxu0
  %v1040 = vadd.f32 0.0, %v1039
  %v1041 = vpop.f32.mrb[0].mxu0
  %1042 = vmatprep.mubr.f32.mxu0 0.0
  %1043 = vmatmul.mubr.f32.gmra.mrb[0].mxu0 %v823
  %v1044 = vpop.f32.mrb[0].mxu0
  %v1045 = vadd.f32 0.0, %v1044
  %v1046 = vpop.f32.mrb[0].mxu0
  %1047 = vmatprep.mubr.f32.mxu0 0.0
  %1048 = vmatmul.mubr.f32.gmra.mrb[0].mxu0 %v826
  %v1049 = vpop.f32.mrb[0].mxu0
  %v1050 = vadd.f32 0.0, %v1049
  %v1051 = vpop.f32.mrb[0].mxu0
  %1052 = vdwg.mxu0
  %v1053 = vld [vmem:[%s5] sm:$0xff]
  %v1054 = vld [vmem:[%s5 + $0x8] sm:$0xff]
  %v1055 = vld [vmem:[%s5 + $0x10] sm:$0xff]
  %v1056 = vld [vmem:[%s5 + $0x18] sm:$0xff]
  %v1057 = vld [vmem:[%s5 + $0x20] sm:$0xff]
  %v1058 = vld [vmem:[%s5 + $0x28] sm:$0xff]
  %v1059 = vld [vmem:[%s5 + $0x30] sm:$0xff]
  %v1060 = vld [vmem:[%s5 + $0x38] sm:$0xff]
  %v1061 = vld [vmem:[%s5 + $0x40] sm:$0xff]
  %v1062 = vld [vmem:[%s5 + $0x48] sm:$0xff]
  %v1063 = vld [vmem:[%s5 + $0x50] sm:$0xff]
  %v1064 = vld [vmem:[%s5 + $0x58] sm:$0xff]
  %v1065 = vld [vmem:[%s5 + $0x60] sm:$0xff]
  %v1066 = vld [vmem:[%s5 + $0x68] sm:$0xff]
  %v1067 = vld [vmem:[%s5 + $0x70] sm:$0xff]
  %v1068 = vld [vmem:[%s5 + $0x78] sm:$0xff]
  %v1069 = vld [vmem:[%s5 + $0x80] sm:$0xff]
  %v1070 = vld [vmem:[%s5 + $0x88] sm:$0xff]
  %v1071 = vld [vmem:[%s5 + $0x90] sm:$0xff]
  %v1072 = vld [vmem:[%s5 + $0x98] sm:$0xff]
  %v1073 = vld [vmem:[%s5 + $0xa0] sm:$0xff]
  %v1074 = vld [vmem:[%s5 + $0xa8] sm:$0xff]
  %v1075 = vld [vmem:[%s5 + $0xb0] sm:$0xff]
  %v1076 = vld [vmem:[%s5 + $0xb8] sm:$0xff]
  %v1077 = vld [vmem:[%s5 + $0xc0] sm:$0xff]
  %v1078 = vld [vmem:[%s5 + $0xc8] sm:$0xff]
  %v1079 = vld [vmem:[%s5 + $0xd0] sm:$0xff]
  %v1080 = vld [vmem:[%s5 + $0xd8] sm:$0xff]
  %v1081 = vld [vmem:[%s5 + $0xe0] sm:$0xff]
  %v1082 = vld [vmem:[%s5 + $0xe8] sm:$0xff]
  %v1083 = vld [vmem:[%s5 + $0xf0] sm:$0xff]
  %v1084 = vld [vmem:[%s5 + $0xf8] sm:$0xff]
  %v1085 = vld [vmem:[%s6] sm:$0xff]
  %v1086 = vld [vmem:[%s6 + $0x8] sm:$0xff]
  %v1087 = vld [vmem:[%s6 + $0x10] sm:$0xff]
  %v1088 = vld [vmem:[%s6 + $0x18] sm:$0xff]
  %v1089 = vld [vmem:[%s6 + $0x20] sm:$0xff]
  %v1090 = vld [vmem:[%s6 + $0x28] sm:$0xff]
  %v1091 = vld [vmem:[%s6 + $0x30] sm:$0xff]
  %v1092 = vld [vmem:[%s6 + $0x38] sm:$0xff]
  %v1093 = vld [vmem:[%s6 + $0x40] sm:$0xff]
  %v1094 = vld [vmem:[%s6 + $0x48] sm:$0xff]
  %v1095 = vld [vmem:[%s6 + $0x50] sm:$0xff]
  %v1096 = vld [vmem:[%s6 + $0x58] sm:$0xff]
  %v1097 = vld [vmem:[%s6 + $0x60] sm:$0xff]
  %v1098 = vld [vmem:[%s6 + $0x68] sm:$0xff]
  %v1099 = vld [vmem:[%s6 + $0x70] sm:$0xff]
  %v1100 = vld [vmem:[%s6 + $0x78] sm:$0xff]
  %v1101 = vld [vmem:[%s6 + $0x80] sm:$0xff]
  %v1102 = vld [vmem:[%s6 + $0x88] sm:$0xff]
  %v1103 = vld [vmem:[%s6 + $0x90] sm:$0xff]
  %v1104 = vld [vmem:[%s6 + $0x98] sm:$0xff]
  %v1105 = vld [vmem:[%s6 + $0xa0] sm:$0xff]
  %v1106 = vld [vmem:[%s6 + $0xa8] sm:$0xff]
  %v1107 = vld [vmem:[%s6 + $0xb0] sm:$0xff]
  %v1108 = vld [vmem:[%s6 + $0xb8] sm:$0xff]
  %v1109 = vld [vmem:[%s6 + $0xc0] sm:$0xff]
  %v1110 = vld [vmem:[%s6 + $0xc8] sm:$0xff]
  %v1111 = vld [vmem:[%s6 + $0xd0] sm:$0xff]
  %v1112 = vld [vmem:[%s6 + $0xd8] sm:$0xff]
  %v1113 = vld [vmem:[%s6 + $0xe0] sm:$0xff]
  %v1114 = vld [vmem:[%s6 + $0xe8] sm:$0xff]
  %v1115 = vld [vmem:[%s6 + $0xf0] sm:$0xff]
  %v1116 = vld [vmem:[%s6 + $0xf8] sm:$0xff]
  %v1117 = vld [vmem:[%s9] sm:$0xff]
  %v1118 = vld [vmem:[%s9 + $0x8] sm:$0xff]
  %v1119 = vld [vmem:[%s9 + $0x10] sm:$0xff]
  %v1120 = vld [vmem:[%s9 + $0x18] sm:$0xff]
  %v1121 = vld [vmem:[%s9 + $0x20] sm:$0xff]
  %v1122 = vld [vmem:[%s9 + $0x28] sm:$0xff]
  %v1123 = vld [vmem:[%s9 + $0x30] sm:$0xff]
  %v1124 = vld [vmem:[%s9 + $0x38] sm:$0xff]
  %v1125 = vld [vmem:[%s11] sm:$0xf]
  %v1126 = vld [vmem:[%s10] sm:$0xff]
  %v1127 = vld [vmem:[%s10 + $0x8] sm:$0xff]
  %v1128 = vld [vmem:[%s10 + $0x10] sm:$0xff]
  %v1129 = vld [vmem:[%s10 + $0x18] sm:$0xff]
  %v1130 = vld [vmem:[%s10 + $0x20] sm:$0xff]
  %v1131 = vld [vmem:[%s10 + $0x28] sm:$0xff]
  %v1132 = vld [vmem:[%s10 + $0x30] sm:$0xff]
  %v1133 = vld [vmem:[%s10 + $0x38] sm:$0xff]
  %1134 = vmatprep.subr.mxu0 0.0
  %1135 = vmatpush1.msra.mxu0 %v621
  %1136 = vmatprep.subr.mxu0 0.0
  %1137 = vmatpush1.msra.mxu0 %v626
  %1138 = vmatprep.subr.mxu0 0.0
  %1139 = vmatpush1.msra.mxu0 %v631
  %1140 = vmatprep.subr.mxu0 0.0
  %1141 = vmatpush1.msra.mxu0 %v636
  %1142 = vmatprep.subr.mxu0 0.0
  %1143 = vmatpush1.msra.mxu0 %v641
  %1144 = vmatprep.subr.mxu0 0.0
  %1145 = vmatpush1.msra.mxu0 %v646
  %1146 = vmatprep.subr.mxu0 0.0
  %1147 = vmatpush1.msra.mxu0 %v651
  %1148 = vmatprep.subr.mxu0 0.0
  %1149 = vmatpush1.msra.mxu0 %v656
  %1150 = vmatprep.subr.mxu0 0.0
  %1151 = vmatpush1.msra.mxu0 %v661
  %1152 = vmatprep.subr.mxu0 0.0
  %1153 = vmatpush1.msra.mxu0 %v666
  %1154 = vmatprep.subr.mxu0 0.0
  %1155 = vmatpush1.msra.mxu0 %v671
  %1156 = vmatprep.subr.mxu0 0.0
  %1157 = vmatpush1.msra.mxu0 %v676
  %1158 = vmatprep.subr.mxu0 0.0
  %1159 = vmatpush1.msra.mxu0 %v681
  %1160 = vmatprep.subr.mxu0 0.0
  %1161 = vmatpush1.msra.mxu0 %v686
  %1162 = vmatprep.subr.mxu0 0.0
  %1163 = vmatpush1.msra.mxu0 %v691
  %1164 = vmatprep.subr.mxu0 0.0
  %1165 = vmatpush1.msra.mxu0 %v696
  %1166 = vmatprep.subr.mxu0 0.0
  %1167 = vmatpush1.msra.mxu0 0.0
  %1168 = vmatprep.subr.mxu0 0.0
  %1169 = vmatpush1.msra.mxu0 0.0
  %1170 = vmatprep.subr.mxu0 0.0
  %1171 = vmatpush1.msra.mxu0 0.0
  %1172 = vmatprep.subr.mxu0 0.0
  %1173 = vmatpush1.msra.mxu0 0.0
  %1174 = vmatprep.subr.mxu0 0.0
  %1175 = vmatpush1.msra.mxu0 0.0
  %1176 = vmatprep.subr.mxu0 0.0
  %1177 = vmatpush1.msra.mxu0 0.0
  %1178 = vmatprep.subr.mxu0 0.0
  %1179 = vmatpush1.msra.mxu0 0.0
  %1180 = vmatprep.subr.mxu0 0.0
  %1181 = vmatpush1.msra.mxu0 0.0
  %1182 = vmatprep.subr.mxu0 0.0
  %1183 = vmatpush1.msra.mxu0 0.0
  %1184 = vmatprep.subr.mxu0 0.0
  %1185 = vmatpush1.msra.mxu0 0.0
  %1186 = vmatprep.subr.mxu0 0.0
  %1187 = vmatpush1.msra.mxu0 0.0
  %1188 = vmatprep.subr.mxu0 0.0
  %1189 = vmatpush1.msra.mxu0 0.0
  %1190 = vmatprep.subr.mxu0 0.0
  %1191 = vmatpush1.msra.mxu0 0.0
  %1192 = vmatprep.subr.mxu0 0.0
  %1193 = vmatpush1.msra.mxu0 0.0
  %1194 = vmatprep.subr.mxu0 0.0
  %1195 = vmatpush1.msra.mxu0 0.0
  %1196 = vmatprep.subr.mxu0 0.0
  %1197 = vmatpush1.msra.mxu0 0.0
  %1198 = vmatprep.mubr.f32.mxu0 0.0
  %1199 = vmatmul.mubr.f32.gmra.mrb[0].mxu0 %v1053
  %v1200 = vpop.f32.mrb[0].mxu0
  %v1201 = vadd.f32 %v895, %v1200
  %v1202 = vpop.f32.mrb[0].mxu0
  %1203 = vmatprep.mubr.f32.mxu0 0.0
  %1204 = vmatmul.mubr.f32.gmra.mrb[0].mxu0 %v1054
  %v1205 = vpop.f32.mrb[0].mxu0
  %v1206 = vadd.f32 %v900, %v1205
  %v1207 = vpop.f32.mrb[0].mxu0
  %1208 = vmatprep.mubr.f32.mxu0 0.0
  %1209 = vmatmul.mubr.f32.gmra.mrb[0].mxu0 %v1055
  %v1210 = vpop.f32.mrb[0].mxu0
  %v1211 = vadd.f32 %v905, %v1210
  %v1212 = vpop.f32.mrb[0].mxu0
  %1213 = vmatprep.mubr.f32.mxu0 0.0
  %1214 = vmatmul.mubr.f32.gmra.mrb[0].mxu0 %v1056
  %v1215 = vpop.f32.mrb[0].mxu0
  %v1216 = vadd.f32 %v910, %v1215
  %v1217 = vpop.f32.mrb[0].mxu0
  %1218 = vmatprep.mubr.f32.mxu0 0.0
  %1219 = vmatmul.mubr.f32.gmra.mrb[0].mxu0 %v1057
  %v1220 = vpop.f32.mrb[0].mxu0
  %v1221 = vadd.f32 %v915, %v1220
  %v1222 = vpop.f32.mrb[0].mxu0
  %1223 = vmatprep.mubr.f32.mxu0 0.0
  %1224 = vmatmul.mubr.f32.gmra.mrb[0].mxu0 %v1058
  %v1225 = vpop.f32.mrb[0].mxu0
  %v1226 = vadd.f32 %v920, %v1225
  %v1227 = vpop.f32.mrb[0].mxu0
  %1228 = vmatprep.mubr.f32.mxu0 0.0
  %1229 = vmatmul.mubr.f32.gmra.mrb[0].mxu0 %v1059
  %v1230 = vpop.f32.mrb[0].mxu0
  %v1231 = vadd.f32 %v925, %v1230
  %v1232 = vpop.f32.mrb[0].mxu0
  %1233 = vmatprep.mubr.f32.mxu0 0.0
  %1234 = vmatmul.mubr.f32.gmra.mrb[0].mxu0 %v1060
  %v1235 = vpop.f32.mrb[0].mxu0
  %v1236 = vadd.f32 %v930, %v1235
  %v1237 = vpop.f32.mrb[0].mxu0
  %1238 = vmatprep.mubr.f32.mxu0 0.0
  %1239 = vmatmul.mubr.f32.gmra.mrb[0].mxu0 %v1061
  %v1240 = vpop.f32.mrb[0].mxu0
  %v1241 = vadd.f32 %v935, %v1240
  %v1242 = vpop.f32.mrb[0].mxu0
  %1243 = vmatprep.mubr.f32.mxu0 0.0
  %1244 = vmatmul.mubr.f32.gmra.mrb[0].mxu0 %v1062
  %v1245 = vpop.f32.mrb[0].mxu0
  %v1246 = vadd.f32 %v940, %v1245
  %v1247 = vpop.f32.mrb[0].mxu0
  %1248 = vmatprep.mubr.f32.mxu0 0.0
  %1249 = vmatmul.mubr.f32.gmra.mrb[0].mxu0 %v1063
  %v1250 = vpop.f32.mrb[0].mxu0
  %v1251 = vadd.f32 %v945, %v1250
  %v1252 = vpop.f32.mrb[0].mxu0
  %1253 = vmatprep.mubr.f32.mxu0 0.0
  %1254 = vmatmul.mubr.f32.gmra.mrb[0].mxu0 %v1064
  %v1255 = vpop.f32.mrb[0].mxu0
  %v1256 = vadd.f32 %v950, %v1255
  %v1257 = vpop.f32.mrb[0].mxu0
  %1258 = vmatprep.mubr.f32.mxu0 0.0
  %1259 = vmatmul.mubr.f32.gmra.mrb[0].mxu0 %v1065
  %v1260 = vpop.f32.mrb[0].mxu0
  %v1261 = vadd.f32 %v955, %v1260
  %v1262 = vpop.f32.mrb[0].mxu0
  %1263 = vmatprep.mubr.f32.mxu0 0.0
  %1264 = vmatmul.mubr.f32.gmra.mrb[0].mxu0 %v1066
  %v1265 = vpop.f32.mrb[0].mxu0
  %v1266 = vadd.f32 %v960, %v1265
  %v1267 = vpop.f32.mrb[0].mxu0
  %1268 = vmatprep.mubr.f32.mxu0 0.0
  %1269 = vmatmul.mubr.f32.gmra.mrb[0].mxu0 %v1067
  %v1270 = vpop.f32.mrb[0].mxu0
  %v1271 = vadd.f32 %v965, %v1270
  %v1272 = vpop.f32.mrb[0].mxu0
  %1273 = vmatprep.mubr.f32.mxu0 0.0
  %1274 = vmatmul.mubr.f32.gmra.mrb[0].mxu0 %v1068
  %v1275 = vpop.f32.mrb[0].mxu0
  %v1276 = vadd.f32 %v970, %v1275
  %v1277 = vpop.f32.mrb[0].mxu0
  %1278 = vmatprep.mubr.f32.mxu0 0.0
  %1279 = vmatmul.mubr.f32.gmra.mrb[0].mxu0 %v1069
  %v1280 = vpop.f32.mrb[0].mxu0
  %v1281 = vadd.f32 %v975, %v1280
  %v1282 = vpop.f32.mrb[0].mxu0
  %1283 = vmatprep.mubr.f32.mxu0 0.0
  %1284 = vmatmul.mubr.f32.gmra.mrb[0].mxu0 %v1070
  %v1285 = vpop.f32.mrb[0].mxu0
  %v1286 = vadd.f32 %v980, %v1285
  %v1287 = vpop.f32.mrb[0].mxu0
  %1288 = vmatprep.mubr.f32.mxu0 0.0
  %1289 = vmatmul.mubr.f32.gmra.mrb[0].mxu0 %v1071
  %v1290 = vpop.f32.mrb[0].mxu0
  %v1291 = vadd.f32 %v985, %v1290
  %v1292 = vpop.f32.mrb[0].mxu0
  %1293 = vmatprep.mubr.f32.mxu0 0.0
  %1294 = vmatmul.mubr.f32.gmra.mrb[0].mxu0 %v1072
  %v1295 = vpop.f32.mrb[0].mxu0
  %v1296 = vadd.f32 %v990, %v1295
  %v1297 = vpop.f32.mrb[0].mxu0
  %1298 = vmatprep.mubr.f32.mxu0 0.0
  %1299 = vmatmul.mubr.f32.gmra.mrb[0].mxu0 %v1073
  %v1300 = vpop.f32.mrb[0].mxu0
  %v1301 = vadd.f32 %v995, %v1300
  %v1302 = vpop.f32.mrb[0].mxu0
  %1303 = vmatprep.mubr.f32.mxu0 0.0
  %1304 = vmatmul.mubr.f32.gmra.mrb[0].mxu0 %v1074
  %v1305 = vpop.f32.mrb[0].mxu0
  %v1306 = vadd.f32 %v1000, %v1305
  %v1307 = vpop.f32.mrb[0].mxu0
  %1308 = vmatprep.mubr.f32.mxu0 0.0
  %1309 = vmatmul.mubr.f32.gmra.mrb[0].mxu0 %v1075
  %v1310 = vpop.f32.mrb[0].mxu0
  %v1311 = vadd.f32 %v1005, %v1310
  %v1312 = vpop.f32.mrb[0].mxu0
  %1313 = vmatprep.mubr.f32.mxu0 0.0
  %1314 = vmatmul.mubr.f32.gmra.mrb[0].mxu0 %v1076
  %v1315 = vpop.f32.mrb[0].mxu0
  %v1316 = vadd.f32 %v1010, %v1315
  %v1317 = vpop.f32.mrb[0].mxu0
  %1318 = vmatprep.mubr.f32.mxu0 0.0
  %1319 = vmatmul.mubr.f32.gmra.mrb[0].mxu0 %v1077
  %v1320 = vpop.f32.mrb[0].mxu0
  %v1321 = vadd.f32 %v1015, %v1320
  %v1322 = vpop.f32.mrb[0].mxu0
  %1323 = vmatprep.mubr.f32.mxu0 0.0
  %1324 = vmatmul.mubr.f32.gmra.mrb[0].mxu0 %v1078
  %v1325 = vpop.f32.mrb[0].mxu0
  %v1326 = vadd.f32 %v1020, %v1325
  %v1327 = vpop.f32.mrb[0].mxu0
  %1328 = vmatprep.mubr.f32.mxu0 0.0
  %1329 = vmatmul.mubr.f32.gmra.mrb[0].mxu0 %v1079
  %v1330 = vpop.f32.mrb[0].mxu0
  %v1331 = vadd.f32 %v1025, %v1330
  %v1332 = vpop.f32.mrb[0].mxu0
  %1333 = vmatprep.mubr.f32.mxu0 0.0
  %1334 = vmatmul.mubr.f32.gmra.mrb[0].mxu0 %v1080
  %v1335 = vpop.f32.mrb[0].mxu0
  %v1336 = vadd.f32 %v1030, %v1335
  %v1337 = vpop.f32.mrb[0].mxu0
  %1338 = vmatprep.mubr.f32.mxu0 0.0
  %1339 = vmatmul.mubr.f32.gmra.mrb[0].mxu0 %v1081
  %v1340 = vpop.f32.mrb[0].mxu0
  %v1341 = vadd.f32 %v1035, %v1340
  %v1342 = vpop.f32.mrb[0].mxu0
  %1343 = vmatprep.mubr.f32.mxu0 0.0
  %1344 = vmatmul.mubr.f32.gmra.mrb[0].mxu0 %v1082
  %v1345 = vpop.f32.mrb[0].mxu0
  %v1346 = vadd.f32 %v1040, %v1345
  %v1347 = vpop.f32.mrb[0].mxu0
  %1348 = vmatprep.mubr.f32.mxu0 0.0
  %1349 = vmatmul.mubr.f32.gmra.mrb[0].mxu0 %v1083
  %v1350 = vpop.f32.mrb[0].mxu0
  %v1351 = vadd.f32 %v1045, %v1350
  %v1352 = vpop.f32.mrb[0].mxu0
  %1353 = vmatprep.mubr.f32.mxu0 0.0
  %1354 = vmatmul.mubr.f32.gmra.mrb[0].mxu0 %v1084
  %v1355 = vpop.f32.mrb[0].mxu0
  %v1356 = vadd.f32 %v1050, %v1355
  %v1357 = vpop.f32.mrb[0].mxu0
  %1358 = vdwg.mxu0
  %v1359 = vmax.f32 %v1201, 0.0
  %v1360 = vmax.f32 %v1206, 0.0
  %v1361 = vmax.f32 %v1211, 0.0
  %v1362 = vmax.f32 %v1216, 0.0
  %v1363 = vmax.f32 %v1221, 0.0
  %v1364 = vmax.f32 %v1226, 0.0
  %v1365 = vmax.f32 %v1231, 0.0
  %v1366 = vmax.f32 %v1236, 0.0
  %v1367 = vmax.f32 %v1241, 0.0
  %v1368 = vmax.f32 %v1246, 0.0
  %v1369 = vmax.f32 %v1251, 0.0
  %v1370 = vmax.f32 %v1256, 0.0
  %v1371 = vmax.f32 %v1261, 0.0
  %v1372 = vmax.f32 %v1266, 0.0
  %v1373 = vmax.f32 %v1271, 0.0
  %v1374 = vmax.f32 %v1276, 0.0
  %v1375 = vmax.f32 %v1281, 0.0
  %v1376 = vmax.f32 %v1286, 0.0
  %v1377 = vmax.f32 %v1291, 0.0
  %v1378 = vmax.f32 %v1296, 0.0
  %v1379 = vmax.f32 %v1301, 0.0
  %v1380 = vmax.f32 %v1306, 0.0
  %v1381 = vmax.f32 %v1311, 0.0
  %v1382 = vmax.f32 %v1316, 0.0
  %v1383 = vmax.f32 %v1321, 0.0
  %v1384 = vmax.f32 %v1326, 0.0
  %v1385 = vmax.f32 %v1331, 0.0
  %v1386 = vmax.f32 %v1336, 0.0
  %v1387 = vmax.f32 %v1341, 0.0
  %v1388 = vmax.f32 %v1346, 0.0
  %v1389 = vmax.f32 %v1351, 0.0
  %v1390 = vmax.f32 %v1356, 0.0
  %1391 = vmatprep.subr.mxu0 0.0
  %1392 = vmatpush1.msra.mxu0 %v1359
  %1393 = vmatprep.subr.mxu0 0.0
  %1394 = vmatpush1.msra.mxu0 %v1360
  %1395 = vmatprep.subr.mxu0 0.0
  %1396 = vmatpush1.msra.mxu0 %v1361
  %1397 = vmatprep.subr.mxu0 0.0
  %1398 = vmatpush1.msra.mxu0 %v1362
  %1399 = vmatprep.subr.mxu0 0.0
  %1400 = vmatpush1.msra.mxu0 %v1363
  %1401 = vmatprep.subr.mxu0 0.0
  %1402 = vmatpush1.msra.mxu0 %v1364
  %1403 = vmatprep.subr.mxu0 0.0
  %1404 = vmatpush1.msra.mxu0 %v1365
  %1405 = vmatprep.subr.mxu0 0.0
  %1406 = vmatpush1.msra.mxu0 %v1366
  %1407 = vmatprep.subr.mxu0 0.0
  %1408 = vmatpush1.msra.mxu0 %v1367
  %1409 = vmatprep.subr.mxu0 0.0
  %1410 = vmatpush1.msra.mxu0 %v1368
  %1411 = vmatprep.subr.mxu0 0.0
  %1412 = vmatpush1.msra.mxu0 %v1369
  %1413 = vmatprep.subr.mxu0 0.0
  %1414 = vmatpush1.msra.mxu0 %v1370
  %1415 = vmatprep.subr.mxu0 0.0
  %1416 = vmatpush1.msra.mxu0 %v1371
  %1417 = vmatprep.subr.mxu0 0.0
  %1418 = vmatpush1.msra.mxu0 %v1372
  %1419 = vmatprep.subr.mxu0 0.0
  %1420 = vmatpush1.msra.mxu0 %v1373
  %1421 = vmatprep.subr.mxu0 0.0
  %1422 = vmatpush1.msra.mxu0 %v1374
  %1423 = vmatprep.subr.mxu0 0.0
  %1424 = vmatpush1.msra.mxu0 %v1375
  %1425 = vmatprep.subr.mxu0 0.0
  %1426 = vmatpush1.msra.mxu0 %v1376
  %1427 = vmatprep.subr.mxu0 0.0
  %1428 = vmatpush1.msra.mxu0 %v1377
  %1429 = vmatprep.subr.mxu0 0.0
  %1430 = vmatpush1.msra.mxu0 %v1378
  %1431 = vmatprep.subr.mxu0 0.0
  %1432 = vmatpush1.msra.mxu0 %v1379
  %1433 = vmatprep.subr.mxu0 0.0
  %1434 = vmatpush1.msra.mxu0 %v1380
  %1435 = vmatprep.subr.mxu0 0.0
  %1436 = vmatpush1.msra.mxu0 %v1381
  %1437 = vmatprep.subr.mxu0 0.0
  %1438 = vmatpush1.msra.mxu0 %v1382
  %1439 = vmatprep.subr.mxu0 0.0
  %1440 = vmatpush1.msra.mxu0 %v1383
  %1441 = vmatprep.subr.mxu0 0.0
  %1442 = vmatpush1.msra.mxu0 %v1384
  %1443 = vmatprep.subr.mxu0 0.0
  %1444 = vmatpush1.msra.mxu0 %v1385
  %1445 = vmatprep.subr.mxu0 0.0
  %1446 = vmatpush1.msra.mxu0 %v1386
  %1447 = vmatprep.subr.mxu0 0.0
  %1448 = vmatpush1.msra.mxu0 %v1387
  %1449 = vmatprep.subr.mxu0 0.0
  %1450 = vmatpush1.msra.mxu0 %v1388
  %1451 = vmatprep.subr.mxu0 0.0
  %1452 = vmatpush1.msra.mxu0 %v1389
  %1453 = vmatprep.subr.mxu0 0.0
  %1454 = vmatpush1.msra.mxu0 %v1390
  %1455 = vmatprep.mubr.f32.mxu0 %v1086
  %1456 = vmatmul.mubr.f32.gmra.mrb[0].mxu0 %v1085
  %v1457 = vpop.f32.mrb[0].mxu0
  %v1458 = vadd.f32 0.0, %v1457
  %v1459 = vpop.f32.mrb[0].mxu0
  %1460 = vmatprep.mubr.f32.mxu0 %v1088
  %1461 = vmatmul.mubr.f32.gmra.mrb[0].mxu0 %v1087
  %v1462 = vpop.f32.mrb[0].mxu0
  %v1463 = vadd.f32 0.0, %v1462
  %v1464 = vpop.f32.mrb[0].mxu0
  %1465 = vmatprep.mubr.f32.mxu0 %v1090
  %1466 = vmatmul.mubr.f32.gmra.mrb[0].mxu0 %v1089
  %v1467 = vpop.f32.mrb[0].mxu0
  %v1468 = vadd.f32 0.0, %v1467
  %v1469 = vpop.f32.mrb[0].mxu0
  %1470 = vmatprep.mubr.f32.mxu0 %v1092
  %1471 = vmatmul.mubr.f32.gmra.mrb[0].mxu0 %v1091
  %v1472 = vpop.f32.mrb[0].mxu0
  %v1473 = vadd.f32 0.0, %v1472
  %v1474 = vpop.f32.mrb[0].mxu0
  %1475 = vmatprep.mubr.f32.mxu0 %v1094
  %1476 = vmatmul.mubr.f32.gmra.mrb[0].mxu0 %v1093
  %v1477 = vpop.f32.mrb[0].mxu0
  %v1478 = vadd.f32 0.0, %v1477
  %v1479 = vpop.f32.mrb[0].mxu0
  %1480 = vmatprep.mubr.f32.mxu0 %v1096
  %1481 = vmatmul.mubr.f32.gmra.mrb[0].mxu0 %v1095
  %v1482 = vpop.f32.mrb[0].mxu0
  %v1483 = vadd.f32 0.0, %v1482
  %v1484 = vpop.f32.mrb[0].mxu0
  %1485 = vmatprep.mubr.f32.mxu0 %v1098
  %1486 = vmatmul.mubr.f32.gmra.mrb[0].mxu0 %v1097
  %v1487 = vpop.f32.mrb[0].mxu0
  %v1488 = vadd.f32 0.0, %v1487
  %v1489 = vpop.f32.mrb[0].mxu0
  %1490 = vmatprep.mubr.f32.mxu0 %v1100
  %1491 = vmatmul.mubr.f32.gmra.mrb[0].mxu0 %v1099
  %v1492 = vpop.f32.mrb[0].mxu0
  %v1493 = vadd.f32 0.0, %v1492
  %v1494 = vpop.f32.mrb[0].mxu0
  %1495 = vmatprep.mubr.f32.mxu0 %v1102
  %1496 = vmatmul.mubr.f32.gmra.mrb[0].mxu0 %v1101
  %v1497 = vpop.f32.mrb[0].mxu0
  %v1498 = vadd.f32 0.0, %v1497
  %v1499 = vpop.f32.mrb[0].mxu0
  %1500 = vmatprep.mubr.f32.mxu0 %v1104
  %1501 = vmatmul.mubr.f32.gmra.mrb[0].mxu0 %v1103
  %v1502 = vpop.f32.mrb[0].mxu0
  %v1503 = vadd.f32 0.0, %v1502
  %v1504 = vpop.f32.mrb[0].mxu0
  %1505 = vmatprep.mubr.f32.mxu0 %v1106
  %1506 = vmatmul.mubr.f32.gmra.mrb[0].mxu0 %v1105
  %v1507 = vpop.f32.mrb[0].mxu0
  %v1508 = vadd.f32 0.0, %v1507
  %v1509 = vpop.f32.mrb[0].mxu0
  %1510 = vmatprep.mubr.f32.mxu0 %v1108
  %1511 = vmatmul.mubr.f32.gmra.mrb[0].mxu0 %v1107
  %v1512 = vpop.f32.mrb[0].mxu0
  %v1513 = vadd.f32 0.0, %v1512
  %v1514 = vpop.f32.mrb[0].mxu0
  %1515 = vmatprep.mubr.f32.mxu0 %v1110
  %1516 = vmatmul.mubr.f32.gmra.mrb[0].mxu0 %v1109
  %v1517 = vpop.f32.mrb[0].mxu0
  %v1518 = vadd.f32 0.0, %v1517
  %v1519 = vpop.f32.mrb[0].mxu0
  %1520 = vmatprep.mubr.f32.mxu0 %v1112
  %1521 = vmatmul.mubr.f32.gmra.mrb[0].mxu0 %v1111
  %v1522 = vpop.f32.mrb[0].mxu0
  %v1523 = vadd.f32 0.0, %v1522
  %v1524 = vpop.f32.mrb[0].mxu0
  %1525 = vmatprep.mubr.f32.mxu0 %v1114
  %1526 = vmatmul.mubr.f32.gmra.mrb[0].mxu0 %v1113
  %v1527 = vpop.f32.mrb[0].mxu0
  %v1528 = vadd.f32 0.0, %v1527
  %v1529 = vpop.f32.mrb[0].mxu0
  %1530 = vmatprep.mubr.f32.mxu0 %v1116
  %1531 = vmatmul.mubr.f32.gmra.mrb[0].mxu0 %v1115
  %v1532 = vpop.f32.mrb[0].mxu0
  %v1533 = vadd.f32 0.0, %v1532
  %v1534 = vpop.f32.mrb[0].mxu0
  %1535 = vdwg.mxu0
  %v1536 = vadd.f32 %v621, %v1458
  %v1537 = vadd.f32 %v626, %v1463
  %v1538 = vadd.f32 %v631, %v1468
  %v1539 = vadd.f32 %v636, %v1473
  %v1540 = vadd.f32 %v641, %v1478
  %v1541 = vadd.f32 %v646, %v1483
  %v1542 = vadd.f32 %v651, %v1488
  %v1543 = vadd.f32 %v656, %v1493
  %v1544 = vadd.f32 %v661, %v1498
  %v1545 = vadd.f32 %v666, %v1503
  %v1546 = vadd.f32 %v671, %v1508
  %v1547 = vadd.f32 %v676, %v1513
  %v1548 = vadd.f32 %v681, %v1518
  %v1549 = vadd.f32 %v686, %v1523
  %v1550 = vadd.f32 %v691, %v1528
  %v1551 = vadd.f32 %v696, %v1533
  %v1552 = vlaneseq
  %v1553 = vshrl.u32 %v1552, 7
  %v1554 = vsub.s32 0, %v1553
  %v1555 = vrot.slane %v1125, %v1554
  %1560 = vrot.lane.b32.xlu0 %v1117, 32
  %v1561 = vpop.permute.xlu0 %1560
  %1562 = vrot.lane.b32.xlu0 %v1119, 32
  %v1563 = vpop.permute.xlu0 %1562
  %1564 = vrot.lane.b32.xlu0 %v1121, 32
  %v1565 = vpop.permute.xlu0 %1564
  %1566 = vrot.lane.b32.xlu0 %v1123, 32
  %v1567 = vpop.permute.xlu0 %1566
  %v1573 = vsel %vm505, %v1536, 0
  %v1576 = vsel %vm505, %v1537, 0
  %v1579 = vsel %vm505, %v1538, 0
  %v1582 = vsel %vm505, %v1539, 0
  %v1585 = vsel %vm505, %v1540, 0
  %v1588 = vsel %vm505, %v1541, 0
  %v1591 = vsel %vm505, %v1542, 0
  %v1594 = vsel %vm505, %v1543, 0
  %v1597 = vsel %vm505, %v1544, 0
  %v1600 = vsel %vm505, %v1545, 0
  %v1603 = vsel %vm505, %v1546, 0
  %v1606 = vsel %vm505, %v1547, 0
  %v1609 = vsel %vm505, %v1548, 0
  %v1612 = vsel %vm505, %v1549, 0
  %v1615 = vsel %vm505, %v1550, 0
  %v1618 = vsel %vm505, %v1551, 0
  %1620 = vmatprep.subr.mxu0 0.0
  %1621 = vmatpush1.msra.mxu0 %v1561
  %1622 = vmatprep.subr.mxu0 0.0
  %1623 = vmatpush1.msra.mxu0 %v1563
  %1624 = vmatprep.subr.mxu0 0.0
  %1625 = vmatpush1.msra.mxu0 %v1565
  %1626 = vmatprep.subr.mxu0 0.0
  %1627 = vmatpush1.msra.mxu0 %v1567
  %1628 = vmatprep.subr.mxu0 0.0
  %1629 = vmatpush1.msra.mxu0 0.0
  %1630 = vmatprep.subr.mxu0 0.0
  %1631 = vmatpush1.msra.mxu0 0.0
  %1632 = vmatprep.subr.mxu0 0.0
  %1633 = vmatpush1.msra.mxu0 0.0
  %1634 = vmatprep.subr.mxu0 0.0
  %1635 = vmatpush1.msra.mxu0 0.0
  %1636 = vmatprep.subr.mxu0 0.0
  %1637 = vmatpush1.msra.mxu0 0.0
  %1638 = vmatprep.subr.mxu0 0.0
  %1639 = vmatpush1.msra.mxu0 0.0
  %1640 = vmatprep.subr.mxu0 0.0
  %1641 = vmatpush1.msra.mxu0 0.0
  %1642 = vmatprep.subr.mxu0 0.0
  %1643 = vmatpush1.msra.mxu0 0.0
  %1644 = vmatprep.subr.mxu0 0.0
  %1645 = vmatpush1.msra.mxu0 0.0
  %1646 = vmatprep.subr.mxu0 0.0
  %1647 = vmatpush1.msra.mxu0 0.0
  %1648 = vmatprep.subr.mxu0 0.0
  %1649 = vmatpush1.msra.mxu0 0.0
  %1650 = vmatprep.subr.mxu0 0.0
  %1651 = vmatpush1.msra.mxu0 0.0
  %1652 = vmatprep.subr.mxu0 0.0
  %1653 = vmatpush1.msra.mxu0 0.0
  %1654 = vmatprep.subr.mxu0 0.0
  %1655 = vmatpush1.msra.mxu0 0.0
  %1656 = vmatprep.subr.mxu0 0.0
  %1657 = vmatpush1.msra.mxu0 0.0
  %1658 = vmatprep.subr.mxu0 0.0
  %1659 = vmatpush1.msra.mxu0 0.0
  %1660 = vmatprep.subr.mxu0 0.0
  %1661 = vmatpush1.msra.mxu0 0.0
  %1662 = vmatprep.subr.mxu0 0.0
  %1663 = vmatpush1.msra.mxu0 0.0
  %1664 = vmatprep.subr.mxu0 0.0
  %1665 = vmatpush1.msra.mxu0 0.0
  %1666 = vmatprep.subr.mxu0 0.0
  %1667 = vmatpush1.msra.mxu0 0.0
  %1668 = vmatprep.subr.mxu0 0.0
  %1669 = vmatpush1.msra.mxu0 0.0
  %1670 = vmatprep.subr.mxu0 0.0
  %1671 = vmatpush1.msra.mxu0 0.0
  %1672 = vmatprep.subr.mxu0 0.0
  %1673 = vmatpush1.msra.mxu0 0.0
  %1674 = vmatprep.subr.mxu0 0.0
  %1675 = vmatpush1.msra.mxu0 0.0
  %1676 = vmatprep.subr.mxu0 0.0
  %1677 = vmatpush1.msra.mxu0 0.0
  %1678 = vmatprep.subr.mxu0 0.0
  %1679 = vmatpush1.msra.mxu0 0.0
  %1680 = vmatprep.subr.mxu0 0.0
  %1681 = vmatpush1.msra.mxu0 0.0
  %1682 = vmatprep.subr.mxu0 0.0
  %1683 = vmatpush1.msra.mxu0 0.0
  %1684 = vmatprep.mubr.f32.mxu0 0.0
  %1685 = vmatmul.mubr.f32.gmra.mrb[0].mxu0 %v1573
  %v1686 = vpop.f32.mrb[0].mxu0
  %v1687 = vadd.f32 %v1555, %v1686
  %v1688 = vpop.f32.mrb[0].mxu0
  %1689 = vmatprep.mubr.f32.mxu0 0.0
  %1690 = vmatmul.mubr.f32.gmra.mrb[0].mxu0 %v1576
  %v1691 = vpop.f32.mrb[0].mxu0
  %v1692 = vadd.f32 %v1555, %v1691
  %v1693 = vpop.f32.mrb[0].mxu0
  %1694 = vmatprep.mubr.f32.mxu0 0.0
  %1695 = vmatmul.mubr.f32.gmra.mrb[0].mxu0 %v1579
  %v1696 = vpop.f32.mrb[0].mxu0
  %v1697 = vadd.f32 %v1555, %v1696
  %v1698 = vpop.f32.mrb[0].mxu0
  %1699 = vmatprep.mubr.f32.mxu0 0.0
  %1700 = vmatmul.mubr.f32.gmra.mrb[0].mxu0 %v1582
  %v1701 = vpop.f32.mrb[0].mxu0
  %v1702 = vadd.f32 %v1555, %v1701
  %v1703 = vpop.f32.mrb[0].mxu0
  %1704 = vmatprep.mubr.f32.mxu0 0.0
  %1705 = vmatmul.mubr.f32.gmra.mrb[0].mxu0 %v1585
  %v1706 = vpop.f32.mrb[0].mxu0
  %v1707 = vadd.f32 %v1555, %v1706
  %v1708 = vpop.f32.mrb[0].mxu0
  %1709 = vmatprep.mubr.f32.mxu0 0.0
  %1710 = vmatmul.mubr.f32.gmra.mrb[0].mxu0 %v1588
  %v1711 = vpop.f32.mrb[0].mxu0
  %v1712 = vadd.f32 %v1555, %v1711
  %v1713 = vpop.f32.mrb[0].mxu0
  %1714 = vmatprep.mubr.f32.mxu0 0.0
  %1715 = vmatmul.mubr.f32.gmra.mrb[0].mxu0 %v1591
  %v1716 = vpop.f32.mrb[0].mxu0
  %v1717 = vadd.f32 %v1555, %v1716
  %v1718 = vpop.f32.mrb[0].mxu0
  %1719 = vmatprep.mubr.f32.mxu0 0.0
  %1720 = vmatmul.mubr.f32.gmra.mrb[0].mxu0 %v1594
  %v1721 = vpop.f32.mrb[0].mxu0
  %v1722 = vadd.f32 %v1555, %v1721
  %v1723 = vpop.f32.mrb[0].mxu0
  %1724 = vmatprep.mubr.f32.mxu0 0.0
  %1725 = vmatmul.mubr.f32.gmra.mrb[0].mxu0 %v1597
  %v1726 = vpop.f32.mrb[0].mxu0
  %v1727 = vadd.f32 %v1555, %v1726
  %v1728 = vpop.f32.mrb[0].mxu0
  %1729 = vmatprep.mubr.f32.mxu0 0.0
  %1730 = vmatmul.mubr.f32.gmra.mrb[0].mxu0 %v1600
  %v1731 = vpop.f32.mrb[0].mxu0
  %v1732 = vadd.f32 %v1555, %v1731
  %v1733 = vpop.f32.mrb[0].mxu0
  %1734 = vmatprep.mubr.f32.mxu0 0.0
  %1735 = vmatmul.mubr.f32.gmra.mrb[0].mxu0 %v1603
  %v1736 = vpop.f32.mrb[0].mxu0
  %v1737 = vadd.f32 %v1555, %v1736
  %v1738 = vpop.f32.mrb[0].mxu0
  %1739 = vmatprep.mubr.f32.mxu0 0.0
  %1740 = vmatmul.mubr.f32.gmra.mrb[0].mxu0 %v1606
  %v1741 = vpop.f32.mrb[0].mxu0
  %v1742 = vadd.f32 %v1555, %v1741
  %v1743 = vpop.f32.mrb[0].mxu0
  %1744 = vmatprep.mubr.f32.mxu0 0.0
  %1745 = vmatmul.mubr.f32.gmra.mrb[0].mxu0 %v1609
  %v1746 = vpop.f32.mrb[0].mxu0
  %v1747 = vadd.f32 %v1555, %v1746
  %v1748 = vpop.f32.mrb[0].mxu0
  %1749 = vmatprep.mubr.f32.mxu0 0.0
  %1750 = vmatmul.mubr.f32.gmra.mrb[0].mxu0 %v1612
  %v1751 = vpop.f32.mrb[0].mxu0
  %v1752 = vadd.f32 %v1555, %v1751
  %v1753 = vpop.f32.mrb[0].mxu0
  %1754 = vmatprep.mubr.f32.mxu0 0.0
  %1755 = vmatmul.mubr.f32.gmra.mrb[0].mxu0 %v1615
  %v1756 = vpop.f32.mrb[0].mxu0
  %v1757 = vadd.f32 %v1555, %v1756
  %v1758 = vpop.f32.mrb[0].mxu0
  %1759 = vmatprep.mubr.f32.mxu0 0.0
  %1760 = vmatmul.mubr.f32.gmra.mrb[0].mxu0 %v1618
  %v1761 = vpop.f32.mrb[0].mxu0
  %v1762 = vadd.f32 %v1555, %v1761
  %v1763 = vpop.f32.mrb[0].mxu0
  %1764 = vdwg.mxu0
  %v1765 = vmax.f32 %v1687, 0.0
  %v1766 = vmax.f32 %v1692, 0.0
  %v1767 = vmax.f32 %v1697, 0.0
  %v1768 = vmax.f32 %v1702, 0.0
  %v1769 = vmax.f32 %v1707, 0.0
  %v1770 = vmax.f32 %v1712, 0.0
  %v1771 = vmax.f32 %v1717, 0.0
  %v1772 = vmax.f32 %v1722, 0.0
  %v1773 = vmax.f32 %v1727, 0.0
  %v1774 = vmax.f32 %v1732, 0.0
  %v1775 = vmax.f32 %v1737, 0.0
  %v1776 = vmax.f32 %v1742, 0.0
  %v1777 = vmax.f32 %v1747, 0.0
  %v1778 = vmax.f32 %v1752, 0.0
  %v1779 = vmax.f32 %v1757, 0.0
  %v1780 = vmax.f32 %v1762, 0.0
  %1782 = vrot.lane.b32.xlu0 %v1555, 96
  %v1783 = vpop.permute.xlu0 %1782
  %v1786 = vsel %vm505, %v1765, 0
  %v1789 = vsel %vm505, %v1766, 0
  %v1792 = vsel %vm505, %v1767, 0
  %v1795 = vsel %vm505, %v1768, 0
  %v1798 = vsel %vm505, %v1769, 0
  %v1801 = vsel %vm505, %v1770, 0
  %v1804 = vsel %vm505, %v1771, 0
  %v1807 = vsel %vm505, %v1772, 0
  %v1810 = vsel %vm505, %v1773, 0
  %v1813 = vsel %vm505, %v1774, 0
  %v1816 = vsel %vm505, %v1775, 0
  %v1819 = vsel %vm505, %v1776, 0
  %v1822 = vsel %vm505, %v1777, 0
  %v1825 = vsel %vm505, %v1778, 0
  %v1828 = vsel %vm505, %v1779, 0
  %v1831 = vsel %vm505, %v1780, 0
  %1833 = vmatprep.subr.mxu0 0.0
  %1834 = vmatpush1.msra.mxu0 %v1118
  %1835 = vmatprep.subr.mxu0 0.0
  %1836 = vmatpush1.msra.mxu0 %v1120
  %1837 = vmatprep.subr.mxu0 0.0
  %1838 = vmatpush1.msra.mxu0 %v1122
  %1839 = vmatprep.subr.mxu0 0.0
  %1840 = vmatpush1.msra.mxu0 %v1124
  %1841 = vmatprep.subr.mxu0 0.0
  %1842 = vmatpush1.msra.mxu0 0.0
  %1843 = vmatprep.subr.mxu0 0.0
  %1844 = vmatpush1.msra.mxu0 0.0
  %1845 = vmatprep.subr.mxu0 0.0
  %1846 = vmatpush1.msra.mxu0 0.0
  %1847 = vmatprep.subr.mxu0 0.0
  %1848 = vmatpush1.msra.mxu0 0.0
  %1849 = vmatprep.subr.mxu0 0.0
  %1850 = vmatpush1.msra.mxu0 0.0
  %1851 = vmatprep.subr.mxu0 0.0
  %1852 = vmatpush1.msra.mxu0 0.0
  %1853 = vmatprep.subr.mxu0 0.0
  %1854 = vmatpush1.msra.mxu0 0.0
  %1855 = vmatprep.subr.mxu0 0.0
  %1856 = vmatpush1.msra.mxu0 0.0
  %1857 = vmatprep.subr.mxu0 0.0
  %1858 = vmatpush1.msra.mxu0 0.0
  %1859 = vmatprep.subr.mxu0 0.0
  %1860 = vmatpush1.msra.mxu0 0.0
  %1861 = vmatprep.subr.mxu0 0.0
  %1862 = vmatpush1.msra.mxu0 0.0
  %1863 = vmatprep.subr.mxu0 0.0
  %1864 = vmatpush1.msra.mxu0 0.0
  %1865 = vmatprep.subr.mxu0 0.0
  %1866 = vmatpush1.msra.mxu0 0.0
  %1867 = vmatprep.subr.mxu0 0.0
  %1868 = vmatpush1.msra.mxu0 0.0
  %1869 = vmatprep.subr.mxu0 0.0
  %1870 = vmatpush1.msra.mxu0 0.0
  %1871 = vmatprep.subr.mxu0 0.0
  %1872 = vmatpush1.msra.mxu0 0.0
  %1873 = vmatprep.subr.mxu0 0.0
  %1874 = vmatpush1.msra.mxu0 0.0
  %1875 = vmatprep.subr.mxu0 0.0
  %1876 = vmatpush1.msra.mxu0 0.0
  %1877 = vmatprep.subr.mxu0 0.0
  %1878 = vmatpush1.msra.mxu0 0.0
  %1879 = vmatprep.subr.mxu0 0.0
  %1880 = vmatpush1.msra.mxu0 0.0
  %1881 = vmatprep.subr.mxu0 0.0
  %1882 = vmatpush1.msra.mxu0 0.0
  %1883 = vmatprep.subr.mxu0 0.0
  %1884 = vmatpush1.msra.mxu0 0.0
  %1885 = vmatprep.subr.mxu0 0.0
  %1886 = vmatpush1.msra.mxu0 0.0
  %1887 = vmatprep.subr.mxu0 0.0
  %1888 = vmatpush1.msra.mxu0 0.0
  %1889 = vmatprep.subr.mxu0 0.0
  %1890 = vmatpush1.msra.mxu0 0.0
  %1891 = vmatprep.subr.mxu0 0.0
  %1892 = vmatpush1.msra.mxu0 0.0
  %1893 = vmatprep.subr.mxu0 0.0
  %1894 = vmatpush1.msra.mxu0 0.0
  %1895 = vmatprep.subr.mxu0 0.0
  %1896 = vmatpush1.msra.mxu0 0.0
  %1897 = vmatprep.mubr.f32.mxu0 0.0
  %1898 = vmatmul.mubr.f32.gmra.mrb[0].mxu0 %v1786
  %v1899 = vpop.f32.mrb[0].mxu0
  %v1900 = vadd.f32 %v1783, %v1899
  %v1901 = vpop.f32.mrb[0].mxu0
  %1902 = vmatprep.mubr.f32.mxu0 0.0
  %1903 = vmatmul.mubr.f32.gmra.mrb[0].mxu0 %v1789
  %v1904 = vpop.f32.mrb[0].mxu0
  %v1905 = vadd.f32 %v1783, %v1904
  %v1906 = vpop.f32.mrb[0].mxu0
  %1907 = vmatprep.mubr.f32.mxu0 0.0
  %1908 = vmatmul.mubr.f32.gmra.mrb[0].mxu0 %v1792
  %v1909 = vpop.f32.mrb[0].mxu0
  %v1910 = vadd.f32 %v1783, %v1909
  %v1911 = vpop.f32.mrb[0].mxu0
  %1912 = vmatprep.mubr.f32.mxu0 0.0
  %1913 = vmatmul.mubr.f32.gmra.mrb[0].mxu0 %v1795
  %v1914 = vpop.f32.mrb[0].mxu0
  %v1915 = vadd.f32 %v1783, %v1914
  %v1916 = vpop.f32.mrb[0].mxu0
  %1917 = vmatprep.mubr.f32.mxu0 0.0
  %1918 = vmatmul.mubr.f32.gmra.mrb[0].mxu0 %v1798
  %v1919 = vpop.f32.mrb[0].mxu0
  %v1920 = vadd.f32 %v1783, %v1919
  %v1921 = vpop.f32.mrb[0].mxu0
  %1922 = vmatprep.mubr.f32.mxu0 0.0
  %1923 = vmatmul.mubr.f32.gmra.mrb[0].mxu0 %v1801
  %v1924 = vpop.f32.mrb[0].mxu0
  %v1925 = vadd.f32 %v1783, %v1924
  %v1926 = vpop.f32.mrb[0].mxu0
  %1927 = vmatprep.mubr.f32.mxu0 0.0
  %1928 = vmatmul.mubr.f32.gmra.mrb[0].mxu0 %v1804
  %v1929 = vpop.f32.mrb[0].mxu0
  %v1930 = vadd.f32 %v1783, %v1929
  %v1931 = vpop.f32.mrb[0].mxu0
  %1932 = vmatprep.mubr.f32.mxu0 0.0
  %1933 = vmatmul.mubr.f32.gmra.mrb[0].mxu0 %v1807
  %v1934 = vpop.f32.mrb[0].mxu0
  %v1935 = vadd.f32 %v1783, %v1934
  %v1936 = vpop.f32.mrb[0].mxu0
  %1937 = vmatprep.mubr.f32.mxu0 0.0
  %1938 = vmatmul.mubr.f32.gmra.mrb[0].mxu0 %v1810
  %v1939 = vpop.f32.mrb[0].mxu0
  %v1940 = vadd.f32 %v1783, %v1939
  %v1941 = vpop.f32.mrb[0].mxu0
  %1942 = vmatprep.mubr.f32.mxu0 0.0
  %1943 = vmatmul.mubr.f32.gmra.mrb[0].mxu0 %v1813
  %v1944 = vpop.f32.mrb[0].mxu0
  %v1945 = vadd.f32 %v1783, %v1944
  %v1946 = vpop.f32.mrb[0].mxu0
  %1947 = vmatprep.mubr.f32.mxu0 0.0
  %1948 = vmatmul.mubr.f32.gmra.mrb[0].mxu0 %v1816
  %v1949 = vpop.f32.mrb[0].mxu0
  %v1950 = vadd.f32 %v1783, %v1949
  %v1951 = vpop.f32.mrb[0].mxu0
  %1952 = vmatprep.mubr.f32.mxu0 0.0
  %1953 = vmatmul.mubr.f32.gmra.mrb[0].mxu0 %v1819
  %v1954 = vpop.f32.mrb[0].mxu0
  %v1955 = vadd.f32 %v1783, %v1954
  %v1956 = vpop.f32.mrb[0].mxu0
  %1957 = vmatprep.mubr.f32.mxu0 0.0
  %1958 = vmatmul.mubr.f32.gmra.mrb[0].mxu0 %v1822
  %v1959 = vpop.f32.mrb[0].mxu0
  %v1960 = vadd.f32 %v1783, %v1959
  %v1961 = vpop.f32.mrb[0].mxu0
  %1962 = vmatprep.mubr.f32.mxu0 0.0
  %1963 = vmatmul.mubr.f32.gmra.mrb[0].mxu0 %v1825
  %v1964 = vpop.f32.mrb[0].mxu0
  %v1965 = vadd.f32 %v1783, %v1964
  %v1966 = vpop.f32.mrb[0].mxu0
  %1967 = vmatprep.mubr.f32.mxu0 0.0
  %1968 = vmatmul.mubr.f32.gmra.mrb[0].mxu0 %v1828
  %v1969 = vpop.f32.mrb[0].mxu0
  %v1970 = vadd.f32 %v1783, %v1969
  %v1971 = vpop.f32.mrb[0].mxu0
  %1972 = vmatprep.mubr.f32.mxu0 0.0
  %1973 = vmatmul.mubr.f32.gmra.mrb[0].mxu0 %v1831
  %v1974 = vpop.f32.mrb[0].mxu0
  %v1975 = vadd.f32 %v1783, %v1974
  %v1976 = vpop.f32.mrb[0].mxu0
  %1977 = vdwg.mxu0
  %v1978 = vadd.f32 %v1900, %v621
  %v1979 = vadd.f32 %v1905, %v626
  %v1980 = vadd.f32 %v1910, %v631
  %v1981 = vadd.f32 %v1915, %v636
  %v1982 = vadd.f32 %v1920, %v641
  %v1983 = vadd.f32 %v1925, %v646
  %v1984 = vadd.f32 %v1930, %v651
  %v1985 = vadd.f32 %v1935, %v656
  %v1986 = vadd.f32 %v1940, %v661
  %v1987 = vadd.f32 %v1945, %v666
  %v1988 = vadd.f32 %v1950, %v671
  %v1989 = vadd.f32 %v1955, %v676
  %v1990 = vadd.f32 %v1960, %v681
  %v1991 = vadd.f32 %v1965, %v686
  %v1992 = vadd.f32 %v1970, %v691
  %v1993 = vadd.f32 %v1975, %v696
  %v1994 = vsel %vm505, %v1978, 0.0
  %v1995 = vsel %vm505, %v1979, 0.0
  %v1996 = vadd.f32 %v1994, %v1995
  %v1997 = vsel %vm505, %v1980, 0.0
  %v1998 = vadd.f32 %v1996, %v1997
  %v1999 = vsel %vm505, %v1981, 0.0
  %v2000 = vadd.f32 %v1998, %v1999
  %v2001 = vsel %vm505, %v1982, 0.0
  %v2002 = vadd.f32 %v2000, %v2001
  %v2003 = vsel %vm505, %v1983, 0.0
  %v2004 = vadd.f32 %v2002, %v2003
  %v2005 = vsel %vm505, %v1984, 0.0
  %v2006 = vadd.f32 %v2004, %v2005
  %v2007 = vsel %vm505, %v1985, 0.0
  %v2008 = vadd.f32 %v2006, %v2007
  %v2009 = vsel %vm505, %v1986, 0.0
  %v2010 = vadd.f32 %v2008, %v2009
  %v2011 = vsel %vm505, %v1987, 0.0
  %v2012 = vadd.f32 %v2010, %v2011
  %v2013 = vsel %vm505, %v1988, 0.0
  %v2014 = vadd.f32 %v2012, %v2013
  %v2015 = vsel %vm505, %v1989, 0.0
  %v2016 = vadd.f32 %v2014, %v2015
  %v2017 = vsel %vm505, %v1990, 0.0
  %v2018 = vadd.f32 %v2016, %v2017
  %v2019 = vsel %vm505, %v1991, 0.0
  %v2020 = vadd.f32 %v2018, %v2019
  %v2021 = vsel %vm505, %v1992, 0.0
  %v2022 = vadd.f32 %v2020, %v2021
  %v2023 = vsel %vm505, %v1993, 0.0
  %v2024 = vadd.f32 %v2022, %v2023
  %v2025 = vrot.slane %v2024, 4
  %v2026 = vadd.f32 %v2024, %v2025
  %v2027 = vrot.slane %v2026, 2
  %v2028 = vadd.f32 %v2026, %v2027
  %v2029 = vrot.slane %v2028, 1
  %v2030 = vadd.f32 %v2028, %v2029
  %v2031 = vmul.f32 %v2030, %v240
  %v2032 = vmul.f32 %v1978, %v1978
  %v2033 = vmul.f32 %v1979, %v1979
  %v2034 = vmul.f32 %v1980, %v1980
  %v2035 = vmul.f32 %v1981, %v1981
  %v2036 = vmul.f32 %v1982, %v1982
  %v2037 = vmul.f32 %v1983, %v1983
  %v2038 = vmul.f32 %v1984, %v1984
  %v2039 = vmul.f32 %v1985, %v1985
  %v2040 = vmul.f32 %v1986, %v1986
  %v2041 = vmul.f32 %v1987, %v1987
  %v2042 = vmul.f32 %v1988, %v1988
  %v2043 = vmul.f32 %v1989, %v1989
  %v2044 = vmul.f32 %v1990, %v1990
  %v2045 = vmul.f32 %v1991, %v1991
  %v2046 = vmul.f32 %v1992, %v1992
  %v2047 = vmul.f32 %v1993, %v1993
  %v2048 = vsel %vm505, %v2032, 0.0
  %v2049 = vsel %vm505, %v2033, 0.0
  %v2050 = vadd.f32 %v2048, %v2049
  %v2051 = vsel %vm505, %v2034, 0.0
  %v2052 = vadd.f32 %v2050, %v2051
  %v2053 = vsel %vm505, %v2035, 0.0
  %v2054 = vadd.f32 %v2052, %v2053
  %v2055 = vsel %vm505, %v2036, 0.0
  %v2056 = vadd.f32 %v2054, %v2055
  %v2057 = vsel %vm505, %v2037, 0.0
  %v2058 = vadd.f32 %v2056, %v2057
  %v2059 = vsel %vm505, %v2038, 0.0
  %v2060 = vadd.f32 %v2058, %v2059
  %v2061 = vsel %vm505, %v2039, 0.0
  %v2062 = vadd.f32 %v2060, %v2061
  %v2063 = vsel %vm505, %v2040, 0.0
  %v2064 = vadd.f32 %v2062, %v2063
  %v2065 = vsel %vm505, %v2041, 0.0
  %v2066 = vadd.f32 %v2064, %v2065
  %v2067 = vsel %vm505, %v2042, 0.0
  %v2068 = vadd.f32 %v2066, %v2067
  %v2069 = vsel %vm505, %v2043, 0.0
  %v2070 = vadd.f32 %v2068, %v2069
  %v2071 = vsel %vm505, %v2044, 0.0
  %v2072 = vadd.f32 %v2070, %v2071
  %v2073 = vsel %vm505, %v2045, 0.0
  %v2074 = vadd.f32 %v2072, %v2073
  %v2075 = vsel %vm505, %v2046, 0.0
  %v2076 = vadd.f32 %v2074, %v2075
  %v2077 = vsel %vm505, %v2047, 0.0
  %v2078 = vadd.f32 %v2076, %v2077
  %v2079 = vrot.slane %v2078, 4
  %v2080 = vadd.f32 %v2078, %v2079
  %v2081 = vrot.slane %v2080, 2
  %v2082 = vadd.f32 %v2080, %v2081
  %v2083 = vrot.slane %v2082, 1
  %v2084 = vadd.f32 %v2082, %v2083
  %v2085 = vmul.f32 %v2084, %v240
  %v2086 = vmul.f32 %v2031, %v2031
  %v2087 = vsub.f32 %v2085, %v2086
  %v2088 = vsub.f32 %v1978, %v2031
  %v2089 = vsub.f32 %v1979, %v2031
  %v2090 = vsub.f32 %v1980, %v2031
  %v2091 = vsub.f32 %v1981, %v2031
  %v2092 = vsub.f32 %v1982, %v2031
  %v2093 = vsub.f32 %v1983, %v2031
  %v2094 = vsub.f32 %v1984, %v2031
  %v2095 = vsub.f32 %v1985, %v2031
  %v2096 = vsub.f32 %v1986, %v2031
  %v2097 = vsub.f32 %v1987, %v2031
  %v2098 = vsub.f32 %v1988, %v2031
  %v2099 = vsub.f32 %v1989, %v2031
  %v2100 = vsub.f32 %v1990, %v2031
  %v2101 = vsub.f32 %v1991, %v2031
  %v2102 = vsub.f32 %v1992, %v2031
  %v2103 = vsub.f32 %v1993, %v2031
  %v2104 = vadd.f32 %v2087, 1e-05
  %v2105 = vrsqrt.pop %v2104
  %v2106 = vmul.f32 %v2088, %v2105
  %v2107 = vmul.f32 %v2089, %v2105
  %v2108 = vmul.f32 %v2090, %v2105
  %v2109 = vmul.f32 %v2091, %v2105
  %v2110 = vmul.f32 %v2092, %v2105
  %v2111 = vmul.f32 %v2093, %v2105
  %v2112 = vmul.f32 %v2094, %v2105
  %v2113 = vmul.f32 %v2095, %v2105
  %v2114 = vmul.f32 %v2096, %v2105
  %v2115 = vmul.f32 %v2097, %v2105
  %v2116 = vmul.f32 %v2098, %v2105
  %v2117 = vmul.f32 %v2099, %v2105
  %v2118 = vmul.f32 %v2100, %v2105
  %v2119 = vmul.f32 %v2101, %v2105
  %v2120 = vmul.f32 %v2102, %v2105
  %v2121 = vmul.f32 %v2103, %v2105
  %2122 = vrot.lane.b32.xlu0 %v1555, 64
  %v2123 = vpop.permute.xlu0 %2122
  %v2125 = vmul.f32 %v2106, %v2123
  %v2126 = vmul.f32 %v2107, %v2123
  %v2127 = vmul.f32 %v2108, %v2123
  %v2128 = vmul.f32 %v2109, %v2123
  %v2129 = vmul.f32 %v2110, %v2123
  %v2130 = vmul.f32 %v2111, %v2123
  %v2131 = vmul.f32 %v2112, %v2123
  %v2132 = vmul.f32 %v2113, %v2123
  %v2133 = vmul.f32 %v2114, %v2123
  %v2134 = vmul.f32 %v2115, %v2123
  %v2135 = vmul.f32 %v2116, %v2123
  %v2136 = vmul.f32 %v2117, %v2123
  %v2137 = vmul.f32 %v2118, %v2123
  %v2138 = vmul.f32 %v2119, %v2123
  %v2139 = vmul.f32 %v2120, %v2123
  %v2140 = vmul.f32 %v2121, %v2123
  %2141 = vrot.lane.b32.xlu0 %v1555, 32
  %v2142 = vpop.permute.xlu0 %2141
  %v2144 = vadd.f32 %v2125, %v2142
  %v2145 = vadd.f32 %v2126, %v2142
  %v2146 = vadd.f32 %v2127, %v2142
  %v2147 = vadd.f32 %v2128, %v2142
  %v2148 = vadd.f32 %v2129, %v2142
  %v2149 = vadd.f32 %v2130, %v2142
  %v2150 = vadd.f32 %v2131, %v2142
  %v2151 = vadd.f32 %v2132, %v2142
  %v2152 = vadd.f32 %v2133, %v2142
  %v2153 = vadd.f32 %v2134, %v2142
  %v2154 = vadd.f32 %v2135, %v2142
  %v2155 = vadd.f32 %v2136, %v2142
  %v2156 = vadd.f32 %v2137, %v2142
  %v2157 = vadd.f32 %v2138, %v2142
  %v2158 = vadd.f32 %v2139, %v2142
  %v2159 = vadd.f32 %v2140, %v2142
  %v2160 = vlaneseq
  %v2161 = vshrl.u32 %v2160, 7
  %v2162 = vsub.s32 1, %v2161
  %v2163 = vrot.slane %v1125, %v2162
  %v2165 = vsel %vm505, %v621, 0
  %v2168 = vsel %vm505, %v626, 0
  %v2171 = vsel %vm505, %v631, 0
  %v2174 = vsel %vm505, %v636, 0
  %v2177 = vsel %vm505, %v641, 0
  %v2180 = vsel %vm505, %v646, 0
  %v2183 = vsel %vm505, %v651, 0
  %v2186 = vsel %vm505, %v656, 0
  %v2189 = vsel %vm505, %v661, 0
  %v2192 = vsel %vm505, %v666, 0
  %v2195 = vsel %vm505, %v671, 0
  %v2198 = vsel %vm505, %v676, 0
  %v2201 = vsel %vm505, %v681, 0
  %v2204 = vsel %vm505, %v686, 0
  %v2207 = vsel %vm505, %v691, 0
  %v2210 = vsel %vm505, %v696, 0
  %2212 = vmatprep.subr.mxu0 0.0
  %2213 = vmatpush1.msra.mxu0 %v1117
  %2214 = vmatprep.subr.mxu0 0.0
  %2215 = vmatpush1.msra.mxu0 %v1119
  %2216 = vmatprep.subr.mxu0 0.0
  %2217 = vmatpush1.msra.mxu0 %v1121
  %2218 = vmatprep.subr.mxu0 0.0
  %2219 = vmatpush1.msra.mxu0 %v1123
  %2220 = vmatprep.subr.mxu0 0.0
  %2221 = vmatpush1.msra.mxu0 0.0
  %2222 = vmatprep.subr.mxu0 0.0
  %2223 = vmatpush1.msra.mxu0 0.0
  %2224 = vmatprep.subr.mxu0 0.0
  %2225 = vmatpush1.msra.mxu0 0.0
  %2226 = vmatprep.subr.mxu0 0.0
  %2227 = vmatpush1.msra.mxu0 0.0
  %2228 = vmatprep.subr.mxu0 0.0
  %2229 = vmatpush1.msra.mxu0 0.0
  %2230 = vmatprep.subr.mxu0 0.0
  %2231 = vmatpush1.msra.mxu0 0.0
  %2232 = vmatprep.subr.mxu0 0.0
  %2233 = vmatpush1.msra.mxu0 0.0
  %2234 = vmatprep.subr.mxu0 0.0
  %2235 = vmatpush1.msra.mxu0 0.0
  %2236 = vmatprep.subr.mxu0 0.0
  %2237 = vmatpush1.msra.mxu0 0.0
  %2238 = vmatprep.subr.mxu0 0.0
  %2239 = vmatpush1.msra.mxu0 0.0
  %2240 = vmatprep.subr.mxu0 0.0
  %2241 = vmatpush1.msra.mxu0 0.0
  %2242 = vmatprep.subr.mxu0 0.0
  %2243 = vmatpush1.msra.mxu0 0.0
  %2244 = vmatprep.subr.mxu0 0.0
  %2245 = vmatpush1.msra.mxu0 0.0
  %2246 = vmatprep.subr.mxu0 0.0
  %2247 = vmatpush1.msra.mxu0 0.0
  %2248 = vmatprep.subr.mxu0 0.0
  %2249 = vmatpush1.msra.mxu0 0.0
  %2250 = vmatprep.subr.mxu0 0.0
  %2251 = vmatpush1.msra.mxu0 0.0
  %2252 = vmatprep.subr.mxu0 0.0
  %2253 = vmatpush1.msra.mxu0 0.0
  %2254 = vmatprep.subr.mxu0 0.0
  %2255 = vmatpush1.msra.mxu0 0.0
  %2256 = vmatprep.subr.mxu0 0.0
  %2257 = vmatpush1.msra.mxu0 0.0
  %2258 = vmatprep.subr.mxu0 0.0
  %2259 = vmatpush1.msra.mxu0 0.0
  %2260 = vmatprep.subr.mxu0 0.0
  %2261 = vmatpush1.msra.mxu0 0.0
  %2262 = vmatprep.subr.mxu0 0.0
  %2263 = vmatpush1.msra.mxu0 0.0
  %2264 = vmatprep.subr.mxu0 0.0
  %2265 = vmatpush1.msra.mxu0 0.0
  %2266 = vmatprep.subr.mxu0 0.0
  %2267 = vmatpush1.msra.mxu0 0.0
  %2268 = vmatprep.subr.mxu0 0.0
  %2269 = vmatpush1.msra.mxu0 0.0
  %2270 = vmatprep.subr.mxu0 0.0
  %2271 = vmatpush1.msra.mxu0 0.0
  %2272 = vmatprep.subr.mxu0 0.0
  %2273 = vmatpush1.msra.mxu0 0.0
  %2274 = vmatprep.subr.mxu0 0.0
  %2275 = vmatpush1.msra.mxu0 0.0
  %2276 = vmatprep.mubr.f32.mxu0 0.0
  %2277 = vmatmul.mubr.f32.gmra.mrb[0].mxu0 %v2165
  %v2278 = vpop.f32.mrb[0].mxu0
  %v2279 = vadd.f32 %v2163, %v2278
  %v2280 = vpop.f32.mrb[0].mxu0
  %2281 = vmatprep.mubr.f32.mxu0 0.0
  %2282 = vmatmul.mubr.f32.gmra.mrb[0].mxu0 %v2168
  %v2283 = vpop.f32.mrb[0].mxu0
  %v2284 = vadd.f32 %v2163, %v2283
  %v2285 = vpop.f32.mrb[0].mxu0
  %2286 = vmatprep.mubr.f32.mxu0 0.0
  %2287 = vmatmul.mubr.f32.gmra.mrb[0].mxu0 %v2171
  %v2288 = vpop.f32.mrb[0].mxu0
  %v2289 = vadd.f32 %v2163, %v2288
  %v2290 = vpop.f32.mrb[0].mxu0
  %2291 = vmatprep.mubr.f32.mxu0 0.0
  %2292 = vmatmul.mubr.f32.gmra.mrb[0].mxu0 %v2174
  %v2293 = vpop.f32.mrb[0].mxu0
  %v2294 = vadd.f32 %v2163, %v2293
  %v2295 = vpop.f32.mrb[0].mxu0
  %2296 = vmatprep.mubr.f32.mxu0 0.0
  %2297 = vmatmul.mubr.f32.gmra.mrb[0].mxu0 %v2177
  %v2298 = vpop.f32.mrb[0].mxu0
  %v2299 = vadd.f32 %v2163, %v2298
  %v2300 = vpop.f32.mrb[0].mxu0
  %2301 = vmatprep.mubr.f32.mxu0 0.0
  %2302 = vmatmul.mubr.f32.gmra.mrb[0].mxu0 %v2180
  %v2303 = vpop.f32.mrb[0].mxu0
  %v2304 = vadd.f32 %v2163, %v2303
  %v2305 = vpop.f32.mrb[0].mxu0
  %2306 = vmatprep.mubr.f32.mxu0 0.0
  %2307 = vmatmul.mubr.f32.gmra.mrb[0].mxu0 %v2183
  %v2308 = vpop.f32.mrb[0].mxu0
  %v2309 = vadd.f32 %v2163, %v2308
  %v2310 = vpop.f32.mrb[0].mxu0
  %2311 = vmatprep.mubr.f32.mxu0 0.0
  %2312 = vmatmul.mubr.f32.gmra.mrb[0].mxu0 %v2186
  %v2313 = vpop.f32.mrb[0].mxu0
  %v2314 = vadd.f32 %v2163, %v2313
  %v2315 = vpop.f32.mrb[0].mxu0
  %2316 = vmatprep.mubr.f32.mxu0 0.0
  %2317 = vmatmul.mubr.f32.gmra.mrb[0].mxu0 %v2189
  %v2318 = vpop.f32.mrb[0].mxu0
  %v2319 = vadd.f32 %v2163, %v2318
  %v2320 = vpop.f32.mrb[0].mxu0
  %2321 = vmatprep.mubr.f32.mxu0 0.0
  %2322 = vmatmul.mubr.f32.gmra.mrb[0].mxu0 %v2192
  %v2323 = vpop.f32.mrb[0].mxu0
  %v2324 = vadd.f32 %v2163, %v2323
  %v2325 = vpop.f32.mrb[0].mxu0
  %2326 = vmatprep.mubr.f32.mxu0 0.0
  %2327 = vmatmul.mubr.f32.gmra.mrb[0].mxu0 %v2195
  %v2328 = vpop.f32.mrb[0].mxu0
  %v2329 = vadd.f32 %v2163, %v2328
  %v2330 = vpop.f32.mrb[0].mxu0
  %2331 = vmatprep.mubr.f32.mxu0 0.0
  %2332 = vmatmul.mubr.f32.gmra.mrb[0].mxu0 %v2198
  %v2333 = vpop.f32.mrb[0].mxu0
  %v2334 = vadd.f32 %v2163, %v2333
  %v2335 = vpop.f32.mrb[0].mxu0
  %2336 = vmatprep.mubr.f32.mxu0 0.0
  %2337 = vmatmul.mubr.f32.gmra.mrb[0].mxu0 %v2201
  %v2338 = vpop.f32.mrb[0].mxu0
  %v2339 = vadd.f32 %v2163, %v2338
  %v2340 = vpop.f32.mrb[0].mxu0
  %2341 = vmatprep.mubr.f32.mxu0 0.0
  %2342 = vmatmul.mubr.f32.gmra.mrb[0].mxu0 %v2204
  %v2343 = vpop.f32.mrb[0].mxu0
  %v2344 = vadd.f32 %v2163, %v2343
  %v2345 = vpop.f32.mrb[0].mxu0
  %2346 = vmatprep.mubr.f32.mxu0 0.0
  %2347 = vmatmul.mubr.f32.gmra.mrb[0].mxu0 %v2207
  %v2348 = vpop.f32.mrb[0].mxu0
  %v2349 = vadd.f32 %v2163, %v2348
  %v2350 = vpop.f32.mrb[0].mxu0
  %2351 = vmatprep.mubr.f32.mxu0 0.0
  %2352 = vmatmul.mubr.f32.gmra.mrb[0].mxu0 %v2210
  %v2353 = vpop.f32.mrb[0].mxu0
  %v2354 = vadd.f32 %v2163, %v2353
  %v2355 = vpop.f32.mrb[0].mxu0
  %2356 = vdwg.mxu0
  %2373 = vrot.lane.b32.xlu0 %v2279, 96
  %v2374 = vpop.permute.xlu0 %2373
  %2375 = vrot.lane.b32.xlu0 %v2284, 96
  %v2376 = vpop.permute.xlu0 %2375
  %2377 = vrot.lane.b32.xlu0 %v2289, 96
  %v2378 = vpop.permute.xlu0 %2377
  %2379 = vrot.lane.b32.xlu0 %v2294, 96
  %v2380 = vpop.permute.xlu0 %2379
  %2381 = vrot.lane.b32.xlu0 %v2299, 96
  %v2382 = vpop.permute.xlu0 %2381
  %2383 = vrot.lane.b32.xlu0 %v2304, 96
  %v2384 = vpop.permute.xlu0 %2383
  %2385 = vrot.lane.b32.xlu0 %v2309, 96
  %v2386 = vpop.permute.xlu0 %2385
  %2387 = vrot.lane.b32.xlu0 %v2314, 96
  %v2388 = vpop.permute.xlu0 %2387
  %2389 = vrot.lane.b32.xlu0 %v2319, 96
  %v2390 = vpop.permute.xlu0 %2389
  %2391 = vrot.lane.b32.xlu0 %v2324, 96
  %v2392 = vpop.permute.xlu0 %2391
  %2393 = vrot.lane.b32.xlu0 %v2329, 96
  %v2394 = vpop.permute.xlu0 %2393
  %2395 = vrot.lane.b32.xlu0 %v2334, 96
  %v2396 = vpop.permute.xlu0 %2395
  %2397 = vrot.lane.b32.xlu0 %v2339, 96
  %v2398 = vpop.permute.xlu0 %2397
  %2399 = vrot.lane.b32.xlu0 %v2344, 96
  %v2400 = vpop.permute.xlu0 %2399
  %2401 = vrot.lane.b32.xlu0 %v2349, 96
  %v2402 = vpop.permute.xlu0 %2401
  %2403 = vrot.lane.b32.xlu0 %v2354, 96
  %v2404 = vpop.permute.xlu0 %2403
  %vm2405 = vcmask 64512
  %v2406 = vsel %vm2405, %v2279, 0
  %v2408 = vsel %vm2405, %v2284, 0
  %v2410 = vsel %vm2405, %v2289, 0
  %v2412 = vsel %vm2405, %v2294, 0
  %v2414 = vsel %vm2405, %v2299, 0
  %v2416 = vsel %vm2405, %v2304, 0
  %v2418 = vsel %vm2405, %v2309, 0
  %v2420 = vsel %vm2405, %v2314, 0
  %v2422 = vsel %vm2405, %v2319, 0
  %v2424 = vsel %vm2405, %v2324, 0
  %v2426 = vsel %vm2405, %v2329, 0
  %v2428 = vsel %vm2405, %v2334, 0
  %v2430 = vsel %vm2405, %v2339, 0
  %v2432 = vsel %vm2405, %v2344, 0
  %v2434 = vsel %vm2405, %v2349, 0
  %v2436 = vsel %vm2405, %v2354, 0
  %v2438 = vsel %vm2405, %v2374, 0
  %v2440 = vsel %vm2405, %v2376, 0
  %v2442 = vsel %vm2405, %v2378, 0
  %v2444 = vsel %vm2405, %v2380, 0
  %v2446 = vsel %vm2405, %v2382, 0
  %v2448 = vsel %vm2405, %v2384, 0
  %v2450 = vsel %vm2405, %v2386, 0
  %v2452 = vsel %vm2405, %v2388, 0
  %v2454 = vsel %vm2405, %v2390, 0
  %v2456 = vsel %vm2405, %v2392, 0
  %v2458 = vsel %vm2405, %v2394, 0
  %v2460 = vsel %vm2405, %v2396, 0
  %v2462 = vsel %vm2405, %v2398, 0
  %v2464 = vsel %vm2405, %v2400, 0
  %v2466 = vsel %vm2405, %v2402, 0
  %v2468 = vsel %vm2405, %v2404, 0
  %2470 = vmatprep.subr.mxu0 0.0
  %2471 = vmatpush1.xpose.msra.mxu0 %v2438
  %2472 = vmatprep.subr.mxu0 0.0
  %2473 = vmatpush1.xpose.msra.mxu0 %v2440
  %2474 = vmatprep.subr.mxu0 0.0
  %2475 = vmatpush1.xpose.msra.mxu0 %v2442
  %2476 = vmatprep.subr.mxu0 0.0
  %2477 = vmatpush1.xpose.msra.mxu0 %v2444
  %2478 = vmatprep.subr.mxu0 0.0
  %2479 = vmatpush1.xpose.msra.mxu0 %v2446
  %2480 = vmatprep.subr.mxu0 0.0
  %2481 = vmatpush1.xpose.msra.mxu0 %v2448
  %2482 = vmatprep.subr.mxu0 0.0
  %2483 = vmatpush1.xpose.msra.mxu0 %v2450
  %2484 = vmatprep.subr.mxu0 0.0
  %2485 = vmatpush1.xpose.msra.mxu0 %v2452
  %2486 = vmatprep.subr.mxu0 0.0
  %2487 = vmatpush1.xpose.msra.mxu0 %v2454
  %2488 = vmatprep.subr.mxu0 0.0
  %2489 = vmatpush1.xpose.msra.mxu0 %v2456
  %2490 = vmatprep.subr.mxu0 0.0
  %2491 = vmatpush1.xpose.msra.mxu0 %v2458
  %2492 = vmatprep.subr.mxu0 0.0
  %2493 = vmatpush1.xpose.msra.mxu0 %v2460
  %2494 = vmatprep.subr.mxu0 0.0
  %2495 = vmatpush1.xpose.msra.mxu0 %v2462
  %2496 = vmatprep.subr.mxu0 0.0
  %2497 = vmatpush1.xpose.msra.mxu0 %v2464
  %2498 = vmatprep.subr.mxu0 0.0
  %2499 = vmatpush1.xpose.msra.mxu0 %v2466
  %2500 = vmatprep.subr.mxu0 0.0
  %2501 = vmatpush1.xpose.msra.mxu0 %v2468
  %2502 = vmatprep.subr.mxu0 0.0
  %2503 = vmatpush1.xpose.msra.mxu0 0.0
  %2504 = vmatprep.subr.mxu0 0.0
  %2505 = vmatpush1.xpose.msra.mxu0 0.0
  %2506 = vmatprep.subr.mxu0 0.0
  %2507 = vmatpush1.xpose.msra.mxu0 0.0
  %2508 = vmatprep.subr.mxu0 0.0
  %2509 = vmatpush1.xpose.msra.mxu0 0.0
  %2510 = vmatprep.subr.mxu0 0.0
  %2511 = vmatpush1.xpose.msra.mxu0 0.0
  %2512 = vmatprep.subr.mxu0 0.0
  %2513 = vmatpush1.xpose.msra.mxu0 0.0
  %2514 = vmatprep.subr.mxu0 0.0
  %2515 = vmatpush1.xpose.msra.mxu0 0.0
  %2516 = vmatprep.subr.mxu0 0.0
  %2517 = vmatpush1.xpose.msra.mxu0 0.0
  %2518 = vmatprep.subr.mxu0 0.0
  %2519 = vmatpush1.xpose.msra.mxu0 0.0
  %2520 = vmatprep.subr.mxu0 0.0
  %2521 = vmatpush1.xpose.msra.mxu0 0.0
  %2522 = vmatprep.subr.mxu0 0.0
  %2523 = vmatpush1.xpose.msra.mxu0 0.0
  %2524 = vmatprep.subr.mxu0 0.0
  %2525 = vmatpush1.xpose.msra.mxu0 0.0
  %2526 = vmatprep.subr.mxu0 0.0
  %2527 = vmatpush1.xpose.msra.mxu0 0.0
  %2528 = vmatprep.subr.mxu0 0.0
  %2529 = vmatpush1.xpose.msra.mxu0 0.0
  %2530 = vmatprep.subr.mxu0 0.0
  %2531 = vmatpush1.xpose.msra.mxu0 0.0
  %2532 = vmatprep.subr.mxu0 0.0
  %2533 = vmatpush1.xpose.msra.mxu0 0.0
  %2534 = vmatprep.mubr.f32.mxu0 0.0
  %2535 = vmatmul.mubr.f32.gmra.mrb[0].mxu0 %v2406
  %v2536 = vpop.f32.mrb[0].mxu0
  %v2537 = vadd.f32 %v170, %v2536
  %v2538 = vpop.f32.mrb[0].mxu0
  %2539 = vmatprep.mubr.f32.mxu0 0.0
  %2540 = vmatmul.mubr.f32.gmra.mrb[0].mxu0 %v2408
  %v2541 = vpop.f32.mrb[0].mxu0
  %v2542 = vadd.f32 %v171, %v2541
  %v2543 = vpop.f32.mrb[0].mxu0
  %2544 = vmatprep.mubr.f32.mxu0 0.0
  %2545 = vmatmul.mubr.f32.gmra.mrb[0].mxu0 %v2410
  %v2546 = vpop.f32.mrb[0].mxu0
  %v2547 = vadd.f32 %v172, %v2546
  %v2548 = vpop.f32.mrb[0].mxu0
  %2549 = vmatprep.mubr.f32.mxu0 0.0
  %2550 = vmatmul.mubr.f32.gmra.mrb[0].mxu0 %v2412
  %v2551 = vpop.f32.mrb[0].mxu0
  %v2552 = vadd.f32 %v173, %v2551
  %v2553 = vpop.f32.mrb[0].mxu0
  %2554 = vmatprep.mubr.f32.mxu0 0.0
  %2555 = vmatmul.mubr.f32.gmra.mrb[0].mxu0 %v2414
  %v2556 = vpop.f32.mrb[0].mxu0
  %v2557 = vadd.f32 %v174, %v2556
  %v2558 = vpop.f32.mrb[0].mxu0
  %2559 = vmatprep.mubr.f32.mxu0 0.0
  %2560 = vmatmul.mubr.f32.gmra.mrb[0].mxu0 %v2416
  %v2561 = vpop.f32.mrb[0].mxu0
  %v2562 = vadd.f32 %v175, %v2561
  %v2563 = vpop.f32.mrb[0].mxu0
  %2564 = vmatprep.mubr.f32.mxu0 0.0
  %2565 = vmatmul.mubr.f32.gmra.mrb[0].mxu0 %v2418
  %v2566 = vpop.f32.mrb[0].mxu0
  %v2567 = vadd.f32 %v176, %v2566
  %v2568 = vpop.f32.mrb[0].mxu0
  %2569 = vmatprep.mubr.f32.mxu0 0.0
  %2570 = vmatmul.mubr.f32.gmra.mrb[0].mxu0 %v2420
  %v2571 = vpop.f32.mrb[0].mxu0
  %v2572 = vadd.f32 %v177, %v2571
  %v2573 = vpop.f32.mrb[0].mxu0
  %2574 = vmatprep.mubr.f32.mxu0 0.0
  %2575 = vmatmul.mubr.f32.gmra.mrb[0].mxu0 %v2422
  %v2576 = vpop.f32.mrb[0].mxu0
  %v2577 = vadd.f32 %v178, %v2576
  %v2578 = vpop.f32.mrb[0].mxu0
  %2579 = vmatprep.mubr.f32.mxu0 0.0
  %2580 = vmatmul.mubr.f32.gmra.mrb[0].mxu0 %v2424
  %v2581 = vpop.f32.mrb[0].mxu0
  %v2582 = vadd.f32 %v179, %v2581
  %v2583 = vpop.f32.mrb[0].mxu0
  %2584 = vmatprep.mubr.f32.mxu0 0.0
  %2585 = vmatmul.mubr.f32.gmra.mrb[0].mxu0 %v2426
  %v2586 = vpop.f32.mrb[0].mxu0
  %v2587 = vadd.f32 %v180, %v2586
  %v2588 = vpop.f32.mrb[0].mxu0
  %2589 = vmatprep.mubr.f32.mxu0 0.0
  %2590 = vmatmul.mubr.f32.gmra.mrb[0].mxu0 %v2428
  %v2591 = vpop.f32.mrb[0].mxu0
  %v2592 = vadd.f32 %v181, %v2591
  %v2593 = vpop.f32.mrb[0].mxu0
  %2594 = vmatprep.mubr.f32.mxu0 0.0
  %2595 = vmatmul.mubr.f32.gmra.mrb[0].mxu0 %v2430
  %v2596 = vpop.f32.mrb[0].mxu0
  %v2597 = vadd.f32 %v182, %v2596
  %v2598 = vpop.f32.mrb[0].mxu0
  %2599 = vmatprep.mubr.f32.mxu0 0.0
  %2600 = vmatmul.mubr.f32.gmra.mrb[0].mxu0 %v2432
  %v2601 = vpop.f32.mrb[0].mxu0
  %v2602 = vadd.f32 %v183, %v2601
  %v2603 = vpop.f32.mrb[0].mxu0
  %2604 = vmatprep.mubr.f32.mxu0 0.0
  %2605 = vmatmul.mubr.f32.gmra.mrb[0].mxu0 %v2434
  %v2606 = vpop.f32.mrb[0].mxu0
  %v2607 = vadd.f32 %v184, %v2606
  %v2608 = vpop.f32.mrb[0].mxu0
  %2609 = vmatprep.mubr.f32.mxu0 0.0
  %2610 = vmatmul.mubr.f32.gmra.mrb[0].mxu0 %v2436
  %v2611 = vpop.f32.mrb[0].mxu0
  %v2612 = vadd.f32 %v185, %v2611
  %v2613 = vpop.f32.mrb[0].mxu0
  %2614 = vdwg.mxu0
  %2615 = vmax.xlane.f32.xlu0 %v2537
  %v2616 = vpop.xlane.xlu0 %2615
  %2617 = vmax.xlane.f32.xlu0 %v2542
  %v2618 = vpop.xlane.xlu0 %2617
  %2619 = vmax.xlane.f32.xlu0 %v2547
  %v2620 = vpop.xlane.xlu0 %2619
  %2621 = vmax.xlane.f32.xlu0 %v2552
  %v2622 = vpop.xlane.xlu0 %2621
  %2623 = vmax.xlane.f32.xlu0 %v2557
  %v2624 = vpop.xlane.xlu0 %2623
  %2625 = vmax.xlane.f32.xlu0 %v2562
  %v2626 = vpop.xlane.xlu0 %2625
  %2627 = vmax.xlane.f32.xlu0 %v2567
  %v2628 = vpop.xlane.xlu0 %2627
  %2629 = vmax.xlane.f32.xlu0 %v2572
  %v2630 = vpop.xlane.xlu0 %2629
  %2631 = vmax.xlane.f32.xlu0 %v2577
  %v2632 = vpop.xlane.xlu0 %2631
  %2633 = vmax.xlane.f32.xlu0 %v2582
  %v2634 = vpop.xlane.xlu0 %2633
  %2635 = vmax.xlane.f32.xlu0 %v2587
  %v2636 = vpop.xlane.xlu0 %2635
  %2637 = vmax.xlane.f32.xlu0 %v2592
  %v2638 = vpop.xlane.xlu0 %2637
  %2639 = vmax.xlane.f32.xlu0 %v2597
  %v2640 = vpop.xlane.xlu0 %2639
  %2641 = vmax.xlane.f32.xlu0 %v2602
  %v2642 = vpop.xlane.xlu0 %2641
  %2643 = vmax.xlane.f32.xlu0 %v2607
  %v2644 = vpop.xlane.xlu0 %2643
  %2645 = vmax.xlane.f32.xlu0 %v2612
  %v2646 = vpop.xlane.xlu0 %2645
  %v2647 = vsub.f32 %v2537, %v2616
  %v2648 = vsub.f32 %v2542, %v2618
  %v2649 = vsub.f32 %v2547, %v2620
  %v2650 = vsub.f32 %v2552, %v2622
  %v2651 = vsub.f32 %v2557, %v2624
  %v2652 = vsub.f32 %v2562, %v2626
  %v2653 = vsub.f32 %v2567, %v2628
  %v2654 = vsub.f32 %v2572, %v2630
  %v2655 = vsub.f32 %v2577, %v2632
  %v2656 = vsub.f32 %v2582, %v2634
  %v2657 = vsub.f32 %v2587, %v2636
  %v2658 = vsub.f32 %v2592, %v2638
  %v2659 = vsub.f32 %v2597, %v2640
  %v2660 = vsub.f32 %v2602, %v2642
  %v2661 = vsub.f32 %v2607, %v2644
  %v2662 = vsub.f32 %v2612, %v2646
  %v2663 = vmul.f32 %v2647, 1.442695
  %v2664 = vpow.pop %v2663
  %v2665 = vmul.f32 %v2648, 1.442695
  %v2666 = vpow.pop %v2665
  %v2667 = vmul.f32 %v2649, 1.442695
  %v2668 = vpow.pop %v2667
  %v2669 = vmul.f32 %v2650, 1.442695
  %v2670 = vpow.pop %v2669
  %v2671 = vmul.f32 %v2651, 1.442695
  %v2672 = vpow.pop %v2671
  %v2673 = vmul.f32 %v2652, 1.442695
  %v2674 = vpow.pop %v2673
  %v2675 = vmul.f32 %v2653, 1.442695
  %v2676 = vpow.pop %v2675
  %v2677 = vmul.f32 %v2654, 1.442695
  %v2678 = vpow.pop %v2677
  %v2679 = vmul.f32 %v2655, 1.442695
  %v2680 = vpow.pop %v2679
  %v2681 = vmul.f32 %v2656, 1.442695
  %v2682 = vpow.pop %v2681
  %v2683 = vmul.f32 %v2657, 1.442695
  %v2684 = vpow.pop %v2683
  %v2685 = vmul.f32 %v2658, 1.442695
  %v2686 = vpow.pop %v2685
  %v2687 = vmul.f32 %v2659, 1.442695
  %v2688 = vpow.pop %v2687
  %v2689 = vmul.f32 %v2660, 1.442695
  %v2690 = vpow.pop %v2689
  %v2691 = vmul.f32 %v2661, 1.442695
  %v2692 = vpow.pop %v2691
  %v2693 = vmul.f32 %v2662, 1.442695
  %v2694 = vpow.pop %v2693
  %2695 = vadd.xlane.f32.xlu0 %v2664
  %v2696 = vpop.xlane.xlu0 %2695
  %2697 = vadd.xlane.f32.xlu0 %v2666
  %v2698 = vpop.xlane.xlu0 %2697
  %2699 = vadd.xlane.f32.xlu0 %v2668
  %v2700 = vpop.xlane.xlu0 %2699
  %2701 = vadd.xlane.f32.xlu0 %v2670
  %v2702 = vpop.xlane.xlu0 %2701
  %2703 = vadd.xlane.f32.xlu0 %v2672
  %v2704 = vpop.xlane.xlu0 %2703
  %2705 = vadd.xlane.f32.xlu0 %v2674
  %v2706 = vpop.xlane.xlu0 %2705
  %2707 = vadd.xlane.f32.xlu0 %v2676
  %v2708 = vpop.xlane.xlu0 %2707
  %2709 = vadd.xlane.f32.xlu0 %v2678
  %v2710 = vpop.xlane.xlu0 %2709
  %2711 = vadd.xlane.f32.xlu0 %v2680
  %v2712 = vpop.xlane.xlu0 %2711
  %2713 = vadd.xlane.f32.xlu0 %v2682
  %v2714 = vpop.xlane.xlu0 %2713
  %2715 = vadd.xlane.f32.xlu0 %v2684
  %v2716 = vpop.xlane.xlu0 %2715
  %2717 = vadd.xlane.f32.xlu0 %v2686
  %v2718 = vpop.xlane.xlu0 %2717
  %2719 = vadd.xlane.f32.xlu0 %v2688
  %v2720 = vpop.xlane.xlu0 %2719
  %2721 = vadd.xlane.f32.xlu0 %v2690
  %v2722 = vpop.xlane.xlu0 %2721
  %2723 = vadd.xlane.f32.xlu0 %v2692
  %v2724 = vpop.xlane.xlu0 %2723
  %2725 = vadd.xlane.f32.xlu0 %v2694
  %v2726 = vpop.xlane.xlu0 %2725
  %v2727 = vrcp.pop %v2696
  %v2728 = vrcp.pop %v2698
  %v2729 = vrcp.pop %v2700
  %v2730 = vrcp.pop %v2702
  %v2731 = vrcp.pop %v2704
  %v2732 = vrcp.pop %v2706
  %v2733 = vrcp.pop %v2708
  %v2734 = vrcp.pop %v2710
  %v2735 = vrcp.pop %v2712
  %v2736 = vrcp.pop %v2714
  %v2737 = vrcp.pop %v2716
  %v2738 = vrcp.pop %v2718
  %v2739 = vrcp.pop %v2720
  %v2740 = vrcp.pop %v2722
  %v2741 = vrcp.pop %v2724
  %v2742 = vrcp.pop %v2726
  %v2743 = vmul.f32 %v2664, %v2727
  %v2744 = vmul.f32 %v2666, %v2728
  %v2745 = vmul.f32 %v2668, %v2729
  %v2746 = vmul.f32 %v2670, %v2730
  %v2747 = vmul.f32 %v2672, %v2731
  %v2748 = vmul.f32 %v2674, %v2732
  %v2749 = vmul.f32 %v2676, %v2733
  %v2750 = vmul.f32 %v2678, %v2734
  %v2751 = vmul.f32 %v2680, %v2735
  %v2752 = vmul.f32 %v2682, %v2736
  %v2753 = vmul.f32 %v2684, %v2737
  %v2754 = vmul.f32 %v2686, %v2738
  %v2755 = vmul.f32 %v2688, %v2739
  %v2756 = vmul.f32 %v2690, %v2740
  %v2757 = vmul.f32 %v2692, %v2741
  %v2758 = vmul.f32 %v2694, %v2742
  %2759 = vrot.lane.b32.xlu0 %v2279, 64
  %v2760 = vpop.permute.xlu0 %2759
  %2761 = vrot.lane.b32.xlu0 %v2284, 64
  %v2762 = vpop.permute.xlu0 %2761
  %2763 = vrot.lane.b32.xlu0 %v2289, 64
  %v2764 = vpop.permute.xlu0 %2763
  %2765 = vrot.lane.b32.xlu0 %v2294, 64
  %v2766 = vpop.permute.xlu0 %2765
  %2767 = vrot.lane.b32.xlu0 %v2299, 64
  %v2768 = vpop.permute.xlu0 %2767
  %2769 = vrot.lane.b32.xlu0 %v2304, 64
  %v2770 = vpop.permute.xlu0 %2769
  %2771 = vrot.lane.b32.xlu0 %v2309, 64
  %v2772 = vpop.permute.xlu0 %2771
  %2773 = vrot.lane.b32.xlu0 %v2314, 64
  %v2774 = vpop.permute.xlu0 %2773
  %2775 = vrot.lane.b32.xlu0 %v2319, 64
  %v2776 = vpop.permute.xlu0 %2775
  %2777 = vrot.lane.b32.xlu0 %v2324, 64
  %v2778 = vpop.permute.xlu0 %2777
  %2779 = vrot.lane.b32.xlu0 %v2329, 64
  %v2780 = vpop.permute.xlu0 %2779
  %2781 = vrot.lane.b32.xlu0 %v2334, 64
  %v2782 = vpop.permute.xlu0 %2781
  %2783 = vrot.lane.b32.xlu0 %v2339, 64
  %v2784 = vpop.permute.xlu0 %2783
  %2785 = vrot.lane.b32.xlu0 %v2344, 64
  %v2786 = vpop.permute.xlu0 %2785
  %2787 = vrot.lane.b32.xlu0 %v2349, 64
  %v2788 = vpop.permute.xlu0 %2787
  %2789 = vrot.lane.b32.xlu0 %v2354, 64
  %v2790 = vpop.permute.xlu0 %2789
  %2807 = vmatprep.subr.mxu0 0.0
  %2808 = vmatpush1.msra.mxu0 %v2760
  %2809 = vmatprep.subr.mxu0 0.0
  %2810 = vmatpush1.msra.mxu0 %v2762
  %2811 = vmatprep.subr.mxu0 0.0
  %2812 = vmatpush1.msra.mxu0 %v2764
  %2813 = vmatprep.subr.mxu0 0.0
  %2814 = vmatpush1.msra.mxu0 %v2766
  %2815 = vmatprep.subr.mxu0 0.0
  %2816 = vmatpush1.msra.mxu0 %v2768
  %2817 = vmatprep.subr.mxu0 0.0
  %2818 = vmatpush1.msra.mxu0 %v2770
  %2819 = vmatprep.subr.mxu0 0.0
  %2820 = vmatpush1.msra.mxu0 %v2772
  %2821 = vmatprep.subr.mxu0 0.0
  %2822 = vmatpush1.msra.mxu0 %v2774
  %2823 = vmatprep.subr.mxu0 0.0
  %2824 = vmatpush1.msra.mxu0 %v2776
  %2825 = vmatprep.subr.mxu0 0.0
  %2826 = vmatpush1.msra.mxu0 %v2778
  %2827 = vmatprep.subr.mxu0 0.0
  %2828 = vmatpush1.msra.mxu0 %v2780
  %2829 = vmatprep.subr.mxu0 0.0
  %2830 = vmatpush1.msra.mxu0 %v2782
  %2831 = vmatprep.subr.mxu0 0.0
  %2832 = vmatpush1.msra.mxu0 %v2784
  %2833 = vmatprep.subr.mxu0 0.0
  %2834 = vmatpush1.msra.mxu0 %v2786
  %2835 = vmatprep.subr.mxu0 0.0
  %2836 = vmatpush1.msra.mxu0 %v2788
  %2837 = vmatprep.subr.mxu0 0.0
  %2838 = vmatpush1.msra.mxu0 %v2790
  %2839 = vmatprep.subr.mxu0 0.0
  %2840 = vmatpush1.msra.mxu0 0.0
  %2841 = vmatprep.subr.mxu0 0.0
  %2842 = vmatpush1.msra.mxu0 0.0
  %2843 = vmatprep.subr.mxu0 0.0
  %2844 = vmatpush1.msra.mxu0 0.0
  %2845 = vmatprep.subr.mxu0 0.0
  %2846 = vmatpush1.msra.mxu0 0.0
  %2847 = vmatprep.subr.mxu0 0.0
  %2848 = vmatpush1.msra.mxu0 0.0
  %2849 = vmatprep.subr.mxu0 0.0
  %2850 = vmatpush1.msra.mxu0 0.0
  %2851 = vmatprep.subr.mxu0 0.0
  %2852 = vmatpush1.msra.mxu0 0.0
  %2853 = vmatprep.subr.mxu0 0.0
  %2854 = vmatpush1.msra.mxu0 0.0
  %2855 = vmatprep.subr.mxu0 0.0
  %2856 = vmatpush1.msra.mxu0 0.0
  %2857 = vmatprep.subr.mxu0 0.0
  %2858 = vmatpush1.msra.mxu0 0.0
  %2859 = vmatprep.subr.mxu0 0.0
  %2860 = vmatpush1.msra.mxu0 0.0
  %2861 = vmatprep.subr.mxu0 0.0
  %2862 = vmatpush1.msra.mxu0 0.0
  %2863 = vmatprep.subr.mxu0 0.0
  %2864 = vmatpush1.msra.mxu0 0.0
  %2865 = vmatprep.subr.mxu0 0.0
  %2866 = vmatpush1.msra.mxu0 0.0
  %2867 = vmatprep.subr.mxu0 0.0
  %2868 = vmatpush1.msra.mxu0 0.0
  %2869 = vmatprep.subr.mxu0 0.0
  %2870 = vmatpush1.msra.mxu0 0.0
  %2871 = vmatprep.mubr.f32.mxu0 0.0
  %2872 = vmatmul.mubr.f32.gmra.mrb[0].mxu0 %v2743
  %v2873 = vpop.f32.mrb[0].mxu0
  %v2874 = vadd.f32 0.0, %v2873
  %v2875 = vpop.f32.mrb[0].mxu0
  %2876 = vmatprep.mubr.f32.mxu0 0.0
  %2877 = vmatmul.mubr.f32.gmra.mrb[0].mxu0 %v2744
  %v2878 = vpop.f32.mrb[0].mxu0
  %v2879 = vadd.f32 0.0, %v2878
  %v2880 = vpop.f32.mrb[0].mxu0
  %2881 = vmatprep.mubr.f32.mxu0 0.0
  %2882 = vmatmul.mubr.f32.gmra.mrb[0].mxu0 %v2745
  %v2883 = vpop.f32.mrb[0].mxu0
  %v2884 = vadd.f32 0.0, %v2883
  %v2885 = vpop.f32.mrb[0].mxu0
  %2886 = vmatprep.mubr.f32.mxu0 0.0
  %2887 = vmatmul.mubr.f32.gmra.mrb[0].mxu0 %v2746
  %v2888 = vpop.f32.mrb[0].mxu0
  %v2889 = vadd.f32 0.0, %v2888
  %v2890 = vpop.f32.mrb[0].mxu0
  %2891 = vmatprep.mubr.f32.mxu0 0.0
  %2892 = vmatmul.mubr.f32.gmra.mrb[0].mxu0 %v2747
  %v2893 = vpop.f32.mrb[0].mxu0
  %v2894 = vadd.f32 0.0, %v2893
  %v2895 = vpop.f32.mrb[0].mxu0
  %2896 = vmatprep.mubr.f32.mxu0 0.0
  %2897 = vmatmul.mubr.f32.gmra.mrb[0].mxu0 %v2748
  %v2898 = vpop.f32.mrb[0].mxu0
  %v2899 = vadd.f32 0.0, %v2898
  %v2900 = vpop.f32.mrb[0].mxu0
  %2901 = vmatprep.mubr.f32.mxu0 0.0
  %2902 = vmatmul.mubr.f32.gmra.mrb[0].mxu0 %v2749
  %v2903 = vpop.f32.mrb[0].mxu0
  %v2904 = vadd.f32 0.0, %v2903
  %v2905 = vpop.f32.mrb[0].mxu0
  %2906 = vmatprep.mubr.f32.mxu0 0.0
  %2907 = vmatmul.mubr.f32.gmra.mrb[0].mxu0 %v2750
  %v2908 = vpop.f32.mrb[0].mxu0
  %v2909 = vadd.f32 0.0, %v2908
  %v2910 = vpop.f32.mrb[0].mxu0
  %2911 = vmatprep.mubr.f32.mxu0 0.0
  %2912 = vmatmul.mubr.f32.gmra.mrb[0].mxu0 %v2751
  %v2913 = vpop.f32.mrb[0].mxu0
  %v2914 = vadd.f32 0.0, %v2913
  %v2915 = vpop.f32.mrb[0].mxu0
  %2916 = vmatprep.mubr.f32.mxu0 0.0
  %2917 = vmatmul.mubr.f32.gmra.mrb[0].mxu0 %v2752
  %v2918 = vpop.f32.mrb[0].mxu0
  %v2919 = vadd.f32 0.0, %v2918
  %v2920 = vpop.f32.mrb[0].mxu0
  %2921 = vmatprep.mubr.f32.mxu0 0.0
  %2922 = vmatmul.mubr.f32.gmra.mrb[0].mxu0 %v2753
  %v2923 = vpop.f32.mrb[0].mxu0
  %v2924 = vadd.f32 0.0, %v2923
  %v2925 = vpop.f32.mrb[0].mxu0
  %2926 = vmatprep.mubr.f32.mxu0 0.0
  %2927 = vmatmul.mubr.f32.gmra.mrb[0].mxu0 %v2754
  %v2928 = vpop.f32.mrb[0].mxu0
  %v2929 = vadd.f32 0.0, %v2928
  %v2930 = vpop.f32.mrb[0].mxu0
  %2931 = vmatprep.mubr.f32.mxu0 0.0
  %2932 = vmatmul.mubr.f32.gmra.mrb[0].mxu0 %v2755
  %v2933 = vpop.f32.mrb[0].mxu0
  %v2934 = vadd.f32 0.0, %v2933
  %v2935 = vpop.f32.mrb[0].mxu0
  %2936 = vmatprep.mubr.f32.mxu0 0.0
  %2937 = vmatmul.mubr.f32.gmra.mrb[0].mxu0 %v2756
  %v2938 = vpop.f32.mrb[0].mxu0
  %v2939 = vadd.f32 0.0, %v2938
  %v2940 = vpop.f32.mrb[0].mxu0
  %2941 = vmatprep.mubr.f32.mxu0 0.0
  %2942 = vmatmul.mubr.f32.gmra.mrb[0].mxu0 %v2757
  %v2943 = vpop.f32.mrb[0].mxu0
  %v2944 = vadd.f32 0.0, %v2943
  %v2945 = vpop.f32.mrb[0].mxu0
  %2946 = vmatprep.mubr.f32.mxu0 0.0
  %2947 = vmatmul.mubr.f32.gmra.mrb[0].mxu0 %v2758
  %v2948 = vpop.f32.mrb[0].mxu0
  %v2949 = vadd.f32 0.0, %v2948
  %v2950 = vpop.f32.mrb[0].mxu0
  %2951 = vdwg.mxu0
  %2952 = vst.msk [vmem:[#allocation2] sm:$0xff] %vm2405, %v2874
  %2953 = vst.msk [vmem:[#allocation2 + $0x8] sm:$0xff] %vm2405, %v2879
  %2954 = vst.msk [vmem:[#allocation2 + $0x10] sm:$0xff] %vm2405, %v2884
  %2955 = vst.msk [vmem:[#allocation2 + $0x18] sm:$0xff] %vm2405, %v2889
  %2956 = vst.msk [vmem:[#allocation2 + $0x20] sm:$0xff] %vm2405, %v2894
  %2957 = vst.msk [vmem:[#allocation2 + $0x28] sm:$0xff] %vm2405, %v2899
  %2958 = vst.msk [vmem:[#allocation2 + $0x30] sm:$0xff] %vm2405, %v2904
  %2959 = vst.msk [vmem:[#allocation2 + $0x38] sm:$0xff] %vm2405, %v2909
  %2960 = vst.msk [vmem:[#allocation2 + $0x40] sm:$0xff] %vm2405, %v2914
  %2961 = vst.msk [vmem:[#allocation2 + $0x48] sm:$0xff] %vm2405, %v2919
  %2962 = vst.msk [vmem:[#allocation2 + $0x50] sm:$0xff] %vm2405, %v2924
  %2963 = vst.msk [vmem:[#allocation2 + $0x58] sm:$0xff] %vm2405, %v2929
  %2964 = vst.msk [vmem:[#allocation2 + $0x60] sm:$0xff] %vm2405, %v2934
  %2965 = vst.msk [vmem:[#allocation2 + $0x68] sm:$0xff] %vm2405, %v2939
  %2966 = vst.msk [vmem:[#allocation2 + $0x70] sm:$0xff] %vm2405, %v2944
  %2967 = vst.msk [vmem:[#allocation2 + $0x78] sm:$0xff] %vm2405, %v2949
  %2968 = vrot.lane.b32.xlu0 %v2279, 120
  %v2969 = vpop.permute.xlu0 %2968
  %2970 = vrot.lane.b32.xlu0 %v2284, 120
  %v2971 = vpop.permute.xlu0 %2970
  %2972 = vrot.lane.b32.xlu0 %v2289, 120
  %v2973 = vpop.permute.xlu0 %2972
  %2974 = vrot.lane.b32.xlu0 %v2294, 120
  %v2975 = vpop.permute.xlu0 %2974
  %2976 = vrot.lane.b32.xlu0 %v2299, 120
  %v2977 = vpop.permute.xlu0 %2976
  %2978 = vrot.lane.b32.xlu0 %v2304, 120
  %v2979 = vpop.permute.xlu0 %2978
  %2980 = vrot.lane.b32.xlu0 %v2309, 120
  %v2981 = vpop.permute.xlu0 %2980
  %2982 = vrot.lane.b32.xlu0 %v2314, 120
  %v2983 = vpop.permute.xlu0 %2982
  %2984 = vrot.lane.b32.xlu0 %v2319, 120
  %v2985 = vpop.permute.xlu0 %2984
  %2986 = vrot.lane.b32.xlu0 %v2324, 120
  %v2987 = vpop.permute.xlu0 %2986
  %2988 = vrot.lane.b32.xlu0 %v2329, 120
  %v2989 = vpop.permute.xlu0 %2988
  %2990 = vrot.lane.b32.xlu0 %v2334, 120
  %v2991 = vpop.permute.xlu0 %2990
  %2992 = vrot.lane.b32.xlu0 %v2339, 120
  %v2993 = vpop.permute.xlu0 %2992
  %2994 = vrot.lane.b32.xlu0 %v2344, 120
  %v2995 = vpop.permute.xlu0 %2994
  %2996 = vrot.lane.b32.xlu0 %v2349, 120
  %v2997 = vpop.permute.xlu0 %2996
  %2998 = vrot.lane.b32.xlu0 %v2354, 120
  %v2999 = vpop.permute.xlu0 %2998
  %3000 = vrot.lane.b32.xlu0 %v2279, 88
  %v3001 = vpop.permute.xlu0 %3000
  %3002 = vrot.lane.b32.xlu0 %v2284, 88
  %v3003 = vpop.permute.xlu0 %3002
  %3004 = vrot.lane.b32.xlu0 %v2289, 88
  %v3005 = vpop.permute.xlu0 %3004
  %3006 = vrot.lane.b32.xlu0 %v2294, 88
  %v3007 = vpop.permute.xlu0 %3006
  %3008 = vrot.lane.b32.xlu0 %v2299, 88
  %v3009 = vpop.permute.xlu0 %3008
  %3010 = vrot.lane.b32.xlu0 %v2304, 88
  %v3011 = vpop.permute.xlu0 %3010
  %3012 = vrot.lane.b32.xlu0 %v2309, 88
  %v3013 = vpop.permute.xlu0 %3012
  %3014 = vrot.lane.b32.xlu0 %v2314, 88
  %v3015 = vpop.permute.xlu0 %3014
  %3016 = vrot.lane.b32.xlu0 %v2319, 88
  %v3017 = vpop.permute.xlu0 %3016
  %3018 = vrot.lane.b32.xlu0 %v2324, 88
  %v3019 = vpop.permute.xlu0 %3018
  %3020 = vrot.lane.b32.xlu0 %v2329, 88
  %v3021 = vpop.permute.xlu0 %3020
  %3022 = vrot.lane.b32.xlu0 %v2334, 88
  %v3023 = vpop.permute.xlu0 %3022
  %3024 = vrot.lane.b32.xlu0 %v2339, 88
  %v3025 = vpop.permute.xlu0 %3024
  %3026 = vrot.lane.b32.xlu0 %v2344, 88
  %v3027 = vpop.permute.xlu0 %3026
  %3028 = vrot.lane.b32.xlu0 %v2349, 88
  %v3029 = vpop.permute.xlu0 %3028
  %3030 = vrot.lane.b32.xlu0 %v2354, 88
  %v3031 = vpop.permute.xlu0 %3030
  %v3032 = vsel %vm2405, %v2969, 0
  %v3034 = vsel %vm2405, %v2971, 0
  %v3036 = vsel %vm2405, %v2973, 0
  %v3038 = vsel %vm2405, %v2975, 0
  %v3040 = vsel %vm2405, %v2977, 0
  %v3042 = vsel %vm2405, %v2979, 0
  %v3044 = vsel %vm2405, %v2981, 0
  %v3046 = vsel %vm2405, %v2983, 0
  %v3048 = vsel %vm2405, %v2985, 0
  %v3050 = vsel %vm2405, %v2987, 0
  %v3052 = vsel %vm2405, %v2989, 0
  %v3054 = vsel %vm2405, %v2991, 0
  %v3056 = vsel %vm2405, %v2993, 0
  %v3058 = vsel %vm2405, %v2995, 0
  %v3060 = vsel %vm2405, %v2997, 0
  %v3062 = vsel %vm2405, %v2999, 0
  %v3064 = vsel %vm2405, %v3001, 0
  %v3066 = vsel %vm2405, %v3003, 0
  %v3068 = vsel %vm2405, %v3005, 0
  %v3070 = vsel %vm2405, %v3007, 0
  %v3072 = vsel %vm2405, %v3009, 0
  %v3074 = vsel %vm2405, %v3011, 0
  %v3076 = vsel %vm2405, %v3013, 0
  %v3078 = vsel %vm2405, %v3015, 0
  %v3080 = vsel %vm2405, %v3017, 0
  %v3082 = vsel %vm2405, %v3019, 0
  %v3084 = vsel %vm2405, %v3021, 0
  %v3086 = vsel %vm2405, %v3023, 0
  %v3088 = vsel %vm2405, %v3025, 0
  %v3090 = vsel %vm2405, %v3027, 0
  %v3092 = vsel %vm2405, %v3029, 0
  %v3094 = vsel %vm2405, %v3031, 0
  %3096 = vmatprep.subr.mxu0 0.0
  %3097 = vmatpush1.xpose.msra.mxu0 %v3064
  %3098 = vmatprep.subr.mxu0 0.0
  %3099 = vmatpush1.xpose.msra.mxu0 %v3066
  %3100 = vmatprep.subr.mxu0 0.0
  %3101 = vmatpush1.xpose.msra.mxu0 %v3068
  %3102 = vmatprep.subr.mxu0 0.0
  %3103 = vmatpush1.xpose.msra.mxu0 %v3070
  %3104 = vmatprep.subr.mxu0 0.0
  %3105 = vmatpush1.xpose.msra.mxu0 %v3072
  %3106 = vmatprep.subr.mxu0 0.0
  %3107 = vmatpush1.xpose.msra.mxu0 %v3074
  %3108 = vmatprep.subr.mxu0 0.0
  %3109 = vmatpush1.xpose.msra.mxu0 %v3076
  %3110 = vmatprep.subr.mxu0 0.0
  %3111 = vmatpush1.xpose.msra.mxu0 %v3078
  %3112 = vmatprep.subr.mxu0 0.0
  %3113 = vmatpush1.xpose.msra.mxu0 %v3080
  %3114 = vmatprep.subr.mxu0 0.0
  %3115 = vmatpush1.xpose.msra.mxu0 %v3082
  %3116 = vmatprep.subr.mxu0 0.0
  %3117 = vmatpush1.xpose.msra.mxu0 %v3084
  %3118 = vmatprep.subr.mxu0 0.0
  %3119 = vmatpush1.xpose.msra.mxu0 %v3086
  %3120 = vmatprep.subr.mxu0 0.0
  %3121 = vmatpush1.xpose.msra.mxu0 %v3088
  %3122 = vmatprep.subr.mxu0 0.0
  %3123 = vmatpush1.xpose.msra.mxu0 %v3090
  %3124 = vmatprep.subr.mxu0 0.0
  %3125 = vmatpush1.xpose.msra.mxu0 %v3092
  %3126 = vmatprep.subr.mxu0 0.0
  %3127 = vmatpush1.xpose.msra.mxu0 %v3094
  %3128 = vmatprep.subr.mxu0 0.0
  %3129 = vmatpush1.xpose.msra.mxu0 0.0
  %3130 = vmatprep.subr.mxu0 0.0
  %3131 = vmatpush1.xpose.msra.mxu0 0.0
  %3132 = vmatprep.subr.mxu0 0.0
  %3133 = vmatpush1.xpose.msra.mxu0 0.0
  %3134 = vmatprep.subr.mxu0 0.0
  %3135 = vmatpush1.xpose.msra.mxu0 0.0
  %3136 = vmatprep.subr.mxu0 0.0
  %3137 = vmatpush1.xpose.msra.mxu0 0.0
  %3138 = vmatprep.subr.mxu0 0.0
  %3139 = vmatpush1.xpose.msra.mxu0 0.0
  %3140 = vmatprep.subr.mxu0 0.0
  %3141 = vmatpush1.xpose.msra.mxu0 0.0
  %3142 = vmatprep.subr.mxu0 0.0
  %3143 = vmatpush1.xpose.msra.mxu0 0.0
  %3144 = vmatprep.subr.mxu0 0.0
  %3145 = vmatpush1.xpose.msra.mxu0 0.0
  %3146 = vmatprep.subr.mxu0 0.0
  %3147 = vmatpush1.xpose.msra.mxu0 0.0
  %3148 = vmatprep.subr.mxu0 0.0
  %3149 = vmatpush1.xpose.msra.mxu0 0.0
  %3150 = vmatprep.subr.mxu0 0.0
  %3151 = vmatpush1.xpose.msra.mxu0 0.0
  %3152 = vmatprep.subr.mxu0 0.0
  %3153 = vmatpush1.xpose.msra.mxu0 0.0
  %3154 = vmatprep.subr.mxu0 0.0
  %3155 = vmatpush1.xpose.msra.mxu0 0.0
  %3156 = vmatprep.subr.mxu0 0.0
  %3157 = vmatpush1.xpose.msra.mxu0 0.0
  %3158 = vmatprep.subr.mxu0 0.0
  %3159 = vmatpush1.xpose.msra.mxu0 0.0
  %3160 = vmatprep.mubr.f32.mxu0 0.0
  %3161 = vmatmul.mubr.f32.gmra.mrb[0].mxu0 %v3032
  %v3162 = vpop.f32.mrb[0].mxu0
  %v3163 = vadd.f32 %v170, %v3162
  %v3164 = vpop.f32.mrb[0].mxu0
  %3165 = vmatprep.mubr.f32.mxu0 0.0
  %3166 = vmatmul.mubr.f32.gmra.mrb[0].mxu0 %v3034
  %v3167 = vpop.f32.mrb[0].mxu0
  %v3168 = vadd.f32 %v171, %v3167
  %v3169 = vpop.f32.mrb[0].mxu0
  %3170 = vmatprep.mubr.f32.mxu0 0.0
  %3171 = vmatmul.mubr.f32.gmra.mrb[0].mxu0 %v3036
  %v3172 = vpop.f32.mrb[0].mxu0
  %v3173 = vadd.f32 %v172, %v3172
  %v3174 = vpop.f32.mrb[0].mxu0
  %3175 = vmatprep.mubr.f32.mxu0 0.0
  %3176 = vmatmul.mubr.f32.gmra.mrb[0].mxu0 %v3038
  %v3177 = vpop.f32.mrb[0].mxu0
  %v3178 = vadd.f32 %v173, %v3177
  %v3179 = vpop.f32.mrb[0].mxu0
  %3180 = vmatprep.mubr.f32.mxu0 0.0
  %3181 = vmatmul.mubr.f32.gmra.mrb[0].mxu0 %v3040
  %v3182 = vpop.f32.mrb[0].mxu0
  %v3183 = vadd.f32 %v174, %v3182
  %v3184 = vpop.f32.mrb[0].mxu0
  %3185 = vmatprep.mubr.f32.mxu0 0.0
  %3186 = vmatmul.mubr.f32.gmra.mrb[0].mxu0 %v3042
  %v3187 = vpop.f32.mrb[0].mxu0
  %v3188 = vadd.f32 %v175, %v3187
  %v3189 = vpop.f32.mrb[0].mxu0
  %3190 = vmatprep.mubr.f32.mxu0 0.0
  %3191 = vmatmul.mubr.f32.gmra.mrb[0].mxu0 %v3044
  %v3192 = vpop.f32.mrb[0].mxu0
  %v3193 = vadd.f32 %v176, %v3192
  %v3194 = vpop.f32.mrb[0].mxu0
  %3195 = vmatprep.mubr.f32.mxu0 0.0
  %3196 = vmatmul.mubr.f32.gmra.mrb[0].mxu0 %v3046
  %v3197 = vpop.f32.mrb[0].mxu0
  %v3198 = vadd.f32 %v177, %v3197
  %v3199 = vpop.f32.mrb[0].mxu0
  %3200 = vmatprep.mubr.f32.mxu0 0.0
  %3201 = vmatmul.mubr.f32.gmra.mrb[0].mxu0 %v3048
  %v3202 = vpop.f32.mrb[0].mxu0
  %v3203 = vadd.f32 %v178, %v3202
  %v3204 = vpop.f32.mrb[0].mxu0
  %3205 = vmatprep.mubr.f32.mxu0 0.0
  %3206 = vmatmul.mubr.f32.gmra.mrb[0].mxu0 %v3050
  %v3207 = vpop.f32.mrb[0].mxu0
  %v3208 = vadd.f32 %v179, %v3207
  %v3209 = vpop.f32.mrb[0].mxu0
  %3210 = vmatprep.mubr.f32.mxu0 0.0
  %3211 = vmatmul.mubr.f32.gmra.mrb[0].mxu0 %v3052
  %v3212 = vpop.f32.mrb[0].mxu0
  %v3213 = vadd.f32 %v180, %v3212
  %v3214 = vpop.f32.mrb[0].mxu0
  %3215 = vmatprep.mubr.f32.mxu0 0.0
  %3216 = vmatmul.mubr.f32.gmra.mrb[0].mxu0 %v3054
  %v3217 = vpop.f32.mrb[0].mxu0
  %v3218 = vadd.f32 %v181, %v3217
  %v3219 = vpop.f32.mrb[0].mxu0
  %3220 = vmatprep.mubr.f32.mxu0 0.0
  %3221 = vmatmul.mubr.f32.gmra.mrb[0].mxu0 %v3056
  %v3222 = vpop.f32.mrb[0].mxu0
  %v3223 = vadd.f32 %v182, %v3222
  %v3224 = vpop.f32.mrb[0].mxu0
  %3225 = vmatprep.mubr.f32.mxu0 0.0
  %3226 = vmatmul.mubr.f32.gmra.mrb[0].mxu0 %v3058
  %v3227 = vpop.f32.mrb[0].mxu0
  %v3228 = vadd.f32 %v183, %v3227
  %v3229 = vpop.f32.mrb[0].mxu0
  %3230 = vmatprep.mubr.f32.mxu0 0.0
  %3231 = vmatmul.mubr.f32.gmra.mrb[0].mxu0 %v3060
  %v3232 = vpop.f32.mrb[0].mxu0
  %v3233 = vadd.f32 %v184, %v3232
  %v3234 = vpop.f32.mrb[0].mxu0
  %3235 = vmatprep.mubr.f32.mxu0 0.0
  %3236 = vmatmul.mubr.f32.gmra.mrb[0].mxu0 %v3062
  %v3237 = vpop.f32.mrb[0].mxu0
  %v3238 = vadd.f32 %v185, %v3237
  %v3239 = vpop.f32.mrb[0].mxu0
  %3240 = vdwg.mxu0
  %3241 = vmax.xlane.f32.xlu0 %v3163
  %v3242 = vpop.xlane.xlu0 %3241
  %3243 = vmax.xlane.f32.xlu0 %v3168
  %v3244 = vpop.xlane.xlu0 %3243
  %3245 = vmax.xlane.f32.xlu0 %v3173
  %v3246 = vpop.xlane.xlu0 %3245
  %3247 = vmax.xlane.f32.xlu0 %v3178
  %v3248 = vpop.xlane.xlu0 %3247
  %3249 = vmax.xlane.f32.xlu0 %v3183
  %v3250 = vpop.xlane.xlu0 %3249
  %3251 = vmax.xlane.f32.xlu0 %v3188
  %v3252 = vpop.xlane.xlu0 %3251
  %3253 = vmax.xlane.f32.xlu0 %v3193
  %v3254 = vpop.xlane.xlu0 %3253
  %3255 = vmax.xlane.f32.xlu0 %v3198
  %v3256 = vpop.xlane.xlu0 %3255
  %3257 = vmax.xlane.f32.xlu0 %v3203
  %v3258 = vpop.xlane.xlu0 %3257
  %3259 = vmax.xlane.f32.xlu0 %v3208
  %v3260 = vpop.xlane.xlu0 %3259
  %3261 = vmax.xlane.f32.xlu0 %v3213
  %v3262 = vpop.xlane.xlu0 %3261
  %3263 = vmax.xlane.f32.xlu0 %v3218
  %v3264 = vpop.xlane.xlu0 %3263
  %3265 = vmax.xlane.f32.xlu0 %v3223
  %v3266 = vpop.xlane.xlu0 %3265
  %3267 = vmax.xlane.f32.xlu0 %v3228
  %v3268 = vpop.xlane.xlu0 %3267
  %3269 = vmax.xlane.f32.xlu0 %v3233
  %v3270 = vpop.xlane.xlu0 %3269
  %3271 = vmax.xlane.f32.xlu0 %v3238
  %v3272 = vpop.xlane.xlu0 %3271
  %v3273 = vsub.f32 %v3163, %v3242
  %v3274 = vsub.f32 %v3168, %v3244
  %v3275 = vsub.f32 %v3173, %v3246
  %v3276 = vsub.f32 %v3178, %v3248
  %v3277 = vsub.f32 %v3183, %v3250
  %v3278 = vsub.f32 %v3188, %v3252
  %v3279 = vsub.f32 %v3193, %v3254
  %v3280 = vsub.f32 %v3198, %v3256
  %v3281 = vsub.f32 %v3203, %v3258
  %v3282 = vsub.f32 %v3208, %v3260
  %v3283 = vsub.f32 %v3213, %v3262
  %v3284 = vsub.f32 %v3218, %v3264
  %v3285 = vsub.f32 %v3223, %v3266
  %v3286 = vsub.f32 %v3228, %v3268
  %v3287 = vsub.f32 %v3233, %v3270
  %v3288 = vsub.f32 %v3238, %v3272
  %v3289 = vmul.f32 %v3273, 1.442695
  %v3290 = vpow.pop %v3289
  %v3291 = vmul.f32 %v3274, 1.442695
  %v3292 = vpow.pop %v3291
  %v3293 = vmul.f32 %v3275, 1.442695
  %v3294 = vpow.pop %v3293
  %v3295 = vmul.f32 %v3276, 1.442695
  %v3296 = vpow.pop %v3295
  %v3297 = vmul.f32 %v3277, 1.442695
  %v3298 = vpow.pop %v3297
  %v3299 = vmul.f32 %v3278, 1.442695
  %v3300 = vpow.pop %v3299
  %v3301 = vmul.f32 %v3279, 1.442695
  %v3302 = vpow.pop %v3301
  %v3303 = vmul.f32 %v3280, 1.442695
  %v3304 = vpow.pop %v3303
  %v3305 = vmul.f32 %v3281, 1.442695
  %v3306 = vpow.pop %v3305
  %v3307 = vmul.f32 %v3282, 1.442695
  %v3308 = vpow.pop %v3307
  %v3309 = vmul.f32 %v3283, 1.442695
  %v3310 = vpow.pop %v3309
  %v3311 = vmul.f32 %v3284, 1.442695
  %v3312 = vpow.pop %v3311
  %v3313 = vmul.f32 %v3285, 1.442695
  %v3314 = vpow.pop %v3313
  %v3315 = vmul.f32 %v3286, 1.442695
  %v3316 = vpow.pop %v3315
  %v3317 = vmul.f32 %v3287, 1.442695
  %v3318 = vpow.pop %v3317
  %v3319 = vmul.f32 %v3288, 1.442695
  %v3320 = vpow.pop %v3319
  %3321 = vadd.xlane.f32.xlu0 %v3290
  %v3322 = vpop.xlane.xlu0 %3321
  %3323 = vadd.xlane.f32.xlu0 %v3292
  %v3324 = vpop.xlane.xlu0 %3323
  %3325 = vadd.xlane.f32.xlu0 %v3294
  %v3326 = vpop.xlane.xlu0 %3325
  %3327 = vadd.xlane.f32.xlu0 %v3296
  %v3328 = vpop.xlane.xlu0 %3327
  %3329 = vadd.xlane.f32.xlu0 %v3298
  %v3330 = vpop.xlane.xlu0 %3329
  %3331 = vadd.xlane.f32.xlu0 %v3300
  %v3332 = vpop.xlane.xlu0 %3331
  %3333 = vadd.xlane.f32.xlu0 %v3302
  %v3334 = vpop.xlane.xlu0 %3333
  %3335 = vadd.xlane.f32.xlu0 %v3304
  %v3336 = vpop.xlane.xlu0 %3335
  %3337 = vadd.xlane.f32.xlu0 %v3306
  %v3338 = vpop.xlane.xlu0 %3337
  %3339 = vadd.xlane.f32.xlu0 %v3308
  %v3340 = vpop.xlane.xlu0 %3339
  %3341 = vadd.xlane.f32.xlu0 %v3310
  %v3342 = vpop.xlane.xlu0 %3341
  %3343 = vadd.xlane.f32.xlu0 %v3312
  %v3344 = vpop.xlane.xlu0 %3343
  %3345 = vadd.xlane.f32.xlu0 %v3314
  %v3346 = vpop.xlane.xlu0 %3345
  %3347 = vadd.xlane.f32.xlu0 %v3316
  %v3348 = vpop.xlane.xlu0 %3347
  %3349 = vadd.xlane.f32.xlu0 %v3318
  %v3350 = vpop.xlane.xlu0 %3349
  %3351 = vadd.xlane.f32.xlu0 %v3320
  %v3352 = vpop.xlane.xlu0 %3351
  %v3353 = vrcp.pop %v3322
  %v3354 = vrcp.pop %v3324
  %v3355 = vrcp.pop %v3326
  %v3356 = vrcp.pop %v3328
  %v3357 = vrcp.pop %v3330
  %v3358 = vrcp.pop %v3332
  %v3359 = vrcp.pop %v3334
  %v3360 = vrcp.pop %v3336
  %v3361 = vrcp.pop %v3338
  %v3362 = vrcp.pop %v3340
  %v3363 = vrcp.pop %v3342
  %v3364 = vrcp.pop %v3344
  %v3365 = vrcp.pop %v3346
  %v3366 = vrcp.pop %v3348
  %v3367 = vrcp.pop %v3350
  %v3368 = vrcp.pop %v3352
  %v3369 = vmul.f32 %v3290, %v3353
  %v3370 = vmul.f32 %v3292, %v3354
  %v3371 = vmul.f32 %v3294, %v3355
  %v3372 = vmul.f32 %v3296, %v3356
  %v3373 = vmul.f32 %v3298, %v3357
  %v3374 = vmul.f32 %v3300, %v3358
  %v3375 = vmul.f32 %v3302, %v3359
  %v3376 = vmul.f32 %v3304, %v3360
  %v3377 = vmul.f32 %v3306, %v3361
  %v3378 = vmul.f32 %v3308, %v3362
  %v3379 = vmul.f32 %v3310, %v3363
  %v3380 = vmul.f32 %v3312, %v3364
  %v3381 = vmul.f32 %v3314, %v3365
  %v3382 = vmul.f32 %v3316, %v3366
  %v3383 = vmul.f32 %v3318, %v3367
  %v3384 = vmul.f32 %v3320, %v3368
  %3385 = vrot.lane.b32.xlu0 %v2279, 56
  %v3386 = vpop.permute.xlu0 %3385
  %3387 = vrot.lane.b32.xlu0 %v2284, 56
  %v3388 = vpop.permute.xlu0 %3387
  %3389 = vrot.lane.b32.xlu0 %v2289, 56
  %v3390 = vpop.permute.xlu0 %3389
  %3391 = vrot.lane.b32.xlu0 %v2294, 56
  %v3392 = vpop.permute.xlu0 %3391
  %3393 = vrot.lane.b32.xlu0 %v2299, 56
  %v3394 = vpop.permute.xlu0 %3393
  %3395 = vrot.lane.b32.xlu0 %v2304, 56
  %v3396 = vpop.permute.xlu0 %3395
  %3397 = vrot.lane.b32.xlu0 %v2309, 56
  %v3398 = vpop.permute.xlu0 %3397
  %3399 = vrot.lane.b32.xlu0 %v2314, 56
  %v3400 = vpop.permute.xlu0 %3399
  %3401 = vrot.lane.b32.xlu0 %v2319, 56
  %v3402 = vpop.permute.xlu0 %3401
  %3403 = vrot.lane.b32.xlu0 %v2324, 56
  %v3404 = vpop.permute.xlu0 %3403
  %3405 = vrot.lane.b32.xlu0 %v2329, 56
  %v3406 = vpop.permute.xlu0 %3405
  %3407 = vrot.lane.b32.xlu0 %v2334, 56
  %v3408 = vpop.permute.xlu0 %3407
  %3409 = vrot.lane.b32.xlu0 %v2339, 56
  %v3410 = vpop.permute.xlu0 %3409
  %3411 = vrot.lane.b32.xlu0 %v2344, 56
  %v3412 = vpop.permute.xlu0 %3411
  %3413 = vrot.lane.b32.xlu0 %v2349, 56
  %v3414 = vpop.permute.xlu0 %3413
  %3415 = vrot.lane.b32.xlu0 %v2354, 56
  %v3416 = vpop.permute.xlu0 %3415
  %3433 = vmatprep.subr.mxu0 0.0
  %3434 = vmatpush1.msra.mxu0 %v3386
  %3435 = vmatprep.subr.mxu0 0.0
  %3436 = vmatpush1.msra.mxu0 %v3388
  %3437 = vmatprep.subr.mxu0 0.0
  %3438 = vmatpush1.msra.mxu0 %v3390
  %3439 = vmatprep.subr.mxu0 0.0
  %3440 = vmatpush1.msra.mxu0 %v3392
  %3441 = vmatprep.subr.mxu0 0.0
  %3442 = vmatpush1.msra.mxu0 %v3394
  %3443 = vmatprep.subr.mxu0 0.0
  %3444 = vmatpush1.msra.mxu0 %v3396
  %3445 = vmatprep.subr.mxu0 0.0
  %3446 = vmatpush1.msra.mxu0 %v3398
  %3447 = vmatprep.subr.mxu0 0.0
  %3448 = vmatpush1.msra.mxu0 %v3400
  %3449 = vmatprep.subr.mxu0 0.0
  %3450 = vmatpush1.msra.mxu0 %v3402
  %3451 = vmatprep.subr.mxu0 0.0
  %3452 = vmatpush1.msra.mxu0 %v3404
  %3453 = vmatprep.subr.mxu0 0.0
  %3454 = vmatpush1.msra.mxu0 %v3406
  %3455 = vmatprep.subr.mxu0 0.0
  %3456 = vmatpush1.msra.mxu0 %v3408
  %3457 = vmatprep.subr.mxu0 0.0
  %3458 = vmatpush1.msra.mxu0 %v3410
  %3459 = vmatprep.subr.mxu0 0.0
  %3460 = vmatpush1.msra.mxu0 %v3412
  %3461 = vmatprep.subr.mxu0 0.0
  %3462 = vmatpush1.msra.mxu0 %v3414
  %3463 = vmatprep.subr.mxu0 0.0
  %3464 = vmatpush1.msra.mxu0 %v3416
  %3465 = vmatprep.subr.mxu0 0.0
  %3466 = vmatpush1.msra.mxu0 0.0
  %3467 = vmatprep.subr.mxu0 0.0
  %3468 = vmatpush1.msra.mxu0 0.0
  %3469 = vmatprep.subr.mxu0 0.0
  %3470 = vmatpush1.msra.mxu0 0.0
  %3471 = vmatprep.subr.mxu0 0.0
  %3472 = vmatpush1.msra.mxu0 0.0
  %3473 = vmatprep.subr.mxu0 0.0
  %3474 = vmatpush1.msra.mxu0 0.0
  %3475 = vmatprep.subr.mxu0 0.0
  %3476 = vmatpush1.msra.mxu0 0.0
  %3477 = vmatprep.subr.mxu0 0.0
  %3478 = vmatpush1.msra.mxu0 0.0
  %3479 = vmatprep.subr.mxu0 0.0
  %3480 = vmatpush1.msra.mxu0 0.0
  %3481 = vmatprep.subr.mxu0 0.0
  %3482 = vmatpush1.msra.mxu0 0.0
  %3483 = vmatprep.subr.mxu0 0.0
  %3484 = vmatpush1.msra.mxu0 0.0
  %3485 = vmatprep.subr.mxu0 0.0
  %3486 = vmatpush1.msra.mxu0 0.0
  %3487 = vmatprep.subr.mxu0 0.0
  %3488 = vmatpush1.msra.mxu0 0.0
  %3489 = vmatprep.subr.mxu0 0.0
  %3490 = vmatpush1.msra.mxu0 0.0
  %3491 = vmatprep.subr.mxu0 0.0
  %3492 = vmatpush1.msra.mxu0 0.0
  %3493 = vmatprep.subr.mxu0 0.0
  %3494 = vmatpush1.msra.mxu0 0.0
  %3495 = vmatprep.subr.mxu0 0.0
  %3496 = vmatpush1.msra.mxu0 0.0
  %3497 = vmatprep.mubr.f32.mxu0 0.0
  %3498 = vmatmul.mubr.f32.gmra.mrb[0].mxu0 %v3369
  %v3499 = vpop.f32.mrb[0].mxu0
  %v3500 = vadd.f32 0.0, %v3499
  %v3501 = vpop.f32.mrb[0].mxu0
  %3502 = vmatprep.mubr.f32.mxu0 0.0
  %3503 = vmatmul.mubr.f32.gmra.mrb[0].mxu0 %v3370
  %v3504 = vpop.f32.mrb[0].mxu0
  %v3505 = vadd.f32 0.0, %v3504
  %v3506 = vpop.f32.mrb[0].mxu0
  %3507 = vmatprep.mubr.f32.mxu0 0.0
  %3508 = vmatmul.mubr.f32.gmra.mrb[0].mxu0 %v3371
  %v3509 = vpop.f32.mrb[0].mxu0
  %v3510 = vadd.f32 0.0, %v3509
  %v3511 = vpop.f32.mrb[0].mxu0
  %3512 = vmatprep.mubr.f32.mxu0 0.0
  %3513 = vmatmul.mubr.f32.gmra.mrb[0].mxu0 %v3372
  %v3514 = vpop.f32.mrb[0].mxu0
  %v3515 = vadd.f32 0.0, %v3514
  %v3516 = vpop.f32.mrb[0].mxu0
  %3517 = vmatprep.mubr.f32.mxu0 0.0
  %3518 = vmatmul.mubr.f32.gmra.mrb[0].mxu0 %v3373
  %v3519 = vpop.f32.mrb[0].mxu0
  %v3520 = vadd.f32 0.0, %v3519
  %v3521 = vpop.f32.mrb[0].mxu0
  %3522 = vmatprep.mubr.f32.mxu0 0.0
  %3523 = vmatmul.mubr.f32.gmra.mrb[0].mxu0 %v3374
  %v3524 = vpop.f32.mrb[0].mxu0
  %v3525 = vadd.f32 0.0, %v3524
  %v3526 = vpop.f32.mrb[0].mxu0
  %3527 = vmatprep.mubr.f32.mxu0 0.0
  %3528 = vmatmul.mubr.f32.gmra.mrb[0].mxu0 %v3375
  %v3529 = vpop.f32.mrb[0].mxu0
  %v3530 = vadd.f32 0.0, %v3529
  %v3531 = vpop.f32.mrb[0].mxu0
  %3532 = vmatprep.mubr.f32.mxu0 0.0
  %3533 = vmatmul.mubr.f32.gmra.mrb[0].mxu0 %v3376
  %v3534 = vpop.f32.mrb[0].mxu0
  %v3535 = vadd.f32 0.0, %v3534
  %v3536 = vpop.f32.mrb[0].mxu0
  %3537 = vmatprep.mubr.f32.mxu0 0.0
  %3538 = vmatmul.mubr.f32.gmra.mrb[0].mxu0 %v3377
  %v3539 = vpop.f32.mrb[0].mxu0
  %v3540 = vadd.f32 0.0, %v3539
  %v3541 = vpop.f32.mrb[0].mxu0
  %3542 = vmatprep.mubr.f32.mxu0 0.0
  %3543 = vmatmul.mubr.f32.gmra.mrb[0].mxu0 %v3378
  %v3544 = vpop.f32.mrb[0].mxu0
  %v3545 = vadd.f32 0.0, %v3544
  %v3546 = vpop.f32.mrb[0].mxu0
  %3547 = vmatprep.mubr.f32.mxu0 0.0
  %3548 = vmatmul.mubr.f32.gmra.mrb[0].mxu0 %v3379
  %v3549 = vpop.f32.mrb[0].mxu0
  %v3550 = vadd.f32 0.0, %v3549
  %v3551 = vpop.f32.mrb[0].mxu0
  %3552 = vmatprep.mubr.f32.mxu0 0.0
  %3553 = vmatmul.mubr.f32.gmra.mrb[0].mxu0 %v3380
  %v3554 = vpop.f32.mrb[0].mxu0
  %v3555 = vadd.f32 0.0, %v3554
  %v3556 = vpop.f32.mrb[0].mxu0
  %3557 = vmatprep.mubr.f32.mxu0 0.0
  %3558 = vmatmul.mubr.f32.gmra.mrb[0].mxu0 %v3381
  %v3559 = vpop.f32.mrb[0].mxu0
  %v3560 = vadd.f32 0.0, %v3559
  %v3561 = vpop.f32.mrb[0].mxu0
  %3562 = vmatprep.mubr.f32.mxu0 0.0
  %3563 = vmatmul.mubr.f32.gmra.mrb[0].mxu0 %v3382
  %v3564 = vpop.f32.mrb[0].mxu0
  %v3565 = vadd.f32 0.0, %v3564
  %v3566 = vpop.f32.mrb[0].mxu0
  %3567 = vmatprep.mubr.f32.mxu0 0.0
  %3568 = vmatmul.mubr.f32.gmra.mrb[0].mxu0 %v3383
  %v3569 = vpop.f32.mrb[0].mxu0
  %v3570 = vadd.f32 0.0, %v3569
  %v3571 = vpop.f32.mrb[0].mxu0
  %3572 = vmatprep.mubr.f32.mxu0 0.0
  %3573 = vmatmul.mubr.f32.gmra.mrb[0].mxu0 %v3384
  %v3574 = vpop.f32.mrb[0].mxu0
  %v3575 = vadd.f32 0.0, %v3574
  %v3576 = vpop.f32.mrb[0].mxu0
  %3577 = vdwg.mxu0
  %3594 = vrot.lane.b32.xlu0 %v3500, 8
  %v3595 = vpop.permute.xlu0 %3594
  %3596 = vrot.lane.b32.xlu0 %v3505, 8
  %v3597 = vpop.permute.xlu0 %3596
  %3598 = vrot.lane.b32.xlu0 %v3510, 8
  %v3599 = vpop.permute.xlu0 %3598
  %3600 = vrot.lane.b32.xlu0 %v3515, 8
  %v3601 = vpop.permute.xlu0 %3600
  %3602 = vrot.lane.b32.xlu0 %v3520, 8
  %v3603 = vpop.permute.xlu0 %3602
  %3604 = vrot.lane.b32.xlu0 %v3525, 8
  %v3605 = vpop.permute.xlu0 %3604
  %3606 = vrot.lane.b32.xlu0 %v3530, 8
  %v3607 = vpop.permute.xlu0 %3606
  %3608 = vrot.lane.b32.xlu0 %v3535, 8
  %v3609 = vpop.permute.xlu0 %3608
  %3610 = vrot.lane.b32.xlu0 %v3540, 8
  %v3611 = vpop.permute.xlu0 %3610
  %3612 = vrot.lane.b32.xlu0 %v3545, 8
  %v3613 = vpop.permute.xlu0 %3612
  %3614 = vrot.lane.b32.xlu0 %v3550, 8
  %v3615 = vpop.permute.xlu0 %3614
  %3616 = vrot.lane.b32.xlu0 %v3555, 8
  %v3617 = vpop.permute.xlu0 %3616
  %3618 = vrot.lane.b32.xlu0 %v3560, 8
  %v3619 = vpop.permute.xlu0 %3618
  %3620 = vrot.lane.b32.xlu0 %v3565, 8
  %v3621 = vpop.permute.xlu0 %3620
  %3622 = vrot.lane.b32.xlu0 %v3570, 8
  %v3623 = vpop.permute.xlu0 %3622
  %3624 = vrot.lane.b32.xlu0 %v3575, 8
  %v3625 = vpop.permute.xlu0 %3624
  %vm3642 = vcmask 130112
  %3643 = vst.msk [vmem:[#allocation2] sm:$0xff] %vm3642, %v3595
  %3644 = vst.msk [vmem:[#allocation2 + $0x8] sm:$0xff] %vm3642, %v3597
  %3645 = vst.msk [vmem:[#allocation2 + $0x10] sm:$0xff] %vm3642, %v3599
  %3646 = vst.msk [vmem:[#allocation2 + $0x18] sm:$0xff] %vm3642, %v3601
  %3647 = vst.msk [vmem:[#allocation2 + $0x20] sm:$0xff] %vm3642, %v3603
  %3648 = vst.msk [vmem:[#allocation2 + $0x28] sm:$0xff] %vm3642, %v3605
  %3649 = vst.msk [vmem:[#allocation2 + $0x30] sm:$0xff] %vm3642, %v3607
  %3650 = vst.msk [vmem:[#allocation2 + $0x38] sm:$0xff] %vm3642, %v3609
  %3651 = vst.msk [vmem:[#allocation2 + $0x40] sm:$0xff] %vm3642, %v3611
  %3652 = vst.msk [vmem:[#allocation2 + $0x48] sm:$0xff] %vm3642, %v3613
  %3653 = vst.msk [vmem:[#allocation2 + $0x50] sm:$0xff] %vm3642, %v3615
  %3654 = vst.msk [vmem:[#allocation2 + $0x58] sm:$0xff] %vm3642, %v3617
  %3655 = vst.msk [vmem:[#allocation2 + $0x60] sm:$0xff] %vm3642, %v3619
  %3656 = vst.msk [vmem:[#allocation2 + $0x68] sm:$0xff] %vm3642, %v3621
  %3657 = vst.msk [vmem:[#allocation2 + $0x70] sm:$0xff] %vm3642, %v3623
  %3658 = vst.msk [vmem:[#allocation2 + $0x78] sm:$0xff] %vm3642, %v3625
  %3659 = vrot.lane.b32.xlu0 %v2279, 112
  %v3660 = vpop.permute.xlu0 %3659
  %3661 = vrot.lane.b32.xlu0 %v2284, 112
  %v3662 = vpop.permute.xlu0 %3661
  %3663 = vrot.lane.b32.xlu0 %v2289, 112
  %v3664 = vpop.permute.xlu0 %3663
  %3665 = vrot.lane.b32.xlu0 %v2294, 112
  %v3666 = vpop.permute.xlu0 %3665
  %3667 = vrot.lane.b32.xlu0 %v2299, 112
  %v3668 = vpop.permute.xlu0 %3667
  %3669 = vrot.lane.b32.xlu0 %v2304, 112
  %v3670 = vpop.permute.xlu0 %3669
  %3671 = vrot.lane.b32.xlu0 %v2309, 112
  %v3672 = vpop.permute.xlu0 %3671
  %3673 = vrot.lane.b32.xlu0 %v2314, 112
  %v3674 = vpop.permute.xlu0 %3673
  %3675 = vrot.lane.b32.xlu0 %v2319, 112
  %v3676 = vpop.permute.xlu0 %3675
  %3677 = vrot.lane.b32.xlu0 %v2324, 112
  %v3678 = vpop.permute.xlu0 %3677
  %3679 = vrot.lane.b32.xlu0 %v2329, 112
  %v3680 = vpop.permute.xlu0 %3679
  %3681 = vrot.lane.b32.xlu0 %v2334, 112
  %v3682 = vpop.permute.xlu0 %3681
  %3683 = vrot.lane.b32.xlu0 %v2339, 112
  %v3684 = vpop.permute.xlu0 %3683
  %3685 = vrot.lane.b32.xlu0 %v2344, 112
  %v3686 = vpop.permute.xlu0 %3685
  %3687 = vrot.lane.b32.xlu0 %v2349, 112
  %v3688 = vpop.permute.xlu0 %3687
  %3689 = vrot.lane.b32.xlu0 %v2354, 112
  %v3690 = vpop.permute.xlu0 %3689
  %3691 = vrot.lane.b32.xlu0 %v2279, 80
  %v3692 = vpop.permute.xlu0 %3691
  %3693 = vrot.lane.b32.xlu0 %v2284, 80
  %v3694 = vpop.permute.xlu0 %3693
  %3695 = vrot.lane.b32.xlu0 %v2289, 80
  %v3696 = vpop.permute.xlu0 %3695
  %3697 = vrot.lane.b32.xlu0 %v2294, 80
  %v3698 = vpop.permute.xlu0 %3697
  %3699 = vrot.lane.b32.xlu0 %v2299, 80
  %v3700 = vpop.permute.xlu0 %3699
  %3701 = vrot.lane.b32.xlu0 %v2304, 80
  %v3702 = vpop.permute.xlu0 %3701
  %3703 = vrot.lane.b32.xlu0 %v2309, 80
  %v3704 = vpop.permute.xlu0 %3703
  %3705 = vrot.lane.b32.xlu0 %v2314, 80
  %v3706 = vpop.permute.xlu0 %3705
  %3707 = vrot.lane.b32.xlu0 %v2319, 80
  %v3708 = vpop.permute.xlu0 %3707
  %3709 = vrot.lane.b32.xlu0 %v2324, 80
  %v3710 = vpop.permute.xlu0 %3709
  %3711 = vrot.lane.b32.xlu0 %v2329, 80
  %v3712 = vpop.permute.xlu0 %3711
  %3713 = vrot.lane.b32.xlu0 %v2334, 80
  %v3714 = vpop.permute.xlu0 %3713
  %3715 = vrot.lane.b32.xlu0 %v2339, 80
  %v3716 = vpop.permute.xlu0 %3715
  %3717 = vrot.lane.b32.xlu0 %v2344, 80
  %v3718 = vpop.permute.xlu0 %3717
  %3719 = vrot.lane.b32.xlu0 %v2349, 80
  %v3720 = vpop.permute.xlu0 %3719
  %3721 = vrot.lane.b32.xlu0 %v2354, 80
  %v3722 = vpop.permute.xlu0 %3721
  %v3723 = vsel %vm2405, %v3660, 0
  %v3725 = vsel %vm2405, %v3662, 0
  %v3727 = vsel %vm2405, %v3664, 0
  %v3729 = vsel %vm2405, %v3666, 0
  %v3731 = vsel %vm2405, %v3668, 0
  %v3733 = vsel %vm2405, %v3670, 0
  %v3735 = vsel %vm2405, %v3672, 0
  %v3737 = vsel %vm2405, %v3674, 0
  %v3739 = vsel %vm2405, %v3676, 0
  %v3741 = vsel %vm2405, %v3678, 0
  %v3743 = vsel %vm2405, %v3680, 0
  %v3745 = vsel %vm2405, %v3682, 0
  %v3747 = vsel %vm2405, %v3684, 0
  %v3749 = vsel %vm2405, %v3686, 0
  %v3751 = vsel %vm2405, %v3688, 0
  %v3753 = vsel %vm2405, %v3690, 0
  %v3755 = vsel %vm2405, %v3692, 0
  %v3757 = vsel %vm2405, %v3694, 0
  %v3759 = vsel %vm2405, %v3696, 0
  %v3761 = vsel %vm2405, %v3698, 0
  %v3763 = vsel %vm2405, %v3700, 0
  %v3765 = vsel %vm2405, %v3702, 0
  %v3767 = vsel %vm2405, %v3704, 0
  %v3769 = vsel %vm2405, %v3706, 0
  %v3771 = vsel %vm2405, %v3708, 0
  %v3773 = vsel %vm2405, %v3710, 0
  %v3775 = vsel %vm2405, %v3712, 0
  %v3777 = vsel %vm2405, %v3714, 0
  %v3779 = vsel %vm2405, %v3716, 0
  %v3781 = vsel %vm2405, %v3718, 0
  %v3783 = vsel %vm2405, %v3720, 0
  %v3785 = vsel %vm2405, %v3722, 0
  %3787 = vmatprep.subr.mxu0 0.0
  %3788 = vmatpush1.xpose.msra.mxu0 %v3755
  %3789 = vmatprep.subr.mxu0 0.0
  %3790 = vmatpush1.xpose.msra.mxu0 %v3757
  %3791 = vmatprep.subr.mxu0 0.0
  %3792 = vmatpush1.xpose.msra.mxu0 %v3759
  %3793 = vmatprep.subr.mxu0 0.0
  %3794 = vmatpush1.xpose.msra.mxu0 %v3761
  %3795 = vmatprep.subr.mxu0 0.0
  %3796 = vmatpush1.xpose.msra.mxu0 %v3763
  %3797 = vmatprep.subr.mxu0 0.0
  %3798 = vmatpush1.xpose.msra.mxu0 %v3765
  %3799 = vmatprep.subr.mxu0 0.0
  %3800 = vmatpush1.xpose.msra.mxu0 %v3767
  %3801 = vmatprep.subr.mxu0 0.0
  %3802 = vmatpush1.xpose.msra.mxu0 %v3769
  %3803 = vmatprep.subr.mxu0 0.0
  %3804 = vmatpush1.xpose.msra.mxu0 %v3771
  %3805 = vmatprep.subr.mxu0 0.0
  %3806 = vmatpush1.xpose.msra.mxu0 %v3773
  %3807 = vmatprep.subr.mxu0 0.0
  %3808 = vmatpush1.xpose.msra.mxu0 %v3775
  %3809 = vmatprep.subr.mxu0 0.0
  %3810 = vmatpush1.xpose.msra.mxu0 %v3777
  %3811 = vmatprep.subr.mxu0 0.0
  %3812 = vmatpush1.xpose.msra.mxu0 %v3779
  %3813 = vmatprep.subr.mxu0 0.0
  %3814 = vmatpush1.xpose.msra.mxu0 %v3781
  %3815 = vmatprep.subr.mxu0 0.0
  %3816 = vmatpush1.xpose.msra.mxu0 %v3783
  %3817 = vmatprep.subr.mxu0 0.0
  %3818 = vmatpush1.xpose.msra.mxu0 %v3785
  %3819 = vmatprep.subr.mxu0 0.0
  %3820 = vmatpush1.xpose.msra.mxu0 0.0
  %3821 = vmatprep.subr.mxu0 0.0
  %3822 = vmatpush1.xpose.msra.mxu0 0.0
  %3823 = vmatprep.subr.mxu0 0.0
  %3824 = vmatpush1.xpose.msra.mxu0 0.0
  %3825 = vmatprep.subr.mxu0 0.0
  %3826 = vmatpush1.xpose.msra.mxu0 0.0
  %3827 = vmatprep.subr.mxu0 0.0
  %3828 = vmatpush1.xpose.msra.mxu0 0.0
  %3829 = vmatprep.subr.mxu0 0.0
  %3830 = vmatpush1.xpose.msra.mxu0 0.0
  %3831 = vmatprep.subr.mxu0 0.0
  %3832 = vmatpush1.xpose.msra.mxu0 0.0
  %3833 = vmatprep.subr.mxu0 0.0
  %3834 = vmatpush1.xpose.msra.mxu0 0.0
  %3835 = vmatprep.subr.mxu0 0.0
  %3836 = vmatpush1.xpose.msra.mxu0 0.0
  %3837 = vmatprep.subr.mxu0 0.0
  %3838 = vmatpush1.xpose.msra.mxu0 0.0
  %3839 = vmatprep.subr.mxu0 0.0
  %3840 = vmatpush1.xpose.msra.mxu0 0.0
  %3841 = vmatprep.subr.mxu0 0.0
  %3842 = vmatpush1.xpose.msra.mxu0 0.0
  %3843 = vmatprep.subr.mxu0 0.0
  %3844 = vmatpush1.xpose.msra.mxu0 0.0
  %3845 = vmatprep.subr.mxu0 0.0
  %3846 = vmatpush1.xpose.msra.mxu0 0.0
  %3847 = vmatprep.subr.mxu0 0.0
  %3848 = vmatpush1.xpose.msra.mxu0 0.0
  %3849 = vmatprep.subr.mxu0 0.0
  %3850 = vmatpush1.xpose.msra.mxu0 0.0
  %3851 = vmatprep.mubr.f32.mxu0 0.0
  %3852 = vmatmul.mubr.f32.gmra.mrb[0].mxu0 %v3723
  %v3853 = vpop.f32.mrb[0].mxu0
  %v3854 = vadd.f32 %v170, %v3853
  %v3855 = vpop.f32.mrb[0].mxu0
  %3856 = vmatprep.mubr.f32.mxu0 0.0
  %3857 = vmatmul.mubr.f32.gmra.mrb[0].mxu0 %v3725
  %v3858 = vpop.f32.mrb[0].mxu0
  %v3859 = vadd.f32 %v171, %v3858
  %v3860 = vpop.f32.mrb[0].mxu0
  %3861 = vmatprep.mubr.f32.mxu0 0.0
  %3862 = vmatmul.mubr.f32.gmra.mrb[0].mxu0 %v3727
  %v3863 = vpop.f32.mrb[0].mxu0
  %v3864 = vadd.f32 %v172, %v3863
  %v3865 = vpop.f32.mrb[0].mxu0
  %3866 = vmatprep.mubr.f32.mxu0 0.0
  %3867 = vmatmul.mubr.f32.gmra.mrb[0].mxu0 %v3729
  %v3868 = vpop.f32.mrb[0].mxu0
  %v3869 = vadd.f32 %v173, %v3868
  %v3870 = vpop.f32.mrb[0].mxu0
  %3871 = vmatprep.mubr.f32.mxu0 0.0
  %3872 = vmatmul.mubr.f32.gmra.mrb[0].mxu0 %v3731
  %v3873 = vpop.f32.mrb[0].mxu0
  %v3874 = vadd.f32 %v174, %v3873
  %v3875 = vpop.f32.mrb[0].mxu0
  %3876 = vmatprep.mubr.f32.mxu0 0.0
  %3877 = vmatmul.mubr.f32.gmra.mrb[0].mxu0 %v3733
  %v3878 = vpop.f32.mrb[0].mxu0
  %v3879 = vadd.f32 %v175, %v3878
  %v3880 = vpop.f32.mrb[0].mxu0
  %3881 = vmatprep.mubr.f32.mxu0 0.0
  %3882 = vmatmul.mubr.f32.gmra.mrb[0].mxu0 %v3735
  %v3883 = vpop.f32.mrb[0].mxu0
  %v3884 = vadd.f32 %v176, %v3883
  %v3885 = vpop.f32.mrb[0].mxu0
  %3886 = vmatprep.mubr.f32.mxu0 0.0
  %3887 = vmatmul.mubr.f32.gmra.mrb[0].mxu0 %v3737
  %v3888 = vpop.f32.mrb[0].mxu0
  %v3889 = vadd.f32 %v177, %v3888
  %v3890 = vpop.f32.mrb[0].mxu0
  %3891 = vmatprep.mubr.f32.mxu0 0.0
  %3892 = vmatmul.mubr.f32.gmra.mrb[0].mxu0 %v3739
  %v3893 = vpop.f32.mrb[0].mxu0
  %v3894 = vadd.f32 %v178, %v3893
  %v3895 = vpop.f32.mrb[0].mxu0
  %3896 = vmatprep.mubr.f32.mxu0 0.0
  %3897 = vmatmul.mubr.f32.gmra.mrb[0].mxu0 %v3741
  %v3898 = vpop.f32.mrb[0].mxu0
  %v3899 = vadd.f32 %v179, %v3898
  %v3900 = vpop.f32.mrb[0].mxu0
  %3901 = vmatprep.mubr.f32.mxu0 0.0
  %3902 = vmatmul.mubr.f32.gmra.mrb[0].mxu0 %v3743
  %v3903 = vpop.f32.mrb[0].mxu0
  %v3904 = vadd.f32 %v180, %v3903
  %v3905 = vpop.f32.mrb[0].mxu0
  %3906 = vmatprep.mubr.f32.mxu0 0.0
  %3907 = vmatmul.mubr.f32.gmra.mrb[0].mxu0 %v3745
  %v3908 = vpop.f32.mrb[0].mxu0
  %v3909 = vadd.f32 %v181, %v3908
  %v3910 = vpop.f32.mrb[0].mxu0
  %3911 = vmatprep.mubr.f32.mxu0 0.0
  %3912 = vmatmul.mubr.f32.gmra.mrb[0].mxu0 %v3747
  %v3913 = vpop.f32.mrb[0].mxu0
  %v3914 = vadd.f32 %v182, %v3913
  %v3915 = vpop.f32.mrb[0].mxu0
  %3916 = vmatprep.mubr.f32.mxu0 0.0
  %3917 = vmatmul.mubr.f32.gmra.mrb[0].mxu0 %v3749
  %v3918 = vpop.f32.mrb[0].mxu0
  %v3919 = vadd.f32 %v183, %v3918
  %v3920 = vpop.f32.mrb[0].mxu0
  %3921 = vmatprep.mubr.f32.mxu0 0.0
  %3922 = vmatmul.mubr.f32.gmra.mrb[0].mxu0 %v3751
  %v3923 = vpop.f32.mrb[0].mxu0
  %v3924 = vadd.f32 %v184, %v3923
  %v3925 = vpop.f32.mrb[0].mxu0
  %3926 = vmatprep.mubr.f32.mxu0 0.0
  %3927 = vmatmul.mubr.f32.gmra.mrb[0].mxu0 %v3753
  %v3928 = vpop.f32.mrb[0].mxu0
  %v3929 = vadd.f32 %v185, %v3928
  %v3930 = vpop.f32.mrb[0].mxu0
  %3931 = vdwg.mxu0
  %3932 = vmax.xlane.f32.xlu0 %v3854
  %v3933 = vpop.xlane.xlu0 %3932
  %3934 = vmax.xlane.f32.xlu0 %v3859
  %v3935 = vpop.xlane.xlu0 %3934
  %3936 = vmax.xlane.f32.xlu0 %v3864
  %v3937 = vpop.xlane.xlu0 %3936
  %3938 = vmax.xlane.f32.xlu0 %v3869
  %v3939 = vpop.xlane.xlu0 %3938
  %3940 = vmax.xlane.f32.xlu0 %v3874
  %v3941 = vpop.xlane.xlu0 %3940
  %3942 = vmax.xlane.f32.xlu0 %v3879
  %v3943 = vpop.xlane.xlu0 %3942
  %3944 = vmax.xlane.f32.xlu0 %v3884
  %v3945 = vpop.xlane.xlu0 %3944
  %3946 = vmax.xlane.f32.xlu0 %v3889
  %v3947 = vpop.xlane.xlu0 %3946
  %3948 = vmax.xlane.f32.xlu0 %v3894
  %v3949 = vpop.xlane.xlu0 %3948
  %3950 = vmax.xlane.f32.xlu0 %v3899
  %v3951 = vpop.xlane.xlu0 %3950
  %3952 = vmax.xlane.f32.xlu0 %v3904
  %v3953 = vpop.xlane.xlu0 %3952
  %3954 = vmax.xlane.f32.xlu0 %v3909
  %v3955 = vpop.xlane.xlu0 %3954
  %3956 = vmax.xlane.f32.xlu0 %v3914
  %v3957 = vpop.xlane.xlu0 %3956
  %3958 = vmax.xlane.f32.xlu0 %v3919
  %v3959 = vpop.xlane.xlu0 %3958
  %3960 = vmax.xlane.f32.xlu0 %v3924
  %v3961 = vpop.xlane.xlu0 %3960
  %3962 = vmax.xlane.f32.xlu0 %v3929
  %v3963 = vpop.xlane.xlu0 %3962
  %v3964 = vsub.f32 %v3854, %v3933
  %v3965 = vsub.f32 %v3859, %v3935
  %v3966 = vsub.f32 %v3864, %v3937
  %v3967 = vsub.f32 %v3869, %v3939
  %v3968 = vsub.f32 %v3874, %v3941
  %v3969 = vsub.f32 %v3879, %v3943
  %v3970 = vsub.f32 %v3884, %v3945
  %v3971 = vsub.f32 %v3889, %v3947
  %v3972 = vsub.f32 %v3894, %v3949
  %v3973 = vsub.f32 %v3899, %v3951
  %v3974 = vsub.f32 %v3904, %v3953
  %v3975 = vsub.f32 %v3909, %v3955
  %v3976 = vsub.f32 %v3914, %v3957
  %v3977 = vsub.f32 %v3919, %v3959
  %v3978 = vsub.f32 %v3924, %v3961
  %v3979 = vsub.f32 %v3929, %v3963
  %v3980 = vmul.f32 %v3964, 1.442695
  %v3981 = vpow.pop %v3980
  %v3982 = vmul.f32 %v3965, 1.442695
  %v3983 = vpow.pop %v3982
  %v3984 = vmul.f32 %v3966, 1.442695
  %v3985 = vpow.pop %v3984
  %v3986 = vmul.f32 %v3967, 1.442695
  %v3987 = vpow.pop %v3986
  %v3988 = vmul.f32 %v3968, 1.442695
  %v3989 = vpow.pop %v3988
  %v3990 = vmul.f32 %v3969, 1.442695
  %v3991 = vpow.pop %v3990
  %v3992 = vmul.f32 %v3970, 1.442695
  %v3993 = vpow.pop %v3992
  %v3994 = vmul.f32 %v3971, 1.442695
  %v3995 = vpow.pop %v3994
  %v3996 = vmul.f32 %v3972, 1.442695
  %v3997 = vpow.pop %v3996
  %v3998 = vmul.f32 %v3973, 1.442695
  %v3999 = vpow.pop %v3998
  %v4000 = vmul.f32 %v3974, 1.442695
  %v4001 = vpow.pop %v4000
  %v4002 = vmul.f32 %v3975, 1.442695
  %v4003 = vpow.pop %v4002
  %v4004 = vmul.f32 %v3976, 1.442695
  %v4005 = vpow.pop %v4004
  %v4006 = vmul.f32 %v3977, 1.442695
  %v4007 = vpow.pop %v4006
  %v4008 = vmul.f32 %v3978, 1.442695
  %v4009 = vpow.pop %v4008
  %v4010 = vmul.f32 %v3979, 1.442695
  %v4011 = vpow.pop %v4010
  %4012 = vadd.xlane.f32.xlu0 %v3981
  %v4013 = vpop.xlane.xlu0 %4012
  %4014 = vadd.xlane.f32.xlu0 %v3983
  %v4015 = vpop.xlane.xlu0 %4014
  %4016 = vadd.xlane.f32.xlu0 %v3985
  %v4017 = vpop.xlane.xlu0 %4016
  %4018 = vadd.xlane.f32.xlu0 %v3987
  %v4019 = vpop.xlane.xlu0 %4018
  %4020 = vadd.xlane.f32.xlu0 %v3989
  %v4021 = vpop.xlane.xlu0 %4020
  %4022 = vadd.xlane.f32.xlu0 %v3991
  %v4023 = vpop.xlane.xlu0 %4022
  %4024 = vadd.xlane.f32.xlu0 %v3993
  %v4025 = vpop.xlane.xlu0 %4024
  %4026 = vadd.xlane.f32.xlu0 %v3995
  %v4027 = vpop.xlane.xlu0 %4026
  %4028 = vadd.xlane.f32.xlu0 %v3997
  %v4029 = vpop.xlane.xlu0 %4028
  %4030 = vadd.xlane.f32.xlu0 %v3999
  %v4031 = vpop.xlane.xlu0 %4030
  %4032 = vadd.xlane.f32.xlu0 %v4001
  %v4033 = vpop.xlane.xlu0 %4032
  %4034 = vadd.xlane.f32.xlu0 %v4003
  %v4035 = vpop.xlane.xlu0 %4034
  %4036 = vadd.xlane.f32.xlu0 %v4005
  %v4037 = vpop.xlane.xlu0 %4036
  %4038 = vadd.xlane.f32.xlu0 %v4007
  %v4039 = vpop.xlane.xlu0 %4038
  %4040 = vadd.xlane.f32.xlu0 %v4009
  %v4041 = vpop.xlane.xlu0 %4040
  %4042 = vadd.xlane.f32.xlu0 %v4011
  %v4043 = vpop.xlane.xlu0 %4042
  %v4044 = vrcp.pop %v4013
  %v4045 = vrcp.pop %v4015
  %v4046 = vrcp.pop %v4017
  %v4047 = vrcp.pop %v4019
  %v4048 = vrcp.pop %v4021
  %v4049 = vrcp.pop %v4023
  %v4050 = vrcp.pop %v4025
  %v4051 = vrcp.pop %v4027
  %v4052 = vrcp.pop %v4029
  %v4053 = vrcp.pop %v4031
  %v4054 = vrcp.pop %v4033
  %v4055 = vrcp.pop %v4035
  %v4056 = vrcp.pop %v4037
  %v4057 = vrcp.pop %v4039
  %v4058 = vrcp.pop %v4041
  %v4059 = vrcp.pop %v4043
  %v4060 = vmul.f32 %v3981, %v4044
  %v4061 = vmul.f32 %v3983, %v4045
  %v4062 = vmul.f32 %v3985, %v4046
  %v4063 = vmul.f32 %v3987, %v4047
  %v4064 = vmul.f32 %v3989, %v4048
  %v4065 = vmul.f32 %v3991, %v4049
  %v4066 = vmul.f32 %v3993, %v4050
  %v4067 = vmul.f32 %v3995, %v4051
  %v4068 = vmul.f32 %v3997, %v4052
  %v4069 = vmul.f32 %v3999, %v4053
  %v4070 = vmul.f32 %v4001, %v4054
  %v4071 = vmul.f32 %v4003, %v4055
  %v4072 = vmul.f32 %v4005, %v4056
  %v4073 = vmul.f32 %v4007, %v4057
  %v4074 = vmul.f32 %v4009, %v4058
  %v4075 = vmul.f32 %v4011, %v4059
  %4076 = vrot.lane.b32.xlu0 %v2279, 48
  %v4077 = vpop.permute.xlu0 %4076
  %4078 = vrot.lane.b32.xlu0 %v2284, 48
  %v4079 = vpop.permute.xlu0 %4078
  %4080 = vrot.lane.b32.xlu0 %v2289, 48
  %v4081 = vpop.permute.xlu0 %4080
  %4082 = vrot.lane.b32.xlu0 %v2294, 48
  %v4083 = vpop.permute.xlu0 %4082
  %4084 = vrot.lane.b32.xlu0 %v2299, 48
  %v4085 = vpop.permute.xlu0 %4084
  %4086 = vrot.lane.b32.xlu0 %v2304, 48
  %v4087 = vpop.permute.xlu0 %4086
  %4088 = vrot.lane.b32.xlu0 %v2309, 48
  %v4089 = vpop.permute.xlu0 %4088
  %4090 = vrot.lane.b32.xlu0 %v2314, 48
  %v4091 = vpop.permute.xlu0 %4090
  %4092 = vrot.lane.b32.xlu0 %v2319, 48
  %v4093 = vpop.permute.xlu0 %4092
  %4094 = vrot.lane.b32.xlu0 %v2324, 48
  %v4095 = vpop.permute.xlu0 %4094
  %4096 = vrot.lane.b32.xlu0 %v2329, 48
  %v4097 = vpop.permute.xlu0 %4096
  %4098 = vrot.lane.b32.xlu0 %v2334, 48
  %v4099 = vpop.permute.xlu0 %4098
  %4100 = vrot.lane.b32.xlu0 %v2339, 48
  %v4101 = vpop.permute.xlu0 %4100
  %4102 = vrot.lane.b32.xlu0 %v2344, 48
  %v4103 = vpop.permute.xlu0 %4102
  %4104 = vrot.lane.b32.xlu0 %v2349, 48
  %v4105 = vpop.permute.xlu0 %4104
  %4106 = vrot.lane.b32.xlu0 %v2354, 48
  %v4107 = vpop.permute.xlu0 %4106
  %4124 = vmatprep.subr.mxu0 0.0
  %4125 = vmatpush1.msra.mxu0 %v4077
  %4126 = vmatprep.subr.mxu0 0.0
  %4127 = vmatpush1.msra.mxu0 %v4079
  %4128 = vmatprep.subr.mxu0 0.0
  %4129 = vmatpush1.msra.mxu0 %v4081
  %4130 = vmatprep.subr.mxu0 0.0
  %4131 = vmatpush1.msra.mxu0 %v4083
  %4132 = vmatprep.subr.mxu0 0.0
  %4133 = vmatpush1.msra.mxu0 %v4085
  %4134 = vmatprep.subr.mxu0 0.0
  %4135 = vmatpush1.msra.mxu0 %v4087
  %4136 = vmatprep.subr.mxu0 0.0
  %4137 = vmatpush1.msra.mxu0 %v4089
  %4138 = vmatprep.subr.mxu0 0.0
  %4139 = vmatpush1.msra.mxu0 %v4091
  %4140 = vmatprep.subr.mxu0 0.0
  %4141 = vmatpush1.msra.mxu0 %v4093
  %4142 = vmatprep.subr.mxu0 0.0
  %4143 = vmatpush1.msra.mxu0 %v4095
  %4144 = vmatprep.subr.mxu0 0.0
  %4145 = vmatpush1.msra.mxu0 %v4097
  %4146 = vmatprep.subr.mxu0 0.0
  %4147 = vmatpush1.msra.mxu0 %v4099
  %4148 = vmatprep.subr.mxu0 0.0
  %4149 = vmatpush1.msra.mxu0 %v4101
  %4150 = vmatprep.subr.mxu0 0.0
  %4151 = vmatpush1.msra.mxu0 %v4103
  %4152 = vmatprep.subr.mxu0 0.0
  %4153 = vmatpush1.msra.mxu0 %v4105
  %4154 = vmatprep.subr.mxu0 0.0
  %4155 = vmatpush1.msra.mxu0 %v4107
  %4156 = vmatprep.subr.mxu0 0.0
  %4157 = vmatpush1.msra.mxu0 0.0
  %4158 = vmatprep.subr.mxu0 0.0
  %4159 = vmatpush1.msra.mxu0 0.0
  %4160 = vmatprep.subr.mxu0 0.0
  %4161 = vmatpush1.msra.mxu0 0.0
  %4162 = vmatprep.subr.mxu0 0.0
  %4163 = vmatpush1.msra.mxu0 0.0
  %4164 = vmatprep.subr.mxu0 0.0
  %4165 = vmatpush1.msra.mxu0 0.0
  %4166 = vmatprep.subr.mxu0 0.0
  %4167 = vmatpush1.msra.mxu0 0.0
  %4168 = vmatprep.subr.mxu0 0.0
  %4169 = vmatpush1.msra.mxu0 0.0
  %4170 = vmatprep.subr.mxu0 0.0
  %4171 = vmatpush1.msra.mxu0 0.0
  %4172 = vmatprep.subr.mxu0 0.0
  %4173 = vmatpush1.msra.mxu0 0.0
  %4174 = vmatprep.subr.mxu0 0.0
  %4175 = vmatpush1.msra.mxu0 0.0
  %4176 = vmatprep.subr.mxu0 0.0
  %4177 = vmatpush1.msra.mxu0 0.0
  %4178 = vmatprep.subr.mxu0 0.0
  %4179 = vmatpush1.msra.mxu0 0.0
  %4180 = vmatprep.subr.mxu0 0.0
  %4181 = vmatpush1.msra.mxu0 0.0
  %4182 = vmatprep.subr.mxu0 0.0
  %4183 = vmatpush1.msra.mxu0 0.0
  %4184 = vmatprep.subr.mxu0 0.0
  %4185 = vmatpush1.msra.mxu0 0.0
  %4186 = vmatprep.subr.mxu0 0.0
  %4187 = vmatpush1.msra.mxu0 0.0
  %4188 = vmatprep.mubr.f32.mxu0 0.0
  %4189 = vmatmul.mubr.f32.gmra.mrb[0].mxu0 %v4060
  %v4190 = vpop.f32.mrb[0].mxu0
  %v4191 = vadd.f32 0.0, %v4190
  %v4192 = vpop.f32.mrb[0].mxu0
  %4193 = vmatprep.mubr.f32.mxu0 0.0
  %4194 = vmatmul.mubr.f32.gmra.mrb[0].mxu0 %v4061
  %v4195 = vpop.f32.mrb[0].mxu0
  %v4196 = vadd.f32 0.0, %v4195
  %v4197 = vpop.f32.mrb[0].mxu0
  %4198 = vmatprep.mubr.f32.mxu0 0.0
  %4199 = vmatmul.mubr.f32.gmra.mrb[0].mxu0 %v4062
  %v4200 = vpop.f32.mrb[0].mxu0
  %v4201 = vadd.f32 0.0, %v4200
  %v4202 = vpop.f32.mrb[0].mxu0
  %4203 = vmatprep.mubr.f32.mxu0 0.0
  %4204 = vmatmul.mubr.f32.gmra.mrb[0].mxu0 %v4063
  %v4205 = vpop.f32.mrb[0].mxu0
  %v4206 = vadd.f32 0.0, %v4205
  %v4207 = vpop.f32.mrb[0].mxu0
  %4208 = vmatprep.mubr.f32.mxu0 0.0
  %4209 = vmatmul.mubr.f32.gmra.mrb[0].mxu0 %v4064
  %v4210 = vpop.f32.mrb[0].mxu0
  %v4211 = vadd.f32 0.0, %v4210
  %v4212 = vpop.f32.mrb[0].mxu0
  %4213 = vmatprep.mubr.f32.mxu0 0.0
  %4214 = vmatmul.mubr.f32.gmra.mrb[0].mxu0 %v4065
  %v4215 = vpop.f32.mrb[0].mxu0
  %v4216 = vadd.f32 0.0, %v4215
  %v4217 = vpop.f32.mrb[0].mxu0
  %4218 = vmatprep.mubr.f32.mxu0 0.0
  %4219 = vmatmul.mubr.f32.gmra.mrb[0].mxu0 %v4066
  %v4220 = vpop.f32.mrb[0].mxu0
  %v4221 = vadd.f32 0.0, %v4220
  %v4222 = vpop.f32.mrb[0].mxu0
  %4223 = vmatprep.mubr.f32.mxu0 0.0
  %4224 = vmatmul.mubr.f32.gmra.mrb[0].mxu0 %v4067
  %v4225 = vpop.f32.mrb[0].mxu0
  %v4226 = vadd.f32 0.0, %v4225
  %v4227 = vpop.f32.mrb[0].mxu0
  %4228 = vmatprep.mubr.f32.mxu0 0.0
  %4229 = vmatmul.mubr.f32.gmra.mrb[0].mxu0 %v4068
  %v4230 = vpop.f32.mrb[0].mxu0
  %v4231 = vadd.f32 0.0, %v4230
  %v4232 = vpop.f32.mrb[0].mxu0
  %4233 = vmatprep.mubr.f32.mxu0 0.0
  %4234 = vmatmul.mubr.f32.gmra.mrb[0].mxu0 %v4069
  %v4235 = vpop.f32.mrb[0].mxu0
  %v4236 = vadd.f32 0.0, %v4235
  %v4237 = vpop.f32.mrb[0].mxu0
  %4238 = vmatprep.mubr.f32.mxu0 0.0
  %4239 = vmatmul.mubr.f32.gmra.mrb[0].mxu0 %v4070
  %v4240 = vpop.f32.mrb[0].mxu0
  %v4241 = vadd.f32 0.0, %v4240
  %v4242 = vpop.f32.mrb[0].mxu0
  %4243 = vmatprep.mubr.f32.mxu0 0.0
  %4244 = vmatmul.mubr.f32.gmra.mrb[0].mxu0 %v4071
  %v4245 = vpop.f32.mrb[0].mxu0
  %v4246 = vadd.f32 0.0, %v4245
  %v4247 = vpop.f32.mrb[0].mxu0
  %4248 = vmatprep.mubr.f32.mxu0 0.0
  %4249 = vmatmul.mubr.f32.gmra.mrb[0].mxu0 %v4072
  %v4250 = vpop.f32.mrb[0].mxu0
  %v4251 = vadd.f32 0.0, %v4250
  %v4252 = vpop.f32.mrb[0].mxu0
  %4253 = vmatprep.mubr.f32.mxu0 0.0
  %4254 = vmatmul.mubr.f32.gmra.mrb[0].mxu0 %v4073
  %v4255 = vpop.f32.mrb[0].mxu0
  %v4256 = vadd.f32 0.0, %v4255
  %v4257 = vpop.f32.mrb[0].mxu0
  %4258 = vmatprep.mubr.f32.mxu0 0.0
  %4259 = vmatmul.mubr.f32.gmra.mrb[0].mxu0 %v4074
  %v4260 = vpop.f32.mrb[0].mxu0
  %v4261 = vadd.f32 0.0, %v4260
  %v4262 = vpop.f32.mrb[0].mxu0
  %4263 = vmatprep.mubr.f32.mxu0 0.0
  %4264 = vmatmul.mubr.f32.gmra.mrb[0].mxu0 %v4075
  %v4265 = vpop.f32.mrb[0].mxu0
  %v4266 = vadd.f32 0.0, %v4265
  %v4267 = vpop.f32.mrb[0].mxu0
  %4268 = vdwg.mxu0
  %4285 = vrot.lane.b32.xlu0 %v4191, 16
  %v4286 = vpop.permute.xlu0 %4285
  %4287 = vrot.lane.b32.xlu0 %v4196, 16
  %v4288 = vpop.permute.xlu0 %4287
  %4289 = vrot.lane.b32.xlu0 %v4201, 16
  %v4290 = vpop.permute.xlu0 %4289
  %4291 = vrot.lane.b32.xlu0 %v4206, 16
  %v4292 = vpop.permute.xlu0 %4291
  %4293 = vrot.lane.b32.xlu0 %v4211, 16
  %v4294 = vpop.permute.xlu0 %4293
  %4295 = vrot.lane.b32.xlu0 %v4216, 16
  %v4296 = vpop.permute.xlu0 %4295
  %4297 = vrot.lane.b32.xlu0 %v4221, 16
  %v4298 = vpop.permute.xlu0 %4297
  %4299 = vrot.lane.b32.xlu0 %v4226, 16
  %v4300 = vpop.permute.xlu0 %4299
  %4301 = vrot.lane.b32.xlu0 %v4231, 16
  %v4302 = vpop.permute.xlu0 %4301
  %4303 = vrot.lane.b32.xlu0 %v4236, 16
  %v4304 = vpop.permute.xlu0 %4303
  %4305 = vrot.lane.b32.xlu0 %v4241, 16
  %v4306 = vpop.permute.xlu0 %4305
  %4307 = vrot.lane.b32.xlu0 %v4246, 16
  %v4308 = vpop.permute.xlu0 %4307
  %4309 = vrot.lane.b32.xlu0 %v4251, 16
  %v4310 = vpop.permute.xlu0 %4309
  %4311 = vrot.lane.b32.xlu0 %v4256, 16
  %v4312 = vpop.permute.xlu0 %4311
  %4313 = vrot.lane.b32.xlu0 %v4261, 16
  %v4314 = vpop.permute.xlu0 %4313
  %4315 = vrot.lane.b32.xlu0 %v4266, 16
  %v4316 = vpop.permute.xlu0 %4315
  %vm4333 = vcmask 195712
  %4334 = vst.msk [vmem:[#allocation2] sm:$0xff] %vm4333, %v4286
  %4335 = vst.msk [vmem:[#allocation2 + $0x8] sm:$0xff] %vm4333, %v4288
  %4336 = vst.msk [vmem:[#allocation2 + $0x10] sm:$0xff] %vm4333, %v4290
  %4337 = vst.msk [vmem:[#allocation2 + $0x18] sm:$0xff] %vm4333, %v4292
  %4338 = vst.msk [vmem:[#allocation2 + $0x20] sm:$0xff] %vm4333, %v4294
  %4339 = vst.msk [vmem:[#allocation2 + $0x28] sm:$0xff] %vm4333, %v4296
  %4340 = vst.msk [vmem:[#allocation2 + $0x30] sm:$0xff] %vm4333, %v4298
  %4341 = vst.msk [vmem:[#allocation2 + $0x38] sm:$0xff] %vm4333, %v4300
  %4342 = vst.msk [vmem:[#allocation2 + $0x40] sm:$0xff] %vm4333, %v4302
  %4343 = vst.msk [vmem:[#allocation2 + $0x48] sm:$0xff] %vm4333, %v4304
  %4344 = vst.msk [vmem:[#allocation2 + $0x50] sm:$0xff] %vm4333, %v4306
  %4345 = vst.msk [vmem:[#allocation2 + $0x58] sm:$0xff] %vm4333, %v4308
  %4346 = vst.msk [vmem:[#allocation2 + $0x60] sm:$0xff] %vm4333, %v4310
  %4347 = vst.msk [vmem:[#allocation2 + $0x68] sm:$0xff] %vm4333, %v4312
  %4348 = vst.msk [vmem:[#allocation2 + $0x70] sm:$0xff] %vm4333, %v4314
  %4349 = vst.msk [vmem:[#allocation2 + $0x78] sm:$0xff] %vm4333, %v4316
  %4350 = vrot.lane.b32.xlu0 %v2279, 104
  %v4351 = vpop.permute.xlu0 %4350
  %4352 = vrot.lane.b32.xlu0 %v2284, 104
  %v4353 = vpop.permute.xlu0 %4352
  %4354 = vrot.lane.b32.xlu0 %v2289, 104
  %v4355 = vpop.permute.xlu0 %4354
  %4356 = vrot.lane.b32.xlu0 %v2294, 104
  %v4357 = vpop.permute.xlu0 %4356
  %4358 = vrot.lane.b32.xlu0 %v2299, 104
  %v4359 = vpop.permute.xlu0 %4358
  %4360 = vrot.lane.b32.xlu0 %v2304, 104
  %v4361 = vpop.permute.xlu0 %4360
  %4362 = vrot.lane.b32.xlu0 %v2309, 104
  %v4363 = vpop.permute.xlu0 %4362
  %4364 = vrot.lane.b32.xlu0 %v2314, 104
  %v4365 = vpop.permute.xlu0 %4364
  %4366 = vrot.lane.b32.xlu0 %v2319, 104
  %v4367 = vpop.permute.xlu0 %4366
  %4368 = vrot.lane.b32.xlu0 %v2324, 104
  %v4369 = vpop.permute.xlu0 %4368
  %4370 = vrot.lane.b32.xlu0 %v2329, 104
  %v4371 = vpop.permute.xlu0 %4370
  %4372 = vrot.lane.b32.xlu0 %v2334, 104
  %v4373 = vpop.permute.xlu0 %4372
  %4374 = vrot.lane.b32.xlu0 %v2339, 104
  %v4375 = vpop.permute.xlu0 %4374
  %4376 = vrot.lane.b32.xlu0 %v2344, 104
  %v4377 = vpop.permute.xlu0 %4376
  %4378 = vrot.lane.b32.xlu0 %v2349, 104
  %v4379 = vpop.permute.xlu0 %4378
  %4380 = vrot.lane.b32.xlu0 %v2354, 104
  %v4381 = vpop.permute.xlu0 %4380
  %4382 = vrot.lane.b32.xlu0 %v2279, 72
  %v4383 = vpop.permute.xlu0 %4382
  %4384 = vrot.lane.b32.xlu0 %v2284, 72
  %v4385 = vpop.permute.xlu0 %4384
  %4386 = vrot.lane.b32.xlu0 %v2289, 72
  %v4387 = vpop.permute.xlu0 %4386
  %4388 = vrot.lane.b32.xlu0 %v2294, 72
  %v4389 = vpop.permute.xlu0 %4388
  %4390 = vrot.lane.b32.xlu0 %v2299, 72
  %v4391 = vpop.permute.xlu0 %4390
  %4392 = vrot.lane.b32.xlu0 %v2304, 72
  %v4393 = vpop.permute.xlu0 %4392
  %4394 = vrot.lane.b32.xlu0 %v2309, 72
  %v4395 = vpop.permute.xlu0 %4394
  %4396 = vrot.lane.b32.xlu0 %v2314, 72
  %v4397 = vpop.permute.xlu0 %4396
  %4398 = vrot.lane.b32.xlu0 %v2319, 72
  %v4399 = vpop.permute.xlu0 %4398
  %4400 = vrot.lane.b32.xlu0 %v2324, 72
  %v4401 = vpop.permute.xlu0 %4400
  %4402 = vrot.lane.b32.xlu0 %v2329, 72
  %v4403 = vpop.permute.xlu0 %4402
  %4404 = vrot.lane.b32.xlu0 %v2334, 72
  %v4405 = vpop.permute.xlu0 %4404
  %4406 = vrot.lane.b32.xlu0 %v2339, 72
  %v4407 = vpop.permute.xlu0 %4406
  %4408 = vrot.lane.b32.xlu0 %v2344, 72
  %v4409 = vpop.permute.xlu0 %4408
  %4410 = vrot.lane.b32.xlu0 %v2349, 72
  %v4411 = vpop.permute.xlu0 %4410
  %4412 = vrot.lane.b32.xlu0 %v2354, 72
  %v4413 = vpop.permute.xlu0 %4412
  %v4414 = vsel %vm2405, %v4351, 0
  %v4416 = vsel %vm2405, %v4353, 0
  %v4418 = vsel %vm2405, %v4355, 0
  %v4420 = vsel %vm2405, %v4357, 0
  %v4422 = vsel %vm2405, %v4359, 0
  %v4424 = vsel %vm2405, %v4361, 0
  %v4426 = vsel %vm2405, %v4363, 0
  %v4428 = vsel %vm2405, %v4365, 0
  %v4430 = vsel %vm2405, %v4367, 0
  %v4432 = vsel %vm2405, %v4369, 0
  %v4434 = vsel %vm2405, %v4371, 0
  %v4436 = vsel %vm2405, %v4373, 0
  %v4438 = vsel %vm2405, %v4375, 0
  %v4440 = vsel %vm2405, %v4377, 0
  %v4442 = vsel %vm2405, %v4379, 0
  %v4444 = vsel %vm2405, %v4381, 0
  %v4446 = vsel %vm2405, %v4383, 0
  %v4448 = vsel %vm2405, %v4385, 0
  %v4450 = vsel %vm2405, %v4387, 0
  %v4452 = vsel %vm2405, %v4389, 0
  %v4454 = vsel %vm2405, %v4391, 0
  %v4456 = vsel %vm2405, %v4393, 0
  %v4458 = vsel %vm2405, %v4395, 0
  %v4460 = vsel %vm2405, %v4397, 0
  %v4462 = vsel %vm2405, %v4399, 0
  %v4464 = vsel %vm2405, %v4401, 0
  %v4466 = vsel %vm2405, %v4403, 0
  %v4468 = vsel %vm2405, %v4405, 0
  %v4470 = vsel %vm2405, %v4407, 0
  %v4472 = vsel %vm2405, %v4409, 0
  %v4474 = vsel %vm2405, %v4411, 0
  %v4476 = vsel %vm2405, %v4413, 0
  %4478 = vmatprep.subr.mxu0 0.0
  %4479 = vmatpush1.xpose.msra.mxu0 %v4446
  %4480 = vmatprep.subr.mxu0 0.0
  %4481 = vmatpush1.xpose.msra.mxu0 %v4448
  %4482 = vmatprep.subr.mxu0 0.0
  %4483 = vmatpush1.xpose.msra.mxu0 %v4450
  %4484 = vmatprep.subr.mxu0 0.0
  %4485 = vmatpush1.xpose.msra.mxu0 %v4452
  %4486 = vmatprep.subr.mxu0 0.0
  %4487 = vmatpush1.xpose.msra.mxu0 %v4454
  %4488 = vmatprep.subr.mxu0 0.0
  %4489 = vmatpush1.xpose.msra.mxu0 %v4456
  %4490 = vmatprep.subr.mxu0 0.0
  %4491 = vmatpush1.xpose.msra.mxu0 %v4458
  %4492 = vmatprep.subr.mxu0 0.0
  %4493 = vmatpush1.xpose.msra.mxu0 %v4460
  %4494 = vmatprep.subr.mxu0 0.0
  %4495 = vmatpush1.xpose.msra.mxu0 %v4462
  %4496 = vmatprep.subr.mxu0 0.0
  %4497 = vmatpush1.xpose.msra.mxu0 %v4464
  %4498 = vmatprep.subr.mxu0 0.0
  %4499 = vmatpush1.xpose.msra.mxu0 %v4466
  %4500 = vmatprep.subr.mxu0 0.0
  %4501 = vmatpush1.xpose.msra.mxu0 %v4468
  %4502 = vmatprep.subr.mxu0 0.0
  %4503 = vmatpush1.xpose.msra.mxu0 %v4470
  %4504 = vmatprep.subr.mxu0 0.0
  %4505 = vmatpush1.xpose.msra.mxu0 %v4472
  %4506 = vmatprep.subr.mxu0 0.0
  %4507 = vmatpush1.xpose.msra.mxu0 %v4474
  %4508 = vmatprep.subr.mxu0 0.0
  %4509 = vmatpush1.xpose.msra.mxu0 %v4476
  %4510 = vmatprep.subr.mxu0 0.0
  %4511 = vmatpush1.xpose.msra.mxu0 0.0
  %4512 = vmatprep.subr.mxu0 0.0
  %4513 = vmatpush1.xpose.msra.mxu0 0.0
  %4514 = vmatprep.subr.mxu0 0.0
  %4515 = vmatpush1.xpose.msra.mxu0 0.0
  %4516 = vmatprep.subr.mxu0 0.0
  %4517 = vmatpush1.xpose.msra.mxu0 0.0
  %4518 = vmatprep.subr.mxu0 0.0
  %4519 = vmatpush1.xpose.msra.mxu0 0.0
  %4520 = vmatprep.subr.mxu0 0.0
  %4521 = vmatpush1.xpose.msra.mxu0 0.0
  %4522 = vmatprep.subr.mxu0 0.0
  %4523 = vmatpush1.xpose.msra.mxu0 0.0
  %4524 = vmatprep.subr.mxu0 0.0
  %4525 = vmatpush1.xpose.msra.mxu0 0.0
  %4526 = vmatprep.subr.mxu0 0.0
  %4527 = vmatpush1.xpose.msra.mxu0 0.0
  %4528 = vmatprep.subr.mxu0 0.0
  %4529 = vmatpush1.xpose.msra.mxu0 0.0
  %4530 = vmatprep.subr.mxu0 0.0
  %4531 = vmatpush1.xpose.msra.mxu0 0.0
  %4532 = vmatprep.subr.mxu0 0.0
  %4533 = vmatpush1.xpose.msra.mxu0 0.0
  %4534 = vmatprep.subr.mxu0 0.0
  %4535 = vmatpush1.xpose.msra.mxu0 0.0
  %4536 = vmatprep.subr.mxu0 0.0
  %4537 = vmatpush1.xpose.msra.mxu0 0.0
  %4538 = vmatprep.subr.mxu0 0.0
  %4539 = vmatpush1.xpose.msra.mxu0 0.0
  %4540 = vmatprep.subr.mxu0 0.0
  %4541 = vmatpush1.xpose.msra.mxu0 0.0
  %4542 = vmatprep.mubr.f32.mxu0 0.0
  %4543 = vmatmul.mubr.f32.gmra.mrb[0].mxu0 %v4414
  %v4544 = vpop.f32.mrb[0].mxu0
  %v4545 = vadd.f32 %v170, %v4544
  %v4546 = vpop.f32.mrb[0].mxu0
  %4547 = vmatprep.mubr.f32.mxu0 0.0
  %4548 = vmatmul.mubr.f32.gmra.mrb[0].mxu0 %v4416
  %v4549 = vpop.f32.mrb[0].mxu0
  %v4550 = vadd.f32 %v171, %v4549
  %v4551 = vpop.f32.mrb[0].mxu0
  %4552 = vmatprep.mubr.f32.mxu0 0.0
  %4553 = vmatmul.mubr.f32.gmra.mrb[0].mxu0 %v4418
  %v4554 = vpop.f32.mrb[0].mxu0
  %v4555 = vadd.f32 %v172, %v4554
  %v4556 = vpop.f32.mrb[0].mxu0
  %4557 = vmatprep.mubr.f32.mxu0 0.0
  %4558 = vmatmul.mubr.f32.gmra.mrb[0].mxu0 %v4420
  %v4559 = vpop.f32.mrb[0].mxu0
  %v4560 = vadd.f32 %v173, %v4559
  %v4561 = vpop.f32.mrb[0].mxu0
  %4562 = vmatprep.mubr.f32.mxu0 0.0
  %4563 = vmatmul.mubr.f32.gmra.mrb[0].mxu0 %v4422
  %v4564 = vpop.f32.mrb[0].mxu0
  %v4565 = vadd.f32 %v174, %v4564
  %v4566 = vpop.f32.mrb[0].mxu0
  %4567 = vmatprep.mubr.f32.mxu0 0.0
  %4568 = vmatmul.mubr.f32.gmra.mrb[0].mxu0 %v4424
  %v4569 = vpop.f32.mrb[0].mxu0
  %v4570 = vadd.f32 %v175, %v4569
  %v4571 = vpop.f32.mrb[0].mxu0
  %4572 = vmatprep.mubr.f32.mxu0 0.0
  %4573 = vmatmul.mubr.f32.gmra.mrb[0].mxu0 %v4426
  %v4574 = vpop.f32.mrb[0].mxu0
  %v4575 = vadd.f32 %v176, %v4574
  %v4576 = vpop.f32.mrb[0].mxu0
  %4577 = vmatprep.mubr.f32.mxu0 0.0
  %4578 = vmatmul.mubr.f32.gmra.mrb[0].mxu0 %v4428
  %v4579 = vpop.f32.mrb[0].mxu0
  %v4580 = vadd.f32 %v177, %v4579
  %v4581 = vpop.f32.mrb[0].mxu0
  %4582 = vmatprep.mubr.f32.mxu0 0.0
  %4583 = vmatmul.mubr.f32.gmra.mrb[0].mxu0 %v4430
  %v4584 = vpop.f32.mrb[0].mxu0
  %v4585 = vadd.f32 %v178, %v4584
  %v4586 = vpop.f32.mrb[0].mxu0
  %4587 = vmatprep.mubr.f32.mxu0 0.0
  %4588 = vmatmul.mubr.f32.gmra.mrb[0].mxu0 %v4432
  %v4589 = vpop.f32.mrb[0].mxu0
  %v4590 = vadd.f32 %v179, %v4589
  %v4591 = vpop.f32.mrb[0].mxu0
  %4592 = vmatprep.mubr.f32.mxu0 0.0
  %4593 = vmatmul.mubr.f32.gmra.mrb[0].mxu0 %v4434
  %v4594 = vpop.f32.mrb[0].mxu0
  %v4595 = vadd.f32 %v180, %v4594
  %v4596 = vpop.f32.mrb[0].mxu0
  %4597 = vmatprep.mubr.f32.mxu0 0.0
  %4598 = vmatmul.mubr.f32.gmra.mrb[0].mxu0 %v4436
  %v4599 = vpop.f32.mrb[0].mxu0
  %v4600 = vadd.f32 %v181, %v4599
  %v4601 = vpop.f32.mrb[0].mxu0
  %4602 = vmatprep.mubr.f32.mxu0 0.0
  %4603 = vmatmul.mubr.f32.gmra.mrb[0].mxu0 %v4438
  %v4604 = vpop.f32.mrb[0].mxu0
  %v4605 = vadd.f32 %v182, %v4604
  %v4606 = vpop.f32.mrb[0].mxu0
  %4607 = vmatprep.mubr.f32.mxu0 0.0
  %4608 = vmatmul.mubr.f32.gmra.mrb[0].mxu0 %v4440
  %v4609 = vpop.f32.mrb[0].mxu0
  %v4610 = vadd.f32 %v183, %v4609
  %v4611 = vpop.f32.mrb[0].mxu0
  %4612 = vmatprep.mubr.f32.mxu0 0.0
  %4613 = vmatmul.mubr.f32.gmra.mrb[0].mxu0 %v4442
  %v4614 = vpop.f32.mrb[0].mxu0
  %v4615 = vadd.f32 %v184, %v4614
  %v4616 = vpop.f32.mrb[0].mxu0
  %4617 = vmatprep.mubr.f32.mxu0 0.0
  %4618 = vmatmul.mubr.f32.gmra.mrb[0].mxu0 %v4444
  %v4619 = vpop.f32.mrb[0].mxu0
  %v4620 = vadd.f32 %v185, %v4619
  %v4621 = vpop.f32.mrb[0].mxu0
  %4622 = vdwg.mxu0
  %4623 = vmax.xlane.f32.xlu0 %v4545
  %v4624 = vpop.xlane.xlu0 %4623
  %4625 = vmax.xlane.f32.xlu0 %v4550
  %v4626 = vpop.xlane.xlu0 %4625
  %4627 = vmax.xlane.f32.xlu0 %v4555
  %v4628 = vpop.xlane.xlu0 %4627
  %4629 = vmax.xlane.f32.xlu0 %v4560
  %v4630 = vpop.xlane.xlu0 %4629
  %4631 = vmax.xlane.f32.xlu0 %v4565
  %v4632 = vpop.xlane.xlu0 %4631
  %4633 = vmax.xlane.f32.xlu0 %v4570
  %v4634 = vpop.xlane.xlu0 %4633
  %4635 = vmax.xlane.f32.xlu0 %v4575
  %v4636 = vpop.xlane.xlu0 %4635
  %4637 = vmax.xlane.f32.xlu0 %v4580
  %v4638 = vpop.xlane.xlu0 %4637
  %4639 = vmax.xlane.f32.xlu0 %v4585
  %v4640 = vpop.xlane.xlu0 %4639
  %4641 = vmax.xlane.f32.xlu0 %v4590
  %v4642 = vpop.xlane.xlu0 %4641
  %4643 = vmax.xlane.f32.xlu0 %v4595
  %v4644 = vpop.xlane.xlu0 %4643
  %4645 = vmax.xlane.f32.xlu0 %v4600
  %v4646 = vpop.xlane.xlu0 %4645
  %4647 = vmax.xlane.f32.xlu0 %v4605
  %v4648 = vpop.xlane.xlu0 %4647
  %4649 = vmax.xlane.f32.xlu0 %v4610
  %v4650 = vpop.xlane.xlu0 %4649
  %4651 = vmax.xlane.f32.xlu0 %v4615
  %v4652 = vpop.xlane.xlu0 %4651
  %4653 = vmax.xlane.f32.xlu0 %v4620
  %v4654 = vpop.xlane.xlu0 %4653
  %v4655 = vsub.f32 %v4545, %v4624
  %v4656 = vsub.f32 %v4550, %v4626
  %v4657 = vsub.f32 %v4555, %v4628
  %v4658 = vsub.f32 %v4560, %v4630
  %v4659 = vsub.f32 %v4565, %v4632
  %v4660 = vsub.f32 %v4570, %v4634
  %v4661 = vsub.f32 %v4575, %v4636
  %v4662 = vsub.f32 %v4580, %v4638
  %v4663 = vsub.f32 %v4585, %v4640
  %v4664 = vsub.f32 %v4590, %v4642
  %v4665 = vsub.f32 %v4595, %v4644
  %v4666 = vsub.f32 %v4600, %v4646
  %v4667 = vsub.f32 %v4605, %v4648
  %v4668 = vsub.f32 %v4610, %v4650
  %v4669 = vsub.f32 %v4615, %v4652
  %v4670 = vsub.f32 %v4620, %v4654
  %v4671 = vmul.f32 %v4655, 1.442695
  %v4672 = vpow.pop %v4671
  %v4673 = vmul.f32 %v4656, 1.442695
  %v4674 = vpow.pop %v4673
  %v4675 = vmul.f32 %v4657, 1.442695
  %v4676 = vpow.pop %v4675
  %v4677 = vmul.f32 %v4658, 1.442695
  %v4678 = vpow.pop %v4677
  %v4679 = vmul.f32 %v4659, 1.442695
  %v4680 = vpow.pop %v4679
  %v4681 = vmul.f32 %v4660, 1.442695
  %v4682 = vpow.pop %v4681
  %v4683 = vmul.f32 %v4661, 1.442695
  %v4684 = vpow.pop %v4683
  %v4685 = vmul.f32 %v4662, 1.442695
  %v4686 = vpow.pop %v4685
  %v4687 = vmul.f32 %v4663, 1.442695
  %v4688 = vpow.pop %v4687
  %v4689 = vmul.f32 %v4664, 1.442695
  %v4690 = vpow.pop %v4689
  %v4691 = vmul.f32 %v4665, 1.442695
  %v4692 = vpow.pop %v4691
  %v4693 = vmul.f32 %v4666, 1.442695
  %v4694 = vpow.pop %v4693
  %v4695 = vmul.f32 %v4667, 1.442695
  %v4696 = vpow.pop %v4695
  %v4697 = vmul.f32 %v4668, 1.442695
  %v4698 = vpow.pop %v4697
  %v4699 = vmul.f32 %v4669, 1.442695
  %v4700 = vpow.pop %v4699
  %v4701 = vmul.f32 %v4670, 1.442695
  %v4702 = vpow.pop %v4701
  %4703 = vadd.xlane.f32.xlu0 %v4672
  %v4704 = vpop.xlane.xlu0 %4703
  %4705 = vadd.xlane.f32.xlu0 %v4674
  %v4706 = vpop.xlane.xlu0 %4705
  %4707 = vadd.xlane.f32.xlu0 %v4676
  %v4708 = vpop.xlane.xlu0 %4707
  %4709 = vadd.xlane.f32.xlu0 %v4678
  %v4710 = vpop.xlane.xlu0 %4709
  %4711 = vadd.xlane.f32.xlu0 %v4680
  %v4712 = vpop.xlane.xlu0 %4711
  %4713 = vadd.xlane.f32.xlu0 %v4682
  %v4714 = vpop.xlane.xlu0 %4713
  %4715 = vadd.xlane.f32.xlu0 %v4684
  %v4716 = vpop.xlane.xlu0 %4715
  %4717 = vadd.xlane.f32.xlu0 %v4686
  %v4718 = vpop.xlane.xlu0 %4717
  %4719 = vadd.xlane.f32.xlu0 %v4688
  %v4720 = vpop.xlane.xlu0 %4719
  %4721 = vadd.xlane.f32.xlu0 %v4690
  %v4722 = vpop.xlane.xlu0 %4721
  %4723 = vadd.xlane.f32.xlu0 %v4692
  %v4724 = vpop.xlane.xlu0 %4723
  %4725 = vadd.xlane.f32.xlu0 %v4694
  %v4726 = vpop.xlane.xlu0 %4725
  %4727 = vadd.xlane.f32.xlu0 %v4696
  %v4728 = vpop.xlane.xlu0 %4727
  %4729 = vadd.xlane.f32.xlu0 %v4698
  %v4730 = vpop.xlane.xlu0 %4729
  %4731 = vadd.xlane.f32.xlu0 %v4700
  %v4732 = vpop.xlane.xlu0 %4731
  %4733 = vadd.xlane.f32.xlu0 %v4702
  %v4734 = vpop.xlane.xlu0 %4733
  %v4735 = vrcp.pop %v4704
  %v4736 = vrcp.pop %v4706
  %v4737 = vrcp.pop %v4708
  %v4738 = vrcp.pop %v4710
  %v4739 = vrcp.pop %v4712
  %v4740 = vrcp.pop %v4714
  %v4741 = vrcp.pop %v4716
  %v4742 = vrcp.pop %v4718
  %v4743 = vrcp.pop %v4720
  %v4744 = vrcp.pop %v4722
  %v4745 = vrcp.pop %v4724
  %v4746 = vrcp.pop %v4726
  %v4747 = vrcp.pop %v4728
  %v4748 = vrcp.pop %v4730
  %v4749 = vrcp.pop %v4732
  %v4750 = vrcp.pop %v4734
  %v4751 = vmul.f32 %v4672, %v4735
  %v4752 = vmul.f32 %v4674, %v4736
  %v4753 = vmul.f32 %v4676, %v4737
  %v4754 = vmul.f32 %v4678, %v4738
  %v4755 = vmul.f32 %v4680, %v4739
  %v4756 = vmul.f32 %v4682, %v4740
  %v4757 = vmul.f32 %v4684, %v4741
  %v4758 = vmul.f32 %v4686, %v4742
  %v4759 = vmul.f32 %v4688, %v4743
  %v4760 = vmul.f32 %v4690, %v4744
  %v4761 = vmul.f32 %v4692, %v4745
  %v4762 = vmul.f32 %v4694, %v4746
  %v4763 = vmul.f32 %v4696, %v4747
  %v4764 = vmul.f32 %v4698, %v4748
  %v4765 = vmul.f32 %v4700, %v4749
  %v4766 = vmul.f32 %v4702, %v4750
  %4767 = vrot.lane.b32.xlu0 %v2279, 40
  %v4768 = vpop.permute.xlu0 %4767
  %4769 = vrot.lane.b32.xlu0 %v2284, 40
  %v4770 = vpop.permute.xlu0 %4769
  %4771 = vrot.lane.b32.xlu0 %v2289, 40
  %v4772 = vpop.permute.xlu0 %4771
  %4773 = vrot.lane.b32.xlu0 %v2294, 40
  %v4774 = vpop.permute.xlu0 %4773
  %4775 = vrot.lane.b32.xlu0 %v2299, 40
  %v4776 = vpop.permute.xlu0 %4775
  %4777 = vrot.lane.b32.xlu0 %v2304, 40
  %v4778 = vpop.permute.xlu0 %4777
  %4779 = vrot.lane.b32.xlu0 %v2309, 40
  %v4780 = vpop.permute.xlu0 %4779
  %4781 = vrot.lane.b32.xlu0 %v2314, 40
  %v4782 = vpop.permute.xlu0 %4781
  %4783 = vrot.lane.b32.xlu0 %v2319, 40
  %v4784 = vpop.permute.xlu0 %4783
  %4785 = vrot.lane.b32.xlu0 %v2324, 40
  %v4786 = vpop.permute.xlu0 %4785
  %4787 = vrot.lane.b32.xlu0 %v2329, 40
  %v4788 = vpop.permute.xlu0 %4787
  %4789 = vrot.lane.b32.xlu0 %v2334, 40
  %v4790 = vpop.permute.xlu0 %4789
  %4791 = vrot.lane.b32.xlu0 %v2339, 40
  %v4792 = vpop.permute.xlu0 %4791
  %4793 = vrot.lane.b32.xlu0 %v2344, 40
  %v4794 = vpop.permute.xlu0 %4793
  %4795 = vrot.lane.b32.xlu0 %v2349, 40
  %v4796 = vpop.permute.xlu0 %4795
  %4797 = vrot.lane.b32.xlu0 %v2354, 40
  %v4798 = vpop.permute.xlu0 %4797
  %4815 = vmatprep.subr.mxu0 0.0
  %4816 = vmatpush1.msra.mxu0 %v4768
  %4817 = vmatprep.subr.mxu0 0.0
  %4818 = vmatpush1.msra.mxu0 %v4770
  %4819 = vmatprep.subr.mxu0 0.0
  %4820 = vmatpush1.msra.mxu0 %v4772
  %4821 = vmatprep.subr.mxu0 0.0
  %4822 = vmatpush1.msra.mxu0 %v4774
  %4823 = vmatprep.subr.mxu0 0.0
  %4824 = vmatpush1.msra.mxu0 %v4776
  %4825 = vmatprep.subr.mxu0 0.0
  %4826 = vmatpush1.msra.mxu0 %v4778
  %4827 = vmatprep.subr.mxu0 0.0
  %4828 = vmatpush1.msra.mxu0 %v4780
  %4829 = vmatprep.subr.mxu0 0.0
  %4830 = vmatpush1.msra.mxu0 %v4782
  %4831 = vmatprep.subr.mxu0 0.0
  %4832 = vmatpush1.msra.mxu0 %v4784
  %4833 = vmatprep.subr.mxu0 0.0
  %4834 = vmatpush1.msra.mxu0 %v4786
  %4835 = vmatprep.subr.mxu0 0.0
  %4836 = vmatpush1.msra.mxu0 %v4788
  %4837 = vmatprep.subr.mxu0 0.0
  %4838 = vmatpush1.msra.mxu0 %v4790
  %4839 = vmatprep.subr.mxu0 0.0
  %4840 = vmatpush1.msra.mxu0 %v4792
  %4841 = vmatprep.subr.mxu0 0.0
  %4842 = vmatpush1.msra.mxu0 %v4794
  %4843 = vmatprep.subr.mxu0 0.0
  %4844 = vmatpush1.msra.mxu0 %v4796
  %4845 = vmatprep.subr.mxu0 0.0
  %4846 = vmatpush1.msra.mxu0 %v4798
  %4847 = vmatprep.subr.mxu0 0.0
  %4848 = vmatpush1.msra.mxu0 0.0
  %4849 = vmatprep.subr.mxu0 0.0
  %4850 = vmatpush1.msra.mxu0 0.0
  %4851 = vmatprep.subr.mxu0 0.0
  %4852 = vmatpush1.msra.mxu0 0.0
  %4853 = vmatprep.subr.mxu0 0.0
  %4854 = vmatpush1.msra.mxu0 0.0
  %4855 = vmatprep.subr.mxu0 0.0
  %4856 = vmatpush1.msra.mxu0 0.0
  %4857 = vmatprep.subr.mxu0 0.0
  %4858 = vmatpush1.msra.mxu0 0.0
  %4859 = vmatprep.subr.mxu0 0.0
  %4860 = vmatpush1.msra.mxu0 0.0
  %4861 = vmatprep.subr.mxu0 0.0
  %4862 = vmatpush1.msra.mxu0 0.0
  %4863 = vmatprep.subr.mxu0 0.0
  %4864 = vmatpush1.msra.mxu0 0.0
  %4865 = vmatprep.subr.mxu0 0.0
  %4866 = vmatpush1.msra.mxu0 0.0
  %4867 = vmatprep.subr.mxu0 0.0
  %4868 = vmatpush1.msra.mxu0 0.0
  %4869 = vmatprep.subr.mxu0 0.0
  %4870 = vmatpush1.msra.mxu0 0.0
  %4871 = vmatprep.subr.mxu0 0.0
  %4872 = vmatpush1.msra.mxu0 0.0
  %4873 = vmatprep.subr.mxu0 0.0
  %4874 = vmatpush1.msra.mxu0 0.0
  %4875 = vmatprep.subr.mxu0 0.0
  %4876 = vmatpush1.msra.mxu0 0.0
  %4877 = vmatprep.subr.mxu0 0.0
  %4878 = vmatpush1.msra.mxu0 0.0
  %4879 = vmatprep.mubr.f32.mxu0 0.0
  %4880 = vmatmul.mubr.f32.gmra.mrb[0].mxu0 %v4751
  %v4881 = vpop.f32.mrb[0].mxu0
  %v4882 = vadd.f32 0.0, %v4881
  %v4883 = vpop.f32.mrb[0].mxu0
  %4884 = vmatprep.mubr.f32.mxu0 0.0
  %4885 = vmatmul.mubr.f32.gmra.mrb[0].mxu0 %v4752
  %v4886 = vpop.f32.mrb[0].mxu0
  %v4887 = vadd.f32 0.0, %v4886
  %v4888 = vpop.f32.mrb[0].mxu0
  %4889 = vmatprep.mubr.f32.mxu0 0.0
  %4890 = vmatmul.mubr.f32.gmra.mrb[0].mxu0 %v4753
  %v4891 = vpop.f32.mrb[0].mxu0
  %v4892 = vadd.f32 0.0, %v4891
  %v4893 = vpop.f32.mrb[0].mxu0
  %4894 = vmatprep.mubr.f32.mxu0 0.0
  %4895 = vmatmul.mubr.f32.gmra.mrb[0].mxu0 %v4754
  %v4896 = vpop.f32.mrb[0].mxu0
  %v4897 = vadd.f32 0.0, %v4896
  %v4898 = vpop.f32.mrb[0].mxu0
  %4899 = vmatprep.mubr.f32.mxu0 0.0
  %4900 = vmatmul.mubr.f32.gmra.mrb[0].mxu0 %v4755
  %v4901 = vpop.f32.mrb[0].mxu0
  %v4902 = vadd.f32 0.0, %v4901
  %v4903 = vpop.f32.mrb[0].mxu0
  %4904 = vmatprep.mubr.f32.mxu0 0.0
  %4905 = vmatmul.mubr.f32.gmra.mrb[0].mxu0 %v4756
  %v4906 = vpop.f32.mrb[0].mxu0
  %v4907 = vadd.f32 0.0, %v4906
  %v4908 = vpop.f32.mrb[0].mxu0
  %4909 = vmatprep.mubr.f32.mxu0 0.0
  %4910 = vmatmul.mubr.f32.gmra.mrb[0].mxu0 %v4757
  %v4911 = vpop.f32.mrb[0].mxu0
  %v4912 = vadd.f32 0.0, %v4911
  %v4913 = vpop.f32.mrb[0].mxu0
  %4914 = vmatprep.mubr.f32.mxu0 0.0
  %4915 = vmatmul.mubr.f32.gmra.mrb[0].mxu0 %v4758
  %v4916 = vpop.f32.mrb[0].mxu0
  %v4917 = vadd.f32 0.0, %v4916
  %v4918 = vpop.f32.mrb[0].mxu0
  %4919 = vmatprep.mubr.f32.mxu0 0.0
  %4920 = vmatmul.mubr.f32.gmra.mrb[0].mxu0 %v4759
  %v4921 = vpop.f32.mrb[0].mxu0
  %v4922 = vadd.f32 0.0, %v4921
  %v4923 = vpop.f32.mrb[0].mxu0
  %4924 = vmatprep.mubr.f32.mxu0 0.0
  %4925 = vmatmul.mubr.f32.gmra.mrb[0].mxu0 %v4760
  %v4926 = vpop.f32.mrb[0].mxu0
  %v4927 = vadd.f32 0.0, %v4926
  %v4928 = vpop.f32.mrb[0].mxu0
  %4929 = vmatprep.mubr.f32.mxu0 0.0
  %4930 = vmatmul.mubr.f32.gmra.mrb[0].mxu0 %v4761
  %v4931 = vpop.f32.mrb[0].mxu0
  %v4932 = vadd.f32 0.0, %v4931
  %v4933 = vpop.f32.mrb[0].mxu0
  %4934 = vmatprep.mubr.f32.mxu0 0.0
  %4935 = vmatmul.mubr.f32.gmra.mrb[0].mxu0 %v4762
  %v4936 = vpop.f32.mrb[0].mxu0
  %v4937 = vadd.f32 0.0, %v4936
  %v4938 = vpop.f32.mrb[0].mxu0
  %4939 = vmatprep.mubr.f32.mxu0 0.0
  %4940 = vmatmul.mubr.f32.gmra.mrb[0].mxu0 %v4763
  %v4941 = vpop.f32.mrb[0].mxu0
  %v4942 = vadd.f32 0.0, %v4941
  %v4943 = vpop.f32.mrb[0].mxu0
  %4944 = vmatprep.mubr.f32.mxu0 0.0
  %4945 = vmatmul.mubr.f32.gmra.mrb[0].mxu0 %v4764
  %v4946 = vpop.f32.mrb[0].mxu0
  %v4947 = vadd.f32 0.0, %v4946
  %v4948 = vpop.f32.mrb[0].mxu0
  %4949 = vmatprep.mubr.f32.mxu0 0.0
  %4950 = vmatmul.mubr.f32.gmra.mrb[0].mxu0 %v4765
  %v4951 = vpop.f32.mrb[0].mxu0
  %v4952 = vadd.f32 0.0, %v4951
  %v4953 = vpop.f32.mrb[0].mxu0
  %4954 = vmatprep.mubr.f32.mxu0 0.0
  %4955 = vmatmul.mubr.f32.gmra.mrb[0].mxu0 %v4766
  %v4956 = vpop.f32.mrb[0].mxu0
  %v4957 = vadd.f32 0.0, %v4956
  %v4958 = vpop.f32.mrb[0].mxu0
  %4959 = vdwg.mxu0
  %4976 = vrot.lane.b32.xlu0 %v4882, 24
  %v4977 = vpop.permute.xlu0 %4976
  %4978 = vrot.lane.b32.xlu0 %v4887, 24
  %v4979 = vpop.permute.xlu0 %4978
  %4980 = vrot.lane.b32.xlu0 %v4892, 24
  %v4981 = vpop.permute.xlu0 %4980
  %4982 = vrot.lane.b32.xlu0 %v4897, 24
  %v4983 = vpop.permute.xlu0 %4982
  %4984 = vrot.lane.b32.xlu0 %v4902, 24
  %v4985 = vpop.permute.xlu0 %4984
  %4986 = vrot.lane.b32.xlu0 %v4907, 24
  %v4987 = vpop.permute.xlu0 %4986
  %4988 = vrot.lane.b32.xlu0 %v4912, 24
  %v4989 = vpop.permute.xlu0 %4988
  %4990 = vrot.lane.b32.xlu0 %v4917, 24
  %v4991 = vpop.permute.xlu0 %4990
  %4992 = vrot.lane.b32.xlu0 %v4922, 24
  %v4993 = vpop.permute.xlu0 %4992
  %4994 = vrot.lane.b32.xlu0 %v4927, 24
  %v4995 = vpop.permute.xlu0 %4994
  %4996 = vrot.lane.b32.xlu0 %v4932, 24
  %v4997 = vpop.permute.xlu0 %4996
  %4998 = vrot.lane.b32.xlu0 %v4937, 24
  %v4999 = vpop.permute.xlu0 %4998
  %5000 = vrot.lane.b32.xlu0 %v4942, 24
  %v5001 = vpop.permute.xlu0 %5000
  %5002 = vrot.lane.b32.xlu0 %v4947, 24
  %v5003 = vpop.permute.xlu0 %5002
  %5004 = vrot.lane.b32.xlu0 %v4952, 24
  %v5005 = vpop.permute.xlu0 %5004
  %5006 = vrot.lane.b32.xlu0 %v4957, 24
  %v5007 = vpop.permute.xlu0 %5006
  %vm5024 = vcmask 261312
  %5025 = vst.msk [vmem:[#allocation2] sm:$0xff] %vm5024, %v4977
  %5026 = vst.msk [vmem:[#allocation2 + $0x8] sm:$0xff] %vm5024, %v4979
  %5027 = vst.msk [vmem:[#allocation2 + $0x10] sm:$0xff] %vm5024, %v4981
  %5028 = vst.msk [vmem:[#allocation2 + $0x18] sm:$0xff] %vm5024, %v4983
  %5029 = vst.msk [vmem:[#allocation2 + $0x20] sm:$0xff] %vm5024, %v4985
  %5030 = vst.msk [vmem:[#allocation2 + $0x28] sm:$0xff] %vm5024, %v4987
  %5031 = vst.msk [vmem:[#allocation2 + $0x30] sm:$0xff] %vm5024, %v4989
  %5032 = vst.msk [vmem:[#allocation2 + $0x38] sm:$0xff] %vm5024, %v4991
  %5033 = vst.msk [vmem:[#allocation2 + $0x40] sm:$0xff] %vm5024, %v4993
  %5034 = vst.msk [vmem:[#allocation2 + $0x48] sm:$0xff] %vm5024, %v4995
  %5035 = vst.msk [vmem:[#allocation2 + $0x50] sm:$0xff] %vm5024, %v4997
  %5036 = vst.msk [vmem:[#allocation2 + $0x58] sm:$0xff] %vm5024, %v4999
  %5037 = vst.msk [vmem:[#allocation2 + $0x60] sm:$0xff] %vm5024, %v5001
  %5038 = vst.msk [vmem:[#allocation2 + $0x68] sm:$0xff] %vm5024, %v5003
  %5039 = vst.msk [vmem:[#allocation2 + $0x70] sm:$0xff] %vm5024, %v5005
  %5040 = vst.msk [vmem:[#allocation2 + $0x78] sm:$0xff] %vm5024, %v5007
  %v5041 = vld [vmem:[#allocation2] sm:$0xff]
  %v5042 = vld [vmem:[#allocation2 + $0x8] sm:$0xff]
  %v5043 = vld [vmem:[#allocation2 + $0x10] sm:$0xff]
  %v5044 = vld [vmem:[#allocation2 + $0x18] sm:$0xff]
  %v5045 = vld [vmem:[#allocation2 + $0x20] sm:$0xff]
  %v5046 = vld [vmem:[#allocation2 + $0x28] sm:$0xff]
  %v5047 = vld [vmem:[#allocation2 + $0x30] sm:$0xff]
  %v5048 = vld [vmem:[#allocation2 + $0x38] sm:$0xff]
  %v5049 = vld [vmem:[#allocation2 + $0x40] sm:$0xff]
  %v5050 = vld [vmem:[#allocation2 + $0x48] sm:$0xff]
  %v5051 = vld [vmem:[#allocation2 + $0x50] sm:$0xff]
  %v5052 = vld [vmem:[#allocation2 + $0x58] sm:$0xff]
  %v5053 = vld [vmem:[#allocation2 + $0x60] sm:$0xff]
  %v5054 = vld [vmem:[#allocation2 + $0x68] sm:$0xff]
  %v5055 = vld [vmem:[#allocation2 + $0x70] sm:$0xff]
  %v5056 = vld [vmem:[#allocation2 + $0x78] sm:$0xff]
  %5061 = vrot.lane.b32.xlu0 %v1118, 96
  %v5062 = vpop.permute.xlu0 %5061
  %5063 = vrot.lane.b32.xlu0 %v1120, 96
  %v5064 = vpop.permute.xlu0 %5063
  %5065 = vrot.lane.b32.xlu0 %v1122, 96
  %v5066 = vpop.permute.xlu0 %5065
  %5067 = vrot.lane.b32.xlu0 %v1124, 96
  %v5068 = vpop.permute.xlu0 %5067
  %5074 = vrot.lane.b32.xlu0 %v2163, 32
  %v5075 = vpop.permute.xlu0 %5074
  %v5078 = vsel %vm505, %v5041, 0
  %v5081 = vsel %vm505, %v5042, 0
  %v5084 = vsel %vm505, %v5043, 0
  %v5087 = vsel %vm505, %v5044, 0
  %v5090 = vsel %vm505, %v5045, 0
  %v5093 = vsel %vm505, %v5046, 0
  %v5096 = vsel %vm505, %v5047, 0
  %v5099 = vsel %vm505, %v5048, 0
  %v5102 = vsel %vm505, %v5049, 0
  %v5105 = vsel %vm505, %v5050, 0
  %v5108 = vsel %vm505, %v5051, 0
  %v5111 = vsel %vm505, %v5052, 0
  %v5114 = vsel %vm505, %v5053, 0
  %v5117 = vsel %vm505, %v5054, 0
  %v5120 = vsel %vm505, %v5055, 0
  %v5123 = vsel %vm505, %v5056, 0
  %5125 = vmatprep.subr.mxu0 0.0
  %5126 = vmatpush1.msra.mxu0 %v5062
  %5127 = vmatprep.subr.mxu0 0.0
  %5128 = vmatpush1.msra.mxu0 %v5064
  %5129 = vmatprep.subr.mxu0 0.0
  %5130 = vmatpush1.msra.mxu0 %v5066
  %5131 = vmatprep.subr.mxu0 0.0
  %5132 = vmatpush1.msra.mxu0 %v5068
  %5133 = vmatprep.subr.mxu0 0.0
  %5134 = vmatpush1.msra.mxu0 0.0
  %5135 = vmatprep.subr.mxu0 0.0
  %5136 = vmatpush1.msra.mxu0 0.0
  %5137 = vmatprep.subr.mxu0 0.0
  %5138 = vmatpush1.msra.mxu0 0.0
  %5139 = vmatprep.subr.mxu0 0.0
  %5140 = vmatpush1.msra.mxu0 0.0
  %5141 = vmatprep.subr.mxu0 0.0
  %5142 = vmatpush1.msra.mxu0 0.0
  %5143 = vmatprep.subr.mxu0 0.0
  %5144 = vmatpush1.msra.mxu0 0.0
  %5145 = vmatprep.subr.mxu0 0.0
  %5146 = vmatpush1.msra.mxu0 0.0
  %5147 = vmatprep.subr.mxu0 0.0
  %5148 = vmatpush1.msra.mxu0 0.0
  %5149 = vmatprep.subr.mxu0 0.0
  %5150 = vmatpush1.msra.mxu0 0.0
  %5151 = vmatprep.subr.mxu0 0.0
  %5152 = vmatpush1.msra.mxu0 0.0
  %5153 = vmatprep.subr.mxu0 0.0
  %5154 = vmatpush1.msra.mxu0 0.0
  %5155 = vmatprep.subr.mxu0 0.0
  %5156 = vmatpush1.msra.mxu0 0.0
  %5157 = vmatprep.subr.mxu0 0.0
  %5158 = vmatpush1.msra.mxu0 0.0
  %5159 = vmatprep.subr.mxu0 0.0
  %5160 = vmatpush1.msra.mxu0 0.0
  %5161 = vmatprep.subr.mxu0 0.0
  %5162 = vmatpush1.msra.mxu0 0.0
  %5163 = vmatprep.subr.mxu0 0.0
  %5164 = vmatpush1.msra.mxu0 0.0
  %5165 = vmatprep.subr.mxu0 0.0
  %5166 = vmatpush1.msra.mxu0 0.0
  %5167 = vmatprep.subr.mxu0 0.0
  %5168 = vmatpush1.msra.mxu0 0.0
  %5169 = vmatprep.subr.mxu0 0.0
  %5170 = vmatpush1.msra.mxu0 0.0
  %5171 = vmatprep.subr.mxu0 0.0
  %5172 = vmatpush1.msra.mxu0 0.0
  %5173 = vmatprep.subr.mxu0 0.0
  %5174 = vmatpush1.msra.mxu0 0.0
  %5175 = vmatprep.subr.mxu0 0.0
  %5176 = vmatpush1.msra.mxu0 0.0
  %5177 = vmatprep.subr.mxu0 0.0
  %5178 = vmatpush1.msra.mxu0 0.0
  %5179 = vmatprep.subr.mxu0 0.0
  %5180 = vmatpush1.msra.mxu0 0.0
  %5181 = vmatprep.subr.mxu0 0.0
  %5182 = vmatpush1.msra.mxu0 0.0
  %5183 = vmatprep.subr.mxu0 0.0
  %5184 = vmatpush1.msra.mxu0 0.0
  %5185 = vmatprep.subr.mxu0 0.0
  %5186 = vmatpush1.msra.mxu0 0.0
  %5187 = vmatprep.subr.mxu0 0.0
  %5188 = vmatpush1.msra.mxu0 0.0
  %5189 = vmatprep.mubr.f32.mxu0 0.0
  %5190 = vmatmul.mubr.f32.gmra.mrb[0].mxu0 %v5078
  %v5191 = vpop.f32.mrb[0].mxu0
  %v5192 = vadd.f32 %v5075, %v5191
  %v5193 = vpop.f32.mrb[0].mxu0
  %5194 = vmatprep.mubr.f32.mxu0 0.0
  %5195 = vmatmul.mubr.f32.gmra.mrb[0].mxu0 %v5081
  %v5196 = vpop.f32.mrb[0].mxu0
  %v5197 = vadd.f32 %v5075, %v5196
  %v5198 = vpop.f32.mrb[0].mxu0
  %5199 = vmatprep.mubr.f32.mxu0 0.0
  %5200 = vmatmul.mubr.f32.gmra.mrb[0].mxu0 %v5084
  %v5201 = vpop.f32.mrb[0].mxu0
  %v5202 = vadd.f32 %v5075, %v5201
  %v5203 = vpop.f32.mrb[0].mxu0
  %5204 = vmatprep.mubr.f32.mxu0 0.0
  %5205 = vmatmul.mubr.f32.gmra.mrb[0].mxu0 %v5087
  %v5206 = vpop.f32.mrb[0].mxu0
  %v5207 = vadd.f32 %v5075, %v5206
  %v5208 = vpop.f32.mrb[0].mxu0
  %5209 = vmatprep.mubr.f32.mxu0 0.0
  %5210 = vmatmul.mubr.f32.gmra.mrb[0].mxu0 %v5090
  %v5211 = vpop.f32.mrb[0].mxu0
  %v5212 = vadd.f32 %v5075, %v5211
  %v5213 = vpop.f32.mrb[0].mxu0
  %5214 = vmatprep.mubr.f32.mxu0 0.0
  %5215 = vmatmul.mubr.f32.gmra.mrb[0].mxu0 %v5093
  %v5216 = vpop.f32.mrb[0].mxu0
  %v5217 = vadd.f32 %v5075, %v5216
  %v5218 = vpop.f32.mrb[0].mxu0
  %5219 = vmatprep.mubr.f32.mxu0 0.0
  %5220 = vmatmul.mubr.f32.gmra.mrb[0].mxu0 %v5096
  %v5221 = vpop.f32.mrb[0].mxu0
  %v5222 = vadd.f32 %v5075, %v5221
  %v5223 = vpop.f32.mrb[0].mxu0
  %5224 = vmatprep.mubr.f32.mxu0 0.0
  %5225 = vmatmul.mubr.f32.gmra.mrb[0].mxu0 %v5099
  %v5226 = vpop.f32.mrb[0].mxu0
  %v5227 = vadd.f32 %v5075, %v5226
  %v5228 = vpop.f32.mrb[0].mxu0
  %5229 = vmatprep.mubr.f32.mxu0 0.0
  %5230 = vmatmul.mubr.f32.gmra.mrb[0].mxu0 %v5102
  %v5231 = vpop.f32.mrb[0].mxu0
  %v5232 = vadd.f32 %v5075, %v5231
  %v5233 = vpop.f32.mrb[0].mxu0
  %5234 = vmatprep.mubr.f32.mxu0 0.0
  %5235 = vmatmul.mubr.f32.gmra.mrb[0].mxu0 %v5105
  %v5236 = vpop.f32.mrb[0].mxu0
  %v5237 = vadd.f32 %v5075, %v5236
  %v5238 = vpop.f32.mrb[0].mxu0
  %5239 = vmatprep.mubr.f32.mxu0 0.0
  %5240 = vmatmul.mubr.f32.gmra.mrb[0].mxu0 %v5108
  %v5241 = vpop.f32.mrb[0].mxu0
  %v5242 = vadd.f32 %v5075, %v5241
  %v5243 = vpop.f32.mrb[0].mxu0
  %5244 = vmatprep.mubr.f32.mxu0 0.0
  %5245 = vmatmul.mubr.f32.gmra.mrb[0].mxu0 %v5111
  %v5246 = vpop.f32.mrb[0].mxu0
  %v5247 = vadd.f32 %v5075, %v5246
  %v5248 = vpop.f32.mrb[0].mxu0
  %5249 = vmatprep.mubr.f32.mxu0 0.0
  %5250 = vmatmul.mubr.f32.gmra.mrb[0].mxu0 %v5114
  %v5251 = vpop.f32.mrb[0].mxu0
  %v5252 = vadd.f32 %v5075, %v5251
  %v5253 = vpop.f32.mrb[0].mxu0
  %5254 = vmatprep.mubr.f32.mxu0 0.0
  %5255 = vmatmul.mubr.f32.gmra.mrb[0].mxu0 %v5117
  %v5256 = vpop.f32.mrb[0].mxu0
  %v5257 = vadd.f32 %v5075, %v5256
  %v5258 = vpop.f32.mrb[0].mxu0
  %5259 = vmatprep.mubr.f32.mxu0 0.0
  %5260 = vmatmul.mubr.f32.gmra.mrb[0].mxu0 %v5120
  %v5261 = vpop.f32.mrb[0].mxu0
  %v5262 = vadd.f32 %v5075, %v5261
  %v5263 = vpop.f32.mrb[0].mxu0
  %5264 = vmatprep.mubr.f32.mxu0 0.0
  %5265 = vmatmul.mubr.f32.gmra.mrb[0].mxu0 %v5123
  %v5266 = vpop.f32.mrb[0].mxu0
  %v5267 = vadd.f32 %v5075, %v5266
  %v5268 = vpop.f32.mrb[0].mxu0
  %5269 = vdwg.mxu0
  %v5270 = vadd.f32 %v5192, %v621
  %v5271 = vadd.f32 %v5197, %v626
  %v5272 = vadd.f32 %v5202, %v631
  %v5273 = vadd.f32 %v5207, %v636
  %v5274 = vadd.f32 %v5212, %v641
  %v5275 = vadd.f32 %v5217, %v646
  %v5276 = vadd.f32 %v5222, %v651
  %v5277 = vadd.f32 %v5227, %v656
  %v5278 = vadd.f32 %v5232, %v661
  %v5279 = vadd.f32 %v5237, %v666
  %v5280 = vadd.f32 %v5242, %v671
  %v5281 = vadd.f32 %v5247, %v676
  %v5282 = vadd.f32 %v5252, %v681
  %v5283 = vadd.f32 %v5257, %v686
  %v5284 = vadd.f32 %v5262, %v691
  %v5285 = vadd.f32 %v5267, %v696
  %v5286 = vsel %vm505, %v5270, 0.0
  %v5287 = vsel %vm505, %v5271, 0.0
  %v5288 = vadd.f32 %v5286, %v5287
  %v5289 = vsel %vm505, %v5272, 0.0
  %v5290 = vadd.f32 %v5288, %v5289
  %v5291 = vsel %vm505, %v5273, 0.0
  %v5292 = vadd.f32 %v5290, %v5291
  %v5293 = vsel %vm505, %v5274, 0.0
  %v5294 = vadd.f32 %v5292, %v5293
  %v5295 = vsel %vm505, %v5275, 0.0
  %v5296 = vadd.f32 %v5294, %v5295
  %v5297 = vsel %vm505, %v5276, 0.0
  %v5298 = vadd.f32 %v5296, %v5297
  %v5299 = vsel %vm505, %v5277, 0.0
  %v5300 = vadd.f32 %v5298, %v5299
  %v5301 = vsel %vm505, %v5278, 0.0
  %v5302 = vadd.f32 %v5300, %v5301
  %v5303 = vsel %vm505, %v5279, 0.0
  %v5304 = vadd.f32 %v5302, %v5303
  %v5305 = vsel %vm505, %v5280, 0.0
  %v5306 = vadd.f32 %v5304, %v5305
  %v5307 = vsel %vm505, %v5281, 0.0
  %v5308 = vadd.f32 %v5306, %v5307
  %v5309 = vsel %vm505, %v5282, 0.0
  %v5310 = vadd.f32 %v5308, %v5309
  %v5311 = vsel %vm505, %v5283, 0.0
  %v5312 = vadd.f32 %v5310, %v5311
  %v5313 = vsel %vm505, %v5284, 0.0
  %v5314 = vadd.f32 %v5312, %v5313
  %v5315 = vsel %vm505, %v5285, 0.0
  %v5316 = vadd.f32 %v5314, %v5315
  %v5317 = vrot.slane %v5316, 4
  %v5318 = vadd.f32 %v5316, %v5317
  %v5319 = vrot.slane %v5318, 2
  %v5320 = vadd.f32 %v5318, %v5319
  %v5321 = vrot.slane %v5320, 1
  %v5322 = vadd.f32 %v5320, %v5321
  %v5323 = vmul.f32 %v5322, %v240
  %v5324 = vmul.f32 %v5270, %v5270
  %v5325 = vmul.f32 %v5271, %v5271
  %v5326 = vmul.f32 %v5272, %v5272
  %v5327 = vmul.f32 %v5273, %v5273
  %v5328 = vmul.f32 %v5274, %v5274
  %v5329 = vmul.f32 %v5275, %v5275
  %v5330 = vmul.f32 %v5276, %v5276
  %v5331 = vmul.f32 %v5277, %v5277
  %v5332 = vmul.f32 %v5278, %v5278
  %v5333 = vmul.f32 %v5279, %v5279
  %v5334 = vmul.f32 %v5280, %v5280
  %v5335 = vmul.f32 %v5281, %v5281
  %v5336 = vmul.f32 %v5282, %v5282
  %v5337 = vmul.f32 %v5283, %v5283
  %v5338 = vmul.f32 %v5284, %v5284
  %v5339 = vmul.f32 %v5285, %v5285
  %v5340 = vsel %vm505, %v5324, 0.0
  %v5341 = vsel %vm505, %v5325, 0.0
  %v5342 = vadd.f32 %v5340, %v5341
  %v5343 = vsel %vm505, %v5326, 0.0
  %v5344 = vadd.f32 %v5342, %v5343
  %v5345 = vsel %vm505, %v5327, 0.0
  %v5346 = vadd.f32 %v5344, %v5345
  %v5347 = vsel %vm505, %v5328, 0.0
  %v5348 = vadd.f32 %v5346, %v5347
  %v5349 = vsel %vm505, %v5329, 0.0
  %v5350 = vadd.f32 %v5348, %v5349
  %v5351 = vsel %vm505, %v5330, 0.0
  %v5352 = vadd.f32 %v5350, %v5351
  %v5353 = vsel %vm505, %v5331, 0.0
  %v5354 = vadd.f32 %v5352, %v5353
  %v5355 = vsel %vm505, %v5332, 0.0
  %v5356 = vadd.f32 %v5354, %v5355
  %v5357 = vsel %vm505, %v5333, 0.0
  %v5358 = vadd.f32 %v5356, %v5357
  %v5359 = vsel %vm505, %v5334, 0.0
  %v5360 = vadd.f32 %v5358, %v5359
  %v5361 = vsel %vm505, %v5335, 0.0
  %v5362 = vadd.f32 %v5360, %v5361
  %v5363 = vsel %vm505, %v5336, 0.0
  %v5364 = vadd.f32 %v5362, %v5363
  %v5365 = vsel %vm505, %v5337, 0.0
  %v5366 = vadd.f32 %v5364, %v5365
  %v5367 = vsel %vm505, %v5338, 0.0
  %v5368 = vadd.f32 %v5366, %v5367
  %v5369 = vsel %vm505, %v5339, 0.0
  %v5370 = vadd.f32 %v5368, %v5369
  %v5371 = vrot.slane %v5370, 4
  %v5372 = vadd.f32 %v5370, %v5371
  %v5373 = vrot.slane %v5372, 2
  %v5374 = vadd.f32 %v5372, %v5373
  %v5375 = vrot.slane %v5374, 1
  %v5376 = vadd.f32 %v5374, %v5375
  %v5377 = vmul.f32 %v5376, %v240
  %v5378 = vmul.f32 %v5323, %v5323
  %v5379 = vsub.f32 %v5377, %v5378
  %v5380 = vsub.f32 %v5270, %v5323
  %v5381 = vsub.f32 %v5271, %v5323
  %v5382 = vsub.f32 %v5272, %v5323
  %v5383 = vsub.f32 %v5273, %v5323
  %v5384 = vsub.f32 %v5274, %v5323
  %v5385 = vsub.f32 %v5275, %v5323
  %v5386 = vsub.f32 %v5276, %v5323
  %v5387 = vsub.f32 %v5277, %v5323
  %v5388 = vsub.f32 %v5278, %v5323
  %v5389 = vsub.f32 %v5279, %v5323
  %v5390 = vsub.f32 %v5280, %v5323
  %v5391 = vsub.f32 %v5281, %v5323
  %v5392 = vsub.f32 %v5282, %v5323
  %v5393 = vsub.f32 %v5283, %v5323
  %v5394 = vsub.f32 %v5284, %v5323
  %v5395 = vsub.f32 %v5285, %v5323
  %v5396 = vadd.f32 %v5379, 1e-05
  %v5397 = vrsqrt.pop %v5396
  %v5398 = vmul.f32 %v5380, %v5397
  %v5399 = vmul.f32 %v5381, %v5397
  %v5400 = vmul.f32 %v5382, %v5397
  %v5401 = vmul.f32 %v5383, %v5397
  %v5402 = vmul.f32 %v5384, %v5397
  %v5403 = vmul.f32 %v5385, %v5397
  %v5404 = vmul.f32 %v5386, %v5397
  %v5405 = vmul.f32 %v5387, %v5397
  %v5406 = vmul.f32 %v5388, %v5397
  %v5407 = vmul.f32 %v5389, %v5397
  %v5408 = vmul.f32 %v5390, %v5397
  %v5409 = vmul.f32 %v5391, %v5397
  %v5410 = vmul.f32 %v5392, %v5397
  %v5411 = vmul.f32 %v5393, %v5397
  %v5412 = vmul.f32 %v5394, %v5397
  %v5413 = vmul.f32 %v5395, %v5397
  %v5414 = vlaneseq
  %v5415 = vshrl.u32 %v5414, 7
  %v5416 = vsub.s32 2, %v5415
  %v5417 = vrot.slane %v1125, %v5416
  %v5418 = vmul.f32 %v5398, %v5417
  %v5419 = vmul.f32 %v5399, %v5417
  %v5420 = vmul.f32 %v5400, %v5417
  %v5421 = vmul.f32 %v5401, %v5417
  %v5422 = vmul.f32 %v5402, %v5417
  %v5423 = vmul.f32 %v5403, %v5417
  %v5424 = vmul.f32 %v5404, %v5417
  %v5425 = vmul.f32 %v5405, %v5417
  %v5426 = vmul.f32 %v5406, %v5417
  %v5427 = vmul.f32 %v5407, %v5417
  %v5428 = vmul.f32 %v5408, %v5417
  %v5429 = vmul.f32 %v5409, %v5417
  %v5430 = vmul.f32 %v5410, %v5417
  %v5431 = vmul.f32 %v5411, %v5417
  %v5432 = vmul.f32 %v5412, %v5417
  %v5433 = vmul.f32 %v5413, %v5417
  %5435 = vrot.lane.b32.xlu0 %v5417, 96
  %v5436 = vpop.permute.xlu0 %5435
  %v5438 = vadd.f32 %v5418, %v5436
  %v5439 = vadd.f32 %v5419, %v5436
  %v5440 = vadd.f32 %v5420, %v5436
  %v5441 = vadd.f32 %v5421, %v5436
  %v5442 = vadd.f32 %v5422, %v5436
  %v5443 = vadd.f32 %v5423, %v5436
  %v5444 = vadd.f32 %v5424, %v5436
  %v5445 = vadd.f32 %v5425, %v5436
  %v5446 = vadd.f32 %v5426, %v5436
  %v5447 = vadd.f32 %v5427, %v5436
  %v5448 = vadd.f32 %v5428, %v5436
  %v5449 = vadd.f32 %v5429, %v5436
  %v5450 = vadd.f32 %v5430, %v5436
  %v5451 = vadd.f32 %v5431, %v5436
  %v5452 = vadd.f32 %v5432, %v5436
  %v5453 = vadd.f32 %v5433, %v5436
  %v5454 = vadd.f32 %v2144, %v5438
  %v5455 = vadd.f32 %v2145, %v5439
  %v5456 = vadd.f32 %v2146, %v5440
  %v5457 = vadd.f32 %v2147, %v5441
  %v5458 = vadd.f32 %v2148, %v5442
  %v5459 = vadd.f32 %v2149, %v5443
  %v5460 = vadd.f32 %v2150, %v5444
  %v5461 = vadd.f32 %v2151, %v5445
  %v5462 = vadd.f32 %v2152, %v5446
  %v5463 = vadd.f32 %v2153, %v5447
  %v5464 = vadd.f32 %v2154, %v5448
  %v5465 = vadd.f32 %v2155, %v5449
  %v5466 = vadd.f32 %v2156, %v5450
  %v5467 = vadd.f32 %v2157, %v5451
  %v5468 = vadd.f32 %v2158, %v5452
  %v5469 = vadd.f32 %v2159, %v5453
  %5470 = vrot.lane.b32.xlu0 %v1118, 64
  %v5471 = vpop.permute.xlu0 %5470
  %5472 = vrot.lane.b32.xlu0 %v1120, 64
  %v5473 = vpop.permute.xlu0 %5472
  %5474 = vrot.lane.b32.xlu0 %v1122, 64
  %v5475 = vpop.permute.xlu0 %5474
  %5476 = vrot.lane.b32.xlu0 %v1124, 64
  %v5477 = vpop.permute.xlu0 %5476
  %5482 = vrot.lane.b32.xlu0 %v5417, 64
  %v5483 = vpop.permute.xlu0 %5482
  %v5486 = vsel %vm505, %v5454, 0
  %v5489 = vsel %vm505, %v5455, 0
  %v5492 = vsel %vm505, %v5456, 0
  %v5495 = vsel %vm505, %v5457, 0
  %v5498 = vsel %vm505, %v5458, 0
  %v5501 = vsel %vm505, %v5459, 0
  %v5504 = vsel %vm505, %v5460, 0
  %v5507 = vsel %vm505, %v5461, 0
  %v5510 = vsel %vm505, %v5462, 0
  %v5513 = vsel %vm505, %v5463, 0
  %v5516 = vsel %vm505, %v5464, 0
  %v5519 = vsel %vm505, %v5465, 0
  %v5522 = vsel %vm505, %v5466, 0
  %v5525 = vsel %vm505, %v5467, 0
  %v5528 = vsel %vm505, %v5468, 0
  %v5531 = vsel %vm505, %v5469, 0
  %5533 = vmatprep.subr.mxu0 0.0
  %5534 = vmatpush1.msra.mxu0 %v5471
  %5535 = vmatprep.subr.mxu0 0.0
  %5536 = vmatpush1.msra.mxu0 %v5473
  %5537 = vmatprep.subr.mxu0 0.0
  %5538 = vmatpush1.msra.mxu0 %v5475
  %5539 = vmatprep.subr.mxu0 0.0
  %5540 = vmatpush1.msra.mxu0 %v5477
  %5541 = vmatprep.subr.mxu0 0.0
  %5542 = vmatpush1.msra.mxu0 0.0
  %5543 = vmatprep.subr.mxu0 0.0
  %5544 = vmatpush1.msra.mxu0 0.0
  %5545 = vmatprep.subr.mxu0 0.0
  %5546 = vmatpush1.msra.mxu0 0.0
  %5547 = vmatprep.subr.mxu0 0.0
  %5548 = vmatpush1.msra.mxu0 0.0
  %5549 = vmatprep.subr.mxu0 0.0
  %5550 = vmatpush1.msra.mxu0 0.0
  %5551 = vmatprep.subr.mxu0 0.0
  %5552 = vmatpush1.msra.mxu0 0.0
  %5553 = vmatprep.subr.mxu0 0.0
  %5554 = vmatpush1.msra.mxu0 0.0
  %5555 = vmatprep.subr.mxu0 0.0
  %5556 = vmatpush1.msra.mxu0 0.0
  %5557 = vmatprep.subr.mxu0 0.0
  %5558 = vmatpush1.msra.mxu0 0.0
  %5559 = vmatprep.subr.mxu0 0.0
  %5560 = vmatpush1.msra.mxu0 0.0
  %5561 = vmatprep.subr.mxu0 0.0
  %5562 = vmatpush1.msra.mxu0 0.0
  %5563 = vmatprep.subr.mxu0 0.0
  %5564 = vmatpush1.msra.mxu0 0.0
  %5565 = vmatprep.subr.mxu0 0.0
  %5566 = vmatpush1.msra.mxu0 0.0
  %5567 = vmatprep.subr.mxu0 0.0
  %5568 = vmatpush1.msra.mxu0 0.0
  %5569 = vmatprep.subr.mxu0 0.0
  %5570 = vmatpush1.msra.mxu0 0.0
  %5571 = vmatprep.subr.mxu0 0.0
  %5572 = vmatpush1.msra.mxu0 0.0
  %5573 = vmatprep.subr.mxu0 0.0
  %5574 = vmatpush1.msra.mxu0 0.0
  %5575 = vmatprep.subr.mxu0 0.0
  %5576 = vmatpush1.msra.mxu0 0.0
  %5577 = vmatprep.subr.mxu0 0.0
  %5578 = vmatpush1.msra.mxu0 0.0
  %5579 = vmatprep.subr.mxu0 0.0
  %5580 = vmatpush1.msra.mxu0 0.0
  %5581 = vmatprep.subr.mxu0 0.0
  %5582 = vmatpush1.msra.mxu0 0.0
  %5583 = vmatprep.subr.mxu0 0.0
  %5584 = vmatpush1.msra.mxu0 0.0
  %5585 = vmatprep.subr.mxu0 0.0
  %5586 = vmatpush1.msra.mxu0 0.0
  %5587 = vmatprep.subr.mxu0 0.0
  %5588 = vmatpush1.msra.mxu0 0.0
  %5589 = vmatprep.subr.mxu0 0.0
  %5590 = vmatpush1.msra.mxu0 0.0
  %5591 = vmatprep.subr.mxu0 0.0
  %5592 = vmatpush1.msra.mxu0 0.0
  %5593 = vmatprep.subr.mxu0 0.0
  %5594 = vmatpush1.msra.mxu0 0.0
  %5595 = vmatprep.subr.mxu0 0.0
  %5596 = vmatpush1.msra.mxu0 0.0
  %5597 = vmatprep.mubr.f32.mxu0 0.0
  %5598 = vmatmul.mubr.f32.gmra.mrb[0].mxu0 %v5486
  %v5599 = vpop.f32.mrb[0].mxu0
  %v5600 = vadd.f32 %v5483, %v5599
  %v5601 = vpop.f32.mrb[0].mxu0
  %5602 = vmatprep.mubr.f32.mxu0 0.0
  %5603 = vmatmul.mubr.f32.gmra.mrb[0].mxu0 %v5489
  %v5604 = vpop.f32.mrb[0].mxu0
  %v5605 = vadd.f32 %v5483, %v5604
  %v5606 = vpop.f32.mrb[0].mxu0
  %5607 = vmatprep.mubr.f32.mxu0 0.0
  %5608 = vmatmul.mubr.f32.gmra.mrb[0].mxu0 %v5492
  %v5609 = vpop.f32.mrb[0].mxu0
  %v5610 = vadd.f32 %v5483, %v5609
  %v5611 = vpop.f32.mrb[0].mxu0
  %5612 = vmatprep.mubr.f32.mxu0 0.0
  %5613 = vmatmul.mubr.f32.gmra.mrb[0].mxu0 %v5495
  %v5614 = vpop.f32.mrb[0].mxu0
  %v5615 = vadd.f32 %v5483, %v5614
  %v5616 = vpop.f32.mrb[0].mxu0
  %5617 = vmatprep.mubr.f32.mxu0 0.0
  %5618 = vmatmul.mubr.f32.gmra.mrb[0].mxu0 %v5498
  %v5619 = vpop.f32.mrb[0].mxu0
  %v5620 = vadd.f32 %v5483, %v5619
  %v5621 = vpop.f32.mrb[0].mxu0
  %5622 = vmatprep.mubr.f32.mxu0 0.0
  %5623 = vmatmul.mubr.f32.gmra.mrb[0].mxu0 %v5501
  %v5624 = vpop.f32.mrb[0].mxu0
  %v5625 = vadd.f32 %v5483, %v5624
  %v5626 = vpop.f32.mrb[0].mxu0
  %5627 = vmatprep.mubr.f32.mxu0 0.0
  %5628 = vmatmul.mubr.f32.gmra.mrb[0].mxu0 %v5504
  %v5629 = vpop.f32.mrb[0].mxu0
  %v5630 = vadd.f32 %v5483, %v5629
  %v5631 = vpop.f32.mrb[0].mxu0
  %5632 = vmatprep.mubr.f32.mxu0 0.0
  %5633 = vmatmul.mubr.f32.gmra.mrb[0].mxu0 %v5507
  %v5634 = vpop.f32.mrb[0].mxu0
  %v5635 = vadd.f32 %v5483, %v5634
  %v5636 = vpop.f32.mrb[0].mxu0
  %5637 = vmatprep.mubr.f32.mxu0 0.0
  %5638 = vmatmul.mubr.f32.gmra.mrb[0].mxu0 %v5510
  %v5639 = vpop.f32.mrb[0].mxu0
  %v5640 = vadd.f32 %v5483, %v5639
  %v5641 = vpop.f32.mrb[0].mxu0
  %5642 = vmatprep.mubr.f32.mxu0 0.0
  %5643 = vmatmul.mubr.f32.gmra.mrb[0].mxu0 %v5513
  %v5644 = vpop.f32.mrb[0].mxu0
  %v5645 = vadd.f32 %v5483, %v5644
  %v5646 = vpop.f32.mrb[0].mxu0
  %5647 = vmatprep.mubr.f32.mxu0 0.0
  %5648 = vmatmul.mubr.f32.gmra.mrb[0].mxu0 %v5516
  %v5649 = vpop.f32.mrb[0].mxu0
  %v5650 = vadd.f32 %v5483, %v5649
  %v5651 = vpop.f32.mrb[0].mxu0
  %5652 = vmatprep.mubr.f32.mxu0 0.0
  %5653 = vmatmul.mubr.f32.gmra.mrb[0].mxu0 %v5519
  %v5654 = vpop.f32.mrb[0].mxu0
  %v5655 = vadd.f32 %v5483, %v5654
  %v5656 = vpop.f32.mrb[0].mxu0
  %5657 = vmatprep.mubr.f32.mxu0 0.0
  %5658 = vmatmul.mubr.f32.gmra.mrb[0].mxu0 %v5522
  %v5659 = vpop.f32.mrb[0].mxu0
  %v5660 = vadd.f32 %v5483, %v5659
  %v5661 = vpop.f32.mrb[0].mxu0
  %5662 = vmatprep.mubr.f32.mxu0 0.0
  %5663 = vmatmul.mubr.f32.gmra.mrb[0].mxu0 %v5525
  %v5664 = vpop.f32.mrb[0].mxu0
  %v5665 = vadd.f32 %v5483, %v5664
  %v5666 = vpop.f32.mrb[0].mxu0
  %5667 = vmatprep.mubr.f32.mxu0 0.0
  %5668 = vmatmul.mubr.f32.gmra.mrb[0].mxu0 %v5528
  %v5669 = vpop.f32.mrb[0].mxu0
  %v5670 = vadd.f32 %v5483, %v5669
  %v5671 = vpop.f32.mrb[0].mxu0
  %5672 = vmatprep.mubr.f32.mxu0 0.0
  %5673 = vmatmul.mubr.f32.gmra.mrb[0].mxu0 %v5531
  %v5674 = vpop.f32.mrb[0].mxu0
  %v5675 = vadd.f32 %v5483, %v5674
  %v5676 = vpop.f32.mrb[0].mxu0
  %5677 = vdwg.mxu0
  %v5678 = vmax.f32 %v5600, 0.0
  %v5679 = vmax.f32 %v5605, 0.0
  %v5680 = vmax.f32 %v5610, 0.0
  %v5681 = vmax.f32 %v5615, 0.0
  %v5682 = vmax.f32 %v5620, 0.0
  %v5683 = vmax.f32 %v5625, 0.0
  %v5684 = vmax.f32 %v5630, 0.0
  %v5685 = vmax.f32 %v5635, 0.0
  %v5686 = vmax.f32 %v5640, 0.0
  %v5687 = vmax.f32 %v5645, 0.0
  %v5688 = vmax.f32 %v5650, 0.0
  %v5689 = vmax.f32 %v5655, 0.0
  %v5690 = vmax.f32 %v5660, 0.0
  %v5691 = vmax.f32 %v5665, 0.0
  %v5692 = vmax.f32 %v5670, 0.0
  %v5693 = vmax.f32 %v5675, 0.0
  %v5694 = vlaneseq
  %v5695 = vshrl.u32 %v5694, 7
  %v5696 = vsub.s32 3, %v5695
  %v5697 = vrot.slane %v1125, %v5696
  %vm5698 = vcmask 523264
  %v5700 = vsel %vm5698, %v5678, 0
  %v5703 = vsel %vm5698, %v5679, 0
  %v5706 = vsel %vm5698, %v5680, 0
  %v5709 = vsel %vm5698, %v5681, 0
  %v5712 = vsel %vm5698, %v5682, 0
  %v5715 = vsel %vm5698, %v5683, 0
  %v5718 = vsel %vm5698, %v5684, 0
  %v5721 = vsel %vm5698, %v5685, 0
  %v5724 = vsel %vm5698, %v5686, 0
  %v5727 = vsel %vm5698, %v5687, 0
  %v5730 = vsel %vm5698, %v5688, 0
  %v5733 = vsel %vm5698, %v5689, 0
  %v5736 = vsel %vm5698, %v5690, 0
  %v5739 = vsel %vm5698, %v5691, 0
  %v5742 = vsel %vm5698, %v5692, 0
  %v5745 = vsel %vm5698, %v5693, 0
  %5747 = vmatprep.subr.mxu0 0.0
  %5748 = vmatpush1.msra.mxu0 %v1126
  %5749 = vmatprep.subr.mxu0 0.0
  %5750 = vmatpush1.msra.mxu0 %v1127
  %5751 = vmatprep.subr.mxu0 0.0
  %5752 = vmatpush1.msra.mxu0 %v1128
  %5753 = vmatprep.subr.mxu0 0.0
  %5754 = vmatpush1.msra.mxu0 %v1129
  %5755 = vmatprep.subr.mxu0 0.0
  %5756 = vmatpush1.msra.mxu0 %v1130
  %5757 = vmatprep.subr.mxu0 0.0
  %5758 = vmatpush1.msra.mxu0 %v1131
  %5759 = vmatprep.subr.mxu0 0.0
  %5760 = vmatpush1.msra.mxu0 %v1132
  %5761 = vmatprep.subr.mxu0 0.0
  %5762 = vmatpush1.msra.mxu0 %v1133
  %5763 = vmatprep.subr.mxu0 0.0
  %5764 = vmatpush1.msra.mxu0 0.0
  %5765 = vmatprep.subr.mxu0 0.0
  %5766 = vmatpush1.msra.mxu0 0.0
  %5767 = vmatprep.subr.mxu0 0.0
  %5768 = vmatpush1.msra.mxu0 0.0
  %5769 = vmatprep.subr.mxu0 0.0
  %5770 = vmatpush1.msra.mxu0 0.0
  %5771 = vmatprep.subr.mxu0 0.0
  %5772 = vmatpush1.msra.mxu0 0.0
  %5773 = vmatprep.subr.mxu0 0.0
  %5774 = vmatpush1.msra.mxu0 0.0
  %5775 = vmatprep.subr.mxu0 0.0
  %5776 = vmatpush1.msra.mxu0 0.0
  %5777 = vmatprep.subr.mxu0 0.0
  %5778 = vmatpush1.msra.mxu0 0.0
  %5779 = vmatprep.subr.mxu0 0.0
  %5780 = vmatpush1.msra.mxu0 0.0
  %5781 = vmatprep.subr.mxu0 0.0
  %5782 = vmatpush1.msra.mxu0 0.0
  %5783 = vmatprep.subr.mxu0 0.0
  %5784 = vmatpush1.msra.mxu0 0.0
  %5785 = vmatprep.subr.mxu0 0.0
  %5786 = vmatpush1.msra.mxu0 0.0
  %5787 = vmatprep.subr.mxu0 0.0
  %5788 = vmatpush1.msra.mxu0 0.0
  %5789 = vmatprep.subr.mxu0 0.0
  %5790 = vmatpush1.msra.mxu0 0.0
  %5791 = vmatprep.subr.mxu0 0.0
  %5792 = vmatpush1.msra.mxu0 0.0
  %5793 = vmatprep.subr.mxu0 0.0
  %5794 = vmatpush1.msra.mxu0 0.0
  %5795 = vmatprep.subr.mxu0 0.0
  %5796 = vmatpush1.msra.mxu0 0.0
  %5797 = vmatprep.subr.mxu0 0.0
  %5798 = vmatpush1.msra.mxu0 0.0
  %5799 = vmatprep.subr.mxu0 0.0
  %5800 = vmatpush1.msra.mxu0 0.0
  %5801 = vmatprep.subr.mxu0 0.0
  %5802 = vmatpush1.msra.mxu0 0.0
  %5803 = vmatprep.subr.mxu0 0.0
  %5804 = vmatpush1.msra.mxu0 0.0
  %5805 = vmatprep.subr.mxu0 0.0
  %5806 = vmatpush1.msra.mxu0 0.0
  %5807 = vmatprep.subr.mxu0 0.0
  %5808 = vmatpush1.msra.mxu0 0.0
  %5809 = vmatprep.subr.mxu0 0.0
  %5810 = vmatpush1.msra.mxu0 0.0
  %5811 = vmatprep.mubr.f32.mxu0 0.0
  %5812 = vmatmul.mubr.f32.gmra.mrb[0].mxu0 %v5700
  %v5813 = vpop.f32.mrb[0].mxu0
  %v5814 = vadd.f32 %v5697, %v5813
  %v5815 = vpop.f32.mrb[0].mxu0
  %5816 = vmatprep.mubr.f32.mxu0 0.0
  %5817 = vmatmul.mubr.f32.gmra.mrb[0].mxu0 %v5703
  %v5818 = vpop.f32.mrb[0].mxu0
  %v5819 = vadd.f32 %v5697, %v5818
  %v5820 = vpop.f32.mrb[0].mxu0
  %5821 = vmatprep.mubr.f32.mxu0 0.0
  %5822 = vmatmul.mubr.f32.gmra.mrb[0].mxu0 %v5706
  %v5823 = vpop.f32.mrb[0].mxu0
  %v5824 = vadd.f32 %v5697, %v5823
  %v5825 = vpop.f32.mrb[0].mxu0
  %5826 = vmatprep.mubr.f32.mxu0 0.0
  %5827 = vmatmul.mubr.f32.gmra.mrb[0].mxu0 %v5709
  %v5828 = vpop.f32.mrb[0].mxu0
  %v5829 = vadd.f32 %v5697, %v5828
  %v5830 = vpop.f32.mrb[0].mxu0
  %5831 = vmatprep.mubr.f32.mxu0 0.0
  %5832 = vmatmul.mubr.f32.gmra.mrb[0].mxu0 %v5712
  %v5833 = vpop.f32.mrb[0].mxu0
  %v5834 = vadd.f32 %v5697, %v5833
  %v5835 = vpop.f32.mrb[0].mxu0
  %5836 = vmatprep.mubr.f32.mxu0 0.0
  %5837 = vmatmul.mubr.f32.gmra.mrb[0].mxu0 %v5715
  %v5838 = vpop.f32.mrb[0].mxu0
  %v5839 = vadd.f32 %v5697, %v5838
  %v5840 = vpop.f32.mrb[0].mxu0
  %5841 = vmatprep.mubr.f32.mxu0 0.0
  %5842 = vmatmul.mubr.f32.gmra.mrb[0].mxu0 %v5718
  %v5843 = vpop.f32.mrb[0].mxu0
  %v5844 = vadd.f32 %v5697, %v5843
  %v5845 = vpop.f32.mrb[0].mxu0
  %5846 = vmatprep.mubr.f32.mxu0 0.0
  %5847 = vmatmul.mubr.f32.gmra.mrb[0].mxu0 %v5721
  %v5848 = vpop.f32.mrb[0].mxu0
  %v5849 = vadd.f32 %v5697, %v5848
  %v5850 = vpop.f32.mrb[0].mxu0
  %5851 = vmatprep.mubr.f32.mxu0 0.0
  %5852 = vmatmul.mubr.f32.gmra.mrb[0].mxu0 %v5724
  %v5853 = vpop.f32.mrb[0].mxu0
  %v5854 = vadd.f32 %v5697, %v5853
  %v5855 = vpop.f32.mrb[0].mxu0
  %5856 = vmatprep.mubr.f32.mxu0 0.0
  %5857 = vmatmul.mubr.f32.gmra.mrb[0].mxu0 %v5727
  %v5858 = vpop.f32.mrb[0].mxu0
  %v5859 = vadd.f32 %v5697, %v5858
  %v5860 = vpop.f32.mrb[0].mxu0
  %5861 = vmatprep.mubr.f32.mxu0 0.0
  %5862 = vmatmul.mubr.f32.gmra.mrb[0].mxu0 %v5730
  %v5863 = vpop.f32.mrb[0].mxu0
  %v5864 = vadd.f32 %v5697, %v5863
  %v5865 = vpop.f32.mrb[0].mxu0
  %5866 = vmatprep.mubr.f32.mxu0 0.0
  %5867 = vmatmul.mubr.f32.gmra.mrb[0].mxu0 %v5733
  %v5868 = vpop.f32.mrb[0].mxu0
  %v5869 = vadd.f32 %v5697, %v5868
  %v5870 = vpop.f32.mrb[0].mxu0
  %5871 = vmatprep.mubr.f32.mxu0 0.0
  %5872 = vmatmul.mubr.f32.gmra.mrb[0].mxu0 %v5736
  %v5873 = vpop.f32.mrb[0].mxu0
  %v5874 = vadd.f32 %v5697, %v5873
  %v5875 = vpop.f32.mrb[0].mxu0
  %5876 = vmatprep.mubr.f32.mxu0 0.0
  %5877 = vmatmul.mubr.f32.gmra.mrb[0].mxu0 %v5739
  %v5878 = vpop.f32.mrb[0].mxu0
  %v5879 = vadd.f32 %v5697, %v5878
  %v5880 = vpop.f32.mrb[0].mxu0
  %5881 = vmatprep.mubr.f32.mxu0 0.0
  %5882 = vmatmul.mubr.f32.gmra.mrb[0].mxu0 %v5742
  %v5883 = vpop.f32.mrb[0].mxu0
  %v5884 = vadd.f32 %v5697, %v5883
  %v5885 = vpop.f32.mrb[0].mxu0
  %5886 = vmatprep.mubr.f32.mxu0 0.0
  %5887 = vmatmul.mubr.f32.gmra.mrb[0].mxu0 %v5745
  %v5888 = vpop.f32.mrb[0].mxu0
  %v5889 = vadd.f32 %v5697, %v5888
  %v5890 = vpop.f32.mrb[0].mxu0
  %5891 = vdwg.mxu0
  %v5892 = vadd.f32 %v5454, %v5814
  %v5893 = vadd.f32 %v5455, %v5819
  %v5894 = vadd.f32 %v5456, %v5824
  %v5895 = vadd.f32 %v5457, %v5829
  %v5896 = vadd.f32 %v5458, %v5834
  %v5897 = vadd.f32 %v5459, %v5839
  %v5898 = vadd.f32 %v5460, %v5844
  %v5899 = vadd.f32 %v5461, %v5849
  %v5900 = vadd.f32 %v5462, %v5854
  %v5901 = vadd.f32 %v5463, %v5859
  %v5902 = vadd.f32 %v5464, %v5864
  %v5903 = vadd.f32 %v5465, %v5869
  %v5904 = vadd.f32 %v5466, %v5874
  %v5905 = vadd.f32 %v5467, %v5879
  %v5906 = vadd.f32 %v5468, %v5884
  %v5907 = vadd.f32 %v5469, %v5889
  %v5908 = vsel %vm505, %v5892, 0.0
  %v5909 = vsel %vm505, %v5893, 0.0
  %v5910 = vadd.f32 %v5908, %v5909
  %v5911 = vsel %vm505, %v5894, 0.0
  %v5912 = vadd.f32 %v5910, %v5911
  %v5913 = vsel %vm505, %v5895, 0.0
  %v5914 = vadd.f32 %v5912, %v5913
  %v5915 = vsel %vm505, %v5896, 0.0
  %v5916 = vadd.f32 %v5914, %v5915
  %v5917 = vsel %vm505, %v5897, 0.0
  %v5918 = vadd.f32 %v5916, %v5917
  %v5919 = vsel %vm505, %v5898, 0.0
  %v5920 = vadd.f32 %v5918, %v5919
  %v5921 = vsel %vm505, %v5899, 0.0
  %v5922 = vadd.f32 %v5920, %v5921
  %v5923 = vsel %vm505, %v5900, 0.0
  %v5924 = vadd.f32 %v5922, %v5923
  %v5925 = vsel %vm505, %v5901, 0.0
  %v5926 = vadd.f32 %v5924, %v5925
  %v5927 = vsel %vm505, %v5902, 0.0
  %v5928 = vadd.f32 %v5926, %v5927
  %v5929 = vsel %vm505, %v5903, 0.0
  %v5930 = vadd.f32 %v5928, %v5929
  %v5931 = vsel %vm505, %v5904, 0.0
  %v5932 = vadd.f32 %v5930, %v5931
  %v5933 = vsel %vm505, %v5905, 0.0
  %v5934 = vadd.f32 %v5932, %v5933
  %v5935 = vsel %vm505, %v5906, 0.0
  %v5936 = vadd.f32 %v5934, %v5935
  %v5937 = vsel %vm505, %v5907, 0.0
  %v5938 = vadd.f32 %v5936, %v5937
  %v5939 = vrot.slane %v5938, 4
  %v5940 = vadd.f32 %v5938, %v5939
  %v5941 = vrot.slane %v5940, 2
  %v5942 = vadd.f32 %v5940, %v5941
  %v5943 = vrot.slane %v5942, 1
  %v5944 = vadd.f32 %v5942, %v5943
  %v5945 = vmul.f32 %v5944, %v240
  %v5946 = vmul.f32 %v5892, %v5892
  %v5947 = vmul.f32 %v5893, %v5893
  %v5948 = vmul.f32 %v5894, %v5894
  %v5949 = vmul.f32 %v5895, %v5895
  %v5950 = vmul.f32 %v5896, %v5896
  %v5951 = vmul.f32 %v5897, %v5897
  %v5952 = vmul.f32 %v5898, %v5898
  %v5953 = vmul.f32 %v5899, %v5899
  %v5954 = vmul.f32 %v5900, %v5900
  %v5955 = vmul.f32 %v5901, %v5901
  %v5956 = vmul.f32 %v5902, %v5902
  %v5957 = vmul.f32 %v5903, %v5903
  %v5958 = vmul.f32 %v5904, %v5904
  %v5959 = vmul.f32 %v5905, %v5905
  %v5960 = vmul.f32 %v5906, %v5906
  %v5961 = vmul.f32 %v5907, %v5907
  %v5962 = vsel %vm505, %v5946, 0.0
  %v5963 = vsel %vm505, %v5947, 0.0
  %v5964 = vadd.f32 %v5962, %v5963
  %v5965 = vsel %vm505, %v5948, 0.0
  %v5966 = vadd.f32 %v5964, %v5965
  %v5967 = vsel %vm505, %v5949, 0.0
  %v5968 = vadd.f32 %v5966, %v5967
  %v5969 = vsel %vm505, %v5950, 0.0
  %v5970 = vadd.f32 %v5968, %v5969
  %v5971 = vsel %vm505, %v5951, 0.0
  %v5972 = vadd.f32 %v5970, %v5971
  %v5973 = vsel %vm505, %v5952, 0.0
  %v5974 = vadd.f32 %v5972, %v5973
  %v5975 = vsel %vm505, %v5953, 0.0
  %v5976 = vadd.f32 %v5974, %v5975
  %v5977 = vsel %vm505, %v5954, 0.0
  %v5978 = vadd.f32 %v5976, %v5977
  %v5979 = vsel %vm505, %v5955, 0.0
  %v5980 = vadd.f32 %v5978, %v5979
  %v5981 = vsel %vm505, %v5956, 0.0
  %v5982 = vadd.f32 %v5980, %v5981
  %v5983 = vsel %vm505, %v5957, 0.0
  %v5984 = vadd.f32 %v5982, %v5983
  %v5985 = vsel %vm505, %v5958, 0.0
  %v5986 = vadd.f32 %v5984, %v5985
  %v5987 = vsel %vm505, %v5959, 0.0
  %v5988 = vadd.f32 %v5986, %v5987
  %v5989 = vsel %vm505, %v5960, 0.0
  %v5990 = vadd.f32 %v5988, %v5989
  %v5991 = vsel %vm505, %v5961, 0.0
  %v5992 = vadd.f32 %v5990, %v5991
  %v5993 = vrot.slane %v5992, 4
  %v5994 = vadd.f32 %v5992, %v5993
  %v5995 = vrot.slane %v5994, 2
  %v5996 = vadd.f32 %v5994, %v5995
  %v5997 = vrot.slane %v5996, 1
  %v5998 = vadd.f32 %v5996, %v5997
  %v5999 = vmul.f32 %v5998, %v240
  %v6000 = vmul.f32 %v5945, %v5945
  %v6001 = vsub.f32 %v5999, %v6000
  %v6002 = vsub.f32 %v5892, %v5945
  %v6003 = vsub.f32 %v5893, %v5945
  %v6004 = vsub.f32 %v5894, %v5945
  %v6005 = vsub.f32 %v5895, %v5945
  %v6006 = vsub.f32 %v5896, %v5945
  %v6007 = vsub.f32 %v5897, %v5945
  %v6008 = vsub.f32 %v5898, %v5945
  %v6009 = vsub.f32 %v5899, %v5945
  %v6010 = vsub.f32 %v5900, %v5945
  %v6011 = vsub.f32 %v5901, %v5945
  %v6012 = vsub.f32 %v5902, %v5945
  %v6013 = vsub.f32 %v5903, %v5945
  %v6014 = vsub.f32 %v5904, %v5945
  %v6015 = vsub.f32 %v5905, %v5945
  %v6016 = vsub.f32 %v5906, %v5945
  %v6017 = vsub.f32 %v5907, %v5945
  %v6018 = vadd.f32 %v6001, 1e-05
  %v6019 = vrsqrt.pop %v6018
  %v6020 = vmul.f32 %v6002, %v6019
  %v6021 = vmul.f32 %v6003, %v6019
  %v6022 = vmul.f32 %v6004, %v6019
  %v6023 = vmul.f32 %v6005, %v6019
  %v6024 = vmul.f32 %v6006, %v6019
  %v6025 = vmul.f32 %v6007, %v6019
  %v6026 = vmul.f32 %v6008, %v6019
  %v6027 = vmul.f32 %v6009, %v6019
  %v6028 = vmul.f32 %v6010, %v6019
  %v6029 = vmul.f32 %v6011, %v6019
  %v6030 = vmul.f32 %v6012, %v6019
  %v6031 = vmul.f32 %v6013, %v6019
  %v6032 = vmul.f32 %v6014, %v6019
  %v6033 = vmul.f32 %v6015, %v6019
  %v6034 = vmul.f32 %v6016, %v6019
  %v6035 = vmul.f32 %v6017, %v6019
  %6037 = vrot.lane.b32.xlu0 %v5697, 96
  %v6038 = vpop.permute.xlu0 %6037
  %v6040 = vmul.f32 %v6020, %v6038
  %v6041 = vmul.f32 %v6021, %v6038
  %v6042 = vmul.f32 %v6022, %v6038
  %v6043 = vmul.f32 %v6023, %v6038
  %v6044 = vmul.f32 %v6024, %v6038
  %v6045 = vmul.f32 %v6025, %v6038
  %v6046 = vmul.f32 %v6026, %v6038
  %v6047 = vmul.f32 %v6027, %v6038
  %v6048 = vmul.f32 %v6028, %v6038
  %v6049 = vmul.f32 %v6029, %v6038
  %v6050 = vmul.f32 %v6030, %v6038
  %v6051 = vmul.f32 %v6031, %v6038
  %v6052 = vmul.f32 %v6032, %v6038
  %v6053 = vmul.f32 %v6033, %v6038
  %v6054 = vmul.f32 %v6034, %v6038
  %v6055 = vmul.f32 %v6035, %v6038
  %6056 = vrot.lane.b32.xlu0 %v5697, 64
  %v6057 = vpop.permute.xlu0 %6056
  %v6059 = vadd.f32 %v6040, %v6057
  %v6060 = vadd.f32 %v6041, %v6057
  %v6061 = vadd.f32 %v6042, %v6057
  %v6062 = vadd.f32 %v6043, %v6057
  %v6063 = vadd.f32 %v6044, %v6057
  %v6064 = vadd.f32 %v6045, %v6057
  %v6065 = vadd.f32 %v6046, %v6057
  %v6066 = vadd.f32 %v6047, %v6057
  %v6067 = vadd.f32 %v6048, %v6057
  %v6068 = vadd.f32 %v6049, %v6057
  %v6069 = vadd.f32 %v6050, %v6057
  %v6070 = vadd.f32 %v6051, %v6057
  %v6071 = vadd.f32 %v6052, %v6057
  %v6072 = vadd.f32 %v6053, %v6057
  %v6073 = vadd.f32 %v6054, %v6057
  %v6074 = vadd.f32 %v6055, %v6057
  %s6075 = scalar_lea.vmem %s9, 64
  %v6076 = vld [vmem:[%s6075] sm:$0xff]
  %v6077 = vld [vmem:[%s6075 + $0x8] sm:$0xff]
  %v6078 = vld [vmem:[%s6075 + $0x10] sm:$0xff]
  %v6079 = vld [vmem:[%s6075 + $0x18] sm:$0xff]
  %v6080 = vld [vmem:[%s6075 + $0x20] sm:$0xff]
  %v6081 = vld [vmem:[%s6075 + $0x28] sm:$0xff]
  %v6082 = vld [vmem:[%s6075 + $0x30] sm:$0xff]
  %v6083 = vld [vmem:[%s6075 + $0x38] sm:$0xff]
  %s6084 = scalar_lea.vmem %s11, 4
  %v6085 = vld [vmem:[%s6084] sm:$0xf]
  %s6086 = scalar_lea.vmem %s10, 64
  %v6087 = vld [vmem:[%s6086] sm:$0xff]
  %v6088 = vld [vmem:[%s6086 + $0x8] sm:$0xff]
  %v6089 = vld [vmem:[%s6086 + $0x10] sm:$0xff]
  %v6090 = vld [vmem:[%s6086 + $0x18] sm:$0xff]
  %v6091 = vld [vmem:[%s6086 + $0x20] sm:$0xff]
  %v6092 = vld [vmem:[%s6086 + $0x28] sm:$0xff]
  %v6093 = vld [vmem:[%s6086 + $0x30] sm:$0xff]
  %v6094 = vld [vmem:[%s6086 + $0x38] sm:$0xff]
  %6095 = vmatprep.subr.mxu0 0.0
  %6096 = vmatpush1.msra.mxu0 %v6059
  %6097 = vmatprep.subr.mxu0 0.0
  %6098 = vmatpush1.msra.mxu0 %v6060
  %6099 = vmatprep.subr.mxu0 0.0
  %6100 = vmatpush1.msra.mxu0 %v6061
  %6101 = vmatprep.subr.mxu0 0.0
  %6102 = vmatpush1.msra.mxu0 %v6062
  %6103 = vmatprep.subr.mxu0 0.0
  %6104 = vmatpush1.msra.mxu0 %v6063
  %6105 = vmatprep.subr.mxu0 0.0
  %6106 = vmatpush1.msra.mxu0 %v6064
  %6107 = vmatprep.subr.mxu0 0.0
  %6108 = vmatpush1.msra.mxu0 %v6065
  %6109 = vmatprep.subr.mxu0 0.0
  %6110 = vmatpush1.msra.mxu0 %v6066
  %6111 = vmatprep.subr.mxu0 0.0
  %6112 = vmatpush1.msra.mxu0 %v6067
  %6113 = vmatprep.subr.mxu0 0.0
  %6114 = vmatpush1.msra.mxu0 %v6068
  %6115 = vmatprep.subr.mxu0 0.0
  %6116 = vmatpush1.msra.mxu0 %v6069
  %6117 = vmatprep.subr.mxu0 0.0
  %6118 = vmatpush1.msra.mxu0 %v6070
  %6119 = vmatprep.subr.mxu0 0.0
  %6120 = vmatpush1.msra.mxu0 %v6071
  %6121 = vmatprep.subr.mxu0 0.0
  %6122 = vmatpush1.msra.mxu0 %v6072
  %6123 = vmatprep.subr.mxu0 0.0
  %6124 = vmatpush1.msra.mxu0 %v6073
  %6125 = vmatprep.subr.mxu0 0.0
  %6126 = vmatpush1.msra.mxu0 %v6074
  %6127 = vmatprep.subr.mxu0 0.0
  %6128 = vmatpush1.msra.mxu0 0.0
  %6129 = vmatprep.subr.mxu0 0.0
  %6130 = vmatpush1.msra.mxu0 0.0
  %6131 = vmatprep.subr.mxu0 0.0
  %6132 = vmatpush1.msra.mxu0 0.0
  %6133 = vmatprep.subr.mxu0 0.0
  %6134 = vmatpush1.msra.mxu0 0.0
  %6135 = vmatprep.subr.mxu0 0.0
  %6136 = vmatpush1.msra.mxu0 0.0
  %6137 = vmatprep.subr.mxu0 0.0
  %6138 = vmatpush1.msra.mxu0 0.0
  %6139 = vmatprep.subr.mxu0 0.0
  %6140 = vmatpush1.msra.mxu0 0.0
  %6141 = vmatprep.subr.mxu0 0.0
  %6142 = vmatpush1.msra.mxu0 0.0
  %6143 = vmatprep.subr.mxu0 0.0
  %6144 = vmatpush1.msra.mxu0 0.0
  %6145 = vmatprep.subr.mxu0 0.0
  %6146 = vmatpush1.msra.mxu0 0.0
  %6147 = vmatprep.subr.mxu0 0.0
  %6148 = vmatpush1.msra.mxu0 0.0
  %6149 = vmatprep.subr.mxu0 0.0
  %6150 = vmatpush1.msra.mxu0 0.0
  %6151 = vmatprep.subr.mxu0 0.0
  %6152 = vmatpush1.msra.mxu0 0.0
  %6153 = vmatprep.subr.mxu0 0.0
  %6154 = vmatpush1.msra.mxu0 0.0
  %6155 = vmatprep.subr.mxu0 0.0
  %6156 = vmatpush1.msra.mxu0 0.0
  %6157 = vmatprep.subr.mxu0 0.0
  %6158 = vmatpush1.msra.mxu0 0.0
  %6159 = vmatprep.mubr.f32.mxu0 0.0
  %6160 = vmatmul.mubr.f32.gmra.mrb[0].mxu0 %v1053
  %v6161 = vpop.f32.mrb[0].mxu0
  %v6162 = vadd.f32 %v895, %v6161
  %v6163 = vpop.f32.mrb[0].mxu0
  %6164 = vmatprep.mubr.f32.mxu0 0.0
  %6165 = vmatmul.mubr.f32.gmra.mrb[0].mxu0 %v1054
  %v6166 = vpop.f32.mrb[0].mxu0
  %v6167 = vadd.f32 %v900, %v6166
  %v6168 = vpop.f32.mrb[0].mxu0
  %6169 = vmatprep.mubr.f32.mxu0 0.0
  %6170 = vmatmul.mubr.f32.gmra.mrb[0].mxu0 %v1055
  %v6171 = vpop.f32.mrb[0].mxu0
  %v6172 = vadd.f32 %v905, %v6171
  %v6173 = vpop.f32.mrb[0].mxu0
  %6174 = vmatprep.mubr.f32.mxu0 0.0
  %6175 = vmatmul.mubr.f32.gmra.mrb[0].mxu0 %v1056
  %v6176 = vpop.f32.mrb[0].mxu0
  %v6177 = vadd.f32 %v910, %v6176
  %v6178 = vpop.f32.mrb[0].mxu0
  %6179 = vmatprep.mubr.f32.mxu0 0.0
  %6180 = vmatmul.mubr.f32.gmra.mrb[0].mxu0 %v1057
  %v6181 = vpop.f32.mrb[0].mxu0
  %v6182 = vadd.f32 %v915, %v6181
  %v6183 = vpop.f32.mrb[0].mxu0
  %6184 = vmatprep.mubr.f32.mxu0 0.0
  %6185 = vmatmul.mubr.f32.gmra.mrb[0].mxu0 %v1058
  %v6186 = vpop.f32.mrb[0].mxu0
  %v6187 = vadd.f32 %v920, %v6186
  %v6188 = vpop.f32.mrb[0].mxu0
  %6189 = vmatprep.mubr.f32.mxu0 0.0
  %6190 = vmatmul.mubr.f32.gmra.mrb[0].mxu0 %v1059
  %v6191 = vpop.f32.mrb[0].mxu0
  %v6192 = vadd.f32 %v925, %v6191
  %v6193 = vpop.f32.mrb[0].mxu0
  %6194 = vmatprep.mubr.f32.mxu0 0.0
  %6195 = vmatmul.mubr.f32.gmra.mrb[0].mxu0 %v1060
  %v6196 = vpop.f32.mrb[0].mxu0
  %v6197 = vadd.f32 %v930, %v6196
  %v6198 = vpop.f32.mrb[0].mxu0
  %6199 = vmatprep.mubr.f32.mxu0 0.0
  %6200 = vmatmul.mubr.f32.gmra.mrb[0].mxu0 %v1061
  %v6201 = vpop.f32.mrb[0].mxu0
  %v6202 = vadd.f32 %v935, %v6201
  %v6203 = vpop.f32.mrb[0].mxu0
  %6204 = vmatprep.mubr.f32.mxu0 0.0
  %6205 = vmatmul.mubr.f32.gmra.mrb[0].mxu0 %v1062
  %v6206 = vpop.f32.mrb[0].mxu0
  %v6207 = vadd.f32 %v940, %v6206
  %v6208 = vpop.f32.mrb[0].mxu0
  %6209 = vmatprep.mubr.f32.mxu0 0.0
  %6210 = vmatmul.mubr.f32.gmra.mrb[0].mxu0 %v1063
  %v6211 = vpop.f32.mrb[0].mxu0
  %v6212 = vadd.f32 %v945, %v6211
  %v6213 = vpop.f32.mrb[0].mxu0
  %6214 = vmatprep.mubr.f32.mxu0 0.0
  %6215 = vmatmul.mubr.f32.gmra.mrb[0].mxu0 %v1064
  %v6216 = vpop.f32.mrb[0].mxu0
  %v6217 = vadd.f32 %v950, %v6216
  %v6218 = vpop.f32.mrb[0].mxu0
  %6219 = vmatprep.mubr.f32.mxu0 0.0
  %6220 = vmatmul.mubr.f32.gmra.mrb[0].mxu0 %v1065
  %v6221 = vpop.f32.mrb[0].mxu0
  %v6222 = vadd.f32 %v955, %v6221
  %v6223 = vpop.f32.mrb[0].mxu0
  %6224 = vmatprep.mubr.f32.mxu0 0.0
  %6225 = vmatmul.mubr.f32.gmra.mrb[0].mxu0 %v1066
  %v6226 = vpop.f32.mrb[0].mxu0
  %v6227 = vadd.f32 %v960, %v6226
  %v6228 = vpop.f32.mrb[0].mxu0
  %6229 = vmatprep.mubr.f32.mxu0 0.0
  %6230 = vmatmul.mubr.f32.gmra.mrb[0].mxu0 %v1067
  %v6231 = vpop.f32.mrb[0].mxu0
  %v6232 = vadd.f32 %v965, %v6231
  %v6233 = vpop.f32.mrb[0].mxu0
  %6234 = vmatprep.mubr.f32.mxu0 0.0
  %6235 = vmatmul.mubr.f32.gmra.mrb[0].mxu0 %v1068
  %v6236 = vpop.f32.mrb[0].mxu0
  %v6237 = vadd.f32 %v970, %v6236
  %v6238 = vpop.f32.mrb[0].mxu0
  %6239 = vmatprep.mubr.f32.mxu0 0.0
  %6240 = vmatmul.mubr.f32.gmra.mrb[0].mxu0 %v1069
  %v6241 = vpop.f32.mrb[0].mxu0
  %v6242 = vadd.f32 %v975, %v6241
  %v6243 = vpop.f32.mrb[0].mxu0
  %6244 = vmatprep.mubr.f32.mxu0 0.0
  %6245 = vmatmul.mubr.f32.gmra.mrb[0].mxu0 %v1070
  %v6246 = vpop.f32.mrb[0].mxu0
  %v6247 = vadd.f32 %v980, %v6246
  %v6248 = vpop.f32.mrb[0].mxu0
  %6249 = vmatprep.mubr.f32.mxu0 0.0
  %6250 = vmatmul.mubr.f32.gmra.mrb[0].mxu0 %v1071
  %v6251 = vpop.f32.mrb[0].mxu0
  %v6252 = vadd.f32 %v985, %v6251
  %v6253 = vpop.f32.mrb[0].mxu0
  %6254 = vmatprep.mubr.f32.mxu0 0.0
  %6255 = vmatmul.mubr.f32.gmra.mrb[0].mxu0 %v1072
  %v6256 = vpop.f32.mrb[0].mxu0
  %v6257 = vadd.f32 %v990, %v6256
  %v6258 = vpop.f32.mrb[0].mxu0
  %6259 = vmatprep.mubr.f32.mxu0 0.0
  %6260 = vmatmul.mubr.f32.gmra.mrb[0].mxu0 %v1073
  %v6261 = vpop.f32.mrb[0].mxu0
  %v6262 = vadd.f32 %v995, %v6261
  %v6263 = vpop.f32.mrb[0].mxu0
  %6264 = vmatprep.mubr.f32.mxu0 0.0
  %6265 = vmatmul.mubr.f32.gmra.mrb[0].mxu0 %v1074
  %v6266 = vpop.f32.mrb[0].mxu0
  %v6267 = vadd.f32 %v1000, %v6266
  %v6268 = vpop.f32.mrb[0].mxu0
  %6269 = vmatprep.mubr.f32.mxu0 0.0
  %6270 = vmatmul.mubr.f32.gmra.mrb[0].mxu0 %v1075
  %v6271 = vpop.f32.mrb[0].mxu0
  %v6272 = vadd.f32 %v1005, %v6271
  %v6273 = vpop.f32.mrb[0].mxu0
  %6274 = vmatprep.mubr.f32.mxu0 0.0
  %6275 = vmatmul.mubr.f32.gmra.mrb[0].mxu0 %v1076
  %v6276 = vpop.f32.mrb[0].mxu0
  %v6277 = vadd.f32 %v1010, %v6276
  %v6278 = vpop.f32.mrb[0].mxu0
  %6279 = vmatprep.mubr.f32.mxu0 0.0
  %6280 = vmatmul.mubr.f32.gmra.mrb[0].mxu0 %v1077
  %v6281 = vpop.f32.mrb[0].mxu0
  %v6282 = vadd.f32 %v1015, %v6281
  %v6283 = vpop.f32.mrb[0].mxu0
  %6284 = vmatprep.mubr.f32.mxu0 0.0
  %6285 = vmatmul.mubr.f32.gmra.mrb[0].mxu0 %v1078
  %v6286 = vpop.f32.mrb[0].mxu0
  %v6287 = vadd.f32 %v1020, %v6286
  %v6288 = vpop.f32.mrb[0].mxu0
  %6289 = vmatprep.mubr.f32.mxu0 0.0
  %6290 = vmatmul.mubr.f32.gmra.mrb[0].mxu0 %v1079
  %v6291 = vpop.f32.mrb[0].mxu0
  %v6292 = vadd.f32 %v1025, %v6291
  %v6293 = vpop.f32.mrb[0].mxu0
  %6294 = vmatprep.mubr.f32.mxu0 0.0
  %6295 = vmatmul.mubr.f32.gmra.mrb[0].mxu0 %v1080
  %v6296 = vpop.f32.mrb[0].mxu0
  %v6297 = vadd.f32 %v1030, %v6296
  %v6298 = vpop.f32.mrb[0].mxu0
  %6299 = vmatprep.mubr.f32.mxu0 0.0
  %6300 = vmatmul.mubr.f32.gmra.mrb[0].mxu0 %v1081
  %v6301 = vpop.f32.mrb[0].mxu0
  %v6302 = vadd.f32 %v1035, %v6301
  %v6303 = vpop.f32.mrb[0].mxu0
  %6304 = vmatprep.mubr.f32.mxu0 0.0
  %6305 = vmatmul.mubr.f32.gmra.mrb[0].mxu0 %v1082
  %v6306 = vpop.f32.mrb[0].mxu0
  %v6307 = vadd.f32 %v1040, %v6306
  %v6308 = vpop.f32.mrb[0].mxu0
  %6309 = vmatprep.mubr.f32.mxu0 0.0
  %6310 = vmatmul.mubr.f32.gmra.mrb[0].mxu0 %v1083
  %v6311 = vpop.f32.mrb[0].mxu0
  %v6312 = vadd.f32 %v1045, %v6311
  %v6313 = vpop.f32.mrb[0].mxu0
  %6314 = vmatprep.mubr.f32.mxu0 0.0
  %6315 = vmatmul.mubr.f32.gmra.mrb[0].mxu0 %v1084
  %v6316 = vpop.f32.mrb[0].mxu0
  %v6317 = vadd.f32 %v1050, %v6316
  %v6318 = vpop.f32.mrb[0].mxu0
  %6319 = vdwg.mxu0
  %v6320 = vmax.f32 %v6162, 0.0
  %v6321 = vmax.f32 %v6167, 0.0
  %v6322 = vmax.f32 %v6172, 0.0
  %v6323 = vmax.f32 %v6177, 0.0
  %v6324 = vmax.f32 %v6182, 0.0
  %v6325 = vmax.f32 %v6187, 0.0
  %v6326 = vmax.f32 %v6192, 0.0
  %v6327 = vmax.f32 %v6197, 0.0
  %v6328 = vmax.f32 %v6202, 0.0
  %v6329 = vmax.f32 %v6207, 0.0
  %v6330 = vmax.f32 %v6212, 0.0
  %v6331 = vmax.f32 %v6217, 0.0
  %v6332 = vmax.f32 %v6222, 0.0
  %v6333 = vmax.f32 %v6227, 0.0
  %v6334 = vmax.f32 %v6232, 0.0
  %v6335 = vmax.f32 %v6237, 0.0
  %v6336 = vmax.f32 %v6242, 0.0
  %v6337 = vmax.f32 %v6247, 0.0
  %v6338 = vmax.f32 %v6252, 0.0
  %v6339 = vmax.f32 %v6257, 0.0
  %v6340 = vmax.f32 %v6262, 0.0
  %v6341 = vmax.f32 %v6267, 0.0
  %v6342 = vmax.f32 %v6272, 0.0
  %v6343 = vmax.f32 %v6277, 0.0
  %v6344 = vmax.f32 %v6282, 0.0
  %v6345 = vmax.f32 %v6287, 0.0
  %v6346 = vmax.f32 %v6292, 0.0
  %v6347 = vmax.f32 %v6297, 0.0
  %v6348 = vmax.f32 %v6302, 0.0
  %v6349 = vmax.f32 %v6307, 0.0
  %v6350 = vmax.f32 %v6312, 0.0
  %v6351 = vmax.f32 %v6317, 0.0
  %6352 = vmatprep.subr.mxu0 0.0
  %6353 = vmatpush1.msra.mxu0 %v6320
  %6354 = vmatprep.subr.mxu0 0.0
  %6355 = vmatpush1.msra.mxu0 %v6321
  %6356 = vmatprep.subr.mxu0 0.0
  %6357 = vmatpush1.msra.mxu0 %v6322
  %6358 = vmatprep.subr.mxu0 0.0
  %6359 = vmatpush1.msra.mxu0 %v6323
  %6360 = vmatprep.subr.mxu0 0.0
  %6361 = vmatpush1.msra.mxu0 %v6324
  %6362 = vmatprep.subr.mxu0 0.0
  %6363 = vmatpush1.msra.mxu0 %v6325
  %6364 = vmatprep.subr.mxu0 0.0
  %6365 = vmatpush1.msra.mxu0 %v6326
  %6366 = vmatprep.subr.mxu0 0.0
  %6367 = vmatpush1.msra.mxu0 %v6327
  %6368 = vmatprep.subr.mxu0 0.0
  %6369 = vmatpush1.msra.mxu0 %v6328
  %6370 = vmatprep.subr.mxu0 0.0
  %6371 = vmatpush1.msra.mxu0 %v6329
  %6372 = vmatprep.subr.mxu0 0.0
  %6373 = vmatpush1.msra.mxu0 %v6330
  %6374 = vmatprep.subr.mxu0 0.0
  %6375 = vmatpush1.msra.mxu0 %v6331
  %6376 = vmatprep.subr.mxu0 0.0
  %6377 = vmatpush1.msra.mxu0 %v6332
  %6378 = vmatprep.subr.mxu0 0.0
  %6379 = vmatpush1.msra.mxu0 %v6333
  %6380 = vmatprep.subr.mxu0 0.0
  %6381 = vmatpush1.msra.mxu0 %v6334
  %6382 = vmatprep.subr.mxu0 0.0
  %6383 = vmatpush1.msra.mxu0 %v6335
  %6384 = vmatprep.subr.mxu0 0.0
  %6385 = vmatpush1.msra.mxu0 %v6336
  %6386 = vmatprep.subr.mxu0 0.0
  %6387 = vmatpush1.msra.mxu0 %v6337
  %6388 = vmatprep.subr.mxu0 0.0
  %6389 = vmatpush1.msra.mxu0 %v6338
  %6390 = vmatprep.subr.mxu0 0.0
  %6391 = vmatpush1.msra.mxu0 %v6339
  %6392 = vmatprep.subr.mxu0 0.0
  %6393 = vmatpush1.msra.mxu0 %v6340
  %6394 = vmatprep.subr.mxu0 0.0
  %6395 = vmatpush1.msra.mxu0 %v6341
  %6396 = vmatprep.subr.mxu0 0.0
  %6397 = vmatpush1.msra.mxu0 %v6342
  %6398 = vmatprep.subr.mxu0 0.0
  %6399 = vmatpush1.msra.mxu0 %v6343
  %6400 = vmatprep.subr.mxu0 0.0
  %6401 = vmatpush1.msra.mxu0 %v6344
  %6402 = vmatprep.subr.mxu0 0.0
  %6403 = vmatpush1.msra.mxu0 %v6345
  %6404 = vmatprep.subr.mxu0 0.0
  %6405 = vmatpush1.msra.mxu0 %v6346
  %6406 = vmatprep.subr.mxu0 0.0
  %6407 = vmatpush1.msra.mxu0 %v6347
  %6408 = vmatprep.subr.mxu0 0.0
  %6409 = vmatpush1.msra.mxu0 %v6348
  %6410 = vmatprep.subr.mxu0 0.0
  %6411 = vmatpush1.msra.mxu0 %v6349
  %6412 = vmatprep.subr.mxu0 0.0
  %6413 = vmatpush1.msra.mxu0 %v6350
  %6414 = vmatprep.subr.mxu0 0.0
  %6415 = vmatpush1.msra.mxu0 %v6351
  %6416 = vmatprep.mubr.f32.mxu0 %v1086
  %6417 = vmatmul.mubr.f32.gmra.mrb[0].mxu0 %v1085
  %v6418 = vpop.f32.mrb[0].mxu0
  %v6419 = vadd.f32 0.0, %v6418
  %v6420 = vpop.f32.mrb[0].mxu0
  %6421 = vmatprep.mubr.f32.mxu0 %v1088
  %6422 = vmatmul.mubr.f32.gmra.mrb[0].mxu0 %v1087
  %v6423 = vpop.f32.mrb[0].mxu0
  %v6424 = vadd.f32 0.0, %v6423
  %v6425 = vpop.f32.mrb[0].mxu0
  %6426 = vmatprep.mubr.f32.mxu0 %v1090
  %6427 = vmatmul.mubr.f32.gmra.mrb[0].mxu0 %v1089
  %v6428 = vpop.f32.mrb[0].mxu0
  %v6429 = vadd.f32 0.0, %v6428
  %v6430 = vpop.f32.mrb[0].mxu0
  %6431 = vmatprep.mubr.f32.mxu0 %v1092
  %6432 = vmatmul.mubr.f32.gmra.mrb[0].mxu0 %v1091
  %v6433 = vpop.f32.mrb[0].mxu0
  %v6434 = vadd.f32 0.0, %v6433
  %v6435 = vpop.f32.mrb[0].mxu0
  %6436 = vmatprep.mubr.f32.mxu0 %v1094
  %6437 = vmatmul.mubr.f32.gmra.mrb[0].mxu0 %v1093
  %v6438 = vpop.f32.mrb[0].mxu0
  %v6439 = vadd.f32 0.0, %v6438
  %v6440 = vpop.f32.mrb[0].mxu0
  %6441 = vmatprep.mubr.f32.mxu0 %v1096
  %6442 = vmatmul.mubr.f32.gmra.mrb[0].mxu0 %v1095
  %v6443 = vpop.f32.mrb[0].mxu0
  %v6444 = vadd.f32 0.0, %v6443
  %v6445 = vpop.f32.mrb[0].mxu0
  %6446 = vmatprep.mubr.f32.mxu0 %v1098
  %6447 = vmatmul.mubr.f32.gmra.mrb[0].mxu0 %v1097
  %v6448 = vpop.f32.mrb[0].mxu0
  %v6449 = vadd.f32 0.0, %v6448
  %v6450 = vpop.f32.mrb[0].mxu0
  %6451 = vmatprep.mubr.f32.mxu0 %v1100
  %6452 = vmatmul.mubr.f32.gmra.mrb[0].mxu0 %v1099
  %v6453 = vpop.f32.mrb[0].mxu0
  %v6454 = vadd.f32 0.0, %v6453
  %v6455 = vpop.f32.mrb[0].mxu0
  %6456 = vmatprep.mubr.f32.mxu0 %v1102
  %6457 = vmatmul.mubr.f32.gmra.mrb[0].mxu0 %v1101
  %v6458 = vpop.f32.mrb[0].mxu0
  %v6459 = vadd.f32 0.0, %v6458
  %v6460 = vpop.f32.mrb[0].mxu0
  %6461 = vmatprep.mubr.f32.mxu0 %v1104
  %6462 = vmatmul.mubr.f32.gmra.mrb[0].mxu0 %v1103
  %v6463 = vpop.f32.mrb[0].mxu0
  %v6464 = vadd.f32 0.0, %v6463
  %v6465 = vpop.f32.mrb[0].mxu0
  %6466 = vmatprep.mubr.f32.mxu0 %v1106
  %6467 = vmatmul.mubr.f32.gmra.mrb[0].mxu0 %v1105
  %v6468 = vpop.f32.mrb[0].mxu0
  %v6469 = vadd.f32 0.0, %v6468
  %v6470 = vpop.f32.mrb[0].mxu0
  %6471 = vmatprep.mubr.f32.mxu0 %v1108
  %6472 = vmatmul.mubr.f32.gmra.mrb[0].mxu0 %v1107
  %v6473 = vpop.f32.mrb[0].mxu0
  %v6474 = vadd.f32 0.0, %v6473
  %v6475 = vpop.f32.mrb[0].mxu0
  %6476 = vmatprep.mubr.f32.mxu0 %v1110
  %6477 = vmatmul.mubr.f32.gmra.mrb[0].mxu0 %v1109
  %v6478 = vpop.f32.mrb[0].mxu0
  %v6479 = vadd.f32 0.0, %v6478
  %v6480 = vpop.f32.mrb[0].mxu0
  %6481 = vmatprep.mubr.f32.mxu0 %v1112
  %6482 = vmatmul.mubr.f32.gmra.mrb[0].mxu0 %v1111
  %v6483 = vpop.f32.mrb[0].mxu0
  %v6484 = vadd.f32 0.0, %v6483
  %v6485 = vpop.f32.mrb[0].mxu0
  %6486 = vmatprep.mubr.f32.mxu0 %v1114
  %6487 = vmatmul.mubr.f32.gmra.mrb[0].mxu0 %v1113
  %v6488 = vpop.f32.mrb[0].mxu0
  %v6489 = vadd.f32 0.0, %v6488
  %v6490 = vpop.f32.mrb[0].mxu0
  %6491 = vmatprep.mubr.f32.mxu0 %v1116
  %6492 = vmatmul.mubr.f32.gmra.mrb[0].mxu0 %v1115
  %v6493 = vpop.f32.mrb[0].mxu0
  %v6494 = vadd.f32 0.0, %v6493
  %v6495 = vpop.f32.mrb[0].mxu0
  %6496 = vdwg.mxu0
  %v6497 = vadd.f32 %v6059, %v6419
  %v6498 = vadd.f32 %v6060, %v6424
  %v6499 = vadd.f32 %v6061, %v6429
  %v6500 = vadd.f32 %v6062, %v6434
  %v6501 = vadd.f32 %v6063, %v6439
  %v6502 = vadd.f32 %v6064, %v6444
  %v6503 = vadd.f32 %v6065, %v6449
  %v6504 = vadd.f32 %v6066, %v6454
  %v6505 = vadd.f32 %v6067, %v6459
  %v6506 = vadd.f32 %v6068, %v6464
  %v6507 = vadd.f32 %v6069, %v6469
  %v6508 = vadd.f32 %v6070, %v6474
  %v6509 = vadd.f32 %v6071, %v6479
  %v6510 = vadd.f32 %v6072, %v6484
  %v6511 = vadd.f32 %v6073, %v6489
  %v6512 = vadd.f32 %v6074, %v6494
  %v6513 = vlaneseq
  %v6514 = vshrl.u32 %v6513, 7
  %v6515 = vsub.s32 0, %v6514
  %v6516 = vrot.slane %v6085, %v6515
  %6521 = vrot.lane.b32.xlu0 %v6076, 32
  %v6522 = vpop.permute.xlu0 %6521
  %6523 = vrot.lane.b32.xlu0 %v6078, 32
  %v6524 = vpop.permute.xlu0 %6523
  %6525 = vrot.lane.b32.xlu0 %v6080, 32
  %v6526 = vpop.permute.xlu0 %6525
  %6527 = vrot.lane.b32.xlu0 %v6082, 32
  %v6528 = vpop.permute.xlu0 %6527
  %v6534 = vsel %vm505, %v6497, 0
  %v6537 = vsel %vm505, %v6498, 0
  %v6540 = vsel %vm505, %v6499, 0
  %v6543 = vsel %vm505, %v6500, 0
  %v6546 = vsel %vm505, %v6501, 0
  %v6549 = vsel %vm505, %v6502, 0
  %v6552 = vsel %vm505, %v6503, 0
  %v6555 = vsel %vm505, %v6504, 0
  %v6558 = vsel %vm505, %v6505, 0
  %v6561 = vsel %vm505, %v6506, 0
  %v6564 = vsel %vm505, %v6507, 0
  %v6567 = vsel %vm505, %v6508, 0
  %v6570 = vsel %vm505, %v6509, 0
  %v6573 = vsel %vm505, %v6510, 0
  %v6576 = vsel %vm505, %v6511, 0
  %v6579 = vsel %vm505, %v6512, 0
  %6581 = vmatprep.subr.mxu0 0.0
  %6582 = vmatpush1.msra.mxu0 %v6522
  %6583 = vmatprep.subr.mxu0 0.0
  %6584 = vmatpush1.msra.mxu0 %v6524
  %6585 = vmatprep.subr.mxu0 0.0
  %6586 = vmatpush1.msra.mxu0 %v6526
  %6587 = vmatprep.subr.mxu0 0.0
  %6588 = vmatpush1.msra.mxu0 %v6528
  %6589 = vmatprep.subr.mxu0 0.0
  %6590 = vmatpush1.msra.mxu0 0.0
  %6591 = vmatprep.subr.mxu0 0.0
  %6592 = vmatpush1.msra.mxu0 0.0
  %6593 = vmatprep.subr.mxu0 0.0
  %6594 = vmatpush1.msra.mxu0 0.0
  %6595 = vmatprep.subr.mxu0 0.0
  %6596 = vmatpush1.msra.mxu0 0.0
  %6597 = vmatprep.subr.mxu0 0.0
  %6598 = vmatpush1.msra.mxu0 0.0
  %6599 = vmatprep.subr.mxu0 0.0
  %6600 = vmatpush1.msra.mxu0 0.0
  %6601 = vmatprep.subr.mxu0 0.0
  %6602 = vmatpush1.msra.mxu0 0.0
  %6603 = vmatprep.subr.mxu0 0.0
  %6604 = vmatpush1.msra.mxu0 0.0
  %6605 = vmatprep.subr.mxu0 0.0
  %6606 = vmatpush1.msra.mxu0 0.0
  %6607 = vmatprep.subr.mxu0 0.0
  %6608 = vmatpush1.msra.mxu0 0.0
  %6609 = vmatprep.subr.mxu0 0.0
  %6610 = vmatpush1.msra.mxu0 0.0
  %6611 = vmatprep.subr.mxu0 0.0
  %6612 = vmatpush1.msra.mxu0 0.0
  %6613 = vmatprep.subr.mxu0 0.0
  %6614 = vmatpush1.msra.mxu0 0.0
  %6615 = vmatprep.subr.mxu0 0.0
  %6616 = vmatpush1.msra.mxu0 0.0
  %6617 = vmatprep.subr.mxu0 0.0
  %6618 = vmatpush1.msra.mxu0 0.0
  %6619 = vmatprep.subr.mxu0 0.0
  %6620 = vmatpush1.msra.mxu0 0.0
  %6621 = vmatprep.subr.mxu0 0.0
  %6622 = vmatpush1.msra.mxu0 0.0
  %6623 = vmatprep.subr.mxu0 0.0
  %6624 = vmatpush1.msra.mxu0 0.0
  %6625 = vmatprep.subr.mxu0 0.0
  %6626 = vmatpush1.msra.mxu0 0.0
  %6627 = vmatprep.subr.mxu0 0.0
  %6628 = vmatpush1.msra.mxu0 0.0
  %6629 = vmatprep.subr.mxu0 0.0
  %6630 = vmatpush1.msra.mxu0 0.0
  %6631 = vmatprep.subr.mxu0 0.0
  %6632 = vmatpush1.msra.mxu0 0.0
  %6633 = vmatprep.subr.mxu0 0.0
  %6634 = vmatpush1.msra.mxu0 0.0
  %6635 = vmatprep.subr.mxu0 0.0
  %6636 = vmatpush1.msra.mxu0 0.0
  %6637 = vmatprep.subr.mxu0 0.0
  %6638 = vmatpush1.msra.mxu0 0.0
  %6639 = vmatprep.subr.mxu0 0.0
  %6640 = vmatpush1.msra.mxu0 0.0
  %6641 = vmatprep.subr.mxu0 0.0
  %6642 = vmatpush1.msra.mxu0 0.0
  %6643 = vmatprep.subr.mxu0 0.0
  %6644 = vmatpush1.msra.mxu0 0.0
  %6645 = vmatprep.mubr.f32.mxu0 0.0
  %6646 = vmatmul.mubr.f32.gmra.mrb[0].mxu0 %v6534
  %v6647 = vpop.f32.mrb[0].mxu0
  %v6648 = vadd.f32 %v6516, %v6647
  %v6649 = vpop.f32.mrb[0].mxu0
  %6650 = vmatprep.mubr.f32.mxu0 0.0
  %6651 = vmatmul.mubr.f32.gmra.mrb[0].mxu0 %v6537
  %v6652 = vpop.f32.mrb[0].mxu0
  %v6653 = vadd.f32 %v6516, %v6652
  %v6654 = vpop.f32.mrb[0].mxu0
  %6655 = vmatprep.mubr.f32.mxu0 0.0
  %6656 = vmatmul.mubr.f32.gmra.mrb[0].mxu0 %v6540
  %v6657 = vpop.f32.mrb[0].mxu0
  %v6658 = vadd.f32 %v6516, %v6657
  %v6659 = vpop.f32.mrb[0].mxu0
  %6660 = vmatprep.mubr.f32.mxu0 0.0
  %6661 = vmatmul.mubr.f32.gmra.mrb[0].mxu0 %v6543
  %v6662 = vpop.f32.mrb[0].mxu0
  %v6663 = vadd.f32 %v6516, %v6662
  %v6664 = vpop.f32.mrb[0].mxu0
  %6665 = vmatprep.mubr.f32.mxu0 0.0
  %6666 = vmatmul.mubr.f32.gmra.mrb[0].mxu0 %v6546
  %v6667 = vpop.f32.mrb[0].mxu0
  %v6668 = vadd.f32 %v6516, %v6667
  %v6669 = vpop.f32.mrb[0].mxu0
  %6670 = vmatprep.mubr.f32.mxu0 0.0
  %6671 = vmatmul.mubr.f32.gmra.mrb[0].mxu0 %v6549
  %v6672 = vpop.f32.mrb[0].mxu0
  %v6673 = vadd.f32 %v6516, %v6672
  %v6674 = vpop.f32.mrb[0].mxu0
  %6675 = vmatprep.mubr.f32.mxu0 0.0
  %6676 = vmatmul.mubr.f32.gmra.mrb[0].mxu0 %v6552
  %v6677 = vpop.f32.mrb[0].mxu0
  %v6678 = vadd.f32 %v6516, %v6677
  %v6679 = vpop.f32.mrb[0].mxu0
  %6680 = vmatprep.mubr.f32.mxu0 0.0
  %6681 = vmatmul.mubr.f32.gmra.mrb[0].mxu0 %v6555
  %v6682 = vpop.f32.mrb[0].mxu0
  %v6683 = vadd.f32 %v6516, %v6682
  %v6684 = vpop.f32.mrb[0].mxu0
  %6685 = vmatprep.mubr.f32.mxu0 0.0
  %6686 = vmatmul.mubr.f32.gmra.mrb[0].mxu0 %v6558
  %v6687 = vpop.f32.mrb[0].mxu0
  %v6688 = vadd.f32 %v6516, %v6687
  %v6689 = vpop.f32.mrb[0].mxu0
  %6690 = vmatprep.mubr.f32.mxu0 0.0
  %6691 = vmatmul.mubr.f32.gmra.mrb[0].mxu0 %v6561
  %v6692 = vpop.f32.mrb[0].mxu0
  %v6693 = vadd.f32 %v6516, %v6692
  %v6694 = vpop.f32.mrb[0].mxu0
  %6695 = vmatprep.mubr.f32.mxu0 0.0
  %6696 = vmatmul.mubr.f32.gmra.mrb[0].mxu0 %v6564
  %v6697 = vpop.f32.mrb[0].mxu0
  %v6698 = vadd.f32 %v6516, %v6697
  %v6699 = vpop.f32.mrb[0].mxu0
  %6700 = vmatprep.mubr.f32.mxu0 0.0
  %6701 = vmatmul.mubr.f32.gmra.mrb[0].mxu0 %v6567
  %v6702 = vpop.f32.mrb[0].mxu0
  %v6703 = vadd.f32 %v6516, %v6702
  %v6704 = vpop.f32.mrb[0].mxu0
  %6705 = vmatprep.mubr.f32.mxu0 0.0
  %6706 = vmatmul.mubr.f32.gmra.mrb[0].mxu0 %v6570
  %v6707 = vpop.f32.mrb[0].mxu0
  %v6708 = vadd.f32 %v6516, %v6707
  %v6709 = vpop.f32.mrb[0].mxu0
  %6710 = vmatprep.mubr.f32.mxu0 0.0
  %6711 = vmatmul.mubr.f32.gmra.mrb[0].mxu0 %v6573
  %v6712 = vpop.f32.mrb[0].mxu0
  %v6713 = vadd.f32 %v6516, %v6712
  %v6714 = vpop.f32.mrb[0].mxu0
  %6715 = vmatprep.mubr.f32.mxu0 0.0
  %6716 = vmatmul.mubr.f32.gmra.mrb[0].mxu0 %v6576
  %v6717 = vpop.f32.mrb[0].mxu0
  %v6718 = vadd.f32 %v6516, %v6717
  %v6719 = vpop.f32.mrb[0].mxu0
  %6720 = vmatprep.mubr.f32.mxu0 0.0
  %6721 = vmatmul.mubr.f32.gmra.mrb[0].mxu0 %v6579
  %v6722 = vpop.f32.mrb[0].mxu0
  %v6723 = vadd.f32 %v6516, %v6722
  %v6724 = vpop.f32.mrb[0].mxu0
  %6725 = vdwg.mxu0
  %v6726 = vmax.f32 %v6648, 0.0
  %v6727 = vmax.f32 %v6653, 0.0
  %v6728 = vmax.f32 %v6658, 0.0
  %v6729 = vmax.f32 %v6663, 0.0
  %v6730 = vmax.f32 %v6668, 0.0
  %v6731 = vmax.f32 %v6673, 0.0
  %v6732 = vmax.f32 %v6678, 0.0
  %v6733 = vmax.f32 %v6683, 0.0
  %v6734 = vmax.f32 %v6688, 0.0
  %v6735 = vmax.f32 %v6693, 0.0
  %v6736 = vmax.f32 %v6698, 0.0
  %v6737 = vmax.f32 %v6703, 0.0
  %v6738 = vmax.f32 %v6708, 0.0
  %v6739 = vmax.f32 %v6713, 0.0
  %v6740 = vmax.f32 %v6718, 0.0
  %v6741 = vmax.f32 %v6723, 0.0
  %6743 = vrot.lane.b32.xlu0 %v6516, 96
  %v6744 = vpop.permute.xlu0 %6743
  %v6747 = vsel %vm505, %v6726, 0
  %v6750 = vsel %vm505, %v6727, 0
  %v6753 = vsel %vm505, %v6728, 0
  %v6756 = vsel %vm505, %v6729, 0
  %v6759 = vsel %vm505, %v6730, 0
  %v6762 = vsel %vm505, %v6731, 0
  %v6765 = vsel %vm505, %v6732, 0
  %v6768 = vsel %vm505, %v6733, 0
  %v6771 = vsel %vm505, %v6734, 0
  %v6774 = vsel %vm505, %v6735, 0
  %v6777 = vsel %vm505, %v6736, 0
  %v6780 = vsel %vm505, %v6737, 0
  %v6783 = vsel %vm505, %v6738, 0
  %v6786 = vsel %vm505, %v6739, 0
  %v6789 = vsel %vm505, %v6740, 0
  %v6792 = vsel %vm505, %v6741, 0
  %6794 = vmatprep.subr.mxu0 0.0
  %6795 = vmatpush1.msra.mxu0 %v6077
  %6796 = vmatprep.subr.mxu0 0.0
  %6797 = vmatpush1.msra.mxu0 %v6079
  %6798 = vmatprep.subr.mxu0 0.0
  %6799 = vmatpush1.msra.mxu0 %v6081
  %6800 = vmatprep.subr.mxu0 0.0
  %6801 = vmatpush1.msra.mxu0 %v6083
  %6802 = vmatprep.subr.mxu0 0.0
  %6803 = vmatpush1.msra.mxu0 0.0
  %6804 = vmatprep.subr.mxu0 0.0
  %6805 = vmatpush1.msra.mxu0 0.0
  %6806 = vmatprep.subr.mxu0 0.0
  %6807 = vmatpush1.msra.mxu0 0.0
  %6808 = vmatprep.subr.mxu0 0.0
  %6809 = vmatpush1.msra.mxu0 0.0
  %6810 = vmatprep.subr.mxu0 0.0
  %6811 = vmatpush1.msra.mxu0 0.0
  %6812 = vmatprep.subr.mxu0 0.0
  %6813 = vmatpush1.msra.mxu0 0.0
  %6814 = vmatprep.subr.mxu0 0.0
  %6815 = vmatpush1.msra.mxu0 0.0
  %6816 = vmatprep.subr.mxu0 0.0
  %6817 = vmatpush1.msra.mxu0 0.0
  %6818 = vmatprep.subr.mxu0 0.0
  %6819 = vmatpush1.msra.mxu0 0.0
  %6820 = vmatprep.subr.mxu0 0.0
  %6821 = vmatpush1.msra.mxu0 0.0
  %6822 = vmatprep.subr.mxu0 0.0
  %6823 = vmatpush1.msra.mxu0 0.0
  %6824 = vmatprep.subr.mxu0 0.0
  %6825 = vmatpush1.msra.mxu0 0.0
  %6826 = vmatprep.subr.mxu0 0.0
  %6827 = vmatpush1.msra.mxu0 0.0
  %6828 = vmatprep.subr.mxu0 0.0
  %6829 = vmatpush1.msra.mxu0 0.0
  %6830 = vmatprep.subr.mxu0 0.0
  %6831 = vmatpush1.msra.mxu0 0.0
  %6832 = vmatprep.subr.mxu0 0.0
  %6833 = vmatpush1.msra.mxu0 0.0
  %6834 = vmatprep.subr.mxu0 0.0
  %6835 = vmatpush1.msra.mxu0 0.0
  %6836 = vmatprep.subr.mxu0 0.0
  %6837 = vmatpush1.msra.mxu0 0.0
  %6838 = vmatprep.subr.mxu0 0.0
  %6839 = vmatpush1.msra.mxu0 0.0
  %6840 = vmatprep.subr.mxu0 0.0
  %6841 = vmatpush1.msra.mxu0 0.0
  %6842 = vmatprep.subr.mxu0 0.0
  %6843 = vmatpush1.msra.mxu0 0.0
  %6844 = vmatprep.subr.mxu0 0.0
  %6845 = vmatpush1.msra.mxu0 0.0
  %6846 = vmatprep.subr.mxu0 0.0
  %6847 = vmatpush1.msra.mxu0 0.0
  %6848 = vmatprep.subr.mxu0 0.0
  %6849 = vmatpush1.msra.mxu0 0.0
  %6850 = vmatprep.subr.mxu0 0.0
  %6851 = vmatpush1.msra.mxu0 0.0
  %6852 = vmatprep.subr.mxu0 0.0
  %6853 = vmatpush1.msra.mxu0 0.0
  %6854 = vmatprep.subr.mxu0 0.0
  %6855 = vmatpush1.msra.mxu0 0.0
  %6856 = vmatprep.subr.mxu0 0.0
  %6857 = vmatpush1.msra.mxu0 0.0
  %6858 = vmatprep.mubr.f32.mxu0 0.0
  %6859 = vmatmul.mubr.f32.gmra.mrb[0].mxu0 %v6747
  %v6860 = vpop.f32.mrb[0].mxu0
  %v6861 = vadd.f32 %v6744, %v6860
  %v6862 = vpop.f32.mrb[0].mxu0
  %6863 = vmatprep.mubr.f32.mxu0 0.0
  %6864 = vmatmul.mubr.f32.gmra.mrb[0].mxu0 %v6750
  %v6865 = vpop.f32.mrb[0].mxu0
  %v6866 = vadd.f32 %v6744, %v6865
  %v6867 = vpop.f32.mrb[0].mxu0
  %6868 = vmatprep.mubr.f32.mxu0 0.0
  %6869 = vmatmul.mubr.f32.gmra.mrb[0].mxu0 %v6753
  %v6870 = vpop.f32.mrb[0].mxu0
  %v6871 = vadd.f32 %v6744, %v6870
  %v6872 = vpop.f32.mrb[0].mxu0
  %6873 = vmatprep.mubr.f32.mxu0 0.0
  %6874 = vmatmul.mubr.f32.gmra.mrb[0].mxu0 %v6756
  %v6875 = vpop.f32.mrb[0].mxu0
  %v6876 = vadd.f32 %v6744, %v6875
  %v6877 = vpop.f32.mrb[0].mxu0
  %6878 = vmatprep.mubr.f32.mxu0 0.0
  %6879 = vmatmul.mubr.f32.gmra.mrb[0].mxu0 %v6759
  %v6880 = vpop.f32.mrb[0].mxu0
  %v6881 = vadd.f32 %v6744, %v6880
  %v6882 = vpop.f32.mrb[0].mxu0
  %6883 = vmatprep.mubr.f32.mxu0 0.0
  %6884 = vmatmul.mubr.f32.gmra.mrb[0].mxu0 %v6762
  %v6885 = vpop.f32.mrb[0].mxu0
  %v6886 = vadd.f32 %v6744, %v6885
  %v6887 = vpop.f32.mrb[0].mxu0
  %6888 = vmatprep.mubr.f32.mxu0 0.0
  %6889 = vmatmul.mubr.f32.gmra.mrb[0].mxu0 %v6765
  %v6890 = vpop.f32.mrb[0].mxu0
  %v6891 = vadd.f32 %v6744, %v6890
  %v6892 = vpop.f32.mrb[0].mxu0
  %6893 = vmatprep.mubr.f32.mxu0 0.0
  %6894 = vmatmul.mubr.f32.gmra.mrb[0].mxu0 %v6768
  %v6895 = vpop.f32.mrb[0].mxu0
  %v6896 = vadd.f32 %v6744, %v6895
  %v6897 = vpop.f32.mrb[0].mxu0
  %6898 = vmatprep.mubr.f32.mxu0 0.0
  %6899 = vmatmul.mubr.f32.gmra.mrb[0].mxu0 %v6771
  %v6900 = vpop.f32.mrb[0].mxu0
  %v6901 = vadd.f32 %v6744, %v6900
  %v6902 = vpop.f32.mrb[0].mxu0
  %6903 = vmatprep.mubr.f32.mxu0 0.0
  %6904 = vmatmul.mubr.f32.gmra.mrb[0].mxu0 %v6774
  %v6905 = vpop.f32.mrb[0].mxu0
  %v6906 = vadd.f32 %v6744, %v6905
  %v6907 = vpop.f32.mrb[0].mxu0
  %6908 = vmatprep.mubr.f32.mxu0 0.0
  %6909 = vmatmul.mubr.f32.gmra.mrb[0].mxu0 %v6777
  %v6910 = vpop.f32.mrb[0].mxu0
  %v6911 = vadd.f32 %v6744, %v6910
  %v6912 = vpop.f32.mrb[0].mxu0
  %6913 = vmatprep.mubr.f32.mxu0 0.0
  %6914 = vmatmul.mubr.f32.gmra.mrb[0].mxu0 %v6780
  %v6915 = vpop.f32.mrb[0].mxu0
  %v6916 = vadd.f32 %v6744, %v6915
  %v6917 = vpop.f32.mrb[0].mxu0
  %6918 = vmatprep.mubr.f32.mxu0 0.0
  %6919 = vmatmul.mubr.f32.gmra.mrb[0].mxu0 %v6783
  %v6920 = vpop.f32.mrb[0].mxu0
  %v6921 = vadd.f32 %v6744, %v6920
  %v6922 = vpop.f32.mrb[0].mxu0
  %6923 = vmatprep.mubr.f32.mxu0 0.0
  %6924 = vmatmul.mubr.f32.gmra.mrb[0].mxu0 %v6786
  %v6925 = vpop.f32.mrb[0].mxu0
  %v6926 = vadd.f32 %v6744, %v6925
  %v6927 = vpop.f32.mrb[0].mxu0
  %6928 = vmatprep.mubr.f32.mxu0 0.0
  %6929 = vmatmul.mubr.f32.gmra.mrb[0].mxu0 %v6789
  %v6930 = vpop.f32.mrb[0].mxu0
  %v6931 = vadd.f32 %v6744, %v6930
  %v6932 = vpop.f32.mrb[0].mxu0
  %6933 = vmatprep.mubr.f32.mxu0 0.0
  %6934 = vmatmul.mubr.f32.gmra.mrb[0].mxu0 %v6792
  %v6935 = vpop.f32.mrb[0].mxu0
  %v6936 = vadd.f32 %v6744, %v6935
  %v6937 = vpop.f32.mrb[0].mxu0
  %6938 = vdwg.mxu0
  %v6939 = vadd.f32 %v6861, %v6059
  %v6940 = vadd.f32 %v6866, %v6060
  %v6941 = vadd.f32 %v6871, %v6061
  %v6942 = vadd.f32 %v6876, %v6062
  %v6943 = vadd.f32 %v6881, %v6063
  %v6944 = vadd.f32 %v6886, %v6064
  %v6945 = vadd.f32 %v6891, %v6065
  %v6946 = vadd.f32 %v6896, %v6066
  %v6947 = vadd.f32 %v6901, %v6067
  %v6948 = vadd.f32 %v6906, %v6068
  %v6949 = vadd.f32 %v6911, %v6069
  %v6950 = vadd.f32 %v6916, %v6070
  %v6951 = vadd.f32 %v6921, %v6071
  %v6952 = vadd.f32 %v6926, %v6072
  %v6953 = vadd.f32 %v6931, %v6073
  %v6954 = vadd.f32 %v6936, %v6074
  %v6955 = vsel %vm505, %v6939, 0.0
  %v6956 = vsel %vm505, %v6940, 0.0
  %v6957 = vadd.f32 %v6955, %v6956
  %v6958 = vsel %vm505, %v6941, 0.0
  %v6959 = vadd.f32 %v6957, %v6958
  %v6960 = vsel %vm505, %v6942, 0.0
  %v6961 = vadd.f32 %v6959, %v6960
  %v6962 = vsel %vm505, %v6943, 0.0
  %v6963 = vadd.f32 %v6961, %v6962
  %v6964 = vsel %vm505, %v6944, 0.0
  %v6965 = vadd.f32 %v6963, %v6964
  %v6966 = vsel %vm505, %v6945, 0.0
  %v6967 = vadd.f32 %v6965, %v6966
  %v6968 = vsel %vm505, %v6946, 0.0
  %v6969 = vadd.f32 %v6967, %v6968
  %v6970 = vsel %vm505, %v6947, 0.0
  %v6971 = vadd.f32 %v6969, %v6970
  %v6972 = vsel %vm505, %v6948, 0.0
  %v6973 = vadd.f32 %v6971, %v6972
  %v6974 = vsel %vm505, %v6949, 0.0
  %v6975 = vadd.f32 %v6973, %v6974
  %v6976 = vsel %vm505, %v6950, 0.0
  %v6977 = vadd.f32 %v6975, %v6976
  %v6978 = vsel %vm505, %v6951, 0.0
  %v6979 = vadd.f32 %v6977, %v6978
  %v6980 = vsel %vm505, %v6952, 0.0
  %v6981 = vadd.f32 %v6979, %v6980
  %v6982 = vsel %vm505, %v6953, 0.0
  %v6983 = vadd.f32 %v6981, %v6982
  %v6984 = vsel %vm505, %v6954, 0.0
  %v6985 = vadd.f32 %v6983, %v6984
  %v6986 = vrot.slane %v6985, 4
  %v6987 = vadd.f32 %v6985, %v6986
  %v6988 = vrot.slane %v6987, 2
  %v6989 = vadd.f32 %v6987, %v6988
  %v6990 = vrot.slane %v6989, 1
  %v6991 = vadd.f32 %v6989, %v6990
  %v6992 = vmul.f32 %v6991, %v240
  %v6993 = vmul.f32 %v6939, %v6939
  %v6994 = vmul.f32 %v6940, %v6940
  %v6995 = vmul.f32 %v6941, %v6941
  %v6996 = vmul.f32 %v6942, %v6942
  %v6997 = vmul.f32 %v6943, %v6943
  %v6998 = vmul.f32 %v6944, %v6944
  %v6999 = vmul.f32 %v6945, %v6945
  %v7000 = vmul.f32 %v6946, %v6946
  %v7001 = vmul.f32 %v6947, %v6947
  %v7002 = vmul.f32 %v6948, %v6948
  %v7003 = vmul.f32 %v6949, %v6949
  %v7004 = vmul.f32 %v6950, %v6950
  %v7005 = vmul.f32 %v6951, %v6951
  %v7006 = vmul.f32 %v6952, %v6952
  %v7007 = vmul.f32 %v6953, %v6953
  %v7008 = vmul.f32 %v6954, %v6954
  %v7009 = vsel %vm505, %v6993, 0.0
  %v7010 = vsel %vm505, %v6994, 0.0
  %v7011 = vadd.f32 %v7009, %v7010
  %v7012 = vsel %vm505, %v6995, 0.0
  %v7013 = vadd.f32 %v7011, %v7012
  %v7014 = vsel %vm505, %v6996, 0.0
  %v7015 = vadd.f32 %v7013, %v7014
  %v7016 = vsel %vm505, %v6997, 0.0
  %v7017 = vadd.f32 %v7015, %v7016
  %v7018 = vsel %vm505, %v6998, 0.0
  %v7019 = vadd.f32 %v7017, %v7018
  %v7020 = vsel %vm505, %v6999, 0.0
  %v7021 = vadd.f32 %v7019, %v7020
  %v7022 = vsel %vm505, %v7000, 0.0
  %v7023 = vadd.f32 %v7021, %v7022
  %v7024 = vsel %vm505, %v7001, 0.0
  %v7025 = vadd.f32 %v7023, %v7024
  %v7026 = vsel %vm505, %v7002, 0.0
  %v7027 = vadd.f32 %v7025, %v7026
  %v7028 = vsel %vm505, %v7003, 0.0
  %v7029 = vadd.f32 %v7027, %v7028
  %v7030 = vsel %vm505, %v7004, 0.0
  %v7031 = vadd.f32 %v7029, %v7030
  %v7032 = vsel %vm505, %v7005, 0.0
  %v7033 = vadd.f32 %v7031, %v7032
  %v7034 = vsel %vm505, %v7006, 0.0
  %v7035 = vadd.f32 %v7033, %v7034
  %v7036 = vsel %vm505, %v7007, 0.0
  %v7037 = vadd.f32 %v7035, %v7036
  %v7038 = vsel %vm505, %v7008, 0.0
  %v7039 = vadd.f32 %v7037, %v7038
  %v7040 = vrot.slane %v7039, 4
  %v7041 = vadd.f32 %v7039, %v7040
  %v7042 = vrot.slane %v7041, 2
  %v7043 = vadd.f32 %v7041, %v7042
  %v7044 = vrot.slane %v7043, 1
  %v7045 = vadd.f32 %v7043, %v7044
  %v7046 = vmul.f32 %v7045, %v240
  %v7047 = vmul.f32 %v6992, %v6992
  %v7048 = vsub.f32 %v7046, %v7047
  %v7049 = vsub.f32 %v6939, %v6992
  %v7050 = vsub.f32 %v6940, %v6992
  %v7051 = vsub.f32 %v6941, %v6992
  %v7052 = vsub.f32 %v6942, %v6992
  %v7053 = vsub.f32 %v6943, %v6992
  %v7054 = vsub.f32 %v6944, %v6992
  %v7055 = vsub.f32 %v6945, %v6992
  %v7056 = vsub.f32 %v6946, %v6992
  %v7057 = vsub.f32 %v6947, %v6992
  %v7058 = vsub.f32 %v6948, %v6992
  %v7059 = vsub.f32 %v6949, %v6992
  %v7060 = vsub.f32 %v6950, %v6992
  %v7061 = vsub.f32 %v6951, %v6992
  %v7062 = vsub.f32 %v6952, %v6992
  %v7063 = vsub.f32 %v6953, %v6992
  %v7064 = vsub.f32 %v6954, %v6992
  %v7065 = vadd.f32 %v7048, 1e-05
  %v7066 = vrsqrt.pop %v7065
  %v7067 = vmul.f32 %v7049, %v7066
  %v7068 = vmul.f32 %v7050, %v7066
  %v7069 = vmul.f32 %v7051, %v7066
  %v7070 = vmul.f32 %v7052, %v7066
  %v7071 = vmul.f32 %v7053, %v7066
  %v7072 = vmul.f32 %v7054, %v7066
  %v7073 = vmul.f32 %v7055, %v7066
  %v7074 = vmul.f32 %v7056, %v7066
  %v7075 = vmul.f32 %v7057, %v7066
  %v7076 = vmul.f32 %v7058, %v7066
  %v7077 = vmul.f32 %v7059, %v7066
  %v7078 = vmul.f32 %v7060, %v7066
  %v7079 = vmul.f32 %v7061, %v7066
  %v7080 = vmul.f32 %v7062, %v7066
  %v7081 = vmul.f32 %v7063, %v7066
  %v7082 = vmul.f32 %v7064, %v7066
  %7083 = vrot.lane.b32.xlu0 %v6516, 64
  %v7084 = vpop.permute.xlu0 %7083
  %v7086 = vmul.f32 %v7067, %v7084
  %v7087 = vmul.f32 %v7068, %v7084
  %v7088 = vmul.f32 %v7069, %v7084
  %v7089 = vmul.f32 %v7070, %v7084
  %v7090 = vmul.f32 %v7071, %v7084
  %v7091 = vmul.f32 %v7072, %v7084
  %v7092 = vmul.f32 %v7073, %v7084
  %v7093 = vmul.f32 %v7074, %v7084
  %v7094 = vmul.f32 %v7075, %v7084
  %v7095 = vmul.f32 %v7076, %v7084
  %v7096 = vmul.f32 %v7077, %v7084
  %v7097 = vmul.f32 %v7078, %v7084
  %v7098 = vmul.f32 %v7079, %v7084
  %v7099 = vmul.f32 %v7080, %v7084
  %v7100 = vmul.f32 %v7081, %v7084
  %v7101 = vmul.f32 %v7082, %v7084
  %7102 = vrot.lane.b32.xlu0 %v6516, 32
  %v7103 = vpop.permute.xlu0 %7102
  %v7105 = vadd.f32 %v7086, %v7103
  %v7106 = vadd.f32 %v7087, %v7103
  %v7107 = vadd.f32 %v7088, %v7103
  %v7108 = vadd.f32 %v7089, %v7103
  %v7109 = vadd.f32 %v7090, %v7103
  %v7110 = vadd.f32 %v7091, %v7103
  %v7111 = vadd.f32 %v7092, %v7103
  %v7112 = vadd.f32 %v7093, %v7103
  %v7113 = vadd.f32 %v7094, %v7103
  %v7114 = vadd.f32 %v7095, %v7103
  %v7115 = vadd.f32 %v7096, %v7103
  %v7116 = vadd.f32 %v7097, %v7103
  %v7117 = vadd.f32 %v7098, %v7103
  %v7118 = vadd.f32 %v7099, %v7103
  %v7119 = vadd.f32 %v7100, %v7103
  %v7120 = vadd.f32 %v7101, %v7103
  %v7121 = vlaneseq
  %v7122 = vshrl.u32 %v7121, 7
  %v7123 = vsub.s32 1, %v7122
  %v7124 = vrot.slane %v6085, %v7123
  %v7126 = vsel %vm505, %v6059, 0
  %v7129 = vsel %vm505, %v6060, 0
  %v7132 = vsel %vm505, %v6061, 0
  %v7135 = vsel %vm505, %v6062, 0
  %v7138 = vsel %vm505, %v6063, 0
  %v7141 = vsel %vm505, %v6064, 0
  %v7144 = vsel %vm505, %v6065, 0
  %v7147 = vsel %vm505, %v6066, 0
  %v7150 = vsel %vm505, %v6067, 0
  %v7153 = vsel %vm505, %v6068, 0
  %v7156 = vsel %vm505, %v6069, 0
  %v7159 = vsel %vm505, %v6070, 0
  %v7162 = vsel %vm505, %v6071, 0
  %v7165 = vsel %vm505, %v6072, 0
  %v7168 = vsel %vm505, %v6073, 0
  %v7171 = vsel %vm505, %v6074, 0
  %7173 = vmatprep.subr.mxu0 0.0
  %7174 = vmatpush1.msra.mxu0 %v6076
  %7175 = vmatprep.subr.mxu0 0.0
  %7176 = vmatpush1.msra.mxu0 %v6078
  %7177 = vmatprep.subr.mxu0 0.0
  %7178 = vmatpush1.msra.mxu0 %v6080
  %7179 = vmatprep.subr.mxu0 0.0
  %7180 = vmatpush1.msra.mxu0 %v6082
  %7181 = vmatprep.subr.mxu0 0.0
  %7182 = vmatpush1.msra.mxu0 0.0
  %7183 = vmatprep.subr.mxu0 0.0
  %7184 = vmatpush1.msra.mxu0 0.0
  %7185 = vmatprep.subr.mxu0 0.0
  %7186 = vmatpush1.msra.mxu0 0.0
  %7187 = vmatprep.subr.mxu0 0.0
  %7188 = vmatpush1.msra.mxu0 0.0
  %7189 = vmatprep.subr.mxu0 0.0
  %7190 = vmatpush1.msra.mxu0 0.0
  %7191 = vmatprep.subr.mxu0 0.0
  %7192 = vmatpush1.msra.mxu0 0.0
  %7193 = vmatprep.subr.mxu0 0.0
  %7194 = vmatpush1.msra.mxu0 0.0
  %7195 = vmatprep.subr.mxu0 0.0
  %7196 = vmatpush1.msra.mxu0 0.0
  %7197 = vmatprep.subr.mxu0 0.0
  %7198 = vmatpush1.msra.mxu0 0.0
  %7199 = vmatprep.subr.mxu0 0.0
  %7200 = vmatpush1.msra.mxu0 0.0
  %7201 = vmatprep.subr.mxu0 0.0
  %7202 = vmatpush1.msra.mxu0 0.0
  %7203 = vmatprep.subr.mxu0 0.0
  %7204 = vmatpush1.msra.mxu0 0.0
  %7205 = vmatprep.subr.mxu0 0.0
  %7206 = vmatpush1.msra.mxu0 0.0
  %7207 = vmatprep.subr.mxu0 0.0
  %7208 = vmatpush1.msra.mxu0 0.0
  %7209 = vmatprep.subr.mxu0 0.0
  %7210 = vmatpush1.msra.mxu0 0.0
  %7211 = vmatprep.subr.mxu0 0.0
  %7212 = vmatpush1.msra.mxu0 0.0
  %7213 = vmatprep.subr.mxu0 0.0
  %7214 = vmatpush1.msra.mxu0 0.0
  %7215 = vmatprep.subr.mxu0 0.0
  %7216 = vmatpush1.msra.mxu0 0.0
  %7217 = vmatprep.subr.mxu0 0.0
  %7218 = vmatpush1.msra.mxu0 0.0
  %7219 = vmatprep.subr.mxu0 0.0
  %7220 = vmatpush1.msra.mxu0 0.0
  %7221 = vmatprep.subr.mxu0 0.0
  %7222 = vmatpush1.msra.mxu0 0.0
  %7223 = vmatprep.subr.mxu0 0.0
  %7224 = vmatpush1.msra.mxu0 0.0
  %7225 = vmatprep.subr.mxu0 0.0
  %7226 = vmatpush1.msra.mxu0 0.0
  %7227 = vmatprep.subr.mxu0 0.0
  %7228 = vmatpush1.msra.mxu0 0.0
  %7229 = vmatprep.subr.mxu0 0.0
  %7230 = vmatpush1.msra.mxu0 0.0
  %7231 = vmatprep.subr.mxu0 0.0
  %7232 = vmatpush1.msra.mxu0 0.0
  %7233 = vmatprep.subr.mxu0 0.0
  %7234 = vmatpush1.msra.mxu0 0.0
  %7235 = vmatprep.subr.mxu0 0.0
  %7236 = vmatpush1.msra.mxu0 0.0
  %7237 = vmatprep.mubr.f32.mxu0 0.0
  %7238 = vmatmul.mubr.f32.gmra.mrb[0].mxu0 %v7126
  %v7239 = vpop.f32.mrb[0].mxu0
  %v7240 = vadd.f32 %v7124, %v7239
  %v7241 = vpop.f32.mrb[0].mxu0
  %7242 = vmatprep.mubr.f32.mxu0 0.0
  %7243 = vmatmul.mubr.f32.gmra.mrb[0].mxu0 %v7129
  %v7244 = vpop.f32.mrb[0].mxu0
  %v7245 = vadd.f32 %v7124, %v7244
  %v7246 = vpop.f32.mrb[0].mxu0
  %7247 = vmatprep.mubr.f32.mxu0 0.0
  %7248 = vmatmul.mubr.f32.gmra.mrb[0].mxu0 %v7132
  %v7249 = vpop.f32.mrb[0].mxu0
  %v7250 = vadd.f32 %v7124, %v7249
  %v7251 = vpop.f32.mrb[0].mxu0
  %7252 = vmatprep.mubr.f32.mxu0 0.0
  %7253 = vmatmul.mubr.f32.gmra.mrb[0].mxu0 %v7135
  %v7254 = vpop.f32.mrb[0].mxu0
  %v7255 = vadd.f32 %v7124, %v7254
  %v7256 = vpop.f32.mrb[0].mxu0
  %7257 = vmatprep.mubr.f32.mxu0 0.0
  %7258 = vmatmul.mubr.f32.gmra.mrb[0].mxu0 %v7138
  %v7259 = vpop.f32.mrb[0].mxu0
  %v7260 = vadd.f32 %v7124, %v7259
  %v7261 = vpop.f32.mrb[0].mxu0
  %7262 = vmatprep.mubr.f32.mxu0 0.0
  %7263 = vmatmul.mubr.f32.gmra.mrb[0].mxu0 %v7141
  %v7264 = vpop.f32.mrb[0].mxu0
  %v7265 = vadd.f32 %v7124, %v7264
  %v7266 = vpop.f32.mrb[0].mxu0
  %7267 = vmatprep.mubr.f32.mxu0 0.0
  %7268 = vmatmul.mubr.f32.gmra.mrb[0].mxu0 %v7144
  %v7269 = vpop.f32.mrb[0].mxu0
  %v7270 = vadd.f32 %v7124, %v7269
  %v7271 = vpop.f32.mrb[0].mxu0
  %7272 = vmatprep.mubr.f32.mxu0 0.0
  %7273 = vmatmul.mubr.f32.gmra.mrb[0].mxu0 %v7147
  %v7274 = vpop.f32.mrb[0].mxu0
  %v7275 = vadd.f32 %v7124, %v7274
  %v7276 = vpop.f32.mrb[0].mxu0
  %7277 = vmatprep.mubr.f32.mxu0 0.0
  %7278 = vmatmul.mubr.f32.gmra.mrb[0].mxu0 %v7150
  %v7279 = vpop.f32.mrb[0].mxu0
  %v7280 = vadd.f32 %v7124, %v7279
  %v7281 = vpop.f32.mrb[0].mxu0
  %7282 = vmatprep.mubr.f32.mxu0 0.0
  %7283 = vmatmul.mubr.f32.gmra.mrb[0].mxu0 %v7153
  %v7284 = vpop.f32.mrb[0].mxu0
  %v7285 = vadd.f32 %v7124, %v7284
  %v7286 = vpop.f32.mrb[0].mxu0
  %7287 = vmatprep.mubr.f32.mxu0 0.0
  %7288 = vmatmul.mubr.f32.gmra.mrb[0].mxu0 %v7156
  %v7289 = vpop.f32.mrb[0].mxu0
  %v7290 = vadd.f32 %v7124, %v7289
  %v7291 = vpop.f32.mrb[0].mxu0
  %7292 = vmatprep.mubr.f32.mxu0 0.0
  %7293 = vmatmul.mubr.f32.gmra.mrb[0].mxu0 %v7159
  %v7294 = vpop.f32.mrb[0].mxu0
  %v7295 = vadd.f32 %v7124, %v7294
  %v7296 = vpop.f32.mrb[0].mxu0
  %7297 = vmatprep.mubr.f32.mxu0 0.0
  %7298 = vmatmul.mubr.f32.gmra.mrb[0].mxu0 %v7162
  %v7299 = vpop.f32.mrb[0].mxu0
  %v7300 = vadd.f32 %v7124, %v7299
  %v7301 = vpop.f32.mrb[0].mxu0
  %7302 = vmatprep.mubr.f32.mxu0 0.0
  %7303 = vmatmul.mubr.f32.gmra.mrb[0].mxu0 %v7165
  %v7304 = vpop.f32.mrb[0].mxu0
  %v7305 = vadd.f32 %v7124, %v7304
  %v7306 = vpop.f32.mrb[0].mxu0
  %7307 = vmatprep.mubr.f32.mxu0 0.0
  %7308 = vmatmul.mubr.f32.gmra.mrb[0].mxu0 %v7168
  %v7309 = vpop.f32.mrb[0].mxu0
  %v7310 = vadd.f32 %v7124, %v7309
  %v7311 = vpop.f32.mrb[0].mxu0
  %7312 = vmatprep.mubr.f32.mxu0 0.0
  %7313 = vmatmul.mubr.f32.gmra.mrb[0].mxu0 %v7171
  %v7314 = vpop.f32.mrb[0].mxu0
  %v7315 = vadd.f32 %v7124, %v7314
  %v7316 = vpop.f32.mrb[0].mxu0
  %7317 = vdwg.mxu0
  %7334 = vrot.lane.b32.xlu0 %v7240, 96
  %v7335 = vpop.permute.xlu0 %7334
  %7336 = vrot.lane.b32.xlu0 %v7245, 96
  %v7337 = vpop.permute.xlu0 %7336
  %7338 = vrot.lane.b32.xlu0 %v7250, 96
  %v7339 = vpop.permute.xlu0 %7338
  %7340 = vrot.lane.b32.xlu0 %v7255, 96
  %v7341 = vpop.permute.xlu0 %7340
  %7342 = vrot.lane.b32.xlu0 %v7260, 96
  %v7343 = vpop.permute.xlu0 %7342
  %7344 = vrot.lane.b32.xlu0 %v7265, 96
  %v7345 = vpop.permute.xlu0 %7344
  %7346 = vrot.lane.b32.xlu0 %v7270, 96
  %v7347 = vpop.permute.xlu0 %7346
  %7348 = vrot.lane.b32.xlu0 %v7275, 96
  %v7349 = vpop.permute.xlu0 %7348
  %7350 = vrot.lane.b32.xlu0 %v7280, 96
  %v7351 = vpop.permute.xlu0 %7350
  %7352 = vrot.lane.b32.xlu0 %v7285, 96
  %v7353 = vpop.permute.xlu0 %7352
  %7354 = vrot.lane.b32.xlu0 %v7290, 96
  %v7355 = vpop.permute.xlu0 %7354
  %7356 = vrot.lane.b32.xlu0 %v7295, 96
  %v7357 = vpop.permute.xlu0 %7356
  %7358 = vrot.lane.b32.xlu0 %v7300, 96
  %v7359 = vpop.permute.xlu0 %7358
  %7360 = vrot.lane.b32.xlu0 %v7305, 96
  %v7361 = vpop.permute.xlu0 %7360
  %7362 = vrot.lane.b32.xlu0 %v7310, 96
  %v7363 = vpop.permute.xlu0 %7362
  %7364 = vrot.lane.b32.xlu0 %v7315, 96
  %v7365 = vpop.permute.xlu0 %7364
  %v7366 = vsel %vm2405, %v7240, 0
  %v7368 = vsel %vm2405, %v7245, 0
  %v7370 = vsel %vm2405, %v7250, 0
  %v7372 = vsel %vm2405, %v7255, 0
  %v7374 = vsel %vm2405, %v7260, 0
  %v7376 = vsel %vm2405, %v7265, 0
  %v7378 = vsel %vm2405, %v7270, 0
  %v7380 = vsel %vm2405, %v7275, 0
  %v7382 = vsel %vm2405, %v7280, 0
  %v7384 = vsel %vm2405, %v7285, 0
  %v7386 = vsel %vm2405, %v7290, 0
  %v7388 = vsel %vm2405, %v7295, 0
  %v7390 = vsel %vm2405, %v7300, 0
  %v7392 = vsel %vm2405, %v7305, 0
  %v7394 = vsel %vm2405, %v7310, 0
  %v7396 = vsel %vm2405, %v7315, 0
  %v7398 = vsel %vm2405, %v7335, 0
  %v7400 = vsel %vm2405, %v7337, 0
  %v7402 = vsel %vm2405, %v7339, 0
  %v7404 = vsel %vm2405, %v7341, 0
  %v7406 = vsel %vm2405, %v7343, 0
  %v7408 = vsel %vm2405, %v7345, 0
  %v7410 = vsel %vm2405, %v7347, 0
  %v7412 = vsel %vm2405, %v7349, 0
  %v7414 = vsel %vm2405, %v7351, 0
  %v7416 = vsel %vm2405, %v7353, 0
  %v7418 = vsel %vm2405, %v7355, 0
  %v7420 = vsel %vm2405, %v7357, 0
  %v7422 = vsel %vm2405, %v7359, 0
  %v7424 = vsel %vm2405, %v7361, 0
  %v7426 = vsel %vm2405, %v7363, 0
  %v7428 = vsel %vm2405, %v7365, 0
  %7430 = vmatprep.subr.mxu0 0.0
  %7431 = vmatpush1.xpose.msra.mxu0 %v7398
  %7432 = vmatprep.subr.mxu0 0.0
  %7433 = vmatpush1.xpose.msra.mxu0 %v7400
  %7434 = vmatprep.subr.mxu0 0.0
  %7435 = vmatpush1.xpose.msra.mxu0 %v7402
  %7436 = vmatprep.subr.mxu0 0.0
  %7437 = vmatpush1.xpose.msra.mxu0 %v7404
  %7438 = vmatprep.subr.mxu0 0.0
  %7439 = vmatpush1.xpose.msra.mxu0 %v7406
  %7440 = vmatprep.subr.mxu0 0.0
  %7441 = vmatpush1.xpose.msra.mxu0 %v7408
  %7442 = vmatprep.subr.mxu0 0.0
  %7443 = vmatpush1.xpose.msra.mxu0 %v7410
  %7444 = vmatprep.subr.mxu0 0.0
  %7445 = vmatpush1.xpose.msra.mxu0 %v7412
  %7446 = vmatprep.subr.mxu0 0.0
  %7447 = vmatpush1.xpose.msra.mxu0 %v7414
  %7448 = vmatprep.subr.mxu0 0.0
  %7449 = vmatpush1.xpose.msra.mxu0 %v7416
  %7450 = vmatprep.subr.mxu0 0.0
  %7451 = vmatpush1.xpose.msra.mxu0 %v7418
  %7452 = vmatprep.subr.mxu0 0.0
  %7453 = vmatpush1.xpose.msra.mxu0 %v7420
  %7454 = vmatprep.subr.mxu0 0.0
  %7455 = vmatpush1.xpose.msra.mxu0 %v7422
  %7456 = vmatprep.subr.mxu0 0.0
  %7457 = vmatpush1.xpose.msra.mxu0 %v7424
  %7458 = vmatprep.subr.mxu0 0.0
  %7459 = vmatpush1.xpose.msra.mxu0 %v7426
  %7460 = vmatprep.subr.mxu0 0.0
  %7461 = vmatpush1.xpose.msra.mxu0 %v7428
  %7462 = vmatprep.subr.mxu0 0.0
  %7463 = vmatpush1.xpose.msra.mxu0 0.0
  %7464 = vmatprep.subr.mxu0 0.0
  %7465 = vmatpush1.xpose.msra.mxu0 0.0
  %7466 = vmatprep.subr.mxu0 0.0
  %7467 = vmatpush1.xpose.msra.mxu0 0.0
  %7468 = vmatprep.subr.mxu0 0.0
  %7469 = vmatpush1.xpose.msra.mxu0 0.0
  %7470 = vmatprep.subr.mxu0 0.0
  %7471 = vmatpush1.xpose.msra.mxu0 0.0
  %7472 = vmatprep.subr.mxu0 0.0
  %7473 = vmatpush1.xpose.msra.mxu0 0.0
  %7474 = vmatprep.subr.mxu0 0.0
  %7475 = vmatpush1.xpose.msra.mxu0 0.0
  %7476 = vmatprep.subr.mxu0 0.0
  %7477 = vmatpush1.xpose.msra.mxu0 0.0
  %7478 = vmatprep.subr.mxu0 0.0
  %7479 = vmatpush1.xpose.msra.mxu0 0.0
  %7480 = vmatprep.subr.mxu0 0.0
  %7481 = vmatpush1.xpose.msra.mxu0 0.0
  %7482 = vmatprep.subr.mxu0 0.0
  %7483 = vmatpush1.xpose.msra.mxu0 0.0
  %7484 = vmatprep.subr.mxu0 0.0
  %7485 = vmatpush1.xpose.msra.mxu0 0.0
  %7486 = vmatprep.subr.mxu0 0.0
  %7487 = vmatpush1.xpose.msra.mxu0 0.0
  %7488 = vmatprep.subr.mxu0 0.0
  %7489 = vmatpush1.xpose.msra.mxu0 0.0
  %7490 = vmatprep.subr.mxu0 0.0
  %7491 = vmatpush1.xpose.msra.mxu0 0.0
  %7492 = vmatprep.subr.mxu0 0.0
  %7493 = vmatpush1.xpose.msra.mxu0 0.0
  %7494 = vmatprep.mubr.f32.mxu0 0.0
  %7495 = vmatmul.mubr.f32.gmra.mrb[0].mxu0 %v7366
  %v7496 = vpop.f32.mrb[0].mxu0
  %v7497 = vadd.f32 %v170, %v7496
  %v7498 = vpop.f32.mrb[0].mxu0
  %7499 = vmatprep.mubr.f32.mxu0 0.0
  %7500 = vmatmul.mubr.f32.gmra.mrb[0].mxu0 %v7368
  %v7501 = vpop.f32.mrb[0].mxu0
  %v7502 = vadd.f32 %v171, %v7501
  %v7503 = vpop.f32.mrb[0].mxu0
  %7504 = vmatprep.mubr.f32.mxu0 0.0
  %7505 = vmatmul.mubr.f32.gmra.mrb[0].mxu0 %v7370
  %v7506 = vpop.f32.mrb[0].mxu0
  %v7507 = vadd.f32 %v172, %v7506
  %v7508 = vpop.f32.mrb[0].mxu0
  %7509 = vmatprep.mubr.f32.mxu0 0.0
  %7510 = vmatmul.mubr.f32.gmra.mrb[0].mxu0 %v7372
  %v7511 = vpop.f32.mrb[0].mxu0
  %v7512 = vadd.f32 %v173, %v7511
  %v7513 = vpop.f32.mrb[0].mxu0
  %7514 = vmatprep.mubr.f32.mxu0 0.0
  %7515 = vmatmul.mubr.f32.gmra.mrb[0].mxu0 %v7374
  %v7516 = vpop.f32.mrb[0].mxu0
  %v7517 = vadd.f32 %v174, %v7516
  %v7518 = vpop.f32.mrb[0].mxu0
  %7519 = vmatprep.mubr.f32.mxu0 0.0
  %7520 = vmatmul.mubr.f32.gmra.mrb[0].mxu0 %v7376
  %v7521 = vpop.f32.mrb[0].mxu0
  %v7522 = vadd.f32 %v175, %v7521
  %v7523 = vpop.f32.mrb[0].mxu0
  %7524 = vmatprep.mubr.f32.mxu0 0.0
  %7525 = vmatmul.mubr.f32.gmra.mrb[0].mxu0 %v7378
  %v7526 = vpop.f32.mrb[0].mxu0
  %v7527 = vadd.f32 %v176, %v7526
  %v7528 = vpop.f32.mrb[0].mxu0
  %7529 = vmatprep.mubr.f32.mxu0 0.0
  %7530 = vmatmul.mubr.f32.gmra.mrb[0].mxu0 %v7380
  %v7531 = vpop.f32.mrb[0].mxu0
  %v7532 = vadd.f32 %v177, %v7531
  %v7533 = vpop.f32.mrb[0].mxu0
  %7534 = vmatprep.mubr.f32.mxu0 0.0
  %7535 = vmatmul.mubr.f32.gmra.mrb[0].mxu0 %v7382
  %v7536 = vpop.f32.mrb[0].mxu0
  %v7537 = vadd.f32 %v178, %v7536
  %v7538 = vpop.f32.mrb[0].mxu0
  %7539 = vmatprep.mubr.f32.mxu0 0.0
  %7540 = vmatmul.mubr.f32.gmra.mrb[0].mxu0 %v7384
  %v7541 = vpop.f32.mrb[0].mxu0
  %v7542 = vadd.f32 %v179, %v7541
  %v7543 = vpop.f32.mrb[0].mxu0
  %7544 = vmatprep.mubr.f32.mxu0 0.0
  %7545 = vmatmul.mubr.f32.gmra.mrb[0].mxu0 %v7386
  %v7546 = vpop.f32.mrb[0].mxu0
  %v7547 = vadd.f32 %v180, %v7546
  %v7548 = vpop.f32.mrb[0].mxu0
  %7549 = vmatprep.mubr.f32.mxu0 0.0
  %7550 = vmatmul.mubr.f32.gmra.mrb[0].mxu0 %v7388
  %v7551 = vpop.f32.mrb[0].mxu0
  %v7552 = vadd.f32 %v181, %v7551
  %v7553 = vpop.f32.mrb[0].mxu0
  %7554 = vmatprep.mubr.f32.mxu0 0.0
  %7555 = vmatmul.mubr.f32.gmra.mrb[0].mxu0 %v7390
  %v7556 = vpop.f32.mrb[0].mxu0
  %v7557 = vadd.f32 %v182, %v7556
  %v7558 = vpop.f32.mrb[0].mxu0
  %7559 = vmatprep.mubr.f32.mxu0 0.0
  %7560 = vmatmul.mubr.f32.gmra.mrb[0].mxu0 %v7392
  %v7561 = vpop.f32.mrb[0].mxu0
  %v7562 = vadd.f32 %v183, %v7561
  %v7563 = vpop.f32.mrb[0].mxu0
  %7564 = vmatprep.mubr.f32.mxu0 0.0
  %7565 = vmatmul.mubr.f32.gmra.mrb[0].mxu0 %v7394
  %v7566 = vpop.f32.mrb[0].mxu0
  %v7567 = vadd.f32 %v184, %v7566
  %v7568 = vpop.f32.mrb[0].mxu0
  %7569 = vmatprep.mubr.f32.mxu0 0.0
  %7570 = vmatmul.mubr.f32.gmra.mrb[0].mxu0 %v7396
  %v7571 = vpop.f32.mrb[0].mxu0
  %v7572 = vadd.f32 %v185, %v7571
  %v7573 = vpop.f32.mrb[0].mxu0
  %7574 = vdwg.mxu0
  %7575 = vmax.xlane.f32.xlu0 %v7497
  %v7576 = vpop.xlane.xlu0 %7575
  %7577 = vmax.xlane.f32.xlu0 %v7502
  %v7578 = vpop.xlane.xlu0 %7577
  %7579 = vmax.xlane.f32.xlu0 %v7507
  %v7580 = vpop.xlane.xlu0 %7579
  %7581 = vmax.xlane.f32.xlu0 %v7512
  %v7582 = vpop.xlane.xlu0 %7581
  %7583 = vmax.xlane.f32.xlu0 %v7517
  %v7584 = vpop.xlane.xlu0 %7583
  %7585 = vmax.xlane.f32.xlu0 %v7522
  %v7586 = vpop.xlane.xlu0 %7585
  %7587 = vmax.xlane.f32.xlu0 %v7527
  %v7588 = vpop.xlane.xlu0 %7587
  %7589 = vmax.xlane.f32.xlu0 %v7532
  %v7590 = vpop.xlane.xlu0 %7589
  %7591 = vmax.xlane.f32.xlu0 %v7537
  %v7592 = vpop.xlane.xlu0 %7591
  %7593 = vmax.xlane.f32.xlu0 %v7542
  %v7594 = vpop.xlane.xlu0 %7593
  %7595 = vmax.xlane.f32.xlu0 %v7547
  %v7596 = vpop.xlane.xlu0 %7595
  %7597 = vmax.xlane.f32.xlu0 %v7552
  %v7598 = vpop.xlane.xlu0 %7597
  %7599 = vmax.xlane.f32.xlu0 %v7557
  %v7600 = vpop.xlane.xlu0 %7599
  %7601 = vmax.xlane.f32.xlu0 %v7562
  %v7602 = vpop.xlane.xlu0 %7601
  %7603 = vmax.xlane.f32.xlu0 %v7567
  %v7604 = vpop.xlane.xlu0 %7603
  %7605 = vmax.xlane.f32.xlu0 %v7572
  %v7606 = vpop.xlane.xlu0 %7605
  %v7607 = vsub.f32 %v7497, %v7576
  %v7608 = vsub.f32 %v7502, %v7578
  %v7609 = vsub.f32 %v7507, %v7580
  %v7610 = vsub.f32 %v7512, %v7582
  %v7611 = vsub.f32 %v7517, %v7584
  %v7612 = vsub.f32 %v7522, %v7586
  %v7613 = vsub.f32 %v7527, %v7588
  %v7614 = vsub.f32 %v7532, %v7590
  %v7615 = vsub.f32 %v7537, %v7592
  %v7616 = vsub.f32 %v7542, %v7594
  %v7617 = vsub.f32 %v7547, %v7596
  %v7618 = vsub.f32 %v7552, %v7598
  %v7619 = vsub.f32 %v7557, %v7600
  %v7620 = vsub.f32 %v7562, %v7602
  %v7621 = vsub.f32 %v7567, %v7604
  %v7622 = vsub.f32 %v7572, %v7606
  %v7623 = vmul.f32 %v7607, 1.442695
  %v7624 = vpow.pop %v7623
  %v7625 = vmul.f32 %v7608, 1.442695
  %v7626 = vpow.pop %v7625
  %v7627 = vmul.f32 %v7609, 1.442695
  %v7628 = vpow.pop %v7627
  %v7629 = vmul.f32 %v7610, 1.442695
  %v7630 = vpow.pop %v7629
  %v7631 = vmul.f32 %v7611, 1.442695
  %v7632 = vpow.pop %v7631
  %v7633 = vmul.f32 %v7612, 1.442695
  %v7634 = vpow.pop %v7633
  %v7635 = vmul.f32 %v7613, 1.442695
  %v7636 = vpow.pop %v7635
  %v7637 = vmul.f32 %v7614, 1.442695
  %v7638 = vpow.pop %v7637
  %v7639 = vmul.f32 %v7615, 1.442695
  %v7640 = vpow.pop %v7639
  %v7641 = vmul.f32 %v7616, 1.442695
  %v7642 = vpow.pop %v7641
  %v7643 = vmul.f32 %v7617, 1.442695
  %v7644 = vpow.pop %v7643
  %v7645 = vmul.f32 %v7618, 1.442695
  %v7646 = vpow.pop %v7645
  %v7647 = vmul.f32 %v7619, 1.442695
  %v7648 = vpow.pop %v7647
  %v7649 = vmul.f32 %v7620, 1.442695
  %v7650 = vpow.pop %v7649
  %v7651 = vmul.f32 %v7621, 1.442695
  %v7652 = vpow.pop %v7651
  %v7653 = vmul.f32 %v7622, 1.442695
  %v7654 = vpow.pop %v7653
  %7655 = vadd.xlane.f32.xlu0 %v7624
  %v7656 = vpop.xlane.xlu0 %7655
  %7657 = vadd.xlane.f32.xlu0 %v7626
  %v7658 = vpop.xlane.xlu0 %7657
  %7659 = vadd.xlane.f32.xlu0 %v7628
  %v7660 = vpop.xlane.xlu0 %7659
  %7661 = vadd.xlane.f32.xlu0 %v7630
  %v7662 = vpop.xlane.xlu0 %7661
  %7663 = vadd.xlane.f32.xlu0 %v7632
  %v7664 = vpop.xlane.xlu0 %7663
  %7665 = vadd.xlane.f32.xlu0 %v7634
  %v7666 = vpop.xlane.xlu0 %7665
  %7667 = vadd.xlane.f32.xlu0 %v7636
  %v7668 = vpop.xlane.xlu0 %7667
  %7669 = vadd.xlane.f32.xlu0 %v7638
  %v7670 = vpop.xlane.xlu0 %7669
  %7671 = vadd.xlane.f32.xlu0 %v7640
  %v7672 = vpop.xlane.xlu0 %7671
  %7673 = vadd.xlane.f32.xlu0 %v7642
  %v7674 = vpop.xlane.xlu0 %7673
  %7675 = vadd.xlane.f32.xlu0 %v7644
  %v7676 = vpop.xlane.xlu0 %7675
  %7677 = vadd.xlane.f32.xlu0 %v7646
  %v7678 = vpop.xlane.xlu0 %7677
  %7679 = vadd.xlane.f32.xlu0 %v7648
  %v7680 = vpop.xlane.xlu0 %7679
  %7681 = vadd.xlane.f32.xlu0 %v7650
  %v7682 = vpop.xlane.xlu0 %7681
  %7683 = vadd.xlane.f32.xlu0 %v7652
  %v7684 = vpop.xlane.xlu0 %7683
  %7685 = vadd.xlane.f32.xlu0 %v7654
  %v7686 = vpop.xlane.xlu0 %7685
  %v7687 = vrcp.pop %v7656
  %v7688 = vrcp.pop %v7658
  %v7689 = vrcp.pop %v7660
  %v7690 = vrcp.pop %v7662
  %v7691 = vrcp.pop %v7664
  %v7692 = vrcp.pop %v7666
  %v7693 = vrcp.pop %v7668
  %v7694 = vrcp.pop %v7670
  %v7695 = vrcp.pop %v7672
  %v7696 = vrcp.pop %v7674
  %v7697 = vrcp.pop %v7676
  %v7698 = vrcp.pop %v7678
  %v7699 = vrcp.pop %v7680
  %v7700 = vrcp.pop %v7682
  %v7701 = vrcp.pop %v7684
  %v7702 = vrcp.pop %v7686
  %v7703 = vmul.f32 %v7624, %v7687
  %v7704 = vmul.f32 %v7626, %v7688
  %v7705 = vmul.f32 %v7628, %v7689
  %v7706 = vmul.f32 %v7630, %v7690
  %v7707 = vmul.f32 %v7632, %v7691
  %v7708 = vmul.f32 %v7634, %v7692
  %v7709 = vmul.f32 %v7636, %v7693
  %v7710 = vmul.f32 %v7638, %v7694
  %v7711 = vmul.f32 %v7640, %v7695
  %v7712 = vmul.f32 %v7642, %v7696
  %v7713 = vmul.f32 %v7644, %v7697
  %v7714 = vmul.f32 %v7646, %v7698
  %v7715 = vmul.f32 %v7648, %v7699
  %v7716 = vmul.f32 %v7650, %v7700
  %v7717 = vmul.f32 %v7652, %v7701
  %v7718 = vmul.f32 %v7654, %v7702
  %7719 = vrot.lane.b32.xlu0 %v7240, 64
  %v7720 = vpop.permute.xlu0 %7719
  %7721 = vrot.lane.b32.xlu0 %v7245, 64
  %v7722 = vpop.permute.xlu0 %7721
  %7723 = vrot.lane.b32.xlu0 %v7250, 64
  %v7724 = vpop.permute.xlu0 %7723
  %7725 = vrot.lane.b32.xlu0 %v7255, 64
  %v7726 = vpop.permute.xlu0 %7725
  %7727 = vrot.lane.b32.xlu0 %v7260, 64
  %v7728 = vpop.permute.xlu0 %7727
  %7729 = vrot.lane.b32.xlu0 %v7265, 64
  %v7730 = vpop.permute.xlu0 %7729
  %7731 = vrot.lane.b32.xlu0 %v7270, 64
  %v7732 = vpop.permute.xlu0 %7731
  %7733 = vrot.lane.b32.xlu0 %v7275, 64
  %v7734 = vpop.permute.xlu0 %7733
  %7735 = vrot.lane.b32.xlu0 %v7280, 64
  %v7736 = vpop.permute.xlu0 %7735
  %7737 = vrot.lane.b32.xlu0 %v7285, 64
  %v7738 = vpop.permute.xlu0 %7737
  %7739 = vrot.lane.b32.xlu0 %v7290, 64
  %v7740 = vpop.permute.xlu0 %7739
  %7741 = vrot.lane.b32.xlu0 %v7295, 64
  %v7742 = vpop.permute.xlu0 %7741
  %7743 = vrot.lane.b32.xlu0 %v7300, 64
  %v7744 = vpop.permute.xlu0 %7743
  %7745 = vrot.lane.b32.xlu0 %v7305, 64
  %v7746 = vpop.permute.xlu0 %7745
  %7747 = vrot.lane.b32.xlu0 %v7310, 64
  %v7748 = vpop.permute.xlu0 %7747
  %7749 = vrot.lane.b32.xlu0 %v7315, 64
  %v7750 = vpop.permute.xlu0 %7749
  %7767 = vmatprep.subr.mxu0 0.0
  %7768 = vmatpush1.msra.mxu0 %v7720
  %7769 = vmatprep.subr.mxu0 0.0
  %7770 = vmatpush1.msra.mxu0 %v7722
  %7771 = vmatprep.subr.mxu0 0.0
  %7772 = vmatpush1.msra.mxu0 %v7724
  %7773 = vmatprep.subr.mxu0 0.0
  %7774 = vmatpush1.msra.mxu0 %v7726
  %7775 = vmatprep.subr.mxu0 0.0
  %7776 = vmatpush1.msra.mxu0 %v7728
  %7777 = vmatprep.subr.mxu0 0.0
  %7778 = vmatpush1.msra.mxu0 %v7730
  %7779 = vmatprep.subr.mxu0 0.0
  %7780 = vmatpush1.msra.mxu0 %v7732
  %7781 = vmatprep.subr.mxu0 0.0
  %7782 = vmatpush1.msra.mxu0 %v7734
  %7783 = vmatprep.subr.mxu0 0.0
  %7784 = vmatpush1.msra.mxu0 %v7736
  %7785 = vmatprep.subr.mxu0 0.0
  %7786 = vmatpush1.msra.mxu0 %v7738
  %7787 = vmatprep.subr.mxu0 0.0
  %7788 = vmatpush1.msra.mxu0 %v7740
  %7789 = vmatprep.subr.mxu0 0.0
  %7790 = vmatpush1.msra.mxu0 %v7742
  %7791 = vmatprep.subr.mxu0 0.0
  %7792 = vmatpush1.msra.mxu0 %v7744
  %7793 = vmatprep.subr.mxu0 0.0
  %7794 = vmatpush1.msra.mxu0 %v7746
  %7795 = vmatprep.subr.mxu0 0.0
  %7796 = vmatpush1.msra.mxu0 %v7748
  %7797 = vmatprep.subr.mxu0 0.0
  %7798 = vmatpush1.msra.mxu0 %v7750
  %7799 = vmatprep.subr.mxu0 0.0
  %7800 = vmatpush1.msra.mxu0 0.0
  %7801 = vmatprep.subr.mxu0 0.0
  %7802 = vmatpush1.msra.mxu0 0.0
  %7803 = vmatprep.subr.mxu0 0.0
  %7804 = vmatpush1.msra.mxu0 0.0
  %7805 = vmatprep.subr.mxu0 0.0
  %7806 = vmatpush1.msra.mxu0 0.0
  %7807 = vmatprep.subr.mxu0 0.0
  %7808 = vmatpush1.msra.mxu0 0.0
  %7809 = vmatprep.subr.mxu0 0.0
  %7810 = vmatpush1.msra.mxu0 0.0
  %7811 = vmatprep.subr.mxu0 0.0
  %7812 = vmatpush1.msra.mxu0 0.0
  %7813 = vmatprep.subr.mxu0 0.0
  %7814 = vmatpush1.msra.mxu0 0.0
  %7815 = vmatprep.subr.mxu0 0.0
  %7816 = vmatpush1.msra.mxu0 0.0
  %7817 = vmatprep.subr.mxu0 0.0
  %7818 = vmatpush1.msra.mxu0 0.0
  %7819 = vmatprep.subr.mxu0 0.0
  %7820 = vmatpush1.msra.mxu0 0.0
  %7821 = vmatprep.subr.mxu0 0.0
  %7822 = vmatpush1.msra.mxu0 0.0
  %7823 = vmatprep.subr.mxu0 0.0
  %7824 = vmatpush1.msra.mxu0 0.0
  %7825 = vmatprep.subr.mxu0 0.0
  %7826 = vmatpush1.msra.mxu0 0.0
  %7827 = vmatprep.subr.mxu0 0.0
  %7828 = vmatpush1.msra.mxu0 0.0
  %7829 = vmatprep.subr.mxu0 0.0
  %7830 = vmatpush1.msra.mxu0 0.0
  %7831 = vmatprep.mubr.f32.mxu0 0.0
  %7832 = vmatmul.mubr.f32.gmra.mrb[0].mxu0 %v7703
  %v7833 = vpop.f32.mrb[0].mxu0
  %v7834 = vadd.f32 0.0, %v7833
  %v7835 = vpop.f32.mrb[0].mxu0
  %7836 = vmatprep.mubr.f32.mxu0 0.0
  %7837 = vmatmul.mubr.f32.gmra.mrb[0].mxu0 %v7704
  %v7838 = vpop.f32.mrb[0].mxu0
  %v7839 = vadd.f32 0.0, %v7838
  %v7840 = vpop.f32.mrb[0].mxu0
  %7841 = vmatprep.mubr.f32.mxu0 0.0
  %7842 = vmatmul.mubr.f32.gmra.mrb[0].mxu0 %v7705
  %v7843 = vpop.f32.mrb[0].mxu0
  %v7844 = vadd.f32 0.0, %v7843
  %v7845 = vpop.f32.mrb[0].mxu0
  %7846 = vmatprep.mubr.f32.mxu0 0.0
  %7847 = vmatmul.mubr.f32.gmra.mrb[0].mxu0 %v7706
  %v7848 = vpop.f32.mrb[0].mxu0
  %v7849 = vadd.f32 0.0, %v7848
  %v7850 = vpop.f32.mrb[0].mxu0
  %7851 = vmatprep.mubr.f32.mxu0 0.0
  %7852 = vmatmul.mubr.f32.gmra.mrb[0].mxu0 %v7707
  %v7853 = vpop.f32.mrb[0].mxu0
  %v7854 = vadd.f32 0.0, %v7853
  %v7855 = vpop.f32.mrb[0].mxu0
  %7856 = vmatprep.mubr.f32.mxu0 0.0
  %7857 = vmatmul.mubr.f32.gmra.mrb[0].mxu0 %v7708
  %v7858 = vpop.f32.mrb[0].mxu0
  %v7859 = vadd.f32 0.0, %v7858
  %v7860 = vpop.f32.mrb[0].mxu0
  %7861 = vmatprep.mubr.f32.mxu0 0.0
  %7862 = vmatmul.mubr.f32.gmra.mrb[0].mxu0 %v7709
  %v7863 = vpop.f32.mrb[0].mxu0
  %v7864 = vadd.f32 0.0, %v7863
  %v7865 = vpop.f32.mrb[0].mxu0
  %7866 = vmatprep.mubr.f32.mxu0 0.0
  %7867 = vmatmul.mubr.f32.gmra.mrb[0].mxu0 %v7710
  %v7868 = vpop.f32.mrb[0].mxu0
  %v7869 = vadd.f32 0.0, %v7868
  %v7870 = vpop.f32.mrb[0].mxu0
  %7871 = vmatprep.mubr.f32.mxu0 0.0
  %7872 = vmatmul.mubr.f32.gmra.mrb[0].mxu0 %v7711
  %v7873 = vpop.f32.mrb[0].mxu0
  %v7874 = vadd.f32 0.0, %v7873
  %v7875 = vpop.f32.mrb[0].mxu0
  %7876 = vmatprep.mubr.f32.mxu0 0.0
  %7877 = vmatmul.mubr.f32.gmra.mrb[0].mxu0 %v7712
  %v7878 = vpop.f32.mrb[0].mxu0
  %v7879 = vadd.f32 0.0, %v7878
  %v7880 = vpop.f32.mrb[0].mxu0
  %7881 = vmatprep.mubr.f32.mxu0 0.0
  %7882 = vmatmul.mubr.f32.gmra.mrb[0].mxu0 %v7713
  %v7883 = vpop.f32.mrb[0].mxu0
  %v7884 = vadd.f32 0.0, %v7883
  %v7885 = vpop.f32.mrb[0].mxu0
  %7886 = vmatprep.mubr.f32.mxu0 0.0
  %7887 = vmatmul.mubr.f32.gmra.mrb[0].mxu0 %v7714
  %v7888 = vpop.f32.mrb[0].mxu0
  %v7889 = vadd.f32 0.0, %v7888
  %v7890 = vpop.f32.mrb[0].mxu0
  %7891 = vmatprep.mubr.f32.mxu0 0.0
  %7892 = vmatmul.mubr.f32.gmra.mrb[0].mxu0 %v7715
  %v7893 = vpop.f32.mrb[0].mxu0
  %v7894 = vadd.f32 0.0, %v7893
  %v7895 = vpop.f32.mrb[0].mxu0
  %7896 = vmatprep.mubr.f32.mxu0 0.0
  %7897 = vmatmul.mubr.f32.gmra.mrb[0].mxu0 %v7716
  %v7898 = vpop.f32.mrb[0].mxu0
  %v7899 = vadd.f32 0.0, %v7898
  %v7900 = vpop.f32.mrb[0].mxu0
  %7901 = vmatprep.mubr.f32.mxu0 0.0
  %7902 = vmatmul.mubr.f32.gmra.mrb[0].mxu0 %v7717
  %v7903 = vpop.f32.mrb[0].mxu0
  %v7904 = vadd.f32 0.0, %v7903
  %v7905 = vpop.f32.mrb[0].mxu0
  %7906 = vmatprep.mubr.f32.mxu0 0.0
  %7907 = vmatmul.mubr.f32.gmra.mrb[0].mxu0 %v7718
  %v7908 = vpop.f32.mrb[0].mxu0
  %v7909 = vadd.f32 0.0, %v7908
  %v7910 = vpop.f32.mrb[0].mxu0
  %7911 = vdwg.mxu0
  %7912 = vst.msk [vmem:[#allocation2] sm:$0xff] %vm2405, %v7834
  %7913 = vst.msk [vmem:[#allocation2 + $0x8] sm:$0xff] %vm2405, %v7839
  %7914 = vst.msk [vmem:[#allocation2 + $0x10] sm:$0xff] %vm2405, %v7844
  %7915 = vst.msk [vmem:[#allocation2 + $0x18] sm:$0xff] %vm2405, %v7849
  %7916 = vst.msk [vmem:[#allocation2 + $0x20] sm:$0xff] %vm2405, %v7854
  %7917 = vst.msk [vmem:[#allocation2 + $0x28] sm:$0xff] %vm2405, %v7859
  %7918 = vst.msk [vmem:[#allocation2 + $0x30] sm:$0xff] %vm2405, %v7864
  %7919 = vst.msk [vmem:[#allocation2 + $0x38] sm:$0xff] %vm2405, %v7869
  %7920 = vst.msk [vmem:[#allocation2 + $0x40] sm:$0xff] %vm2405, %v7874
  %7921 = vst.msk [vmem:[#allocation2 + $0x48] sm:$0xff] %vm2405, %v7879
  %7922 = vst.msk [vmem:[#allocation2 + $0x50] sm:$0xff] %vm2405, %v7884
  %7923 = vst.msk [vmem:[#allocation2 + $0x58] sm:$0xff] %vm2405, %v7889
  %7924 = vst.msk [vmem:[#allocation2 + $0x60] sm:$0xff] %vm2405, %v7894
  %7925 = vst.msk [vmem:[#allocation2 + $0x68] sm:$0xff] %vm2405, %v7899
  %7926 = vst.msk [vmem:[#allocation2 + $0x70] sm:$0xff] %vm2405, %v7904
  %7927 = vst.msk [vmem:[#allocation2 + $0x78] sm:$0xff] %vm2405, %v7909
  %7928 = vrot.lane.b32.xlu0 %v7240, 120
  %v7929 = vpop.permute.xlu0 %7928
  %7930 = vrot.lane.b32.xlu0 %v7245, 120
  %v7931 = vpop.permute.xlu0 %7930
  %7932 = vrot.lane.b32.xlu0 %v7250, 120
  %v7933 = vpop.permute.xlu0 %7932
  %7934 = vrot.lane.b32.xlu0 %v7255, 120
  %v7935 = vpop.permute.xlu0 %7934
  %7936 = vrot.lane.b32.xlu0 %v7260, 120
  %v7937 = vpop.permute.xlu0 %7936
  %7938 = vrot.lane.b32.xlu0 %v7265, 120
  %v7939 = vpop.permute.xlu0 %7938
  %7940 = vrot.lane.b32.xlu0 %v7270, 120
  %v7941 = vpop.permute.xlu0 %7940
  %7942 = vrot.lane.b32.xlu0 %v7275, 120
  %v7943 = vpop.permute.xlu0 %7942
  %7944 = vrot.lane.b32.xlu0 %v7280, 120
  %v7945 = vpop.permute.xlu0 %7944
  %7946 = vrot.lane.b32.xlu0 %v7285, 120
  %v7947 = vpop.permute.xlu0 %7946
  %7948 = vrot.lane.b32.xlu0 %v7290, 120
  %v7949 = vpop.permute.xlu0 %7948
  %7950 = vrot.lane.b32.xlu0 %v7295, 120
  %v7951 = vpop.permute.xlu0 %7950
  %7952 = vrot.lane.b32.xlu0 %v7300, 120
  %v7953 = vpop.permute.xlu0 %7952
  %7954 = vrot.lane.b32.xlu0 %v7305, 120
  %v7955 = vpop.permute.xlu0 %7954
  %7956 = vrot.lane.b32.xlu0 %v7310, 120
  %v7957 = vpop.permute.xlu0 %7956
  %7958 = vrot.lane.b32.xlu0 %v7315, 120
  %v7959 = vpop.permute.xlu0 %7958
  %7960 = vrot.lane.b32.xlu0 %v7240, 88
  %v7961 = vpop.permute.xlu0 %7960
  %7962 = vrot.lane.b32.xlu0 %v7245, 88
  %v7963 = vpop.permute.xlu0 %7962
  %7964 = vrot.lane.b32.xlu0 %v7250, 88
  %v7965 = vpop.permute.xlu0 %7964
  %7966 = vrot.lane.b32.xlu0 %v7255, 88
  %v7967 = vpop.permute.xlu0 %7966
  %7968 = vrot.lane.b32.xlu0 %v7260, 88
  %v7969 = vpop.permute.xlu0 %7968
  %7970 = vrot.lane.b32.xlu0 %v7265, 88
  %v7971 = vpop.permute.xlu0 %7970
  %7972 = vrot.lane.b32.xlu0 %v7270, 88
  %v7973 = vpop.permute.xlu0 %7972
  %7974 = vrot.lane.b32.xlu0 %v7275, 88
  %v7975 = vpop.permute.xlu0 %7974
  %7976 = vrot.lane.b32.xlu0 %v7280, 88
  %v7977 = vpop.permute.xlu0 %7976
  %7978 = vrot.lane.b32.xlu0 %v7285, 88
  %v7979 = vpop.permute.xlu0 %7978
  %7980 = vrot.lane.b32.xlu0 %v7290, 88
  %v7981 = vpop.permute.xlu0 %7980
  %7982 = vrot.lane.b32.xlu0 %v7295, 88
  %v7983 = vpop.permute.xlu0 %7982
  %7984 = vrot.lane.b32.xlu0 %v7300, 88
  %v7985 = vpop.permute.xlu0 %7984
  %7986 = vrot.lane.b32.xlu0 %v7305, 88
  %v7987 = vpop.permute.xlu0 %7986
  %7988 = vrot.lane.b32.xlu0 %v7310, 88
  %v7989 = vpop.permute.xlu0 %7988
  %7990 = vrot.lane.b32.xlu0 %v7315, 88
  %v7991 = vpop.permute.xlu0 %7990
  %v7992 = vsel %vm2405, %v7929, 0
  %v7994 = vsel %vm2405, %v7931, 0
  %v7996 = vsel %vm2405, %v7933, 0
  %v7998 = vsel %vm2405, %v7935, 0
  %v8000 = vsel %vm2405, %v7937, 0
  %v8002 = vsel %vm2405, %v7939, 0
  %v8004 = vsel %vm2405, %v7941, 0
  %v8006 = vsel %vm2405, %v7943, 0
  %v8008 = vsel %vm2405, %v7945, 0
  %v8010 = vsel %vm2405, %v7947, 0
  %v8012 = vsel %vm2405, %v7949, 0
  %v8014 = vsel %vm2405, %v7951, 0
  %v8016 = vsel %vm2405, %v7953, 0
  %v8018 = vsel %vm2405, %v7955, 0
  %v8020 = vsel %vm2405, %v7957, 0
  %v8022 = vsel %vm2405, %v7959, 0
  %v8024 = vsel %vm2405, %v7961, 0
  %v8026 = vsel %vm2405, %v7963, 0
  %v8028 = vsel %vm2405, %v7965, 0
  %v8030 = vsel %vm2405, %v7967, 0
  %v8032 = vsel %vm2405, %v7969, 0
  %v8034 = vsel %vm2405, %v7971, 0
  %v8036 = vsel %vm2405, %v7973, 0
  %v8038 = vsel %vm2405, %v7975, 0
  %v8040 = vsel %vm2405, %v7977, 0
  %v8042 = vsel %vm2405, %v7979, 0
  %v8044 = vsel %vm2405, %v7981, 0
  %v8046 = vsel %vm2405, %v7983, 0
  %v8048 = vsel %vm2405, %v7985, 0
  %v8050 = vsel %vm2405, %v7987, 0
  %v8052 = vsel %vm2405, %v7989, 0
  %v8054 = vsel %vm2405, %v7991, 0
  %8056 = vmatprep.subr.mxu0 0.0
  %8057 = vmatpush1.xpose.msra.mxu0 %v8024
  %8058 = vmatprep.subr.mxu0 0.0
  %8059 = vmatpush1.xpose.msra.mxu0 %v8026
  %8060 = vmatprep.subr.mxu0 0.0
  %8061 = vmatpush1.xpose.msra.mxu0 %v8028
  %8062 = vmatprep.subr.mxu0 0.0
  %8063 = vmatpush1.xpose.msra.mxu0 %v8030
  %8064 = vmatprep.subr.mxu0 0.0
  %8065 = vmatpush1.xpose.msra.mxu0 %v8032
  %8066 = vmatprep.subr.mxu0 0.0
  %8067 = vmatpush1.xpose.msra.mxu0 %v8034
  %8068 = vmatprep.subr.mxu0 0.0
  %8069 = vmatpush1.xpose.msra.mxu0 %v8036
  %8070 = vmatprep.subr.mxu0 0.0
  %8071 = vmatpush1.xpose.msra.mxu0 %v8038
  %8072 = vmatprep.subr.mxu0 0.0
  %8073 = vmatpush1.xpose.msra.mxu0 %v8040
  %8074 = vmatprep.subr.mxu0 0.0
  %8075 = vmatpush1.xpose.msra.mxu0 %v8042
  %8076 = vmatprep.subr.mxu0 0.0
  %8077 = vmatpush1.xpose.msra.mxu0 %v8044
  %8078 = vmatprep.subr.mxu0 0.0
  %8079 = vmatpush1.xpose.msra.mxu0 %v8046
  %8080 = vmatprep.subr.mxu0 0.0
  %8081 = vmatpush1.xpose.msra.mxu0 %v8048
  %8082 = vmatprep.subr.mxu0 0.0
  %8083 = vmatpush1.xpose.msra.mxu0 %v8050
  %8084 = vmatprep.subr.mxu0 0.0
  %8085 = vmatpush1.xpose.msra.mxu0 %v8052
  %8086 = vmatprep.subr.mxu0 0.0
  %8087 = vmatpush1.xpose.msra.mxu0 %v8054
  %8088 = vmatprep.subr.mxu0 0.0
  %8089 = vmatpush1.xpose.msra.mxu0 0.0
  %8090 = vmatprep.subr.mxu0 0.0
  %8091 = vmatpush1.xpose.msra.mxu0 0.0
  %8092 = vmatprep.subr.mxu0 0.0
  %8093 = vmatpush1.xpose.msra.mxu0 0.0
  %8094 = vmatprep.subr.mxu0 0.0
  %8095 = vmatpush1.xpose.msra.mxu0 0.0
  %8096 = vmatprep.subr.mxu0 0.0
  %8097 = vmatpush1.xpose.msra.mxu0 0.0
  %8098 = vmatprep.subr.mxu0 0.0
  %8099 = vmatpush1.xpose.msra.mxu0 0.0
  %8100 = vmatprep.subr.mxu0 0.0
  %8101 = vmatpush1.xpose.msra.mxu0 0.0
  %8102 = vmatprep.subr.mxu0 0.0
  %8103 = vmatpush1.xpose.msra.mxu0 0.0
  %8104 = vmatprep.subr.mxu0 0.0
  %8105 = vmatpush1.xpose.msra.mxu0 0.0
  %8106 = vmatprep.subr.mxu0 0.0
  %8107 = vmatpush1.xpose.msra.mxu0 0.0
  %8108 = vmatprep.subr.mxu0 0.0
  %8109 = vmatpush1.xpose.msra.mxu0 0.0
  %8110 = vmatprep.subr.mxu0 0.0
  %8111 = vmatpush1.xpose.msra.mxu0 0.0
  %8112 = vmatprep.subr.mxu0 0.0
  %8113 = vmatpush1.xpose.msra.mxu0 0.0
  %8114 = vmatprep.subr.mxu0 0.0
  %8115 = vmatpush1.xpose.msra.mxu0 0.0
  %8116 = vmatprep.subr.mxu0 0.0
  %8117 = vmatpush1.xpose.msra.mxu0 0.0
  %8118 = vmatprep.subr.mxu0 0.0
  %8119 = vmatpush1.xpose.msra.mxu0 0.0
  %8120 = vmatprep.mubr.f32.mxu0 0.0
  %8121 = vmatmul.mubr.f32.gmra.mrb[0].mxu0 %v7992
  %v8122 = vpop.f32.mrb[0].mxu0
  %v8123 = vadd.f32 %v170, %v8122
  %v8124 = vpop.f32.mrb[0].mxu0
  %8125 = vmatprep.mubr.f32.mxu0 0.0
  %8126 = vmatmul.mubr.f32.gmra.mrb[0].mxu0 %v7994
  %v8127 = vpop.f32.mrb[0].mxu0
  %v8128 = vadd.f32 %v171, %v8127
  %v8129 = vpop.f32.mrb[0].mxu0
  %8130 = vmatprep.mubr.f32.mxu0 0.0
  %8131 = vmatmul.mubr.f32.gmra.mrb[0].mxu0 %v7996
  %v8132 = vpop.f32.mrb[0].mxu0
  %v8133 = vadd.f32 %v172, %v8132
  %v8134 = vpop.f32.mrb[0].mxu0
  %8135 = vmatprep.mubr.f32.mxu0 0.0
  %8136 = vmatmul.mubr.f32.gmra.mrb[0].mxu0 %v7998
  %v8137 = vpop.f32.mrb[0].mxu0
  %v8138 = vadd.f32 %v173, %v8137
  %v8139 = vpop.f32.mrb[0].mxu0
  %8140 = vmatprep.mubr.f32.mxu0 0.0
  %8141 = vmatmul.mubr.f32.gmra.mrb[0].mxu0 %v8000
  %v8142 = vpop.f32.mrb[0].mxu0
  %v8143 = vadd.f32 %v174, %v8142
  %v8144 = vpop.f32.mrb[0].mxu0
  %8145 = vmatprep.mubr.f32.mxu0 0.0
  %8146 = vmatmul.mubr.f32.gmra.mrb[0].mxu0 %v8002
  %v8147 = vpop.f32.mrb[0].mxu0
  %v8148 = vadd.f32 %v175, %v8147
  %v8149 = vpop.f32.mrb[0].mxu0
  %8150 = vmatprep.mubr.f32.mxu0 0.0
  %8151 = vmatmul.mubr.f32.gmra.mrb[0].mxu0 %v8004
  %v8152 = vpop.f32.mrb[0].mxu0
  %v8153 = vadd.f32 %v176, %v8152
  %v8154 = vpop.f32.mrb[0].mxu0
  %8155 = vmatprep.mubr.f32.mxu0 0.0
  %8156 = vmatmul.mubr.f32.gmra.mrb[0].mxu0 %v8006
  %v8157 = vpop.f32.mrb[0].mxu0
  %v8158 = vadd.f32 %v177, %v8157
  %v8159 = vpop.f32.mrb[0].mxu0
  %8160 = vmatprep.mubr.f32.mxu0 0.0
  %8161 = vmatmul.mubr.f32.gmra.mrb[0].mxu0 %v8008
  %v8162 = vpop.f32.mrb[0].mxu0
  %v8163 = vadd.f32 %v178, %v8162
  %v8164 = vpop.f32.mrb[0].mxu0
  %8165 = vmatprep.mubr.f32.mxu0 0.0
  %8166 = vmatmul.mubr.f32.gmra.mrb[0].mxu0 %v8010
  %v8167 = vpop.f32.mrb[0].mxu0
  %v8168 = vadd.f32 %v179, %v8167
  %v8169 = vpop.f32.mrb[0].mxu0
  %8170 = vmatprep.mubr.f32.mxu0 0.0
  %8171 = vmatmul.mubr.f32.gmra.mrb[0].mxu0 %v8012
  %v8172 = vpop.f32.mrb[0].mxu0
  %v8173 = vadd.f32 %v180, %v8172
  %v8174 = vpop.f32.mrb[0].mxu0
  %8175 = vmatprep.mubr.f32.mxu0 0.0
  %8176 = vmatmul.mubr.f32.gmra.mrb[0].mxu0 %v8014
  %v8177 = vpop.f32.mrb[0].mxu0
  %v8178 = vadd.f32 %v181, %v8177
  %v8179 = vpop.f32.mrb[0].mxu0
  %8180 = vmatprep.mubr.f32.mxu0 0.0
  %8181 = vmatmul.mubr.f32.gmra.mrb[0].mxu0 %v8016
  %v8182 = vpop.f32.mrb[0].mxu0
  %v8183 = vadd.f32 %v182, %v8182
  %v8184 = vpop.f32.mrb[0].mxu0
  %8185 = vmatprep.mubr.f32.mxu0 0.0
  %8186 = vmatmul.mubr.f32.gmra.mrb[0].mxu0 %v8018
  %v8187 = vpop.f32.mrb[0].mxu0
  %v8188 = vadd.f32 %v183, %v8187
  %v8189 = vpop.f32.mrb[0].mxu0
  %8190 = vmatprep.mubr.f32.mxu0 0.0
  %8191 = vmatmul.mubr.f32.gmra.mrb[0].mxu0 %v8020
  %v8192 = vpop.f32.mrb[0].mxu0
  %v8193 = vadd.f32 %v184, %v8192
  %v8194 = vpop.f32.mrb[0].mxu0
  %8195 = vmatprep.mubr.f32.mxu0 0.0
  %8196 = vmatmul.mubr.f32.gmra.mrb[0].mxu0 %v8022
  %v8197 = vpop.f32.mrb[0].mxu0
  %v8198 = vadd.f32 %v185, %v8197
  %v8199 = vpop.f32.mrb[0].mxu0
  %8200 = vdwg.mxu0
  %8201 = vmax.xlane.f32.xlu0 %v8123
  %v8202 = vpop.xlane.xlu0 %8201
  %8203 = vmax.xlane.f32.xlu0 %v8128
  %v8204 = vpop.xlane.xlu0 %8203
  %8205 = vmax.xlane.f32.xlu0 %v8133
  %v8206 = vpop.xlane.xlu0 %8205
  %8207 = vmax.xlane.f32.xlu0 %v8138
  %v8208 = vpop.xlane.xlu0 %8207
  %8209 = vmax.xlane.f32.xlu0 %v8143
  %v8210 = vpop.xlane.xlu0 %8209
  %8211 = vmax.xlane.f32.xlu0 %v8148
  %v8212 = vpop.xlane.xlu0 %8211
  %8213 = vmax.xlane.f32.xlu0 %v8153
  %v8214 = vpop.xlane.xlu0 %8213
  %8215 = vmax.xlane.f32.xlu0 %v8158
  %v8216 = vpop.xlane.xlu0 %8215
  %8217 = vmax.xlane.f32.xlu0 %v8163
  %v8218 = vpop.xlane.xlu0 %8217
  %8219 = vmax.xlane.f32.xlu0 %v8168
  %v8220 = vpop.xlane.xlu0 %8219
  %8221 = vmax.xlane.f32.xlu0 %v8173
  %v8222 = vpop.xlane.xlu0 %8221
  %8223 = vmax.xlane.f32.xlu0 %v8178
  %v8224 = vpop.xlane.xlu0 %8223
  %8225 = vmax.xlane.f32.xlu0 %v8183
  %v8226 = vpop.xlane.xlu0 %8225
  %8227 = vmax.xlane.f32.xlu0 %v8188
  %v8228 = vpop.xlane.xlu0 %8227
  %8229 = vmax.xlane.f32.xlu0 %v8193
  %v8230 = vpop.xlane.xlu0 %8229
  %8231 = vmax.xlane.f32.xlu0 %v8198
  %v8232 = vpop.xlane.xlu0 %8231
  %v8233 = vsub.f32 %v8123, %v8202
  %v8234 = vsub.f32 %v8128, %v8204
  %v8235 = vsub.f32 %v8133, %v8206
  %v8236 = vsub.f32 %v8138, %v8208
  %v8237 = vsub.f32 %v8143, %v8210
  %v8238 = vsub.f32 %v8148, %v8212
  %v8239 = vsub.f32 %v8153, %v8214
  %v8240 = vsub.f32 %v8158, %v8216
  %v8241 = vsub.f32 %v8163, %v8218
  %v8242 = vsub.f32 %v8168, %v8220
  %v8243 = vsub.f32 %v8173, %v8222
  %v8244 = vsub.f32 %v8178, %v8224
  %v8245 = vsub.f32 %v8183, %v8226
  %v8246 = vsub.f32 %v8188, %v8228
  %v8247 = vsub.f32 %v8193, %v8230
  %v8248 = vsub.f32 %v8198, %v8232
  %v8249 = vmul.f32 %v8233, 1.442695
  %v8250 = vpow.pop %v8249
  %v8251 = vmul.f32 %v8234, 1.442695
  %v8252 = vpow.pop %v8251
  %v8253 = vmul.f32 %v8235, 1.442695
  %v8254 = vpow.pop %v8253
  %v8255 = vmul.f32 %v8236, 1.442695
  %v8256 = vpow.pop %v8255
  %v8257 = vmul.f32 %v8237, 1.442695
  %v8258 = vpow.pop %v8257
  %v8259 = vmul.f32 %v8238, 1.442695
  %v8260 = vpow.pop %v8259
  %v8261 = vmul.f32 %v8239, 1.442695
  %v8262 = vpow.pop %v8261
  %v8263 = vmul.f32 %v8240, 1.442695
  %v8264 = vpow.pop %v8263
  %v8265 = vmul.f32 %v8241, 1.442695
  %v8266 = vpow.pop %v8265
  %v8267 = vmul.f32 %v8242, 1.442695
  %v8268 = vpow.pop %v8267
  %v8269 = vmul.f32 %v8243, 1.442695
  %v8270 = vpow.pop %v8269
  %v8271 = vmul.f32 %v8244, 1.442695
  %v8272 = vpow.pop %v8271
  %v8273 = vmul.f32 %v8245, 1.442695
  %v8274 = vpow.pop %v8273
  %v8275 = vmul.f32 %v8246, 1.442695
  %v8276 = vpow.pop %v8275
  %v8277 = vmul.f32 %v8247, 1.442695
  %v8278 = vpow.pop %v8277
  %v8279 = vmul.f32 %v8248, 1.442695
  %v8280 = vpow.pop %v8279
  %8281 = vadd.xlane.f32.xlu0 %v8250
  %v8282 = vpop.xlane.xlu0 %8281
  %8283 = vadd.xlane.f32.xlu0 %v8252
  %v8284 = vpop.xlane.xlu0 %8283
  %8285 = vadd.xlane.f32.xlu0 %v8254
  %v8286 = vpop.xlane.xlu0 %8285
  %8287 = vadd.xlane.f32.xlu0 %v8256
  %v8288 = vpop.xlane.xlu0 %8287
  %8289 = vadd.xlane.f32.xlu0 %v8258
  %v8290 = vpop.xlane.xlu0 %8289
  %8291 = vadd.xlane.f32.xlu0 %v8260
  %v8292 = vpop.xlane.xlu0 %8291
  %8293 = vadd.xlane.f32.xlu0 %v8262
  %v8294 = vpop.xlane.xlu0 %8293
  %8295 = vadd.xlane.f32.xlu0 %v8264
  %v8296 = vpop.xlane.xlu0 %8295
  %8297 = vadd.xlane.f32.xlu0 %v8266
  %v8298 = vpop.xlane.xlu0 %8297
  %8299 = vadd.xlane.f32.xlu0 %v8268
  %v8300 = vpop.xlane.xlu0 %8299
  %8301 = vadd.xlane.f32.xlu0 %v8270
  %v8302 = vpop.xlane.xlu0 %8301
  %8303 = vadd.xlane.f32.xlu0 %v8272
  %v8304 = vpop.xlane.xlu0 %8303
  %8305 = vadd.xlane.f32.xlu0 %v8274
  %v8306 = vpop.xlane.xlu0 %8305
  %8307 = vadd.xlane.f32.xlu0 %v8276
  %v8308 = vpop.xlane.xlu0 %8307
  %8309 = vadd.xlane.f32.xlu0 %v8278
  %v8310 = vpop.xlane.xlu0 %8309
  %8311 = vadd.xlane.f32.xlu0 %v8280
  %v8312 = vpop.xlane.xlu0 %8311
  %v8313 = vrcp.pop %v8282
  %v8314 = vrcp.pop %v8284
  %v8315 = vrcp.pop %v8286
  %v8316 = vrcp.pop %v8288
  %v8317 = vrcp.pop %v8290
  %v8318 = vrcp.pop %v8292
  %v8319 = vrcp.pop %v8294
  %v8320 = vrcp.pop %v8296
  %v8321 = vrcp.pop %v8298
  %v8322 = vrcp.pop %v8300
  %v8323 = vrcp.pop %v8302
  %v8324 = vrcp.pop %v8304
  %v8325 = vrcp.pop %v8306
  %v8326 = vrcp.pop %v8308
  %v8327 = vrcp.pop %v8310
  %v8328 = vrcp.pop %v8312
  %v8329 = vmul.f32 %v8250, %v8313
  %v8330 = vmul.f32 %v8252, %v8314
  %v8331 = vmul.f32 %v8254, %v8315
  %v8332 = vmul.f32 %v8256, %v8316
  %v8333 = vmul.f32 %v8258, %v8317
  %v8334 = vmul.f32 %v8260, %v8318
  %v8335 = vmul.f32 %v8262, %v8319
  %v8336 = vmul.f32 %v8264, %v8320
  %v8337 = vmul.f32 %v8266, %v8321
  %v8338 = vmul.f32 %v8268, %v8322
  %v8339 = vmul.f32 %v8270, %v8323
  %v8340 = vmul.f32 %v8272, %v8324
  %v8341 = vmul.f32 %v8274, %v8325
  %v8342 = vmul.f32 %v8276, %v8326
  %v8343 = vmul.f32 %v8278, %v8327
  %v8344 = vmul.f32 %v8280, %v8328
  %8345 = vrot.lane.b32.xlu0 %v7240, 56
  %v8346 = vpop.permute.xlu0 %8345
  %8347 = vrot.lane.b32.xlu0 %v7245, 56
  %v8348 = vpop.permute.xlu0 %8347
  %8349 = vrot.lane.b32.xlu0 %v7250, 56
  %v8350 = vpop.permute.xlu0 %8349
  %8351 = vrot.lane.b32.xlu0 %v7255, 56
  %v8352 = vpop.permute.xlu0 %8351
  %8353 = vrot.lane.b32.xlu0 %v7260, 56
  %v8354 = vpop.permute.xlu0 %8353
  %8355 = vrot.lane.b32.xlu0 %v7265, 56
  %v8356 = vpop.permute.xlu0 %8355
  %8357 = vrot.lane.b32.xlu0 %v7270, 56
  %v8358 = vpop.permute.xlu0 %8357
  %8359 = vrot.lane.b32.xlu0 %v7275, 56
  %v8360 = vpop.permute.xlu0 %8359
  %8361 = vrot.lane.b32.xlu0 %v7280, 56
  %v8362 = vpop.permute.xlu0 %8361
  %8363 = vrot.lane.b32.xlu0 %v7285, 56
  %v8364 = vpop.permute.xlu0 %8363
  %8365 = vrot.lane.b32.xlu0 %v7290, 56
  %v8366 = vpop.permute.xlu0 %8365
  %8367 = vrot.lane.b32.xlu0 %v7295, 56
  %v8368 = vpop.permute.xlu0 %8367
  %8369 = vrot.lane.b32.xlu0 %v7300, 56
  %v8370 = vpop.permute.xlu0 %8369
  %8371 = vrot.lane.b32.xlu0 %v7305, 56
  %v8372 = vpop.permute.xlu0 %8371
  %8373 = vrot.lane.b32.xlu0 %v7310, 56
  %v8374 = vpop.permute.xlu0 %8373
  %8375 = vrot.lane.b32.xlu0 %v7315, 56
  %v8376 = vpop.permute.xlu0 %8375
  %8393 = vmatprep.subr.mxu0 0.0
  %8394 = vmatpush1.msra.mxu0 %v8346
  %8395 = vmatprep.subr.mxu0 0.0
  %8396 = vmatpush1.msra.mxu0 %v8348
  %8397 = vmatprep.subr.mxu0 0.0
  %8398 = vmatpush1.msra.mxu0 %v8350
  %8399 = vmatprep.subr.mxu0 0.0
  %8400 = vmatpush1.msra.mxu0 %v8352
  %8401 = vmatprep.subr.mxu0 0.0
  %8402 = vmatpush1.msra.mxu0 %v8354
  %8403 = vmatprep.subr.mxu0 0.0
  %8404 = vmatpush1.msra.mxu0 %v8356
  %8405 = vmatprep.subr.mxu0 0.0
  %8406 = vmatpush1.msra.mxu0 %v8358
  %8407 = vmatprep.subr.mxu0 0.0
  %8408 = vmatpush1.msra.mxu0 %v8360
  %8409 = vmatprep.subr.mxu0 0.0
  %8410 = vmatpush1.msra.mxu0 %v8362
  %8411 = vmatprep.subr.mxu0 0.0
  %8412 = vmatpush1.msra.mxu0 %v8364
  %8413 = vmatprep.subr.mxu0 0.0
  %8414 = vmatpush1.msra.mxu0 %v8366
  %8415 = vmatprep.subr.mxu0 0.0
  %8416 = vmatpush1.msra.mxu0 %v8368
  %8417 = vmatprep.subr.mxu0 0.0
  %8418 = vmatpush1.msra.mxu0 %v8370
  %8419 = vmatprep.subr.mxu0 0.0
  %8420 = vmatpush1.msra.mxu0 %v8372
  %8421 = vmatprep.subr.mxu0 0.0
  %8422 = vmatpush1.msra.mxu0 %v8374
  %8423 = vmatprep.subr.mxu0 0.0
  %8424 = vmatpush1.msra.mxu0 %v8376
  %8425 = vmatprep.subr.mxu0 0.0
  %8426 = vmatpush1.msra.mxu0 0.0
  %8427 = vmatprep.subr.mxu0 0.0
  %8428 = vmatpush1.msra.mxu0 0.0
  %8429 = vmatprep.subr.mxu0 0.0
  %8430 = vmatpush1.msra.mxu0 0.0
  %8431 = vmatprep.subr.mxu0 0.0
  %8432 = vmatpush1.msra.mxu0 0.0
  %8433 = vmatprep.subr.mxu0 0.0
  %8434 = vmatpush1.msra.mxu0 0.0
  %8435 = vmatprep.subr.mxu0 0.0
  %8436 = vmatpush1.msra.mxu0 0.0
  %8437 = vmatprep.subr.mxu0 0.0
  %8438 = vmatpush1.msra.mxu0 0.0
  %8439 = vmatprep.subr.mxu0 0.0
  %8440 = vmatpush1.msra.mxu0 0.0
  %8441 = vmatprep.subr.mxu0 0.0
  %8442 = vmatpush1.msra.mxu0 0.0
  %8443 = vmatprep.subr.mxu0 0.0
  %8444 = vmatpush1.msra.mxu0 0.0
  %8445 = vmatprep.subr.mxu0 0.0
  %8446 = vmatpush1.msra.mxu0 0.0
  %8447 = vmatprep.subr.mxu0 0.0
  %8448 = vmatpush1.msra.mxu0 0.0
  %8449 = vmatprep.subr.mxu0 0.0
  %8450 = vmatpush1.msra.mxu0 0.0
  %8451 = vmatprep.subr.mxu0 0.0
  %8452 = vmatpush1.msra.mxu0 0.0
  %8453 = vmatprep.subr.mxu0 0.0
  %8454 = vmatpush1.msra.mxu0 0.0
  %8455 = vmatprep.subr.mxu0 0.0
  %8456 = vmatpush1.msra.mxu0 0.0
  %8457 = vmatprep.mubr.f32.mxu0 0.0
  %8458 = vmatmul.mubr.f32.gmra.mrb[0].mxu0 %v8329
  %v8459 = vpop.f32.mrb[0].mxu0
  %v8460 = vadd.f32 0.0, %v8459
  %v8461 = vpop.f32.mrb[0].mxu0
  %8462 = vmatprep.mubr.f32.mxu0 0.0
  %8463 = vmatmul.mubr.f32.gmra.mrb[0].mxu0 %v8330
  %v8464 = vpop.f32.mrb[0].mxu0
  %v8465 = vadd.f32 0.0, %v8464
  %v8466 = vpop.f32.mrb[0].mxu0
  %8467 = vmatprep.mubr.f32.mxu0 0.0
  %8468 = vmatmul.mubr.f32.gmra.mrb[0].mxu0 %v8331
  %v8469 = vpop.f32.mrb[0].mxu0
  %v8470 = vadd.f32 0.0, %v8469
  %v8471 = vpop.f32.mrb[0].mxu0
  %8472 = vmatprep.mubr.f32.mxu0 0.0
  %8473 = vmatmul.mubr.f32.gmra.mrb[0].mxu0 %v8332
  %v8474 = vpop.f32.mrb[0].mxu0
  %v8475 = vadd.f32 0.0, %v8474
  %v8476 = vpop.f32.mrb[0].mxu0
  %8477 = vmatprep.mubr.f32.mxu0 0.0
  %8478 = vmatmul.mubr.f32.gmra.mrb[0].mxu0 %v8333
  %v8479 = vpop.f32.mrb[0].mxu0
  %v8480 = vadd.f32 0.0, %v8479
  %v8481 = vpop.f32.mrb[0].mxu0
  %8482 = vmatprep.mubr.f32.mxu0 0.0
  %8483 = vmatmul.mubr.f32.gmra.mrb[0].mxu0 %v8334
  %v8484 = vpop.f32.mrb[0].mxu0
  %v8485 = vadd.f32 0.0, %v8484
  %v8486 = vpop.f32.mrb[0].mxu0
  %8487 = vmatprep.mubr.f32.mxu0 0.0
  %8488 = vmatmul.mubr.f32.gmra.mrb[0].mxu0 %v8335
  %v8489 = vpop.f32.mrb[0].mxu0
  %v8490 = vadd.f32 0.0, %v8489
  %v8491 = vpop.f32.mrb[0].mxu0
  %8492 = vmatprep.mubr.f32.mxu0 0.0
  %8493 = vmatmul.mubr.f32.gmra.mrb[0].mxu0 %v8336
  %v8494 = vpop.f32.mrb[0].mxu0
  %v8495 = vadd.f32 0.0, %v8494
  %v8496 = vpop.f32.mrb[0].mxu0
  %8497 = vmatprep.mubr.f32.mxu0 0.0
  %8498 = vmatmul.mubr.f32.gmra.mrb[0].mxu0 %v8337
  %v8499 = vpop.f32.mrb[0].mxu0
  %v8500 = vadd.f32 0.0, %v8499
  %v8501 = vpop.f32.mrb[0].mxu0
  %8502 = vmatprep.mubr.f32.mxu0 0.0
  %8503 = vmatmul.mubr.f32.gmra.mrb[0].mxu0 %v8338
  %v8504 = vpop.f32.mrb[0].mxu0
  %v8505 = vadd.f32 0.0, %v8504
  %v8506 = vpop.f32.mrb[0].mxu0
  %8507 = vmatprep.mubr.f32.mxu0 0.0
  %8508 = vmatmul.mubr.f32.gmra.mrb[0].mxu0 %v8339
  %v8509 = vpop.f32.mrb[0].mxu0
  %v8510 = vadd.f32 0.0, %v8509
  %v8511 = vpop.f32.mrb[0].mxu0
  %8512 = vmatprep.mubr.f32.mxu0 0.0
  %8513 = vmatmul.mubr.f32.gmra.mrb[0].mxu0 %v8340
  %v8514 = vpop.f32.mrb[0].mxu0
  %v8515 = vadd.f32 0.0, %v8514
  %v8516 = vpop.f32.mrb[0].mxu0
  %8517 = vmatprep.mubr.f32.mxu0 0.0
  %8518 = vmatmul.mubr.f32.gmra.mrb[0].mxu0 %v8341
  %v8519 = vpop.f32.mrb[0].mxu0
  %v8520 = vadd.f32 0.0, %v8519
  %v8521 = vpop.f32.mrb[0].mxu0
  %8522 = vmatprep.mubr.f32.mxu0 0.0
  %8523 = vmatmul.mubr.f32.gmra.mrb[0].mxu0 %v8342
  %v8524 = vpop.f32.mrb[0].mxu0
  %v8525 = vadd.f32 0.0, %v8524
  %v8526 = vpop.f32.mrb[0].mxu0
  %8527 = vmatprep.mubr.f32.mxu0 0.0
  %8528 = vmatmul.mubr.f32.gmra.mrb[0].mxu0 %v8343
  %v8529 = vpop.f32.mrb[0].mxu0
  %v8530 = vadd.f32 0.0, %v8529
  %v8531 = vpop.f32.mrb[0].mxu0
  %8532 = vmatprep.mubr.f32.mxu0 0.0
  %8533 = vmatmul.mubr.f32.gmra.mrb[0].mxu0 %v8344
  %v8534 = vpop.f32.mrb[0].mxu0
  %v8535 = vadd.f32 0.0, %v8534
  %v8536 = vpop.f32.mrb[0].mxu0
  %8537 = vdwg.mxu0
  %8554 = vrot.lane.b32.xlu0 %v8460, 8
  %v8555 = vpop.permute.xlu0 %8554
  %8556 = vrot.lane.b32.xlu0 %v8465, 8
  %v8557 = vpop.permute.xlu0 %8556
  %8558 = vrot.lane.b32.xlu0 %v8470, 8
  %v8559 = vpop.permute.xlu0 %8558
  %8560 = vrot.lane.b32.xlu0 %v8475, 8
  %v8561 = vpop.permute.xlu0 %8560
  %8562 = vrot.lane.b32.xlu0 %v8480, 8
  %v8563 = vpop.permute.xlu0 %8562
  %8564 = vrot.lane.b32.xlu0 %v8485, 8
  %v8565 = vpop.permute.xlu0 %8564
  %8566 = vrot.lane.b32.xlu0 %v8490, 8
  %v8567 = vpop.permute.xlu0 %8566
  %8568 = vrot.lane.b32.xlu0 %v8495, 8
  %v8569 = vpop.permute.xlu0 %8568
  %8570 = vrot.lane.b32.xlu0 %v8500, 8
  %v8571 = vpop.permute.xlu0 %8570
  %8572 = vrot.lane.b32.xlu0 %v8505, 8
  %v8573 = vpop.permute.xlu0 %8572
  %8574 = vrot.lane.b32.xlu0 %v8510, 8
  %v8575 = vpop.permute.xlu0 %8574
  %8576 = vrot.lane.b32.xlu0 %v8515, 8
  %v8577 = vpop.permute.xlu0 %8576
  %8578 = vrot.lane.b32.xlu0 %v8520, 8
  %v8579 = vpop.permute.xlu0 %8578
  %8580 = vrot.lane.b32.xlu0 %v8525, 8
  %v8581 = vpop.permute.xlu0 %8580
  %8582 = vrot.lane.b32.xlu0 %v8530, 8
  %v8583 = vpop.permute.xlu0 %8582
  %8584 = vrot.lane.b32.xlu0 %v8535, 8
  %v8585 = vpop.permute.xlu0 %8584
  %8602 = vst.msk [vmem:[#allocation2] sm:$0xff] %vm3642, %v8555
  %8603 = vst.msk [vmem:[#allocation2 + $0x8] sm:$0xff] %vm3642, %v8557
  %8604 = vst.msk [vmem:[#allocation2 + $0x10] sm:$0xff] %vm3642, %v8559
  %8605 = vst.msk [vmem:[#allocation2 + $0x18] sm:$0xff] %vm3642, %v8561
  %8606 = vst.msk [vmem:[#allocation2 + $0x20] sm:$0xff] %vm3642, %v8563
  %8607 = vst.msk [vmem:[#allocation2 + $0x28] sm:$0xff] %vm3642, %v8565
  %8608 = vst.msk [vmem:[#allocation2 + $0x30] sm:$0xff] %vm3642, %v8567
  %8609 = vst.msk [vmem:[#allocation2 + $0x38] sm:$0xff] %vm3642, %v8569
  %8610 = vst.msk [vmem:[#allocation2 + $0x40] sm:$0xff] %vm3642, %v8571
  %8611 = vst.msk [vmem:[#allocation2 + $0x48] sm:$0xff] %vm3642, %v8573
  %8612 = vst.msk [vmem:[#allocation2 + $0x50] sm:$0xff] %vm3642, %v8575
  %8613 = vst.msk [vmem:[#allocation2 + $0x58] sm:$0xff] %vm3642, %v8577
  %8614 = vst.msk [vmem:[#allocation2 + $0x60] sm:$0xff] %vm3642, %v8579
  %8615 = vst.msk [vmem:[#allocation2 + $0x68] sm:$0xff] %vm3642, %v8581
  %8616 = vst.msk [vmem:[#allocation2 + $0x70] sm:$0xff] %vm3642, %v8583
  %8617 = vst.msk [vmem:[#allocation2 + $0x78] sm:$0xff] %vm3642, %v8585
  %8618 = vrot.lane.b32.xlu0 %v7240, 112
  %v8619 = vpop.permute.xlu0 %8618
  %8620 = vrot.lane.b32.xlu0 %v7245, 112
  %v8621 = vpop.permute.xlu0 %8620
  %8622 = vrot.lane.b32.xlu0 %v7250, 112
  %v8623 = vpop.permute.xlu0 %8622
  %8624 = vrot.lane.b32.xlu0 %v7255, 112
  %v8625 = vpop.permute.xlu0 %8624
  %8626 = vrot.lane.b32.xlu0 %v7260, 112
  %v8627 = vpop.permute.xlu0 %8626
  %8628 = vrot.lane.b32.xlu0 %v7265, 112
  %v8629 = vpop.permute.xlu0 %8628
  %8630 = vrot.lane.b32.xlu0 %v7270, 112
  %v8631 = vpop.permute.xlu0 %8630
  %8632 = vrot.lane.b32.xlu0 %v7275, 112
  %v8633 = vpop.permute.xlu0 %8632
  %8634 = vrot.lane.b32.xlu0 %v7280, 112
  %v8635 = vpop.permute.xlu0 %8634
  %8636 = vrot.lane.b32.xlu0 %v7285, 112
  %v8637 = vpop.permute.xlu0 %8636
  %8638 = vrot.lane.b32.xlu0 %v7290, 112
  %v8639 = vpop.permute.xlu0 %8638
  %8640 = vrot.lane.b32.xlu0 %v7295, 112
  %v8641 = vpop.permute.xlu0 %8640
  %8642 = vrot.lane.b32.xlu0 %v7300, 112
  %v8643 = vpop.permute.xlu0 %8642
  %8644 = vrot.lane.b32.xlu0 %v7305, 112
  %v8645 = vpop.permute.xlu0 %8644
  %8646 = vrot.lane.b32.xlu0 %v7310, 112
  %v8647 = vpop.permute.xlu0 %8646
  %8648 = vrot.lane.b32.xlu0 %v7315, 112
  %v8649 = vpop.permute.xlu0 %8648
  %8650 = vrot.lane.b32.xlu0 %v7240, 80
  %v8651 = vpop.permute.xlu0 %8650
  %8652 = vrot.lane.b32.xlu0 %v7245, 80
  %v8653 = vpop.permute.xlu0 %8652
  %8654 = vrot.lane.b32.xlu0 %v7250, 80
  %v8655 = vpop.permute.xlu0 %8654
  %8656 = vrot.lane.b32.xlu0 %v7255, 80
  %v8657 = vpop.permute.xlu0 %8656
  %8658 = vrot.lane.b32.xlu0 %v7260, 80
  %v8659 = vpop.permute.xlu0 %8658
  %8660 = vrot.lane.b32.xlu0 %v7265, 80
  %v8661 = vpop.permute.xlu0 %8660
  %8662 = vrot.lane.b32.xlu0 %v7270, 80
  %v8663 = vpop.permute.xlu0 %8662
  %8664 = vrot.lane.b32.xlu0 %v7275, 80
  %v8665 = vpop.permute.xlu0 %8664
  %8666 = vrot.lane.b32.xlu0 %v7280, 80
  %v8667 = vpop.permute.xlu0 %8666
  %8668 = vrot.lane.b32.xlu0 %v7285, 80
  %v8669 = vpop.permute.xlu0 %8668
  %8670 = vrot.lane.b32.xlu0 %v7290, 80
  %v8671 = vpop.permute.xlu0 %8670
  %8672 = vrot.lane.b32.xlu0 %v7295, 80
  %v8673 = vpop.permute.xlu0 %8672
  %8674 = vrot.lane.b32.xlu0 %v7300, 80
  %v8675 = vpop.permute.xlu0 %8674
  %8676 = vrot.lane.b32.xlu0 %v7305, 80
  %v8677 = vpop.permute.xlu0 %8676
  %8678 = vrot.lane.b32.xlu0 %v7310, 80
  %v8679 = vpop.permute.xlu0 %8678
  %8680 = vrot.lane.b32.xlu0 %v7315, 80
  %v8681 = vpop.permute.xlu0 %8680
  %v8682 = vsel %vm2405, %v8619, 0
  %v8684 = vsel %vm2405, %v8621, 0
  %v8686 = vsel %vm2405, %v8623, 0
  %v8688 = vsel %vm2405, %v8625, 0
  %v8690 = vsel %vm2405, %v8627, 0
  %v8692 = vsel %vm2405, %v8629, 0
  %v8694 = vsel %vm2405, %v8631, 0
  %v8696 = vsel %vm2405, %v8633, 0
  %v8698 = vsel %vm2405, %v8635, 0
  %v8700 = vsel %vm2405, %v8637, 0
  %v8702 = vsel %vm2405, %v8639, 0
  %v8704 = vsel %vm2405, %v8641, 0
  %v8706 = vsel %vm2405, %v8643, 0
  %v8708 = vsel %vm2405, %v8645, 0
  %v8710 = vsel %vm2405, %v8647, 0
  %v8712 = vsel %vm2405, %v8649, 0
  %v8714 = vsel %vm2405, %v8651, 0
  %v8716 = vsel %vm2405, %v8653, 0
  %v8718 = vsel %vm2405, %v8655, 0
  %v8720 = vsel %vm2405, %v8657, 0
  %v8722 = vsel %vm2405, %v8659, 0
  %v8724 = vsel %vm2405, %v8661, 0
  %v8726 = vsel %vm2405, %v8663, 0
  %v8728 = vsel %vm2405, %v8665, 0
  %v8730 = vsel %vm2405, %v8667, 0
  %v8732 = vsel %vm2405, %v8669, 0
  %v8734 = vsel %vm2405, %v8671, 0
  %v8736 = vsel %vm2405, %v8673, 0
  %v8738 = vsel %vm2405, %v8675, 0
  %v8740 = vsel %vm2405, %v8677, 0
  %v8742 = vsel %vm2405, %v8679, 0
  %v8744 = vsel %vm2405, %v8681, 0
  %8746 = vmatprep.subr.mxu0 0.0
  %8747 = vmatpush1.xpose.msra.mxu0 %v8714
  %8748 = vmatprep.subr.mxu0 0.0
  %8749 = vmatpush1.xpose.msra.mxu0 %v8716
  %8750 = vmatprep.subr.mxu0 0.0
  %8751 = vmatpush1.xpose.msra.mxu0 %v8718
  %8752 = vmatprep.subr.mxu0 0.0
  %8753 = vmatpush1.xpose.msra.mxu0 %v8720
  %8754 = vmatprep.subr.mxu0 0.0
  %8755 = vmatpush1.xpose.msra.mxu0 %v8722
  %8756 = vmatprep.subr.mxu0 0.0
  %8757 = vmatpush1.xpose.msra.mxu0 %v8724
  %8758 = vmatprep.subr.mxu0 0.0
  %8759 = vmatpush1.xpose.msra.mxu0 %v8726
  %8760 = vmatprep.subr.mxu0 0.0
  %8761 = vmatpush1.xpose.msra.mxu0 %v8728
  %8762 = vmatprep.subr.mxu0 0.0
  %8763 = vmatpush1.xpose.msra.mxu0 %v8730
  %8764 = vmatprep.subr.mxu0 0.0
  %8765 = vmatpush1.xpose.msra.mxu0 %v8732
  %8766 = vmatprep.subr.mxu0 0.0
  %8767 = vmatpush1.xpose.msra.mxu0 %v8734
  %8768 = vmatprep.subr.mxu0 0.0
  %8769 = vmatpush1.xpose.msra.mxu0 %v8736
  %8770 = vmatprep.subr.mxu0 0.0
  %8771 = vmatpush1.xpose.msra.mxu0 %v8738
  %8772 = vmatprep.subr.mxu0 0.0
  %8773 = vmatpush1.xpose.msra.mxu0 %v8740
  %8774 = vmatprep.subr.mxu0 0.0
  %8775 = vmatpush1.xpose.msra.mxu0 %v8742
  %8776 = vmatprep.subr.mxu0 0.0
  %8777 = vmatpush1.xpose.msra.mxu0 %v8744
  %8778 = vmatprep.subr.mxu0 0.0
  %8779 = vmatpush1.xpose.msra.mxu0 0.0
  %8780 = vmatprep.subr.mxu0 0.0
  %8781 = vmatpush1.xpose.msra.mxu0 0.0
  %8782 = vmatprep.subr.mxu0 0.0
  %8783 = vmatpush1.xpose.msra.mxu0 0.0
  %8784 = vmatprep.subr.mxu0 0.0
  %8785 = vmatpush1.xpose.msra.mxu0 0.0
  %8786 = vmatprep.subr.mxu0 0.0
  %8787 = vmatpush1.xpose.msra.mxu0 0.0
  %8788 = vmatprep.subr.mxu0 0.0
  %8789 = vmatpush1.xpose.msra.mxu0 0.0
  %8790 = vmatprep.subr.mxu0 0.0
  %8791 = vmatpush1.xpose.msra.mxu0 0.0
  %8792 = vmatprep.subr.mxu0 0.0
  %8793 = vmatpush1.xpose.msra.mxu0 0.0
  %8794 = vmatprep.subr.mxu0 0.0
  %8795 = vmatpush1.xpose.msra.mxu0 0.0
  %8796 = vmatprep.subr.mxu0 0.0
  %8797 = vmatpush1.xpose.msra.mxu0 0.0
  %8798 = vmatprep.subr.mxu0 0.0
  %8799 = vmatpush1.xpose.msra.mxu0 0.0
  %8800 = vmatprep.subr.mxu0 0.0
  %8801 = vmatpush1.xpose.msra.mxu0 0.0
  %8802 = vmatprep.subr.mxu0 0.0
  %8803 = vmatpush1.xpose.msra.mxu0 0.0
  %8804 = vmatprep.subr.mxu0 0.0
  %8805 = vmatpush1.xpose.msra.mxu0 0.0
  %8806 = vmatprep.subr.mxu0 0.0
  %8807 = vmatpush1.xpose.msra.mxu0 0.0
  %8808 = vmatprep.subr.mxu0 0.0
  %8809 = vmatpush1.xpose.msra.mxu0 0.0
  %8810 = vmatprep.mubr.f32.mxu0 0.0
  %8811 = vmatmul.mubr.f32.gmra.mrb[0].mxu0 %v8682
  %v8812 = vpop.f32.mrb[0].mxu0
  %v8813 = vadd.f32 %v170, %v8812
  %v8814 = vpop.f32.mrb[0].mxu0
  %8815 = vmatprep.mubr.f32.mxu0 0.0
  %8816 = vmatmul.mubr.f32.gmra.mrb[0].mxu0 %v8684
  %v8817 = vpop.f32.mrb[0].mxu0
  %v8818 = vadd.f32 %v171, %v8817
  %v8819 = vpop.f32.mrb[0].mxu0
  %8820 = vmatprep.mubr.f32.mxu0 0.0
  %8821 = vmatmul.mubr.f32.gmra.mrb[0].mxu0 %v8686
  %v8822 = vpop.f32.mrb[0].mxu0
  %v8823 = vadd.f32 %v172, %v8822
  %v8824 = vpop.f32.mrb[0].mxu0
  %8825 = vmatprep.mubr.f32.mxu0 0.0
  %8826 = vmatmul.mubr.f32.gmra.mrb[0].mxu0 %v8688
  %v8827 = vpop.f32.mrb[0].mxu0
  %v8828 = vadd.f32 %v173, %v8827
  %v8829 = vpop.f32.mrb[0].mxu0
  %8830 = vmatprep.mubr.f32.mxu0 0.0
  %8831 = vmatmul.mubr.f32.gmra.mrb[0].mxu0 %v8690
  %v8832 = vpop.f32.mrb[0].mxu0
  %v8833 = vadd.f32 %v174, %v8832
  %v8834 = vpop.f32.mrb[0].mxu0
  %8835 = vmatprep.mubr.f32.mxu0 0.0
  %8836 = vmatmul.mubr.f32.gmra.mrb[0].mxu0 %v8692
  %v8837 = vpop.f32.mrb[0].mxu0
  %v8838 = vadd.f32 %v175, %v8837
  %v8839 = vpop.f32.mrb[0].mxu0
  %8840 = vmatprep.mubr.f32.mxu0 0.0
  %8841 = vmatmul.mubr.f32.gmra.mrb[0].mxu0 %v8694
  %v8842 = vpop.f32.mrb[0].mxu0
  %v8843 = vadd.f32 %v176, %v8842
  %v8844 = vpop.f32.mrb[0].mxu0
  %8845 = vmatprep.mubr.f32.mxu0 0.0
  %8846 = vmatmul.mubr.f32.gmra.mrb[0].mxu0 %v8696
  %v8847 = vpop.f32.mrb[0].mxu0
  %v8848 = vadd.f32 %v177, %v8847
  %v8849 = vpop.f32.mrb[0].mxu0
  %8850 = vmatprep.mubr.f32.mxu0 0.0
  %8851 = vmatmul.mubr.f32.gmra.mrb[0].mxu0 %v8698
  %v8852 = vpop.f32.mrb[0].mxu0
  %v8853 = vadd.f32 %v178, %v8852
  %v8854 = vpop.f32.mrb[0].mxu0
  %8855 = vmatprep.mubr.f32.mxu0 0.0
  %8856 = vmatmul.mubr.f32.gmra.mrb[0].mxu0 %v8700
  %v8857 = vpop.f32.mrb[0].mxu0
  %v8858 = vadd.f32 %v179, %v8857
  %v8859 = vpop.f32.mrb[0].mxu0
  %8860 = vmatprep.mubr.f32.mxu0 0.0
  %8861 = vmatmul.mubr.f32.gmra.mrb[0].mxu0 %v8702
  %v8862 = vpop.f32.mrb[0].mxu0
  %v8863 = vadd.f32 %v180, %v8862
  %v8864 = vpop.f32.mrb[0].mxu0
  %8865 = vmatprep.mubr.f32.mxu0 0.0
  %8866 = vmatmul.mubr.f32.gmra.mrb[0].mxu0 %v8704
  %v8867 = vpop.f32.mrb[0].mxu0
  %v8868 = vadd.f32 %v181, %v8867
  %v8869 = vpop.f32.mrb[0].mxu0
  %8870 = vmatprep.mubr.f32.mxu0 0.0
  %8871 = vmatmul.mubr.f32.gmra.mrb[0].mxu0 %v8706
  %v8872 = vpop.f32.mrb[0].mxu0
  %v8873 = vadd.f32 %v182, %v8872
  %v8874 = vpop.f32.mrb[0].mxu0
  %8875 = vmatprep.mubr.f32.mxu0 0.0
  %8876 = vmatmul.mubr.f32.gmra.mrb[0].mxu0 %v8708
  %v8877 = vpop.f32.mrb[0].mxu0
  %v8878 = vadd.f32 %v183, %v8877
  %v8879 = vpop.f32.mrb[0].mxu0
  %8880 = vmatprep.mubr.f32.mxu0 0.0
  %8881 = vmatmul.mubr.f32.gmra.mrb[0].mxu0 %v8710
  %v8882 = vpop.f32.mrb[0].mxu0
  %v8883 = vadd.f32 %v184, %v8882
  %v8884 = vpop.f32.mrb[0].mxu0
  %8885 = vmatprep.mubr.f32.mxu0 0.0
  %8886 = vmatmul.mubr.f32.gmra.mrb[0].mxu0 %v8712
  %v8887 = vpop.f32.mrb[0].mxu0
  %v8888 = vadd.f32 %v185, %v8887
  %v8889 = vpop.f32.mrb[0].mxu0
  %8890 = vdwg.mxu0
  %8891 = vmax.xlane.f32.xlu0 %v8813
  %v8892 = vpop.xlane.xlu0 %8891
  %8893 = vmax.xlane.f32.xlu0 %v8818
  %v8894 = vpop.xlane.xlu0 %8893
  %8895 = vmax.xlane.f32.xlu0 %v8823
  %v8896 = vpop.xlane.xlu0 %8895
  %8897 = vmax.xlane.f32.xlu0 %v8828
  %v8898 = vpop.xlane.xlu0 %8897
  %8899 = vmax.xlane.f32.xlu0 %v8833
  %v8900 = vpop.xlane.xlu0 %8899
  %8901 = vmax.xlane.f32.xlu0 %v8838
  %v8902 = vpop.xlane.xlu0 %8901
  %8903 = vmax.xlane.f32.xlu0 %v8843
  %v8904 = vpop.xlane.xlu0 %8903
  %8905 = vmax.xlane.f32.xlu0 %v8848
  %v8906 = vpop.xlane.xlu0 %8905
  %8907 = vmax.xlane.f32.xlu0 %v8853
  %v8908 = vpop.xlane.xlu0 %8907
  %8909 = vmax.xlane.f32.xlu0 %v8858
  %v8910 = vpop.xlane.xlu0 %8909
  %8911 = vmax.xlane.f32.xlu0 %v8863
  %v8912 = vpop.xlane.xlu0 %8911
  %8913 = vmax.xlane.f32.xlu0 %v8868
  %v8914 = vpop.xlane.xlu0 %8913
  %8915 = vmax.xlane.f32.xlu0 %v8873
  %v8916 = vpop.xlane.xlu0 %8915
  %8917 = vmax.xlane.f32.xlu0 %v8878
  %v8918 = vpop.xlane.xlu0 %8917
  %8919 = vmax.xlane.f32.xlu0 %v8883
  %v8920 = vpop.xlane.xlu0 %8919
  %8921 = vmax.xlane.f32.xlu0 %v8888
  %v8922 = vpop.xlane.xlu0 %8921
  %v8923 = vsub.f32 %v8813, %v8892
  %v8924 = vsub.f32 %v8818, %v8894
  %v8925 = vsub.f32 %v8823, %v8896
  %v8926 = vsub.f32 %v8828, %v8898
  %v8927 = vsub.f32 %v8833, %v8900
  %v8928 = vsub.f32 %v8838, %v8902
  %v8929 = vsub.f32 %v8843, %v8904
  %v8930 = vsub.f32 %v8848, %v8906
  %v8931 = vsub.f32 %v8853, %v8908
  %v8932 = vsub.f32 %v8858, %v8910
  %v8933 = vsub.f32 %v8863, %v8912
  %v8934 = vsub.f32 %v8868, %v8914
  %v8935 = vsub.f32 %v8873, %v8916
  %v8936 = vsub.f32 %v8878, %v8918
  %v8937 = vsub.f32 %v8883, %v8920
  %v8938 = vsub.f32 %v8888, %v8922
  %v8939 = vmul.f32 %v8923, 1.442695
  %v8940 = vpow.pop %v8939
  %v8941 = vmul.f32 %v8924, 1.442695
  %v8942 = vpow.pop %v8941
  %v8943 = vmul.f32 %v8925, 1.442695
  %v8944 = vpow.pop %v8943
  %v8945 = vmul.f32 %v8926, 1.442695
  %v8946 = vpow.pop %v8945
  %v8947 = vmul.f32 %v8927, 1.442695
  %v8948 = vpow.pop %v8947
  %v8949 = vmul.f32 %v8928, 1.442695
  %v8950 = vpow.pop %v8949
  %v8951 = vmul.f32 %v8929, 1.442695
  %v8952 = vpow.pop %v8951
  %v8953 = vmul.f32 %v8930, 1.442695
  %v8954 = vpow.pop %v8953
  %v8955 = vmul.f32 %v8931, 1.442695
  %v8956 = vpow.pop %v8955
  %v8957 = vmul.f32 %v8932, 1.442695
  %v8958 = vpow.pop %v8957
  %v8959 = vmul.f32 %v8933, 1.442695
  %v8960 = vpow.pop %v8959
  %v8961 = vmul.f32 %v8934, 1.442695
  %v8962 = vpow.pop %v8961
  %v8963 = vmul.f32 %v8935, 1.442695
  %v8964 = vpow.pop %v8963
  %v8965 = vmul.f32 %v8936, 1.442695
  %v8966 = vpow.pop %v8965
  %v8967 = vmul.f32 %v8937, 1.442695
  %v8968 = vpow.pop %v8967
  %v8969 = vmul.f32 %v8938, 1.442695
  %v8970 = vpow.pop %v8969
  %8971 = vadd.xlane.f32.xlu0 %v8940
  %v8972 = vpop.xlane.xlu0 %8971
  %8973 = vadd.xlane.f32.xlu0 %v8942
  %v8974 = vpop.xlane.xlu0 %8973
  %8975 = vadd.xlane.f32.xlu0 %v8944
  %v8976 = vpop.xlane.xlu0 %8975
  %8977 = vadd.xlane.f32.xlu0 %v8946
  %v8978 = vpop.xlane.xlu0 %8977
  %8979 = vadd.xlane.f32.xlu0 %v8948
  %v8980 = vpop.xlane.xlu0 %8979
  %8981 = vadd.xlane.f32.xlu0 %v8950
  %v8982 = vpop.xlane.xlu0 %8981
  %8983 = vadd.xlane.f32.xlu0 %v8952
  %v8984 = vpop.xlane.xlu0 %8983
  %8985 = vadd.xlane.f32.xlu0 %v8954
  %v8986 = vpop.xlane.xlu0 %8985
  %8987 = vadd.xlane.f32.xlu0 %v8956
  %v8988 = vpop.xlane.xlu0 %8987
  %8989 = vadd.xlane.f32.xlu0 %v8958
  %v8990 = vpop.xlane.xlu0 %8989
  %8991 = vadd.xlane.f32.xlu0 %v8960
  %v8992 = vpop.xlane.xlu0 %8991
  %8993 = vadd.xlane.f32.xlu0 %v8962
  %v8994 = vpop.xlane.xlu0 %8993
  %8995 = vadd.xlane.f32.xlu0 %v8964
  %v8996 = vpop.xlane.xlu0 %8995
  %8997 = vadd.xlane.f32.xlu0 %v8966
  %v8998 = vpop.xlane.xlu0 %8997
  %8999 = vadd.xlane.f32.xlu0 %v8968
  %v9000 = vpop.xlane.xlu0 %8999
  %9001 = vadd.xlane.f32.xlu0 %v8970
  %v9002 = vpop.xlane.xlu0 %9001
  %v9003 = vrcp.pop %v8972
  %v9004 = vrcp.pop %v8974
  %v9005 = vrcp.pop %v8976
  %v9006 = vrcp.pop %v8978
  %v9007 = vrcp.pop %v8980
  %v9008 = vrcp.pop %v8982
  %v9009 = vrcp.pop %v8984
  %v9010 = vrcp.pop %v8986
  %v9011 = vrcp.pop %v8988
  %v9012 = vrcp.pop %v8990
  %v9013 = vrcp.pop %v8992
  %v9014 = vrcp.pop %v8994
  %v9015 = vrcp.pop %v8996
  %v9016 = vrcp.pop %v8998
  %v9017 = vrcp.pop %v9000
  %v9018 = vrcp.pop %v9002
  %v9019 = vmul.f32 %v8940, %v9003
  %v9020 = vmul.f32 %v8942, %v9004
  %v9021 = vmul.f32 %v8944, %v9005
  %v9022 = vmul.f32 %v8946, %v9006
  %v9023 = vmul.f32 %v8948, %v9007
  %v9024 = vmul.f32 %v8950, %v9008
  %v9025 = vmul.f32 %v8952, %v9009
  %v9026 = vmul.f32 %v8954, %v9010
  %v9027 = vmul.f32 %v8956, %v9011
  %v9028 = vmul.f32 %v8958, %v9012
  %v9029 = vmul.f32 %v8960, %v9013
  %v9030 = vmul.f32 %v8962, %v9014
  %v9031 = vmul.f32 %v8964, %v9015
  %v9032 = vmul.f32 %v8966, %v9016
  %v9033 = vmul.f32 %v8968, %v9017
  %v9034 = vmul.f32 %v8970, %v9018
  %9035 = vrot.lane.b32.xlu0 %v7240, 48
  %v9036 = vpop.permute.xlu0 %9035
  %9037 = vrot.lane.b32.xlu0 %v7245, 48
  %v9038 = vpop.permute.xlu0 %9037
  %9039 = vrot.lane.b32.xlu0 %v7250, 48
  %v9040 = vpop.permute.xlu0 %9039
  %9041 = vrot.lane.b32.xlu0 %v7255, 48
  %v9042 = vpop.permute.xlu0 %9041
  %9043 = vrot.lane.b32.xlu0 %v7260, 48
  %v9044 = vpop.permute.xlu0 %9043
  %9045 = vrot.lane.b32.xlu0 %v7265, 48
  %v9046 = vpop.permute.xlu0 %9045
  %9047 = vrot.lane.b32.xlu0 %v7270, 48
  %v9048 = vpop.permute.xlu0 %9047
  %9049 = vrot.lane.b32.xlu0 %v7275, 48
  %v9050 = vpop.permute.xlu0 %9049
  %9051 = vrot.lane.b32.xlu0 %v7280, 48
  %v9052 = vpop.permute.xlu0 %9051
  %9053 = vrot.lane.b32.xlu0 %v7285, 48
  %v9054 = vpop.permute.xlu0 %9053
  %9055 = vrot.lane.b32.xlu0 %v7290, 48
  %v9056 = vpop.permute.xlu0 %9055
  %9057 = vrot.lane.b32.xlu0 %v7295, 48
  %v9058 = vpop.permute.xlu0 %9057
  %9059 = vrot.lane.b32.xlu0 %v7300, 48
  %v9060 = vpop.permute.xlu0 %9059
  %9061 = vrot.lane.b32.xlu0 %v7305, 48
  %v9062 = vpop.permute.xlu0 %9061
  %9063 = vrot.lane.b32.xlu0 %v7310, 48
  %v9064 = vpop.permute.xlu0 %9063
  %9065 = vrot.lane.b32.xlu0 %v7315, 48
  %v9066 = vpop.permute.xlu0 %9065
  %9083 = vmatprep.subr.mxu0 0.0
  %9084 = vmatpush1.msra.mxu0 %v9036
  %9085 = vmatprep.subr.mxu0 0.0
  %9086 = vmatpush1.msra.mxu0 %v9038
  %9087 = vmatprep.subr.mxu0 0.0
  %9088 = vmatpush1.msra.mxu0 %v9040
  %9089 = vmatprep.subr.mxu0 0.0
  %9090 = vmatpush1.msra.mxu0 %v9042
  %9091 = vmatprep.subr.mxu0 0.0
  %9092 = vmatpush1.msra.mxu0 %v9044
  %9093 = vmatprep.subr.mxu0 0.0
  %9094 = vmatpush1.msra.mxu0 %v9046
  %9095 = vmatprep.subr.mxu0 0.0
  %9096 = vmatpush1.msra.mxu0 %v9048
  %9097 = vmatprep.subr.mxu0 0.0
  %9098 = vmatpush1.msra.mxu0 %v9050
  %9099 = vmatprep.subr.mxu0 0.0
  %9100 = vmatpush1.msra.mxu0 %v9052
  %9101 = vmatprep.subr.mxu0 0.0
  %9102 = vmatpush1.msra.mxu0 %v9054
  %9103 = vmatprep.subr.mxu0 0.0
  %9104 = vmatpush1.msra.mxu0 %v9056
  %9105 = vmatprep.subr.mxu0 0.0
  %9106 = vmatpush1.msra.mxu0 %v9058
  %9107 = vmatprep.subr.mxu0 0.0
  %9108 = vmatpush1.msra.mxu0 %v9060
  %9109 = vmatprep.subr.mxu0 0.0
  %9110 = vmatpush1.msra.mxu0 %v9062
  %9111 = vmatprep.subr.mxu0 0.0
  %9112 = vmatpush1.msra.mxu0 %v9064
  %9113 = vmatprep.subr.mxu0 0.0
  %9114 = vmatpush1.msra.mxu0 %v9066
  %9115 = vmatprep.subr.mxu0 0.0
  %9116 = vmatpush1.msra.mxu0 0.0
  %9117 = vmatprep.subr.mxu0 0.0
  %9118 = vmatpush1.msra.mxu0 0.0
  %9119 = vmatprep.subr.mxu0 0.0
  %9120 = vmatpush1.msra.mxu0 0.0
  %9121 = vmatprep.subr.mxu0 0.0
  %9122 = vmatpush1.msra.mxu0 0.0
  %9123 = vmatprep.subr.mxu0 0.0
  %9124 = vmatpush1.msra.mxu0 0.0
  %9125 = vmatprep.subr.mxu0 0.0
  %9126 = vmatpush1.msra.mxu0 0.0
  %9127 = vmatprep.subr.mxu0 0.0
  %9128 = vmatpush1.msra.mxu0 0.0
  %9129 = vmatprep.subr.mxu0 0.0
  %9130 = vmatpush1.msra.mxu0 0.0
  %9131 = vmatprep.subr.mxu0 0.0
  %9132 = vmatpush1.msra.mxu0 0.0
  %9133 = vmatprep.subr.mxu0 0.0
  %9134 = vmatpush1.msra.mxu0 0.0
  %9135 = vmatprep.subr.mxu0 0.0
  %9136 = vmatpush1.msra.mxu0 0.0
  %9137 = vmatprep.subr.mxu0 0.0
  %9138 = vmatpush1.msra.mxu0 0.0
  %9139 = vmatprep.subr.mxu0 0.0
  %9140 = vmatpush1.msra.mxu0 0.0
  %9141 = vmatprep.subr.mxu0 0.0
  %9142 = vmatpush1.msra.mxu0 0.0
  %9143 = vmatprep.subr.mxu0 0.0
  %9144 = vmatpush1.msra.mxu0 0.0
  %9145 = vmatprep.subr.mxu0 0.0
  %9146 = vmatpush1.msra.mxu0 0.0
  %9147 = vmatprep.mubr.f32.mxu0 0.0
  %9148 = vmatmul.mubr.f32.gmra.mrb[0].mxu0 %v9019
  %v9149 = vpop.f32.mrb[0].mxu0
  %v9150 = vadd.f32 0.0, %v9149
  %v9151 = vpop.f32.mrb[0].mxu0
  %9152 = vmatprep.mubr.f32.mxu0 0.0
  %9153 = vmatmul.mubr.f32.gmra.mrb[0].mxu0 %v9020
  %v9154 = vpop.f32.mrb[0].mxu0
  %v9155 = vadd.f32 0.0, %v9154
  %v9156 = vpop.f32.mrb[0].mxu0
  %9157 = vmatprep.mubr.f32.mxu0 0.0
  %9158 = vmatmul.mubr.f32.gmra.mrb[0].mxu0 %v9021
  %v9159 = vpop.f32.mrb[0].mxu0
  %v9160 = vadd.f32 0.0, %v9159
  %v9161 = vpop.f32.mrb[0].mxu0
  %9162 = vmatprep.mubr.f32.mxu0 0.0
  %9163 = vmatmul.mubr.f32.gmra.mrb[0].mxu0 %v9022
  %v9164 = vpop.f32.mrb[0].mxu0
  %v9165 = vadd.f32 0.0, %v9164
  %v9166 = vpop.f32.mrb[0].mxu0
  %9167 = vmatprep.mubr.f32.mxu0 0.0
  %9168 = vmatmul.mubr.f32.gmra.mrb[0].mxu0 %v9023
  %v9169 = vpop.f32.mrb[0].mxu0
  %v9170 = vadd.f32 0.0, %v9169
  %v9171 = vpop.f32.mrb[0].mxu0
  %9172 = vmatprep.mubr.f32.mxu0 0.0
  %9173 = vmatmul.mubr.f32.gmra.mrb[0].mxu0 %v9024
  %v9174 = vpop.f32.mrb[0].mxu0
  %v9175 = vadd.f32 0.0, %v9174
  %v9176 = vpop.f32.mrb[0].mxu0
  %9177 = vmatprep.mubr.f32.mxu0 0.0
  %9178 = vmatmul.mubr.f32.gmra.mrb[0].mxu0 %v9025
  %v9179 = vpop.f32.mrb[0].mxu0
  %v9180 = vadd.f32 0.0, %v9179
  %v9181 = vpop.f32.mrb[0].mxu0
  %9182 = vmatprep.mubr.f32.mxu0 0.0
  %9183 = vmatmul.mubr.f32.gmra.mrb[0].mxu0 %v9026
  %v9184 = vpop.f32.mrb[0].mxu0
  %v9185 = vadd.f32 0.0, %v9184
  %v9186 = vpop.f32.mrb[0].mxu0
  %9187 = vmatprep.mubr.f32.mxu0 0.0
  %9188 = vmatmul.mubr.f32.gmra.mrb[0].mxu0 %v9027
  %v9189 = vpop.f32.mrb[0].mxu0
  %v9190 = vadd.f32 0.0, %v9189
  %v9191 = vpop.f32.mrb[0].mxu0
  %9192 = vmatprep.mubr.f32.mxu0 0.0
  %9193 = vmatmul.mubr.f32.gmra.mrb[0].mxu0 %v9028
  %v9194 = vpop.f32.mrb[0].mxu0
  %v9195 = vadd.f32 0.0, %v9194
  %v9196 = vpop.f32.mrb[0].mxu0
  %9197 = vmatprep.mubr.f32.mxu0 0.0
  %9198 = vmatmul.mubr.f32.gmra.mrb[0].mxu0 %v9029
  %v9199 = vpop.f32.mrb[0].mxu0
  %v9200 = vadd.f32 0.0, %v9199
  %v9201 = vpop.f32.mrb[0].mxu0
  %9202 = vmatprep.mubr.f32.mxu0 0.0
  %9203 = vmatmul.mubr.f32.gmra.mrb[0].mxu0 %v9030
  %v9204 = vpop.f32.mrb[0].mxu0
  %v9205 = vadd.f32 0.0, %v9204
  %v9206 = vpop.f32.mrb[0].mxu0
  %9207 = vmatprep.mubr.f32.mxu0 0.0
  %9208 = vmatmul.mubr.f32.gmra.mrb[0].mxu0 %v9031
  %v9209 = vpop.f32.mrb[0].mxu0
  %v9210 = vadd.f32 0.0, %v9209
  %v9211 = vpop.f32.mrb[0].mxu0
  %9212 = vmatprep.mubr.f32.mxu0 0.0
  %9213 = vmatmul.mubr.f32.gmra.mrb[0].mxu0 %v9032
  %v9214 = vpop.f32.mrb[0].mxu0
  %v9215 = vadd.f32 0.0, %v9214
  %v9216 = vpop.f32.mrb[0].mxu0
  %9217 = vmatprep.mubr.f32.mxu0 0.0
  %9218 = vmatmul.mubr.f32.gmra.mrb[0].mxu0 %v9033
  %v9219 = vpop.f32.mrb[0].mxu0
  %v9220 = vadd.f32 0.0, %v9219
  %v9221 = vpop.f32.mrb[0].mxu0
  %9222 = vmatprep.mubr.f32.mxu0 0.0
  %9223 = vmatmul.mubr.f32.gmra.mrb[0].mxu0 %v9034
  %v9224 = vpop.f32.mrb[0].mxu0
  %v9225 = vadd.f32 0.0, %v9224
  %v9226 = vpop.f32.mrb[0].mxu0
  %9227 = vdwg.mxu0
  %9244 = vrot.lane.b32.xlu0 %v9150, 16
  %v9245 = vpop.permute.xlu0 %9244
  %9246 = vrot.lane.b32.xlu0 %v9155, 16
  %v9247 = vpop.permute.xlu0 %9246
  %9248 = vrot.lane.b32.xlu0 %v9160, 16
  %v9249 = vpop.permute.xlu0 %9248
  %9250 = vrot.lane.b32.xlu0 %v9165, 16
  %v9251 = vpop.permute.xlu0 %9250
  %9252 = vrot.lane.b32.xlu0 %v9170, 16
  %v9253 = vpop.permute.xlu0 %9252
  %9254 = vrot.lane.b32.xlu0 %v9175, 16
  %v9255 = vpop.permute.xlu0 %9254
  %9256 = vrot.lane.b32.xlu0 %v9180, 16
  %v9257 = vpop.permute.xlu0 %9256
  %9258 = vrot.lane.b32.xlu0 %v9185, 16
  %v9259 = vpop.permute.xlu0 %9258
  %9260 = vrot.lane.b32.xlu0 %v9190, 16
  %v9261 = vpop.permute.xlu0 %9260
  %9262 = vrot.lane.b32.xlu0 %v9195, 16
  %v9263 = vpop.permute.xlu0 %9262
  %9264 = vrot.lane.b32.xlu0 %v9200, 16
  %v9265 = vpop.permute.xlu0 %9264
  %9266 = vrot.lane.b32.xlu0 %v9205, 16
  %v9267 = vpop.permute.xlu0 %9266
  %9268 = vrot.lane.b32.xlu0 %v9210, 16
  %v9269 = vpop.permute.xlu0 %9268
  %9270 = vrot.lane.b32.xlu0 %v9215, 16
  %v9271 = vpop.permute.xlu0 %9270
  %9272 = vrot.lane.b32.xlu0 %v9220, 16
  %v9273 = vpop.permute.xlu0 %9272
  %9274 = vrot.lane.b32.xlu0 %v9225, 16
  %v9275 = vpop.permute.xlu0 %9274
  %9292 = vst.msk [vmem:[#allocation2] sm:$0xff] %vm4333, %v9245
  %9293 = vst.msk [vmem:[#allocation2 + $0x8] sm:$0xff] %vm4333, %v9247
  %9294 = vst.msk [vmem:[#allocation2 + $0x10] sm:$0xff] %vm4333, %v9249
  %9295 = vst.msk [vmem:[#allocation2 + $0x18] sm:$0xff] %vm4333, %v9251
  %9296 = vst.msk [vmem:[#allocation2 + $0x20] sm:$0xff] %vm4333, %v9253
  %9297 = vst.msk [vmem:[#allocation2 + $0x28] sm:$0xff] %vm4333, %v9255
  %9298 = vst.msk [vmem:[#allocation2 + $0x30] sm:$0xff] %vm4333, %v9257
  %9299 = vst.msk [vmem:[#allocation2 + $0x38] sm:$0xff] %vm4333, %v9259
  %9300 = vst.msk [vmem:[#allocation2 + $0x40] sm:$0xff] %vm4333, %v9261
  %9301 = vst.msk [vmem:[#allocation2 + $0x48] sm:$0xff] %vm4333, %v9263
  %9302 = vst.msk [vmem:[#allocation2 + $0x50] sm:$0xff] %vm4333, %v9265
  %9303 = vst.msk [vmem:[#allocation2 + $0x58] sm:$0xff] %vm4333, %v9267
  %9304 = vst.msk [vmem:[#allocation2 + $0x60] sm:$0xff] %vm4333, %v9269
  %9305 = vst.msk [vmem:[#allocation2 + $0x68] sm:$0xff] %vm4333, %v9271
  %9306 = vst.msk [vmem:[#allocation2 + $0x70] sm:$0xff] %vm4333, %v9273
  %9307 = vst.msk [vmem:[#allocation2 + $0x78] sm:$0xff] %vm4333, %v9275
  %9308 = vrot.lane.b32.xlu0 %v7240, 104
  %v9309 = vpop.permute.xlu0 %9308
  %9310 = vrot.lane.b32.xlu0 %v7245, 104
  %v9311 = vpop.permute.xlu0 %9310
  %9312 = vrot.lane.b32.xlu0 %v7250, 104
  %v9313 = vpop.permute.xlu0 %9312
  %9314 = vrot.lane.b32.xlu0 %v7255, 104
  %v9315 = vpop.permute.xlu0 %9314
  %9316 = vrot.lane.b32.xlu0 %v7260, 104
  %v9317 = vpop.permute.xlu0 %9316
  %9318 = vrot.lane.b32.xlu0 %v7265, 104
  %v9319 = vpop.permute.xlu0 %9318
  %9320 = vrot.lane.b32.xlu0 %v7270, 104
  %v9321 = vpop.permute.xlu0 %9320
  %9322 = vrot.lane.b32.xlu0 %v7275, 104
  %v9323 = vpop.permute.xlu0 %9322
  %9324 = vrot.lane.b32.xlu0 %v7280, 104
  %v9325 = vpop.permute.xlu0 %9324
  %9326 = vrot.lane.b32.xlu0 %v7285, 104
  %v9327 = vpop.permute.xlu0 %9326
  %9328 = vrot.lane.b32.xlu0 %v7290, 104
  %v9329 = vpop.permute.xlu0 %9328
  %9330 = vrot.lane.b32.xlu0 %v7295, 104
  %v9331 = vpop.permute.xlu0 %9330
  %9332 = vrot.lane.b32.xlu0 %v7300, 104
  %v9333 = vpop.permute.xlu0 %9332
  %9334 = vrot.lane.b32.xlu0 %v7305, 104
  %v9335 = vpop.permute.xlu0 %9334
  %9336 = vrot.lane.b32.xlu0 %v7310, 104
  %v9337 = vpop.permute.xlu0 %9336
  %9338 = vrot.lane.b32.xlu0 %v7315, 104
  %v9339 = vpop.permute.xlu0 %9338
  %9340 = vrot.lane.b32.xlu0 %v7240, 72
  %v9341 = vpop.permute.xlu0 %9340
  %9342 = vrot.lane.b32.xlu0 %v7245, 72
  %v9343 = vpop.permute.xlu0 %9342
  %9344 = vrot.lane.b32.xlu0 %v7250, 72
  %v9345 = vpop.permute.xlu0 %9344
  %9346 = vrot.lane.b32.xlu0 %v7255, 72
  %v9347 = vpop.permute.xlu0 %9346
  %9348 = vrot.lane.b32.xlu0 %v7260, 72
  %v9349 = vpop.permute.xlu0 %9348
  %9350 = vrot.lane.b32.xlu0 %v7265, 72
  %v9351 = vpop.permute.xlu0 %9350
  %9352 = vrot.lane.b32.xlu0 %v7270, 72
  %v9353 = vpop.permute.xlu0 %9352
  %9354 = vrot.lane.b32.xlu0 %v7275, 72
  %v9355 = vpop.permute.xlu0 %9354
  %9356 = vrot.lane.b32.xlu0 %v7280, 72
  %v9357 = vpop.permute.xlu0 %9356
  %9358 = vrot.lane.b32.xlu0 %v7285, 72
  %v9359 = vpop.permute.xlu0 %9358
  %9360 = vrot.lane.b32.xlu0 %v7290, 72
  %v9361 = vpop.permute.xlu0 %9360
  %9362 = vrot.lane.b32.xlu0 %v7295, 72
  %v9363 = vpop.permute.xlu0 %9362
  %9364 = vrot.lane.b32.xlu0 %v7300, 72
  %v9365 = vpop.permute.xlu0 %9364
  %9366 = vrot.lane.b32.xlu0 %v7305, 72
  %v9367 = vpop.permute.xlu0 %9366
  %9368 = vrot.lane.b32.xlu0 %v7310, 72
  %v9369 = vpop.permute.xlu0 %9368
  %9370 = vrot.lane.b32.xlu0 %v7315, 72
  %v9371 = vpop.permute.xlu0 %9370
  %v9372 = vsel %vm2405, %v9309, 0
  %v9374 = vsel %vm2405, %v9311, 0
  %v9376 = vsel %vm2405, %v9313, 0
  %v9378 = vsel %vm2405, %v9315, 0
  %v9380 = vsel %vm2405, %v9317, 0
  %v9382 = vsel %vm2405, %v9319, 0
  %v9384 = vsel %vm2405, %v9321, 0
  %v9386 = vsel %vm2405, %v9323, 0
  %v9388 = vsel %vm2405, %v9325, 0
  %v9390 = vsel %vm2405, %v9327, 0
  %v9392 = vsel %vm2405, %v9329, 0
  %v9394 = vsel %vm2405, %v9331, 0
  %v9396 = vsel %vm2405, %v9333, 0
  %v9398 = vsel %vm2405, %v9335, 0
  %v9400 = vsel %vm2405, %v9337, 0
  %v9402 = vsel %vm2405, %v9339, 0
  %v9404 = vsel %vm2405, %v9341, 0
  %v9406 = vsel %vm2405, %v9343, 0
  %v9408 = vsel %vm2405, %v9345, 0
  %v9410 = vsel %vm2405, %v9347, 0
  %v9412 = vsel %vm2405, %v9349, 0
  %v9414 = vsel %vm2405, %v9351, 0
  %v9416 = vsel %vm2405, %v9353, 0
  %v9418 = vsel %vm2405, %v9355, 0
  %v9420 = vsel %vm2405, %v9357, 0
  %v9422 = vsel %vm2405, %v9359, 0
  %v9424 = vsel %vm2405, %v9361, 0
  %v9426 = vsel %vm2405, %v9363, 0
  %v9428 = vsel %vm2405, %v9365, 0
  %v9430 = vsel %vm2405, %v9367, 0
  %v9432 = vsel %vm2405, %v9369, 0
  %v9434 = vsel %vm2405, %v9371, 0
  %9436 = vmatprep.subr.mxu0 0.0
  %9437 = vmatpush1.xpose.msra.mxu0 %v9404
  %9438 = vmatprep.subr.mxu0 0.0
  %9439 = vmatpush1.xpose.msra.mxu0 %v9406
  %9440 = vmatprep.subr.mxu0 0.0
  %9441 = vmatpush1.xpose.msra.mxu0 %v9408
  %9442 = vmatprep.subr.mxu0 0.0
  %9443 = vmatpush1.xpose.msra.mxu0 %v9410
  %9444 = vmatprep.subr.mxu0 0.0
  %9445 = vmatpush1.xpose.msra.mxu0 %v9412
  %9446 = vmatprep.subr.mxu0 0.0
  %9447 = vmatpush1.xpose.msra.mxu0 %v9414
  %9448 = vmatprep.subr.mxu0 0.0
  %9449 = vmatpush1.xpose.msra.mxu0 %v9416
  %9450 = vmatprep.subr.mxu0 0.0
  %9451 = vmatpush1.xpose.msra.mxu0 %v9418
  %9452 = vmatprep.subr.mxu0 0.0
  %9453 = vmatpush1.xpose.msra.mxu0 %v9420
  %9454 = vmatprep.subr.mxu0 0.0
  %9455 = vmatpush1.xpose.msra.mxu0 %v9422
  %9456 = vmatprep.subr.mxu0 0.0
  %9457 = vmatpush1.xpose.msra.mxu0 %v9424
  %9458 = vmatprep.subr.mxu0 0.0
  %9459 = vmatpush1.xpose.msra.mxu0 %v9426
  %9460 = vmatprep.subr.mxu0 0.0
  %9461 = vmatpush1.xpose.msra.mxu0 %v9428
  %9462 = vmatprep.subr.mxu0 0.0
  %9463 = vmatpush1.xpose.msra.mxu0 %v9430
  %9464 = vmatprep.subr.mxu0 0.0
  %9465 = vmatpush1.xpose.msra.mxu0 %v9432
  %9466 = vmatprep.subr.mxu0 0.0
  %9467 = vmatpush1.xpose.msra.mxu0 %v9434
  %9468 = vmatprep.subr.mxu0 0.0
  %9469 = vmatpush1.xpose.msra.mxu0 0.0
  %9470 = vmatprep.subr.mxu0 0.0
  %9471 = vmatpush1.xpose.msra.mxu0 0.0
  %9472 = vmatprep.subr.mxu0 0.0
  %9473 = vmatpush1.xpose.msra.mxu0 0.0
  %9474 = vmatprep.subr.mxu0 0.0
  %9475 = vmatpush1.xpose.msra.mxu0 0.0
  %9476 = vmatprep.subr.mxu0 0.0
  %9477 = vmatpush1.xpose.msra.mxu0 0.0
  %9478 = vmatprep.subr.mxu0 0.0
  %9479 = vmatpush1.xpose.msra.mxu0 0.0
  %9480 = vmatprep.subr.mxu0 0.0
  %9481 = vmatpush1.xpose.msra.mxu0 0.0
  %9482 = vmatprep.subr.mxu0 0.0
  %9483 = vmatpush1.xpose.msra.mxu0 0.0
  %9484 = vmatprep.subr.mxu0 0.0
  %9485 = vmatpush1.xpose.msra.mxu0 0.0
  %9486 = vmatprep.subr.mxu0 0.0
  %9487 = vmatpush1.xpose.msra.mxu0 0.0
  %9488 = vmatprep.subr.mxu0 0.0
  %9489 = vmatpush1.xpose.msra.mxu0 0.0
  %9490 = vmatprep.subr.mxu0 0.0
  %9491 = vmatpush1.xpose.msra.mxu0 0.0
  %9492 = vmatprep.subr.mxu0 0.0
  %9493 = vmatpush1.xpose.msra.mxu0 0.0
  %9494 = vmatprep.subr.mxu0 0.0
  %9495 = vmatpush1.xpose.msra.mxu0 0.0
  %9496 = vmatprep.subr.mxu0 0.0
  %9497 = vmatpush1.xpose.msra.mxu0 0.0
  %9498 = vmatprep.subr.mxu0 0.0
  %9499 = vmatpush1.xpose.msra.mxu0 0.0
  %9500 = vmatprep.mubr.f32.mxu0 0.0
  %9501 = vmatmul.mubr.f32.gmra.mrb[0].mxu0 %v9372
  %v9502 = vpop.f32.mrb[0].mxu0
  %v9503 = vadd.f32 %v170, %v9502
  %v9504 = vpop.f32.mrb[0].mxu0
  %9505 = vmatprep.mubr.f32.mxu0 0.0
  %9506 = vmatmul.mubr.f32.gmra.mrb[0].mxu0 %v9374
  %v9507 = vpop.f32.mrb[0].mxu0
  %v9508 = vadd.f32 %v171, %v9507
  %v9509 = vpop.f32.mrb[0].mxu0
  %9510 = vmatprep.mubr.f32.mxu0 0.0
  %9511 = vmatmul.mubr.f32.gmra.mrb[0].mxu0 %v9376
  %v9512 = vpop.f32.mrb[0].mxu0
  %v9513 = vadd.f32 %v172, %v9512
  %v9514 = vpop.f32.mrb[0].mxu0
  %9515 = vmatprep.mubr.f32.mxu0 0.0
  %9516 = vmatmul.mubr.f32.gmra.mrb[0].mxu0 %v9378
  %v9517 = vpop.f32.mrb[0].mxu0
  %v9518 = vadd.f32 %v173, %v9517
  %v9519 = vpop.f32.mrb[0].mxu0
  %9520 = vmatprep.mubr.f32.mxu0 0.0
  %9521 = vmatmul.mubr.f32.gmra.mrb[0].mxu0 %v9380
  %v9522 = vpop.f32.mrb[0].mxu0
  %v9523 = vadd.f32 %v174, %v9522
  %v9524 = vpop.f32.mrb[0].mxu0
  %9525 = vmatprep.mubr.f32.mxu0 0.0
  %9526 = vmatmul.mubr.f32.gmra.mrb[0].mxu0 %v9382
  %v9527 = vpop.f32.mrb[0].mxu0
  %v9528 = vadd.f32 %v175, %v9527
  %v9529 = vpop.f32.mrb[0].mxu0
  %9530 = vmatprep.mubr.f32.mxu0 0.0
  %9531 = vmatmul.mubr.f32.gmra.mrb[0].mxu0 %v9384
  %v9532 = vpop.f32.mrb[0].mxu0
  %v9533 = vadd.f32 %v176, %v9532
  %v9534 = vpop.f32.mrb[0].mxu0
  %9535 = vmatprep.mubr.f32.mxu0 0.0
  %9536 = vmatmul.mubr.f32.gmra.mrb[0].mxu0 %v9386
  %v9537 = vpop.f32.mrb[0].mxu0
  %v9538 = vadd.f32 %v177, %v9537
  %v9539 = vpop.f32.mrb[0].mxu0
  %9540 = vmatprep.mubr.f32.mxu0 0.0
  %9541 = vmatmul.mubr.f32.gmra.mrb[0].mxu0 %v9388
  %v9542 = vpop.f32.mrb[0].mxu0
  %v9543 = vadd.f32 %v178, %v9542
  %v9544 = vpop.f32.mrb[0].mxu0
  %9545 = vmatprep.mubr.f32.mxu0 0.0
  %9546 = vmatmul.mubr.f32.gmra.mrb[0].mxu0 %v9390
  %v9547 = vpop.f32.mrb[0].mxu0
  %v9548 = vadd.f32 %v179, %v9547
  %v9549 = vpop.f32.mrb[0].mxu0
  %9550 = vmatprep.mubr.f32.mxu0 0.0
  %9551 = vmatmul.mubr.f32.gmra.mrb[0].mxu0 %v9392
  %v9552 = vpop.f32.mrb[0].mxu0
  %v9553 = vadd.f32 %v180, %v9552
  %v9554 = vpop.f32.mrb[0].mxu0
  %9555 = vmatprep.mubr.f32.mxu0 0.0
  %9556 = vmatmul.mubr.f32.gmra.mrb[0].mxu0 %v9394
  %v9557 = vpop.f32.mrb[0].mxu0
  %v9558 = vadd.f32 %v181, %v9557
  %v9559 = vpop.f32.mrb[0].mxu0
  %9560 = vmatprep.mubr.f32.mxu0 0.0
  %9561 = vmatmul.mubr.f32.gmra.mrb[0].mxu0 %v9396
  %v9562 = vpop.f32.mrb[0].mxu0
  %v9563 = vadd.f32 %v182, %v9562
  %v9564 = vpop.f32.mrb[0].mxu0
  %9565 = vmatprep.mubr.f32.mxu0 0.0
  %9566 = vmatmul.mubr.f32.gmra.mrb[0].mxu0 %v9398
  %v9567 = vpop.f32.mrb[0].mxu0
  %v9568 = vadd.f32 %v183, %v9567
  %v9569 = vpop.f32.mrb[0].mxu0
  %9570 = vmatprep.mubr.f32.mxu0 0.0
  %9571 = vmatmul.mubr.f32.gmra.mrb[0].mxu0 %v9400
  %v9572 = vpop.f32.mrb[0].mxu0
  %v9573 = vadd.f32 %v184, %v9572
  %v9574 = vpop.f32.mrb[0].mxu0
  %9575 = vmatprep.mubr.f32.mxu0 0.0
  %9576 = vmatmul.mubr.f32.gmra.mrb[0].mxu0 %v9402
  %v9577 = vpop.f32.mrb[0].mxu0
  %v9578 = vadd.f32 %v185, %v9577
  %v9579 = vpop.f32.mrb[0].mxu0
  %9580 = vdwg.mxu0
  %9581 = vmax.xlane.f32.xlu0 %v9503
  %v9582 = vpop.xlane.xlu0 %9581
  %9583 = vmax.xlane.f32.xlu0 %v9508
  %v9584 = vpop.xlane.xlu0 %9583
  %9585 = vmax.xlane.f32.xlu0 %v9513
  %v9586 = vpop.xlane.xlu0 %9585
  %9587 = vmax.xlane.f32.xlu0 %v9518
  %v9588 = vpop.xlane.xlu0 %9587
  %9589 = vmax.xlane.f32.xlu0 %v9523
  %v9590 = vpop.xlane.xlu0 %9589
  %9591 = vmax.xlane.f32.xlu0 %v9528
  %v9592 = vpop.xlane.xlu0 %9591
  %9593 = vmax.xlane.f32.xlu0 %v9533
  %v9594 = vpop.xlane.xlu0 %9593
  %9595 = vmax.xlane.f32.xlu0 %v9538
  %v9596 = vpop.xlane.xlu0 %9595
  %9597 = vmax.xlane.f32.xlu0 %v9543
  %v9598 = vpop.xlane.xlu0 %9597
  %9599 = vmax.xlane.f32.xlu0 %v9548
  %v9600 = vpop.xlane.xlu0 %9599
  %9601 = vmax.xlane.f32.xlu0 %v9553
  %v9602 = vpop.xlane.xlu0 %9601
  %9603 = vmax.xlane.f32.xlu0 %v9558
  %v9604 = vpop.xlane.xlu0 %9603
  %9605 = vmax.xlane.f32.xlu0 %v9563
  %v9606 = vpop.xlane.xlu0 %9605
  %9607 = vmax.xlane.f32.xlu0 %v9568
  %v9608 = vpop.xlane.xlu0 %9607
  %9609 = vmax.xlane.f32.xlu0 %v9573
  %v9610 = vpop.xlane.xlu0 %9609
  %9611 = vmax.xlane.f32.xlu0 %v9578
  %v9612 = vpop.xlane.xlu0 %9611
  %v9613 = vsub.f32 %v9503, %v9582
  %v9614 = vsub.f32 %v9508, %v9584
  %v9615 = vsub.f32 %v9513, %v9586
  %v9616 = vsub.f32 %v9518, %v9588
  %v9617 = vsub.f32 %v9523, %v9590
  %v9618 = vsub.f32 %v9528, %v9592
  %v9619 = vsub.f32 %v9533, %v9594
  %v9620 = vsub.f32 %v9538, %v9596
  %v9621 = vsub.f32 %v9543, %v9598
  %v9622 = vsub.f32 %v9548, %v9600
  %v9623 = vsub.f32 %v9553, %v9602
  %v9624 = vsub.f32 %v9558, %v9604
  %v9625 = vsub.f32 %v9563, %v9606
  %v9626 = vsub.f32 %v9568, %v9608
  %v9627 = vsub.f32 %v9573, %v9610
  %v9628 = vsub.f32 %v9578, %v9612
  %v9629 = vmul.f32 %v9613, 1.442695
  %v9630 = vpow.pop %v9629
  %v9631 = vmul.f32 %v9614, 1.442695
  %v9632 = vpow.pop %v9631
  %v9633 = vmul.f32 %v9615, 1.442695
  %v9634 = vpow.pop %v9633
  %v9635 = vmul.f32 %v9616, 1.442695
  %v9636 = vpow.pop %v9635
  %v9637 = vmul.f32 %v9617, 1.442695
  %v9638 = vpow.pop %v9637
  %v9639 = vmul.f32 %v9618, 1.442695
  %v9640 = vpow.pop %v9639
  %v9641 = vmul.f32 %v9619, 1.442695
  %v9642 = vpow.pop %v9641
  %v9643 = vmul.f32 %v9620, 1.442695
  %v9644 = vpow.pop %v9643
  %v9645 = vmul.f32 %v9621, 1.442695
  %v9646 = vpow.pop %v9645
  %v9647 = vmul.f32 %v9622, 1.442695
  %v9648 = vpow.pop %v9647
  %v9649 = vmul.f32 %v9623, 1.442695
  %v9650 = vpow.pop %v9649
  %v9651 = vmul.f32 %v9624, 1.442695
  %v9652 = vpow.pop %v9651
  %v9653 = vmul.f32 %v9625, 1.442695
  %v9654 = vpow.pop %v9653
  %v9655 = vmul.f32 %v9626, 1.442695
  %v9656 = vpow.pop %v9655
  %v9657 = vmul.f32 %v9627, 1.442695
  %v9658 = vpow.pop %v9657
  %v9659 = vmul.f32 %v9628, 1.442695
  %v9660 = vpow.pop %v9659
  %9661 = vadd.xlane.f32.xlu0 %v9630
  %v9662 = vpop.xlane.xlu0 %9661
  %9663 = vadd.xlane.f32.xlu0 %v9632
  %v9664 = vpop.xlane.xlu0 %9663
  %9665 = vadd.xlane.f32.xlu0 %v9634
  %v9666 = vpop.xlane.xlu0 %9665
  %9667 = vadd.xlane.f32.xlu0 %v9636
  %v9668 = vpop.xlane.xlu0 %9667
  %9669 = vadd.xlane.f32.xlu0 %v9638
  %v9670 = vpop.xlane.xlu0 %9669
  %9671 = vadd.xlane.f32.xlu0 %v9640
  %v9672 = vpop.xlane.xlu0 %9671
  %9673 = vadd.xlane.f32.xlu0 %v9642
  %v9674 = vpop.xlane.xlu0 %9673
  %9675 = vadd.xlane.f32.xlu0 %v9644
  %v9676 = vpop.xlane.xlu0 %9675
  %9677 = vadd.xlane.f32.xlu0 %v9646
  %v9678 = vpop.xlane.xlu0 %9677
  %9679 = vadd.xlane.f32.xlu0 %v9648
  %v9680 = vpop.xlane.xlu0 %9679
  %9681 = vadd.xlane.f32.xlu0 %v9650
  %v9682 = vpop.xlane.xlu0 %9681
  %9683 = vadd.xlane.f32.xlu0 %v9652
  %v9684 = vpop.xlane.xlu0 %9683
  %9685 = vadd.xlane.f32.xlu0 %v9654
  %v9686 = vpop.xlane.xlu0 %9685
  %9687 = vadd.xlane.f32.xlu0 %v9656
  %v9688 = vpop.xlane.xlu0 %9687
  %9689 = vadd.xlane.f32.xlu0 %v9658
  %v9690 = vpop.xlane.xlu0 %9689
  %9691 = vadd.xlane.f32.xlu0 %v9660
  %v9692 = vpop.xlane.xlu0 %9691
  %v9693 = vrcp.pop %v9662
  %v9694 = vrcp.pop %v9664
  %v9695 = vrcp.pop %v9666
  %v9696 = vrcp.pop %v9668
  %v9697 = vrcp.pop %v9670
  %v9698 = vrcp.pop %v9672
  %v9699 = vrcp.pop %v9674
  %v9700 = vrcp.pop %v9676
  %v9701 = vrcp.pop %v9678
  %v9702 = vrcp.pop %v9680
  %v9703 = vrcp.pop %v9682
  %v9704 = vrcp.pop %v9684
  %v9705 = vrcp.pop %v9686
  %v9706 = vrcp.pop %v9688
  %v9707 = vrcp.pop %v9690
  %v9708 = vrcp.pop %v9692
  %v9709 = vmul.f32 %v9630, %v9693
  %v9710 = vmul.f32 %v9632, %v9694
  %v9711 = vmul.f32 %v9634, %v9695
  %v9712 = vmul.f32 %v9636, %v9696
  %v9713 = vmul.f32 %v9638, %v9697
  %v9714 = vmul.f32 %v9640, %v9698
  %v9715 = vmul.f32 %v9642, %v9699
  %v9716 = vmul.f32 %v9644, %v9700
  %v9717 = vmul.f32 %v9646, %v9701
  %v9718 = vmul.f32 %v9648, %v9702
  %v9719 = vmul.f32 %v9650, %v9703
  %v9720 = vmul.f32 %v9652, %v9704
  %v9721 = vmul.f32 %v9654, %v9705
  %v9722 = vmul.f32 %v9656, %v9706
  %v9723 = vmul.f32 %v9658, %v9707
  %v9724 = vmul.f32 %v9660, %v9708
  %9725 = vrot.lane.b32.xlu0 %v7240, 40
  %v9726 = vpop.permute.xlu0 %9725
  %9727 = vrot.lane.b32.xlu0 %v7245, 40
  %v9728 = vpop.permute.xlu0 %9727
  %9729 = vrot.lane.b32.xlu0 %v7250, 40
  %v9730 = vpop.permute.xlu0 %9729
  %9731 = vrot.lane.b32.xlu0 %v7255, 40
  %v9732 = vpop.permute.xlu0 %9731
  %9733 = vrot.lane.b32.xlu0 %v7260, 40
  %v9734 = vpop.permute.xlu0 %9733
  %9735 = vrot.lane.b32.xlu0 %v7265, 40
  %v9736 = vpop.permute.xlu0 %9735
  %9737 = vrot.lane.b32.xlu0 %v7270, 40
  %v9738 = vpop.permute.xlu0 %9737
  %9739 = vrot.lane.b32.xlu0 %v7275, 40
  %v9740 = vpop.permute.xlu0 %9739
  %9741 = vrot.lane.b32.xlu0 %v7280, 40
  %v9742 = vpop.permute.xlu0 %9741
  %9743 = vrot.lane.b32.xlu0 %v7285, 40
  %v9744 = vpop.permute.xlu0 %9743
  %9745 = vrot.lane.b32.xlu0 %v7290, 40
  %v9746 = vpop.permute.xlu0 %9745
  %9747 = vrot.lane.b32.xlu0 %v7295, 40
  %v9748 = vpop.permute.xlu0 %9747
  %9749 = vrot.lane.b32.xlu0 %v7300, 40
  %v9750 = vpop.permute.xlu0 %9749
  %9751 = vrot.lane.b32.xlu0 %v7305, 40
  %v9752 = vpop.permute.xlu0 %9751
  %9753 = vrot.lane.b32.xlu0 %v7310, 40
  %v9754 = vpop.permute.xlu0 %9753
  %9755 = vrot.lane.b32.xlu0 %v7315, 40
  %v9756 = vpop.permute.xlu0 %9755
  %9773 = vmatprep.subr.mxu0 0.0
  %9774 = vmatpush1.msra.mxu0 %v9726
  %9775 = vmatprep.subr.mxu0 0.0
  %9776 = vmatpush1.msra.mxu0 %v9728
  %9777 = vmatprep.subr.mxu0 0.0
  %9778 = vmatpush1.msra.mxu0 %v9730
  %9779 = vmatprep.subr.mxu0 0.0
  %9780 = vmatpush1.msra.mxu0 %v9732
  %9781 = vmatprep.subr.mxu0 0.0
  %9782 = vmatpush1.msra.mxu0 %v9734
  %9783 = vmatprep.subr.mxu0 0.0
  %9784 = vmatpush1.msra.mxu0 %v9736
  %9785 = vmatprep.subr.mxu0 0.0
  %9786 = vmatpush1.msra.mxu0 %v9738
  %9787 = vmatprep.subr.mxu0 0.0
  %9788 = vmatpush1.msra.mxu0 %v9740
  %9789 = vmatprep.subr.mxu0 0.0
  %9790 = vmatpush1.msra.mxu0 %v9742
  %9791 = vmatprep.subr.mxu0 0.0
  %9792 = vmatpush1.msra.mxu0 %v9744
  %9793 = vmatprep.subr.mxu0 0.0
  %9794 = vmatpush1.msra.mxu0 %v9746
  %9795 = vmatprep.subr.mxu0 0.0
  %9796 = vmatpush1.msra.mxu0 %v9748
  %9797 = vmatprep.subr.mxu0 0.0
  %9798 = vmatpush1.msra.mxu0 %v9750
  %9799 = vmatprep.subr.mxu0 0.0
  %9800 = vmatpush1.msra.mxu0 %v9752
  %9801 = vmatprep.subr.mxu0 0.0
  %9802 = vmatpush1.msra.mxu0 %v9754
  %9803 = vmatprep.subr.mxu0 0.0
  %9804 = vmatpush1.msra.mxu0 %v9756
  %9805 = vmatprep.subr.mxu0 0.0
  %9806 = vmatpush1.msra.mxu0 0.0
  %9807 = vmatprep.subr.mxu0 0.0
  %9808 = vmatpush1.msra.mxu0 0.0
  %9809 = vmatprep.subr.mxu0 0.0
  %9810 = vmatpush1.msra.mxu0 0.0
  %9811 = vmatprep.subr.mxu0 0.0
  %9812 = vmatpush1.msra.mxu0 0.0
  %9813 = vmatprep.subr.mxu0 0.0
  %9814 = vmatpush1.msra.mxu0 0.0
  %9815 = vmatprep.subr.mxu0 0.0
  %9816 = vmatpush1.msra.mxu0 0.0
  %9817 = vmatprep.subr.mxu0 0.0
  %9818 = vmatpush1.msra.mxu0 0.0
  %9819 = vmatprep.subr.mxu0 0.0
  %9820 = vmatpush1.msra.mxu0 0.0
  %9821 = vmatprep.subr.mxu0 0.0
  %9822 = vmatpush1.msra.mxu0 0.0
  %9823 = vmatprep.subr.mxu0 0.0
  %9824 = vmatpush1.msra.mxu0 0.0
  %9825 = vmatprep.subr.mxu0 0.0
  %9826 = vmatpush1.msra.mxu0 0.0
  %9827 = vmatprep.subr.mxu0 0.0
  %9828 = vmatpush1.msra.mxu0 0.0
  %9829 = vmatprep.subr.mxu0 0.0
  %9830 = vmatpush1.msra.mxu0 0.0
  %9831 = vmatprep.subr.mxu0 0.0
  %9832 = vmatpush1.msra.mxu0 0.0
  %9833 = vmatprep.subr.mxu0 0.0
  %9834 = vmatpush1.msra.mxu0 0.0
  %9835 = vmatprep.subr.mxu0 0.0
  %9836 = vmatpush1.msra.mxu0 0.0
  %9837 = vmatprep.mubr.f32.mxu0 0.0
  %9838 = vmatmul.mubr.f32.gmra.mrb[0].mxu0 %v9709
  %v9839 = vpop.f32.mrb[0].mxu0
  %v9840 = vadd.f32 0.0, %v9839
  %v9841 = vpop.f32.mrb[0].mxu0
  %9842 = vmatprep.mubr.f32.mxu0 0.0
  %9843 = vmatmul.mubr.f32.gmra.mrb[0].mxu0 %v9710
  %v9844 = vpop.f32.mrb[0].mxu0
  %v9845 = vadd.f32 0.0, %v9844
  %v9846 = vpop.f32.mrb[0].mxu0
  %9847 = vmatprep.mubr.f32.mxu0 0.0
  %9848 = vmatmul.mubr.f32.gmra.mrb[0].mxu0 %v9711
  %v9849 = vpop.f32.mrb[0].mxu0
  %v9850 = vadd.f32 0.0, %v9849
  %v9851 = vpop.f32.mrb[0].mxu0
  %9852 = vmatprep.mubr.f32.mxu0 0.0
  %9853 = vmatmul.mubr.f32.gmra.mrb[0].mxu0 %v9712
  %v9854 = vpop.f32.mrb[0].mxu0
  %v9855 = vadd.f32 0.0, %v9854
  %v9856 = vpop.f32.mrb[0].mxu0
  %9857 = vmatprep.mubr.f32.mxu0 0.0
  %9858 = vmatmul.mubr.f32.gmra.mrb[0].mxu0 %v9713
  %v9859 = vpop.f32.mrb[0].mxu0
  %v9860 = vadd.f32 0.0, %v9859
  %v9861 = vpop.f32.mrb[0].mxu0
  %9862 = vmatprep.mubr.f32.mxu0 0.0
  %9863 = vmatmul.mubr.f32.gmra.mrb[0].mxu0 %v9714
  %v9864 = vpop.f32.mrb[0].mxu0
  %v9865 = vadd.f32 0.0, %v9864
  %v9866 = vpop.f32.mrb[0].mxu0
  %9867 = vmatprep.mubr.f32.mxu0 0.0
  %9868 = vmatmul.mubr.f32.gmra.mrb[0].mxu0 %v9715
  %v9869 = vpop.f32.mrb[0].mxu0
  %v9870 = vadd.f32 0.0, %v9869
  %v9871 = vpop.f32.mrb[0].mxu0
  %9872 = vmatprep.mubr.f32.mxu0 0.0
  %9873 = vmatmul.mubr.f32.gmra.mrb[0].mxu0 %v9716
  %v9874 = vpop.f32.mrb[0].mxu0
  %v9875 = vadd.f32 0.0, %v9874
  %v9876 = vpop.f32.mrb[0].mxu0
  %9877 = vmatprep.mubr.f32.mxu0 0.0
  %9878 = vmatmul.mubr.f32.gmra.mrb[0].mxu0 %v9717
  %v9879 = vpop.f32.mrb[0].mxu0
  %v9880 = vadd.f32 0.0, %v9879
  %v9881 = vpop.f32.mrb[0].mxu0
  %9882 = vmatprep.mubr.f32.mxu0 0.0
  %9883 = vmatmul.mubr.f32.gmra.mrb[0].mxu0 %v9718
  %v9884 = vpop.f32.mrb[0].mxu0
  %v9885 = vadd.f32 0.0, %v9884
  %v9886 = vpop.f32.mrb[0].mxu0
  %9887 = vmatprep.mubr.f32.mxu0 0.0
  %9888 = vmatmul.mubr.f32.gmra.mrb[0].mxu0 %v9719
  %v9889 = vpop.f32.mrb[0].mxu0
  %v9890 = vadd.f32 0.0, %v9889
  %v9891 = vpop.f32.mrb[0].mxu0
  %9892 = vmatprep.mubr.f32.mxu0 0.0
  %9893 = vmatmul.mubr.f32.gmra.mrb[0].mxu0 %v9720
  %v9894 = vpop.f32.mrb[0].mxu0
  %v9895 = vadd.f32 0.0, %v9894
  %v9896 = vpop.f32.mrb[0].mxu0
  %9897 = vmatprep.mubr.f32.mxu0 0.0
  %9898 = vmatmul.mubr.f32.gmra.mrb[0].mxu0 %v9721
  %v9899 = vpop.f32.mrb[0].mxu0
  %v9900 = vadd.f32 0.0, %v9899
  %v9901 = vpop.f32.mrb[0].mxu0
  %9902 = vmatprep.mubr.f32.mxu0 0.0
  %9903 = vmatmul.mubr.f32.gmra.mrb[0].mxu0 %v9722
  %v9904 = vpop.f32.mrb[0].mxu0
  %v9905 = vadd.f32 0.0, %v9904
  %v9906 = vpop.f32.mrb[0].mxu0
  %9907 = vmatprep.mubr.f32.mxu0 0.0
  %9908 = vmatmul.mubr.f32.gmra.mrb[0].mxu0 %v9723
  %v9909 = vpop.f32.mrb[0].mxu0
  %v9910 = vadd.f32 0.0, %v9909
  %v9911 = vpop.f32.mrb[0].mxu0
  %9912 = vmatprep.mubr.f32.mxu0 0.0
  %9913 = vmatmul.mubr.f32.gmra.mrb[0].mxu0 %v9724
  %v9914 = vpop.f32.mrb[0].mxu0
  %v9915 = vadd.f32 0.0, %v9914
  %v9916 = vpop.f32.mrb[0].mxu0
  %9917 = vdwg.mxu0
  %9934 = vrot.lane.b32.xlu0 %v9840, 24
  %v9935 = vpop.permute.xlu0 %9934
  %9936 = vrot.lane.b32.xlu0 %v9845, 24
  %v9937 = vpop.permute.xlu0 %9936
  %9938 = vrot.lane.b32.xlu0 %v9850, 24
  %v9939 = vpop.permute.xlu0 %9938
  %9940 = vrot.lane.b32.xlu0 %v9855, 24
  %v9941 = vpop.permute.xlu0 %9940
  %9942 = vrot.lane.b32.xlu0 %v9860, 24
  %v9943 = vpop.permute.xlu0 %9942
  %9944 = vrot.lane.b32.xlu0 %v9865, 24
  %v9945 = vpop.permute.xlu0 %9944
  %9946 = vrot.lane.b32.xlu0 %v9870, 24
  %v9947 = vpop.permute.xlu0 %9946
  %9948 = vrot.lane.b32.xlu0 %v9875, 24
  %v9949 = vpop.permute.xlu0 %9948
  %9950 = vrot.lane.b32.xlu0 %v9880, 24
  %v9951 = vpop.permute.xlu0 %9950
  %9952 = vrot.lane.b32.xlu0 %v9885, 24
  %v9953 = vpop.permute.xlu0 %9952
  %9954 = vrot.lane.b32.xlu0 %v9890, 24
  %v9955 = vpop.permute.xlu0 %9954
  %9956 = vrot.lane.b32.xlu0 %v9895, 24
  %v9957 = vpop.permute.xlu0 %9956
  %9958 = vrot.lane.b32.xlu0 %v9900, 24
  %v9959 = vpop.permute.xlu0 %9958
  %9960 = vrot.lane.b32.xlu0 %v9905, 24
  %v9961 = vpop.permute.xlu0 %9960
  %9962 = vrot.lane.b32.xlu0 %v9910, 24
  %v9963 = vpop.permute.xlu0 %9962
  %9964 = vrot.lane.b32.xlu0 %v9915, 24
  %v9965 = vpop.permute.xlu0 %9964
  %9982 = vst.msk [vmem:[#allocation2] sm:$0xff] %vm5024, %v9935
  %9983 = vst.msk [vmem:[#allocation2 + $0x8] sm:$0xff] %vm5024, %v9937
  %9984 = vst.msk [vmem:[#allocation2 + $0x10] sm:$0xff] %vm5024, %v9939
  %9985 = vst.msk [vmem:[#allocation2 + $0x18] sm:$0xff] %vm5024, %v9941
  %9986 = vst.msk [vmem:[#allocation2 + $0x20] sm:$0xff] %vm5024, %v9943
  %9987 = vst.msk [vmem:[#allocation2 + $0x28] sm:$0xff] %vm5024, %v9945
  %9988 = vst.msk [vmem:[#allocation2 + $0x30] sm:$0xff] %vm5024, %v9947
  %9989 = vst.msk [vmem:[#allocation2 + $0x38] sm:$0xff] %vm5024, %v9949
  %9990 = vst.msk [vmem:[#allocation2 + $0x40] sm:$0xff] %vm5024, %v9951
  %9991 = vst.msk [vmem:[#allocation2 + $0x48] sm:$0xff] %vm5024, %v9953
  %9992 = vst.msk [vmem:[#allocation2 + $0x50] sm:$0xff] %vm5024, %v9955
  %9993 = vst.msk [vmem:[#allocation2 + $0x58] sm:$0xff] %vm5024, %v9957
  %9994 = vst.msk [vmem:[#allocation2 + $0x60] sm:$0xff] %vm5024, %v9959
  %9995 = vst.msk [vmem:[#allocation2 + $0x68] sm:$0xff] %vm5024, %v9961
  %9996 = vst.msk [vmem:[#allocation2 + $0x70] sm:$0xff] %vm5024, %v9963
  %9997 = vst.msk [vmem:[#allocation2 + $0x78] sm:$0xff] %vm5024, %v9965
  %v9998 = vld [vmem:[#allocation2] sm:$0xff]
  %v9999 = vld [vmem:[#allocation2 + $0x8] sm:$0xff]
  %v10000 = vld [vmem:[#allocation2 + $0x10] sm:$0xff]
  %v10001 = vld [vmem:[#allocation2 + $0x18] sm:$0xff]
  %v10002 = vld [vmem:[#allocation2 + $0x20] sm:$0xff]
  %v10003 = vld [vmem:[#allocation2 + $0x28] sm:$0xff]
  %v10004 = vld [vmem:[#allocation2 + $0x30] sm:$0xff]
  %v10005 = vld [vmem:[#allocation2 + $0x38] sm:$0xff]
  %v10006 = vld [vmem:[#allocation2 + $0x40] sm:$0xff]
  %v10007 = vld [vmem:[#allocation2 + $0x48] sm:$0xff]
  %v10008 = vld [vmem:[#allocation2 + $0x50] sm:$0xff]
  %v10009 = vld [vmem:[#allocation2 + $0x58] sm:$0xff]
  %v10010 = vld [vmem:[#allocation2 + $0x60] sm:$0xff]
  %v10011 = vld [vmem:[#allocation2 + $0x68] sm:$0xff]
  %v10012 = vld [vmem:[#allocation2 + $0x70] sm:$0xff]
  %v10013 = vld [vmem:[#allocation2 + $0x78] sm:$0xff]
  %10018 = vrot.lane.b32.xlu0 %v6077, 96
  %v10019 = vpop.permute.xlu0 %10018
  %10020 = vrot.lane.b32.xlu0 %v6079, 96
  %v10021 = vpop.permute.xlu0 %10020
  %10022 = vrot.lane.b32.xlu0 %v6081, 96
  %v10023 = vpop.permute.xlu0 %10022
  %10024 = vrot.lane.b32.xlu0 %v6083, 96
  %v10025 = vpop.permute.xlu0 %10024
  %10031 = vrot.lane.b32.xlu0 %v7124, 32
  %v10032 = vpop.permute.xlu0 %10031
  %v10035 = vsel %vm505, %v9998, 0
  %v10038 = vsel %vm505, %v9999, 0
  %v10041 = vsel %vm505, %v10000, 0
  %v10044 = vsel %vm505, %v10001, 0
  %v10047 = vsel %vm505, %v10002, 0
  %v10050 = vsel %vm505, %v10003, 0
  %v10053 = vsel %vm505, %v10004, 0
  %v10056 = vsel %vm505, %v10005, 0
  %v10059 = vsel %vm505, %v10006, 0
  %v10062 = vsel %vm505, %v10007, 0
  %v10065 = vsel %vm505, %v10008, 0
  %v10068 = vsel %vm505, %v10009, 0
  %v10071 = vsel %vm505, %v10010, 0
  %v10074 = vsel %vm505, %v10011, 0
  %v10077 = vsel %vm505, %v10012, 0
  %v10080 = vsel %vm505, %v10013, 0
  %10082 = vmatprep.subr.mxu0 0.0
  %10083 = vmatpush1.msra.mxu0 %v10019
  %10084 = vmatprep.subr.mxu0 0.0
  %10085 = vmatpush1.msra.mxu0 %v10021
  %10086 = vmatprep.subr.mxu0 0.0
  %10087 = vmatpush1.msra.mxu0 %v10023
  %10088 = vmatprep.subr.mxu0 0.0
  %10089 = vmatpush1.msra.mxu0 %v10025
  %10090 = vmatprep.subr.mxu0 0.0
  %10091 = vmatpush1.msra.mxu0 0.0
  %10092 = vmatprep.subr.mxu0 0.0
  %10093 = vmatpush1.msra.mxu0 0.0
  %10094 = vmatprep.subr.mxu0 0.0
  %10095 = vmatpush1.msra.mxu0 0.0
  %10096 = vmatprep.subr.mxu0 0.0
  %10097 = vmatpush1.msra.mxu0 0.0
  %10098 = vmatprep.subr.mxu0 0.0
  %10099 = vmatpush1.msra.mxu0 0.0
  %10100 = vmatprep.subr.mxu0 0.0
  %10101 = vmatpush1.msra.mxu0 0.0
  %10102 = vmatprep.subr.mxu0 0.0
  %10103 = vmatpush1.msra.mxu0 0.0
  %10104 = vmatprep.subr.mxu0 0.0
  %10105 = vmatpush1.msra.mxu0 0.0
  %10106 = vmatprep.subr.mxu0 0.0
  %10107 = vmatpush1.msra.mxu0 0.0
  %10108 = vmatprep.subr.mxu0 0.0
  %10109 = vmatpush1.msra.mxu0 0.0
  %10110 = vmatprep.subr.mxu0 0.0
  %10111 = vmatpush1.msra.mxu0 0.0
  %10112 = vmatprep.subr.mxu0 0.0
  %10113 = vmatpush1.msra.mxu0 0.0
  %10114 = vmatprep.subr.mxu0 0.0
  %10115 = vmatpush1.msra.mxu0 0.0
  %10116 = vmatprep.subr.mxu0 0.0
  %10117 = vmatpush1.msra.mxu0 0.0
  %10118 = vmatprep.subr.mxu0 0.0
  %10119 = vmatpush1.msra.mxu0 0.0
  %10120 = vmatprep.subr.mxu0 0.0
  %10121 = vmatpush1.msra.mxu0 0.0
  %10122 = vmatprep.subr.mxu0 0.0
  %10123 = vmatpush1.msra.mxu0 0.0
  %10124 = vmatprep.subr.mxu0 0.0
  %10125 = vmatpush1.msra.mxu0 0.0
  %10126 = vmatprep.subr.mxu0 0.0
  %10127 = vmatpush1.msra.mxu0 0.0
  %10128 = vmatprep.subr.mxu0 0.0
  %10129 = vmatpush1.msra.mxu0 0.0
  %10130 = vmatprep.subr.mxu0 0.0
  %10131 = vmatpush1.msra.mxu0 0.0
  %10132 = vmatprep.subr.mxu0 0.0
  %10133 = vmatpush1.msra.mxu0 0.0
  %10134 = vmatprep.subr.mxu0 0.0
  %10135 = vmatpush1.msra.mxu0 0.0
  %10136 = vmatprep.subr.mxu0 0.0
  %10137 = vmatpush1.msra.mxu0 0.0
  %10138 = vmatprep.subr.mxu0 0.0
  %10139 = vmatpush1.msra.mxu0 0.0
  %10140 = vmatprep.subr.mxu0 0.0
  %10141 = vmatpush1.msra.mxu0 0.0
  %10142 = vmatprep.subr.mxu0 0.0
  %10143 = vmatpush1.msra.mxu0 0.0
  %10144 = vmatprep.subr.mxu0 0.0
  %10145 = vmatpush1.msra.mxu0 0.0
  %10146 = vmatprep.mubr.f32.mxu0 0.0
  %10147 = vmatmul.mubr.f32.gmra.mrb[0].mxu0 %v10035
  %v10148 = vpop.f32.mrb[0].mxu0
  %v10149 = vadd.f32 %v10032, %v10148
  %v10150 = vpop.f32.mrb[0].mxu0
  %10151 = vmatprep.mubr.f32.mxu0 0.0
  %10152 = vmatmul.mubr.f32.gmra.mrb[0].mxu0 %v10038
  %v10153 = vpop.f32.mrb[0].mxu0
  %v10154 = vadd.f32 %v10032, %v10153
  %v10155 = vpop.f32.mrb[0].mxu0
  %10156 = vmatprep.mubr.f32.mxu0 0.0
  %10157 = vmatmul.mubr.f32.gmra.mrb[0].mxu0 %v10041
  %v10158 = vpop.f32.mrb[0].mxu0
  %v10159 = vadd.f32 %v10032, %v10158
  %v10160 = vpop.f32.mrb[0].mxu0
  %10161 = vmatprep.mubr.f32.mxu0 0.0
  %10162 = vmatmul.mubr.f32.gmra.mrb[0].mxu0 %v10044
  %v10163 = vpop.f32.mrb[0].mxu0
  %v10164 = vadd.f32 %v10032, %v10163
  %v10165 = vpop.f32.mrb[0].mxu0
  %10166 = vmatprep.mubr.f32.mxu0 0.0
  %10167 = vmatmul.mubr.f32.gmra.mrb[0].mxu0 %v10047
  %v10168 = vpop.f32.mrb[0].mxu0
  %v10169 = vadd.f32 %v10032, %v10168
  %v10170 = vpop.f32.mrb[0].mxu0
  %10171 = vmatprep.mubr.f32.mxu0 0.0
  %10172 = vmatmul.mubr.f32.gmra.mrb[0].mxu0 %v10050
  %v10173 = vpop.f32.mrb[0].mxu0
  %v10174 = vadd.f32 %v10032, %v10173
  %v10175 = vpop.f32.mrb[0].mxu0
  %10176 = vmatprep.mubr.f32.mxu0 0.0
  %10177 = vmatmul.mubr.f32.gmra.mrb[0].mxu0 %v10053
  %v10178 = vpop.f32.mrb[0].mxu0
  %v10179 = vadd.f32 %v10032, %v10178
  %v10180 = vpop.f32.mrb[0].mxu0
  %10181 = vmatprep.mubr.f32.mxu0 0.0
  %10182 = vmatmul.mubr.f32.gmra.mrb[0].mxu0 %v10056
  %v10183 = vpop.f32.mrb[0].mxu0
  %v10184 = vadd.f32 %v10032, %v10183
  %v10185 = vpop.f32.mrb[0].mxu0
  %10186 = vmatprep.mubr.f32.mxu0 0.0
  %10187 = vmatmul.mubr.f32.gmra.mrb[0].mxu0 %v10059
  %v10188 = vpop.f32.mrb[0].mxu0
  %v10189 = vadd.f32 %v10032, %v10188
  %v10190 = vpop.f32.mrb[0].mxu0
  %10191 = vmatprep.mubr.f32.mxu0 0.0
  %10192 = vmatmul.mubr.f32.gmra.mrb[0].mxu0 %v10062
  %v10193 = vpop.f32.mrb[0].mxu0
  %v10194 = vadd.f32 %v10032, %v10193
  %v10195 = vpop.f32.mrb[0].mxu0
  %10196 = vmatprep.mubr.f32.mxu0 0.0
  %10197 = vmatmul.mubr.f32.gmra.mrb[0].mxu0 %v10065
  %v10198 = vpop.f32.mrb[0].mxu0
  %v10199 = vadd.f32 %v10032, %v10198
  %v10200 = vpop.f32.mrb[0].mxu0
  %10201 = vmatprep.mubr.f32.mxu0 0.0
  %10202 = vmatmul.mubr.f32.gmra.mrb[0].mxu0 %v10068
  %v10203 = vpop.f32.mrb[0].mxu0
  %v10204 = vadd.f32 %v10032, %v10203
  %v10205 = vpop.f32.mrb[0].mxu0
  %10206 = vmatprep.mubr.f32.mxu0 0.0
  %10207 = vmatmul.mubr.f32.gmra.mrb[0].mxu0 %v10071
  %v10208 = vpop.f32.mrb[0].mxu0
  %v10209 = vadd.f32 %v10032, %v10208
  %v10210 = vpop.f32.mrb[0].mxu0
  %10211 = vmatprep.mubr.f32.mxu0 0.0
  %10212 = vmatmul.mubr.f32.gmra.mrb[0].mxu0 %v10074
  %v10213 = vpop.f32.mrb[0].mxu0
  %v10214 = vadd.f32 %v10032, %v10213
  %v10215 = vpop.f32.mrb[0].mxu0
  %10216 = vmatprep.mubr.f32.mxu0 0.0
  %10217 = vmatmul.mubr.f32.gmra.mrb[0].mxu0 %v10077
  %v10218 = vpop.f32.mrb[0].mxu0
  %v10219 = vadd.f32 %v10032, %v10218
  %v10220 = vpop.f32.mrb[0].mxu0
  %10221 = vmatprep.mubr.f32.mxu0 0.0
  %10222 = vmatmul.mubr.f32.gmra.mrb[0].mxu0 %v10080
  %v10223 = vpop.f32.mrb[0].mxu0
  %v10224 = vadd.f32 %v10032, %v10223
  %v10225 = vpop.f32.mrb[0].mxu0
  %10226 = vdwg.mxu0
  %v10227 = vadd.f32 %v10149, %v6059
  %v10228 = vadd.f32 %v10154, %v6060
  %v10229 = vadd.f32 %v10159, %v6061
  %v10230 = vadd.f32 %v10164, %v6062
  %v10231 = vadd.f32 %v10169, %v6063
  %v10232 = vadd.f32 %v10174, %v6064
  %v10233 = vadd.f32 %v10179, %v6065
  %v10234 = vadd.f32 %v10184, %v6066
  %v10235 = vadd.f32 %v10189, %v6067
  %v10236 = vadd.f32 %v10194, %v6068
  %v10237 = vadd.f32 %v10199, %v6069
  %v10238 = vadd.f32 %v10204, %v6070
  %v10239 = vadd.f32 %v10209, %v6071
  %v10240 = vadd.f32 %v10214, %v6072
  %v10241 = vadd.f32 %v10219, %v6073
  %v10242 = vadd.f32 %v10224, %v6074
  %v10243 = vsel %vm505, %v10227, 0.0
  %v10244 = vsel %vm505, %v10228, 0.0
  %v10245 = vadd.f32 %v10243, %v10244
  %v10246 = vsel %vm505, %v10229, 0.0
  %v10247 = vadd.f32 %v10245, %v10246
  %v10248 = vsel %vm505, %v10230, 0.0
  %v10249 = vadd.f32 %v10247, %v10248
  %v10250 = vsel %vm505, %v10231, 0.0
  %v10251 = vadd.f32 %v10249, %v10250
  %v10252 = vsel %vm505, %v10232, 0.0
  %v10253 = vadd.f32 %v10251, %v10252
  %v10254 = vsel %vm505, %v10233, 0.0
  %v10255 = vadd.f32 %v10253, %v10254
  %v10256 = vsel %vm505, %v10234, 0.0
  %v10257 = vadd.f32 %v10255, %v10256
  %v10258 = vsel %vm505, %v10235, 0.0
  %v10259 = vadd.f32 %v10257, %v10258
  %v10260 = vsel %vm505, %v10236, 0.0
  %v10261 = vadd.f32 %v10259, %v10260
  %v10262 = vsel %vm505, %v10237, 0.0
  %v10263 = vadd.f32 %v10261, %v10262
  %v10264 = vsel %vm505, %v10238, 0.0
  %v10265 = vadd.f32 %v10263, %v10264
  %v10266 = vsel %vm505, %v10239, 0.0
  %v10267 = vadd.f32 %v10265, %v10266
  %v10268 = vsel %vm505, %v10240, 0.0
  %v10269 = vadd.f32 %v10267, %v10268
  %v10270 = vsel %vm505, %v10241, 0.0
  %v10271 = vadd.f32 %v10269, %v10270
  %v10272 = vsel %vm505, %v10242, 0.0
  %v10273 = vadd.f32 %v10271, %v10272
  %v10274 = vrot.slane %v10273, 4
  %v10275 = vadd.f32 %v10273, %v10274
  %v10276 = vrot.slane %v10275, 2
  %v10277 = vadd.f32 %v10275, %v10276
  %v10278 = vrot.slane %v10277, 1
  %v10279 = vadd.f32 %v10277, %v10278
  %v10280 = vmul.f32 %v10279, %v240
  %v10281 = vmul.f32 %v10227, %v10227
  %v10282 = vmul.f32 %v10228, %v10228
  %v10283 = vmul.f32 %v10229, %v10229
  %v10284 = vmul.f32 %v10230, %v10230
  %v10285 = vmul.f32 %v10231, %v10231
  %v10286 = vmul.f32 %v10232, %v10232
  %v10287 = vmul.f32 %v10233, %v10233
  %v10288 = vmul.f32 %v10234, %v10234
  %v10289 = vmul.f32 %v10235, %v10235
  %v10290 = vmul.f32 %v10236, %v10236
  %v10291 = vmul.f32 %v10237, %v10237
  %v10292 = vmul.f32 %v10238, %v10238
  %v10293 = vmul.f32 %v10239, %v10239
  %v10294 = vmul.f32 %v10240, %v10240
  %v10295 = vmul.f32 %v10241, %v10241
  %v10296 = vmul.f32 %v10242, %v10242
  %v10297 = vsel %vm505, %v10281, 0.0
  %v10298 = vsel %vm505, %v10282, 0.0
  %v10299 = vadd.f32 %v10297, %v10298
  %v10300 = vsel %vm505, %v10283, 0.0
  %v10301 = vadd.f32 %v10299, %v10300
  %v10302 = vsel %vm505, %v10284, 0.0
  %v10303 = vadd.f32 %v10301, %v10302
  %v10304 = vsel %vm505, %v10285, 0.0
  %v10305 = vadd.f32 %v10303, %v10304
  %v10306 = vsel %vm505, %v10286, 0.0
  %v10307 = vadd.f32 %v10305, %v10306
  %v10308 = vsel %vm505, %v10287, 0.0
  %v10309 = vadd.f32 %v10307, %v10308
  %v10310 = vsel %vm505, %v10288, 0.0
  %v10311 = vadd.f32 %v10309, %v10310
  %v10312 = vsel %vm505, %v10289, 0.0
  %v10313 = vadd.f32 %v10311, %v10312
  %v10314 = vsel %vm505, %v10290, 0.0
  %v10315 = vadd.f32 %v10313, %v10314
  %v10316 = vsel %vm505, %v10291, 0.0
  %v10317 = vadd.f32 %v10315, %v10316
  %v10318 = vsel %vm505, %v10292, 0.0
  %v10319 = vadd.f32 %v10317, %v10318
  %v10320 = vsel %vm505, %v10293, 0.0
  %v10321 = vadd.f32 %v10319, %v10320
  %v10322 = vsel %vm505, %v10294, 0.0
  %v10323 = vadd.f32 %v10321, %v10322
  %v10324 = vsel %vm505, %v10295, 0.0
  %v10325 = vadd.f32 %v10323, %v10324
  %v10326 = vsel %vm505, %v10296, 0.0
  %v10327 = vadd.f32 %v10325, %v10326
  %v10328 = vrot.slane %v10327, 4
  %v10329 = vadd.f32 %v10327, %v10328
  %v10330 = vrot.slane %v10329, 2
  %v10331 = vadd.f32 %v10329, %v10330
  %v10332 = vrot.slane %v10331, 1
  %v10333 = vadd.f32 %v10331, %v10332
  %v10334 = vmul.f32 %v10333, %v240
  %v10335 = vmul.f32 %v10280, %v10280
  %v10336 = vsub.f32 %v10334, %v10335
  %v10337 = vsub.f32 %v10227, %v10280
  %v10338 = vsub.f32 %v10228, %v10280
  %v10339 = vsub.f32 %v10229, %v10280
  %v10340 = vsub.f32 %v10230, %v10280
  %v10341 = vsub.f32 %v10231, %v10280
  %v10342 = vsub.f32 %v10232, %v10280
  %v10343 = vsub.f32 %v10233, %v10280
  %v10344 = vsub.f32 %v10234, %v10280
  %v10345 = vsub.f32 %v10235, %v10280
  %v10346 = vsub.f32 %v10236, %v10280
  %v10347 = vsub.f32 %v10237, %v10280
  %v10348 = vsub.f32 %v10238, %v10280
  %v10349 = vsub.f32 %v10239, %v10280
  %v10350 = vsub.f32 %v10240, %v10280
  %v10351 = vsub.f32 %v10241, %v10280
  %v10352 = vsub.f32 %v10242, %v10280
  %v10353 = vadd.f32 %v10336, 1e-05
  %v10354 = vrsqrt.pop %v10353
  %v10355 = vmul.f32 %v10337, %v10354
  %v10356 = vmul.f32 %v10338, %v10354
  %v10357 = vmul.f32 %v10339, %v10354
  %v10358 = vmul.f32 %v10340, %v10354
  %v10359 = vmul.f32 %v10341, %v10354
  %v10360 = vmul.f32 %v10342, %v10354
  %v10361 = vmul.f32 %v10343, %v10354
  %v10362 = vmul.f32 %v10344, %v10354
  %v10363 = vmul.f32 %v10345, %v10354
  %v10364 = vmul.f32 %v10346, %v10354
  %v10365 = vmul.f32 %v10347, %v10354
  %v10366 = vmul.f32 %v10348, %v10354
  %v10367 = vmul.f32 %v10349, %v10354
  %v10368 = vmul.f32 %v10350, %v10354
  %v10369 = vmul.f32 %v10351, %v10354
  %v10370 = vmul.f32 %v10352, %v10354
  %v10371 = vlaneseq
  %v10372 = vshrl.u32 %v10371, 7
  %v10373 = vsub.s32 2, %v10372
  %v10374 = vrot.slane %v6085, %v10373
  %v10375 = vmul.f32 %v10355, %v10374
  %v10376 = vmul.f32 %v10356, %v10374
  %v10377 = vmul.f32 %v10357, %v10374
  %v10378 = vmul.f32 %v10358, %v10374
  %v10379 = vmul.f32 %v10359, %v10374
  %v10380 = vmul.f32 %v10360, %v10374
  %v10381 = vmul.f32 %v10361, %v10374
  %v10382 = vmul.f32 %v10362, %v10374
  %v10383 = vmul.f32 %v10363, %v10374
  %v10384 = vmul.f32 %v10364, %v10374
  %v10385 = vmul.f32 %v10365, %v10374
  %v10386 = vmul.f32 %v10366, %v10374
  %v10387 = vmul.f32 %v10367, %v10374
  %v10388 = vmul.f32 %v10368, %v10374
  %v10389 = vmul.f32 %v10369, %v10374
  %v10390 = vmul.f32 %v10370, %v10374
  %10392 = vrot.lane.b32.xlu0 %v10374, 96
  %v10393 = vpop.permute.xlu0 %10392
  %v10395 = vadd.f32 %v10375, %v10393
  %v10396 = vadd.f32 %v10376, %v10393
  %v10397 = vadd.f32 %v10377, %v10393
  %v10398 = vadd.f32 %v10378, %v10393
  %v10399 = vadd.f32 %v10379, %v10393
  %v10400 = vadd.f32 %v10380, %v10393
  %v10401 = vadd.f32 %v10381, %v10393
  %v10402 = vadd.f32 %v10382, %v10393
  %v10403 = vadd.f32 %v10383, %v10393
  %v10404 = vadd.f32 %v10384, %v10393
  %v10405 = vadd.f32 %v10385, %v10393
  %v10406 = vadd.f32 %v10386, %v10393
  %v10407 = vadd.f32 %v10387, %v10393
  %v10408 = vadd.f32 %v10388, %v10393
  %v10409 = vadd.f32 %v10389, %v10393
  %v10410 = vadd.f32 %v10390, %v10393
  %v10411 = vadd.f32 %v7105, %v10395
  %v10412 = vadd.f32 %v7106, %v10396
  %v10413 = vadd.f32 %v7107, %v10397
  %v10414 = vadd.f32 %v7108, %v10398
  %v10415 = vadd.f32 %v7109, %v10399
  %v10416 = vadd.f32 %v7110, %v10400
  %v10417 = vadd.f32 %v7111, %v10401
  %v10418 = vadd.f32 %v7112, %v10402
  %v10419 = vadd.f32 %v7113, %v10403
  %v10420 = vadd.f32 %v7114, %v10404
  %v10421 = vadd.f32 %v7115, %v10405
  %v10422 = vadd.f32 %v7116, %v10406
  %v10423 = vadd.f32 %v7117, %v10407
  %v10424 = vadd.f32 %v7118, %v10408
  %v10425 = vadd.f32 %v7119, %v10409
  %v10426 = vadd.f32 %v7120, %v10410
  %10427 = vrot.lane.b32.xlu0 %v6077, 64
  %v10428 = vpop.permute.xlu0 %10427
  %10429 = vrot.lane.b32.xlu0 %v6079, 64
  %v10430 = vpop.permute.xlu0 %10429
  %10431 = vrot.lane.b32.xlu0 %v6081, 64
  %v10432 = vpop.permute.xlu0 %10431
  %10433 = vrot.lane.b32.xlu0 %v6083, 64
  %v10434 = vpop.permute.xlu0 %10433
  %10439 = vrot.lane.b32.xlu0 %v10374, 64
  %v10440 = vpop.permute.xlu0 %10439
  %v10443 = vsel %vm505, %v10411, 0
  %v10446 = vsel %vm505, %v10412, 0
  %v10449 = vsel %vm505, %v10413, 0
  %v10452 = vsel %vm505, %v10414, 0
  %v10455 = vsel %vm505, %v10415, 0
  %v10458 = vsel %vm505, %v10416, 0
  %v10461 = vsel %vm505, %v10417, 0
  %v10464 = vsel %vm505, %v10418, 0
  %v10467 = vsel %vm505, %v10419, 0
  %v10470 = vsel %vm505, %v10420, 0
  %v10473 = vsel %vm505, %v10421, 0
  %v10476 = vsel %vm505, %v10422, 0
  %v10479 = vsel %vm505, %v10423, 0
  %v10482 = vsel %vm505, %v10424, 0
  %v10485 = vsel %vm505, %v10425, 0
  %v10488 = vsel %vm505, %v10426, 0
  %10490 = vmatprep.subr.mxu0 0.0
  %10491 = vmatpush1.msra.mxu0 %v10428
  %10492 = vmatprep.subr.mxu0 0.0
  %10493 = vmatpush1.msra.mxu0 %v10430
  %10494 = vmatprep.subr.mxu0 0.0
  %10495 = vmatpush1.msra.mxu0 %v10432
  %10496 = vmatprep.subr.mxu0 0.0
  %10497 = vmatpush1.msra.mxu0 %v10434
  %10498 = vmatprep.subr.mxu0 0.0
  %10499 = vmatpush1.msra.mxu0 0.0
  %10500 = vmatprep.subr.mxu0 0.0
  %10501 = vmatpush1.msra.mxu0 0.0
  %10502 = vmatprep.subr.mxu0 0.0
  %10503 = vmatpush1.msra.mxu0 0.0
  %10504 = vmatprep.subr.mxu0 0.0
  %10505 = vmatpush1.msra.mxu0 0.0
  %10506 = vmatprep.subr.mxu0 0.0
  %10507 = vmatpush1.msra.mxu0 0.0
  %10508 = vmatprep.subr.mxu0 0.0
  %10509 = vmatpush1.msra.mxu0 0.0
  %10510 = vmatprep.subr.mxu0 0.0
  %10511 = vmatpush1.msra.mxu0 0.0
  %10512 = vmatprep.subr.mxu0 0.0
  %10513 = vmatpush1.msra.mxu0 0.0
  %10514 = vmatprep.subr.mxu0 0.0
  %10515 = vmatpush1.msra.mxu0 0.0
  %10516 = vmatprep.subr.mxu0 0.0
  %10517 = vmatpush1.msra.mxu0 0.0
  %10518 = vmatprep.subr.mxu0 0.0
  %10519 = vmatpush1.msra.mxu0 0.0
  %10520 = vmatprep.subr.mxu0 0.0
  %10521 = vmatpush1.msra.mxu0 0.0
  %10522 = vmatprep.subr.mxu0 0.0
  %10523 = vmatpush1.msra.mxu0 0.0
  %10524 = vmatprep.subr.mxu0 0.0
  %10525 = vmatpush1.msra.mxu0 0.0
  %10526 = vmatprep.subr.mxu0 0.0
  %10527 = vmatpush1.msra.mxu0 0.0
  %10528 = vmatprep.subr.mxu0 0.0
  %10529 = vmatpush1.msra.mxu0 0.0
  %10530 = vmatprep.subr.mxu0 0.0
  %10531 = vmatpush1.msra.mxu0 0.0
  %10532 = vmatprep.subr.mxu0 0.0
  %10533 = vmatpush1.msra.mxu0 0.0
  %10534 = vmatprep.subr.mxu0 0.0
  %10535 = vmatpush1.msra.mxu0 0.0
  %10536 = vmatprep.subr.mxu0 0.0
  %10537 = vmatpush1.msra.mxu0 0.0
  %10538 = vmatprep.subr.mxu0 0.0
  %10539 = vmatpush1.msra.mxu0 0.0
  %10540 = vmatprep.subr.mxu0 0.0
  %10541 = vmatpush1.msra.mxu0 0.0
  %10542 = vmatprep.subr.mxu0 0.0
  %10543 = vmatpush1.msra.mxu0 0.0
  %10544 = vmatprep.subr.mxu0 0.0
  %10545 = vmatpush1.msra.mxu0 0.0
  %10546 = vmatprep.subr.mxu0 0.0
  %10547 = vmatpush1.msra.mxu0 0.0
  %10548 = vmatprep.subr.mxu0 0.0
  %10549 = vmatpush1.msra.mxu0 0.0
  %10550 = vmatprep.subr.mxu0 0.0
  %10551 = vmatpush1.msra.mxu0 0.0
  %10552 = vmatprep.subr.mxu0 0.0
  %10553 = vmatpush1.msra.mxu0 0.0
  %10554 = vmatprep.mubr.f32.mxu0 0.0
  %10555 = vmatmul.mubr.f32.gmra.mrb[0].mxu0 %v10443
  %v10556 = vpop.f32.mrb[0].mxu0
  %v10557 = vadd.f32 %v10440, %v10556
  %v10558 = vpop.f32.mrb[0].mxu0
  %10559 = vmatprep.mubr.f32.mxu0 0.0
  %10560 = vmatmul.mubr.f32.gmra.mrb[0].mxu0 %v10446
  %v10561 = vpop.f32.mrb[0].mxu0
  %v10562 = vadd.f32 %v10440, %v10561
  %v10563 = vpop.f32.mrb[0].mxu0
  %10564 = vmatprep.mubr.f32.mxu0 0.0
  %10565 = vmatmul.mubr.f32.gmra.mrb[0].mxu0 %v10449
  %v10566 = vpop.f32.mrb[0].mxu0
  %v10567 = vadd.f32 %v10440, %v10566
  %v10568 = vpop.f32.mrb[0].mxu0
  %10569 = vmatprep.mubr.f32.mxu0 0.0
  %10570 = vmatmul.mubr.f32.gmra.mrb[0].mxu0 %v10452
  %v10571 = vpop.f32.mrb[0].mxu0
  %v10572 = vadd.f32 %v10440, %v10571
  %v10573 = vpop.f32.mrb[0].mxu0
  %10574 = vmatprep.mubr.f32.mxu0 0.0
  %10575 = vmatmul.mubr.f32.gmra.mrb[0].mxu0 %v10455
  %v10576 = vpop.f32.mrb[0].mxu0
  %v10577 = vadd.f32 %v10440, %v10576
  %v10578 = vpop.f32.mrb[0].mxu0
  %10579 = vmatprep.mubr.f32.mxu0 0.0
  %10580 = vmatmul.mubr.f32.gmra.mrb[0].mxu0 %v10458
  %v10581 = vpop.f32.mrb[0].mxu0
  %v10582 = vadd.f32 %v10440, %v10581
  %v10583 = vpop.f32.mrb[0].mxu0
  %10584 = vmatprep.mubr.f32.mxu0 0.0
  %10585 = vmatmul.mubr.f32.gmra.mrb[0].mxu0 %v10461
  %v10586 = vpop.f32.mrb[0].mxu0
  %v10587 = vadd.f32 %v10440, %v10586
  %v10588 = vpop.f32.mrb[0].mxu0
  %10589 = vmatprep.mubr.f32.mxu0 0.0
  %10590 = vmatmul.mubr.f32.gmra.mrb[0].mxu0 %v10464
  %v10591 = vpop.f32.mrb[0].mxu0
  %v10592 = vadd.f32 %v10440, %v10591
  %v10593 = vpop.f32.mrb[0].mxu0
  %10594 = vmatprep.mubr.f32.mxu0 0.0
  %10595 = vmatmul.mubr.f32.gmra.mrb[0].mxu0 %v10467
  %v10596 = vpop.f32.mrb[0].mxu0
  %v10597 = vadd.f32 %v10440, %v10596
  %v10598 = vpop.f32.mrb[0].mxu0
  %10599 = vmatprep.mubr.f32.mxu0 0.0
  %10600 = vmatmul.mubr.f32.gmra.mrb[0].mxu0 %v10470
  %v10601 = vpop.f32.mrb[0].mxu0
  %v10602 = vadd.f32 %v10440, %v10601
  %v10603 = vpop.f32.mrb[0].mxu0
  %10604 = vmatprep.mubr.f32.mxu0 0.0
  %10605 = vmatmul.mubr.f32.gmra.mrb[0].mxu0 %v10473
  %v10606 = vpop.f32.mrb[0].mxu0
  %v10607 = vadd.f32 %v10440, %v10606
  %v10608 = vpop.f32.mrb[0].mxu0
  %10609 = vmatprep.mubr.f32.mxu0 0.0
  %10610 = vmatmul.mubr.f32.gmra.mrb[0].mxu0 %v10476
  %v10611 = vpop.f32.mrb[0].mxu0
  %v10612 = vadd.f32 %v10440, %v10611
  %v10613 = vpop.f32.mrb[0].mxu0
  %10614 = vmatprep.mubr.f32.mxu0 0.0
  %10615 = vmatmul.mubr.f32.gmra.mrb[0].mxu0 %v10479
  %v10616 = vpop.f32.mrb[0].mxu0
  %v10617 = vadd.f32 %v10440, %v10616
  %v10618 = vpop.f32.mrb[0].mxu0
  %10619 = vmatprep.mubr.f32.mxu0 0.0
  %10620 = vmatmul.mubr.f32.gmra.mrb[0].mxu0 %v10482
  %v10621 = vpop.f32.mrb[0].mxu0
  %v10622 = vadd.f32 %v10440, %v10621
  %v10623 = vpop.f32.mrb[0].mxu0
  %10624 = vmatprep.mubr.f32.mxu0 0.0
  %10625 = vmatmul.mubr.f32.gmra.mrb[0].mxu0 %v10485
  %v10626 = vpop.f32.mrb[0].mxu0
  %v10627 = vadd.f32 %v10440, %v10626
  %v10628 = vpop.f32.mrb[0].mxu0
  %10629 = vmatprep.mubr.f32.mxu0 0.0
  %10630 = vmatmul.mubr.f32.gmra.mrb[0].mxu0 %v10488
  %v10631 = vpop.f32.mrb[0].mxu0
  %v10632 = vadd.f32 %v10440, %v10631
  %v10633 = vpop.f32.mrb[0].mxu0
  %10634 = vdwg.mxu0
  %v10635 = vmax.f32 %v10557, 0.0
  %v10636 = vmax.f32 %v10562, 0.0
  %v10637 = vmax.f32 %v10567, 0.0
  %v10638 = vmax.f32 %v10572, 0.0
  %v10639 = vmax.f32 %v10577, 0.0
  %v10640 = vmax.f32 %v10582, 0.0
  %v10641 = vmax.f32 %v10587, 0.0
  %v10642 = vmax.f32 %v10592, 0.0
  %v10643 = vmax.f32 %v10597, 0.0
  %v10644 = vmax.f32 %v10602, 0.0
  %v10645 = vmax.f32 %v10607, 0.0
  %v10646 = vmax.f32 %v10612, 0.0
  %v10647 = vmax.f32 %v10617, 0.0
  %v10648 = vmax.f32 %v10622, 0.0
  %v10649 = vmax.f32 %v10627, 0.0
  %v10650 = vmax.f32 %v10632, 0.0
  %v10651 = vlaneseq
  %v10652 = vshrl.u32 %v10651, 7
  %v10653 = vsub.s32 3, %v10652
  %v10654 = vrot.slane %v6085, %v10653
  %v10656 = vsel %vm5698, %v10635, 0
  %v10659 = vsel %vm5698, %v10636, 0
  %v10662 = vsel %vm5698, %v10637, 0
  %v10665 = vsel %vm5698, %v10638, 0
  %v10668 = vsel %vm5698, %v10639, 0
  %v10671 = vsel %vm5698, %v10640, 0
  %v10674 = vsel %vm5698, %v10641, 0
  %v10677 = vsel %vm5698, %v10642, 0
  %v10680 = vsel %vm5698, %v10643, 0
  %v10683 = vsel %vm5698, %v10644, 0
  %v10686 = vsel %vm5698, %v10645, 0
  %v10689 = vsel %vm5698, %v10646, 0
  %v10692 = vsel %vm5698, %v10647, 0
  %v10695 = vsel %vm5698, %v10648, 0
  %v10698 = vsel %vm5698, %v10649, 0
  %v10701 = vsel %vm5698, %v10650, 0
  %10703 = vmatprep.subr.mxu0 0.0
  %10704 = vmatpush1.msra.mxu0 %v6087
  %10705 = vmatprep.subr.mxu0 0.0
  %10706 = vmatpush1.msra.mxu0 %v6088
  %10707 = vmatprep.subr.mxu0 0.0
  %10708 = vmatpush1.msra.mxu0 %v6089
  %10709 = vmatprep.subr.mxu0 0.0
  %10710 = vmatpush1.msra.mxu0 %v6090
  %10711 = vmatprep.subr.mxu0 0.0
  %10712 = vmatpush1.msra.mxu0 %v6091
  %10713 = vmatprep.subr.mxu0 0.0
  %10714 = vmatpush1.msra.mxu0 %v6092
  %10715 = vmatprep.subr.mxu0 0.0
  %10716 = vmatpush1.msra.mxu0 %v6093
  %10717 = vmatprep.subr.mxu0 0.0
  %10718 = vmatpush1.msra.mxu0 %v6094
  %10719 = vmatprep.subr.mxu0 0.0
  %10720 = vmatpush1.msra.mxu0 0.0
  %10721 = vmatprep.subr.mxu0 0.0
  %10722 = vmatpush1.msra.mxu0 0.0
  %10723 = vmatprep.subr.mxu0 0.0
  %10724 = vmatpush1.msra.mxu0 0.0
  %10725 = vmatprep.subr.mxu0 0.0
  %10726 = vmatpush1.msra.mxu0 0.0
  %10727 = vmatprep.subr.mxu0 0.0
  %10728 = vmatpush1.msra.mxu0 0.0
  %10729 = vmatprep.subr.mxu0 0.0
  %10730 = vmatpush1.msra.mxu0 0.0
  %10731 = vmatprep.subr.mxu0 0.0
  %10732 = vmatpush1.msra.mxu0 0.0
  %10733 = vmatprep.subr.mxu0 0.0
  %10734 = vmatpush1.msra.mxu0 0.0
  %10735 = vmatprep.subr.mxu0 0.0
  %10736 = vmatpush1.msra.mxu0 0.0
  %10737 = vmatprep.subr.mxu0 0.0
  %10738 = vmatpush1.msra.mxu0 0.0
  %10739 = vmatprep.subr.mxu0 0.0
  %10740 = vmatpush1.msra.mxu0 0.0
  %10741 = vmatprep.subr.mxu0 0.0
  %10742 = vmatpush1.msra.mxu0 0.0
  %10743 = vmatprep.subr.mxu0 0.0
  %10744 = vmatpush1.msra.mxu0 0.0
  %10745 = vmatprep.subr.mxu0 0.0
  %10746 = vmatpush1.msra.mxu0 0.0
  %10747 = vmatprep.subr.mxu0 0.0
  %10748 = vmatpush1.msra.mxu0 0.0
  %10749 = vmatprep.subr.mxu0 0.0
  %10750 = vmatpush1.msra.mxu0 0.0
  %10751 = vmatprep.subr.mxu0 0.0
  %10752 = vmatpush1.msra.mxu0 0.0
  %10753 = vmatprep.subr.mxu0 0.0
  %10754 = vmatpush1.msra.mxu0 0.0
  %10755 = vmatprep.subr.mxu0 0.0
  %10756 = vmatpush1.msra.mxu0 0.0
  %10757 = vmatprep.subr.mxu0 0.0
  %10758 = vmatpush1.msra.mxu0 0.0
  %10759 = vmatprep.subr.mxu0 0.0
  %10760 = vmatpush1.msra.mxu0 0.0
  %10761 = vmatprep.subr.mxu0 0.0
  %10762 = vmatpush1.msra.mxu0 0.0
  %10763 = vmatprep.subr.mxu0 0.0
  %10764 = vmatpush1.msra.mxu0 0.0
  %10765 = vmatprep.subr.mxu0 0.0
  %10766 = vmatpush1.msra.mxu0 0.0
  %10767 = vmatprep.mubr.f32.mxu0 0.0
  %10768 = vmatmul.mubr.f32.gmra.mrb[0].mxu0 %v10656
  %v10769 = vpop.f32.mrb[0].mxu0
  %v10770 = vadd.f32 %v10654, %v10769
  %v10771 = vpop.f32.mrb[0].mxu0
  %10772 = vmatprep.mubr.f32.mxu0 0.0
  %10773 = vmatmul.mubr.f32.gmra.mrb[0].mxu0 %v10659
  %v10774 = vpop.f32.mrb[0].mxu0
  %v10775 = vadd.f32 %v10654, %v10774
  %v10776 = vpop.f32.mrb[0].mxu0
  %10777 = vmatprep.mubr.f32.mxu0 0.0
  %10778 = vmatmul.mubr.f32.gmra.mrb[0].mxu0 %v10662
  %v10779 = vpop.f32.mrb[0].mxu0
  %v10780 = vadd.f32 %v10654, %v10779
  %v10781 = vpop.f32.mrb[0].mxu0
  %10782 = vmatprep.mubr.f32.mxu0 0.0
  %10783 = vmatmul.mubr.f32.gmra.mrb[0].mxu0 %v10665
  %v10784 = vpop.f32.mrb[0].mxu0
  %v10785 = vadd.f32 %v10654, %v10784
  %v10786 = vpop.f32.mrb[0].mxu0
  %10787 = vmatprep.mubr.f32.mxu0 0.0
  %10788 = vmatmul.mubr.f32.gmra.mrb[0].mxu0 %v10668
  %v10789 = vpop.f32.mrb[0].mxu0
  %v10790 = vadd.f32 %v10654, %v10789
  %v10791 = vpop.f32.mrb[0].mxu0
  %10792 = vmatprep.mubr.f32.mxu0 0.0
  %10793 = vmatmul.mubr.f32.gmra.mrb[0].mxu0 %v10671
  %v10794 = vpop.f32.mrb[0].mxu0
  %v10795 = vadd.f32 %v10654, %v10794
  %v10796 = vpop.f32.mrb[0].mxu0
  %10797 = vmatprep.mubr.f32.mxu0 0.0
  %10798 = vmatmul.mubr.f32.gmra.mrb[0].mxu0 %v10674
  %v10799 = vpop.f32.mrb[0].mxu0
  %v10800 = vadd.f32 %v10654, %v10799
  %v10801 = vpop.f32.mrb[0].mxu0
  %10802 = vmatprep.mubr.f32.mxu0 0.0
  %10803 = vmatmul.mubr.f32.gmra.mrb[0].mxu0 %v10677
  %v10804 = vpop.f32.mrb[0].mxu0
  %v10805 = vadd.f32 %v10654, %v10804
  %v10806 = vpop.f32.mrb[0].mxu0
  %10807 = vmatprep.mubr.f32.mxu0 0.0
  %10808 = vmatmul.mubr.f32.gmra.mrb[0].mxu0 %v10680
  %v10809 = vpop.f32.mrb[0].mxu0
  %v10810 = vadd.f32 %v10654, %v10809
  %v10811 = vpop.f32.mrb[0].mxu0
  %10812 = vmatprep.mubr.f32.mxu0 0.0
  %10813 = vmatmul.mubr.f32.gmra.mrb[0].mxu0 %v10683
  %v10814 = vpop.f32.mrb[0].mxu0
  %v10815 = vadd.f32 %v10654, %v10814
  %v10816 = vpop.f32.mrb[0].mxu0
  %10817 = vmatprep.mubr.f32.mxu0 0.0
  %10818 = vmatmul.mubr.f32.gmra.mrb[0].mxu0 %v10686
  %v10819 = vpop.f32.mrb[0].mxu0
  %v10820 = vadd.f32 %v10654, %v10819
  %v10821 = vpop.f32.mrb[0].mxu0
  %10822 = vmatprep.mubr.f32.mxu0 0.0
  %10823 = vmatmul.mubr.f32.gmra.mrb[0].mxu0 %v10689
  %v10824 = vpop.f32.mrb[0].mxu0
  %v10825 = vadd.f32 %v10654, %v10824
  %v10826 = vpop.f32.mrb[0].mxu0
  %10827 = vmatprep.mubr.f32.mxu0 0.0
  %10828 = vmatmul.mubr.f32.gmra.mrb[0].mxu0 %v10692
  %v10829 = vpop.f32.mrb[0].mxu0
  %v10830 = vadd.f32 %v10654, %v10829
  %v10831 = vpop.f32.mrb[0].mxu0
  %10832 = vmatprep.mubr.f32.mxu0 0.0
  %10833 = vmatmul.mubr.f32.gmra.mrb[0].mxu0 %v10695
  %v10834 = vpop.f32.mrb[0].mxu0
  %v10835 = vadd.f32 %v10654, %v10834
  %v10836 = vpop.f32.mrb[0].mxu0
  %10837 = vmatprep.mubr.f32.mxu0 0.0
  %10838 = vmatmul.mubr.f32.gmra.mrb[0].mxu0 %v10698
  %v10839 = vpop.f32.mrb[0].mxu0
  %v10840 = vadd.f32 %v10654, %v10839
  %v10841 = vpop.f32.mrb[0].mxu0
  %10842 = vmatprep.mubr.f32.mxu0 0.0
  %10843 = vmatmul.mubr.f32.gmra.mrb[0].mxu0 %v10701
  %v10844 = vpop.f32.mrb[0].mxu0
  %v10845 = vadd.f32 %v10654, %v10844
  %v10846 = vpop.f32.mrb[0].mxu0
  %10847 = vdwg.mxu0
  %v10848 = vadd.f32 %v10411, %v10770
  %v10849 = vadd.f32 %v10412, %v10775
  %v10850 = vadd.f32 %v10413, %v10780
  %v10851 = vadd.f32 %v10414, %v10785
  %v10852 = vadd.f32 %v10415, %v10790
  %v10853 = vadd.f32 %v10416, %v10795
  %v10854 = vadd.f32 %v10417, %v10800
  %v10855 = vadd.f32 %v10418, %v10805
  %v10856 = vadd.f32 %v10419, %v10810
  %v10857 = vadd.f32 %v10420, %v10815
  %v10858 = vadd.f32 %v10421, %v10820
  %v10859 = vadd.f32 %v10422, %v10825
  %v10860 = vadd.f32 %v10423, %v10830
  %v10861 = vadd.f32 %v10424, %v10835
  %v10862 = vadd.f32 %v10425, %v10840
  %v10863 = vadd.f32 %v10426, %v10845
  %v10864 = vsel %vm505, %v10848, 0.0
  %v10865 = vsel %vm505, %v10849, 0.0
  %v10866 = vadd.f32 %v10864, %v10865
  %v10867 = vsel %vm505, %v10850, 0.0
  %v10868 = vadd.f32 %v10866, %v10867
  %v10869 = vsel %vm505, %v10851, 0.0
  %v10870 = vadd.f32 %v10868, %v10869
  %v10871 = vsel %vm505, %v10852, 0.0
  %v10872 = vadd.f32 %v10870, %v10871
  %v10873 = vsel %vm505, %v10853, 0.0
  %v10874 = vadd.f32 %v10872, %v10873
  %v10875 = vsel %vm505, %v10854, 0.0
  %v10876 = vadd.f32 %v10874, %v10875
  %v10877 = vsel %vm505, %v10855, 0.0
  %v10878 = vadd.f32 %v10876, %v10877
  %v10879 = vsel %vm505, %v10856, 0.0
  %v10880 = vadd.f32 %v10878, %v10879
  %v10881 = vsel %vm505, %v10857, 0.0
  %v10882 = vadd.f32 %v10880, %v10881
  %v10883 = vsel %vm505, %v10858, 0.0
  %v10884 = vadd.f32 %v10882, %v10883
  %v10885 = vsel %vm505, %v10859, 0.0
  %v10886 = vadd.f32 %v10884, %v10885
  %v10887 = vsel %vm505, %v10860, 0.0
  %v10888 = vadd.f32 %v10886, %v10887
  %v10889 = vsel %vm505, %v10861, 0.0
  %v10890 = vadd.f32 %v10888, %v10889
  %v10891 = vsel %vm505, %v10862, 0.0
  %v10892 = vadd.f32 %v10890, %v10891
  %v10893 = vsel %vm505, %v10863, 0.0
  %v10894 = vadd.f32 %v10892, %v10893
  %v10895 = vrot.slane %v10894, 4
  %v10896 = vadd.f32 %v10894, %v10895
  %v10897 = vrot.slane %v10896, 2
  %v10898 = vadd.f32 %v10896, %v10897
  %v10899 = vrot.slane %v10898, 1
  %v10900 = vadd.f32 %v10898, %v10899
  %v10901 = vmul.f32 %v10900, %v240
  %v10902 = vmul.f32 %v10848, %v10848
  %v10903 = vmul.f32 %v10849, %v10849
  %v10904 = vmul.f32 %v10850, %v10850
  %v10905 = vmul.f32 %v10851, %v10851
  %v10906 = vmul.f32 %v10852, %v10852
  %v10907 = vmul.f32 %v10853, %v10853
  %v10908 = vmul.f32 %v10854, %v10854
  %v10909 = vmul.f32 %v10855, %v10855
  %v10910 = vmul.f32 %v10856, %v10856
  %v10911 = vmul.f32 %v10857, %v10857
  %v10912 = vmul.f32 %v10858, %v10858
  %v10913 = vmul.f32 %v10859, %v10859
  %v10914 = vmul.f32 %v10860, %v10860
  %v10915 = vmul.f32 %v10861, %v10861
  %v10916 = vmul.f32 %v10862, %v10862
  %v10917 = vmul.f32 %v10863, %v10863
  %v10918 = vsel %vm505, %v10902, 0.0
  %v10919 = vsel %vm505, %v10903, 0.0
  %v10920 = vadd.f32 %v10918, %v10919
  %v10921 = vsel %vm505, %v10904, 0.0
  %v10922 = vadd.f32 %v10920, %v10921
  %v10923 = vsel %vm505, %v10905, 0.0
  %v10924 = vadd.f32 %v10922, %v10923
  %v10925 = vsel %vm505, %v10906, 0.0
  %v10926 = vadd.f32 %v10924, %v10925
  %v10927 = vsel %vm505, %v10907, 0.0
  %v10928 = vadd.f32 %v10926, %v10927
  %v10929 = vsel %vm505, %v10908, 0.0
  %v10930 = vadd.f32 %v10928, %v10929
  %v10931 = vsel %vm505, %v10909, 0.0
  %v10932 = vadd.f32 %v10930, %v10931
  %v10933 = vsel %vm505, %v10910, 0.0
  %v10934 = vadd.f32 %v10932, %v10933
  %v10935 = vsel %vm505, %v10911, 0.0
  %v10936 = vadd.f32 %v10934, %v10935
  %v10937 = vsel %vm505, %v10912, 0.0
  %v10938 = vadd.f32 %v10936, %v10937
  %v10939 = vsel %vm505, %v10913, 0.0
  %v10940 = vadd.f32 %v10938, %v10939
  %v10941 = vsel %vm505, %v10914, 0.0
  %v10942 = vadd.f32 %v10940, %v10941
  %v10943 = vsel %vm505, %v10915, 0.0
  %v10944 = vadd.f32 %v10942, %v10943
  %v10945 = vsel %vm505, %v10916, 0.0
  %v10946 = vadd.f32 %v10944, %v10945
  %v10947 = vsel %vm505, %v10917, 0.0
  %v10948 = vadd.f32 %v10946, %v10947
  %v10949 = vrot.slane %v10948, 4
  %v10950 = vadd.f32 %v10948, %v10949
  %v10951 = vrot.slane %v10950, 2
  %v10952 = vadd.f32 %v10950, %v10951
  %v10953 = vrot.slane %v10952, 1
  %v10954 = vadd.f32 %v10952, %v10953
  %v10955 = vmul.f32 %v10954, %v240
  %v10956 = vmul.f32 %v10901, %v10901
  %v10957 = vsub.f32 %v10955, %v10956
  %v10958 = vsub.f32 %v10848, %v10901
  %v10959 = vsub.f32 %v10849, %v10901
  %v10960 = vsub.f32 %v10850, %v10901
  %v10961 = vsub.f32 %v10851, %v10901
  %v10962 = vsub.f32 %v10852, %v10901
  %v10963 = vsub.f32 %v10853, %v10901
  %v10964 = vsub.f32 %v10854, %v10901
  %v10965 = vsub.f32 %v10855, %v10901
  %v10966 = vsub.f32 %v10856, %v10901
  %v10967 = vsub.f32 %v10857, %v10901
  %v10968 = vsub.f32 %v10858, %v10901
  %v10969 = vsub.f32 %v10859, %v10901
  %v10970 = vsub.f32 %v10860, %v10901
  %v10971 = vsub.f32 %v10861, %v10901
  %v10972 = vsub.f32 %v10862, %v10901
  %v10973 = vsub.f32 %v10863, %v10901
  %v10974 = vadd.f32 %v10957, 1e-05
  %v10975 = vrsqrt.pop %v10974
  %v10976 = vmul.f32 %v10958, %v10975
  %v10977 = vmul.f32 %v10959, %v10975
  %v10978 = vmul.f32 %v10960, %v10975
  %v10979 = vmul.f32 %v10961, %v10975
  %v10980 = vmul.f32 %v10962, %v10975
  %v10981 = vmul.f32 %v10963, %v10975
  %v10982 = vmul.f32 %v10964, %v10975
  %v10983 = vmul.f32 %v10965, %v10975
  %v10984 = vmul.f32 %v10966, %v10975
  %v10985 = vmul.f32 %v10967, %v10975
  %v10986 = vmul.f32 %v10968, %v10975
  %v10987 = vmul.f32 %v10969, %v10975
  %v10988 = vmul.f32 %v10970, %v10975
  %v10989 = vmul.f32 %v10971, %v10975
  %v10990 = vmul.f32 %v10972, %v10975
  %v10991 = vmul.f32 %v10973, %v10975
  %10993 = vrot.lane.b32.xlu0 %v10654, 96
  %v10994 = vpop.permute.xlu0 %10993
  %v10996 = vmul.f32 %v10976, %v10994
  %v10997 = vmul.f32 %v10977, %v10994
  %v10998 = vmul.f32 %v10978, %v10994
  %v10999 = vmul.f32 %v10979, %v10994
  %v11000 = vmul.f32 %v10980, %v10994
  %v11001 = vmul.f32 %v10981, %v10994
  %v11002 = vmul.f32 %v10982, %v10994
  %v11003 = vmul.f32 %v10983, %v10994
  %v11004 = vmul.f32 %v10984, %v10994
  %v11005 = vmul.f32 %v10985, %v10994
  %v11006 = vmul.f32 %v10986, %v10994
  %v11007 = vmul.f32 %v10987, %v10994
  %v11008 = vmul.f32 %v10988, %v10994
  %v11009 = vmul.f32 %v10989, %v10994
  %v11010 = vmul.f32 %v10990, %v10994
  %v11011 = vmul.f32 %v10991, %v10994
  %11012 = vrot.lane.b32.xlu0 %v10654, 64
  %v11013 = vpop.permute.xlu0 %11012
  %v11015 = vadd.f32 %v10996, %v11013
  %v11016 = vadd.f32 %v10997, %v11013
  %v11017 = vadd.f32 %v10998, %v11013
  %v11018 = vadd.f32 %v10999, %v11013
  %v11019 = vadd.f32 %v11000, %v11013
  %v11020 = vadd.f32 %v11001, %v11013
  %v11021 = vadd.f32 %v11002, %v11013
  %v11022 = vadd.f32 %v11003, %v11013
  %v11023 = vadd.f32 %v11004, %v11013
  %v11024 = vadd.f32 %v11005, %v11013
  %v11025 = vadd.f32 %v11006, %v11013
  %v11026 = vadd.f32 %v11007, %v11013
  %v11027 = vadd.f32 %v11008, %v11013
  %v11028 = vadd.f32 %v11009, %v11013
  %v11029 = vadd.f32 %v11010, %v11013
  %v11030 = vadd.f32 %v11011, %v11013
  %v11031 = vld [vmem:[%s12] sm:$0xff]
  %v11032 = vld [vmem:[%s12 + $0x8] sm:$0xff]
  %v11033 = vld [vmem:[%s12 + $0x10] sm:$0xff]
  %v11034 = vld [vmem:[%s12 + $0x18] sm:$0xff]
  %v11035 = vld [vmem:[%s12 + $0x20] sm:$0xff]
  %v11036 = vld [vmem:[%s12 + $0x28] sm:$0xff]
  %v11037 = vld [vmem:[%s12 + $0x30] sm:$0xff]
  %v11038 = vlaneseq
  %v11039 = vshrl.u32 %v11038, 7
  %v11040 = vsub.s32 1, %v11039
  %v11041 = vrot.slane %v44, %v11040
  %v11043 = vsel %vm505, %v11015, 0
  %v11046 = vsel %vm505, %v11016, 0
  %v11049 = vsel %vm505, %v11017, 0
  %v11052 = vsel %vm505, %v11018, 0
  %v11055 = vsel %vm505, %v11019, 0
  %v11058 = vsel %vm505, %v11020, 0
  %v11061 = vsel %vm505, %v11021, 0
  %v11064 = vsel %vm505, %v11022, 0
  %v11067 = vsel %vm505, %v11023, 0
  %v11070 = vsel %vm505, %v11024, 0
  %v11073 = vsel %vm505, %v11025, 0
  %v11076 = vsel %vm505, %v11026, 0
  %v11079 = vsel %vm505, %v11027, 0
  %v11082 = vsel %vm505, %v11028, 0
  %v11085 = vsel %vm505, %v11029, 0
  %v11088 = vsel %vm505, %v11030, 0
  %11090 = vmatprep.subr.mxu0 0.0
  %11091 = vmatpush1.msra.mxu0 %v11031
  %11092 = vmatprep.subr.mxu0 0.0
  %11093 = vmatpush1.msra.mxu0 %v11032
  %11094 = vmatprep.subr.mxu0 0.0
  %11095 = vmatpush1.msra.mxu0 %v11033
  %11096 = vmatprep.subr.mxu0 0.0
  %11097 = vmatpush1.msra.mxu0 %v11034
  %11098 = vmatprep.subr.mxu0 0.0
  %11099 = vmatpush1.msra.mxu0 0.0
  %11100 = vmatprep.subr.mxu0 0.0
  %11101 = vmatpush1.msra.mxu0 0.0
  %11102 = vmatprep.subr.mxu0 0.0
  %11103 = vmatpush1.msra.mxu0 0.0
  %11104 = vmatprep.subr.mxu0 0.0
  %11105 = vmatpush1.msra.mxu0 0.0
  %11106 = vmatprep.subr.mxu0 0.0
  %11107 = vmatpush1.msra.mxu0 0.0
  %11108 = vmatprep.subr.mxu0 0.0
  %11109 = vmatpush1.msra.mxu0 0.0
  %11110 = vmatprep.subr.mxu0 0.0
  %11111 = vmatpush1.msra.mxu0 0.0
  %11112 = vmatprep.subr.mxu0 0.0
  %11113 = vmatpush1.msra.mxu0 0.0
  %11114 = vmatprep.subr.mxu0 0.0
  %11115 = vmatpush1.msra.mxu0 0.0
  %11116 = vmatprep.subr.mxu0 0.0
  %11117 = vmatpush1.msra.mxu0 0.0
  %11118 = vmatprep.subr.mxu0 0.0
  %11119 = vmatpush1.msra.mxu0 0.0
  %11120 = vmatprep.subr.mxu0 0.0
  %11121 = vmatpush1.msra.mxu0 0.0
  %11122 = vmatprep.subr.mxu0 0.0
  %11123 = vmatpush1.msra.mxu0 0.0
  %11124 = vmatprep.subr.mxu0 0.0
  %11125 = vmatpush1.msra.mxu0 0.0
  %11126 = vmatprep.subr.mxu0 0.0
  %11127 = vmatpush1.msra.mxu0 0.0
  %11128 = vmatprep.subr.mxu0 0.0
  %11129 = vmatpush1.msra.mxu0 0.0
  %11130 = vmatprep.subr.mxu0 0.0
  %11131 = vmatpush1.msra.mxu0 0.0
  %11132 = vmatprep.subr.mxu0 0.0
  %11133 = vmatpush1.msra.mxu0 0.0
  %11134 = vmatprep.subr.mxu0 0.0
  %11135 = vmatpush1.msra.mxu0 0.0
  %11136 = vmatprep.subr.mxu0 0.0
  %11137 = vmatpush1.msra.mxu0 0.0
  %11138 = vmatprep.subr.mxu0 0.0
  %11139 = vmatpush1.msra.mxu0 0.0
  %11140 = vmatprep.subr.mxu0 0.0
  %11141 = vmatpush1.msra.mxu0 0.0
  %11142 = vmatprep.subr.mxu0 0.0
  %11143 = vmatpush1.msra.mxu0 0.0
  %11144 = vmatprep.subr.mxu0 0.0
  %11145 = vmatpush1.msra.mxu0 0.0
  %11146 = vmatprep.subr.mxu0 0.0
  %11147 = vmatpush1.msra.mxu0 0.0
  %11148 = vmatprep.subr.mxu0 0.0
  %11149 = vmatpush1.msra.mxu0 0.0
  %11150 = vmatprep.subr.mxu0 0.0
  %11151 = vmatpush1.msra.mxu0 0.0
  %11152 = vmatprep.subr.mxu0 0.0
  %11153 = vmatpush1.msra.mxu0 0.0
  %11154 = vmatprep.mubr.f32.mxu0 0.0
  %11155 = vmatmul.mubr.f32.gmra.mrb[0].mxu0 %v11043
  %v11156 = vpop.f32.mrb[0].mxu0
  %v11157 = vadd.f32 %v11041, %v11156
  %v11158 = vpop.f32.mrb[0].mxu0
  %11159 = vmatprep.mubr.f32.mxu0 0.0
  %11160 = vmatmul.mubr.f32.gmra.mrb[0].mxu0 %v11046
  %v11161 = vpop.f32.mrb[0].mxu0
  %v11162 = vadd.f32 %v11041, %v11161
  %v11163 = vpop.f32.mrb[0].mxu0
  %11164 = vmatprep.mubr.f32.mxu0 0.0
  %11165 = vmatmul.mubr.f32.gmra.mrb[0].mxu0 %v11049
  %v11166 = vpop.f32.mrb[0].mxu0
  %v11167 = vadd.f32 %v11041, %v11166
  %v11168 = vpop.f32.mrb[0].mxu0
  %11169 = vmatprep.mubr.f32.mxu0 0.0
  %11170 = vmatmul.mubr.f32.gmra.mrb[0].mxu0 %v11052
  %v11171 = vpop.f32.mrb[0].mxu0
  %v11172 = vadd.f32 %v11041, %v11171
  %v11173 = vpop.f32.mrb[0].mxu0
  %11174 = vmatprep.mubr.f32.mxu0 0.0
  %11175 = vmatmul.mubr.f32.gmra.mrb[0].mxu0 %v11055
  %v11176 = vpop.f32.mrb[0].mxu0
  %v11177 = vadd.f32 %v11041, %v11176
  %v11178 = vpop.f32.mrb[0].mxu0
  %11179 = vmatprep.mubr.f32.mxu0 0.0
  %11180 = vmatmul.mubr.f32.gmra.mrb[0].mxu0 %v11058
  %v11181 = vpop.f32.mrb[0].mxu0
  %v11182 = vadd.f32 %v11041, %v11181
  %v11183 = vpop.f32.mrb[0].mxu0
  %11184 = vmatprep.mubr.f32.mxu0 0.0
  %11185 = vmatmul.mubr.f32.gmra.mrb[0].mxu0 %v11061
  %v11186 = vpop.f32.mrb[0].mxu0
  %v11187 = vadd.f32 %v11041, %v11186
  %v11188 = vpop.f32.mrb[0].mxu0
  %11189 = vmatprep.mubr.f32.mxu0 0.0
  %11190 = vmatmul.mubr.f32.gmra.mrb[0].mxu0 %v11064
  %v11191 = vpop.f32.mrb[0].mxu0
  %v11192 = vadd.f32 %v11041, %v11191
  %v11193 = vpop.f32.mrb[0].mxu0
  %11194 = vmatprep.mubr.f32.mxu0 0.0
  %11195 = vmatmul.mubr.f32.gmra.mrb[0].mxu0 %v11067
  %v11196 = vpop.f32.mrb[0].mxu0
  %v11197 = vadd.f32 %v11041, %v11196
  %v11198 = vpop.f32.mrb[0].mxu0
  %11199 = vmatprep.mubr.f32.mxu0 0.0
  %11200 = vmatmul.mubr.f32.gmra.mrb[0].mxu0 %v11070
  %v11201 = vpop.f32.mrb[0].mxu0
  %v11202 = vadd.f32 %v11041, %v11201
  %v11203 = vpop.f32.mrb[0].mxu0
  %11204 = vmatprep.mubr.f32.mxu0 0.0
  %11205 = vmatmul.mubr.f32.gmra.mrb[0].mxu0 %v11073
  %v11206 = vpop.f32.mrb[0].mxu0
  %v11207 = vadd.f32 %v11041, %v11206
  %v11208 = vpop.f32.mrb[0].mxu0
  %11209 = vmatprep.mubr.f32.mxu0 0.0
  %11210 = vmatmul.mubr.f32.gmra.mrb[0].mxu0 %v11076
  %v11211 = vpop.f32.mrb[0].mxu0
  %v11212 = vadd.f32 %v11041, %v11211
  %v11213 = vpop.f32.mrb[0].mxu0
  %11214 = vmatprep.mubr.f32.mxu0 0.0
  %11215 = vmatmul.mubr.f32.gmra.mrb[0].mxu0 %v11079
  %v11216 = vpop.f32.mrb[0].mxu0
  %v11217 = vadd.f32 %v11041, %v11216
  %v11218 = vpop.f32.mrb[0].mxu0
  %11219 = vmatprep.mubr.f32.mxu0 0.0
  %11220 = vmatmul.mubr.f32.gmra.mrb[0].mxu0 %v11082
  %v11221 = vpop.f32.mrb[0].mxu0
  %v11222 = vadd.f32 %v11041, %v11221
  %v11223 = vpop.f32.mrb[0].mxu0
  %11224 = vmatprep.mubr.f32.mxu0 0.0
  %11225 = vmatmul.mubr.f32.gmra.mrb[0].mxu0 %v11085
  %v11226 = vpop.f32.mrb[0].mxu0
  %v11227 = vadd.f32 %v11041, %v11226
  %v11228 = vpop.f32.mrb[0].mxu0
  %11229 = vmatprep.mubr.f32.mxu0 0.0
  %11230 = vmatmul.mubr.f32.gmra.mrb[0].mxu0 %v11088
  %v11231 = vpop.f32.mrb[0].mxu0
  %v11232 = vadd.f32 %v11041, %v11231
  %v11233 = vpop.f32.mrb[0].mxu0
  %11234 = vdwg.mxu0
  %v11235 = vsel %vm731, %v11157, 0.0
  %11236 = vadd.xlane.f32.xlu0 %v11235
  %v11237 = vpop.xlane.xlu0 %11236
  %v11238 = vsel %vm731, %v11162, 0.0
  %11239 = vadd.xlane.f32.xlu0 %v11238
  %v11240 = vpop.xlane.xlu0 %11239
  %v11241 = vsel %vm731, %v11167, 0.0
  %11242 = vadd.xlane.f32.xlu0 %v11241
  %v11243 = vpop.xlane.xlu0 %11242
  %v11244 = vsel %vm731, %v11172, 0.0
  %11245 = vadd.xlane.f32.xlu0 %v11244
  %v11246 = vpop.xlane.xlu0 %11245
  %v11247 = vsel %vm731, %v11177, 0.0
  %11248 = vadd.xlane.f32.xlu0 %v11247
  %v11249 = vpop.xlane.xlu0 %11248
  %v11250 = vsel %vm731, %v11182, 0.0
  %11251 = vadd.xlane.f32.xlu0 %v11250
  %v11252 = vpop.xlane.xlu0 %11251
  %v11253 = vsel %vm731, %v11187, 0.0
  %11254 = vadd.xlane.f32.xlu0 %v11253
  %v11255 = vpop.xlane.xlu0 %11254
  %v11256 = vsel %vm731, %v11192, 0.0
  %11257 = vadd.xlane.f32.xlu0 %v11256
  %v11258 = vpop.xlane.xlu0 %11257
  %v11259 = vsel %vm731, %v11197, 0.0
  %11260 = vadd.xlane.f32.xlu0 %v11259
  %v11261 = vpop.xlane.xlu0 %11260
  %v11262 = vsel %vm731, %v11202, 0.0
  %11263 = vadd.xlane.f32.xlu0 %v11262
  %v11264 = vpop.xlane.xlu0 %11263
  %v11265 = vsel %vm731, %v11207, 0.0
  %11266 = vadd.xlane.f32.xlu0 %v11265
  %v11267 = vpop.xlane.xlu0 %11266
  %v11268 = vsel %vm731, %v11212, 0.0
  %11269 = vadd.xlane.f32.xlu0 %v11268
  %v11270 = vpop.xlane.xlu0 %11269
  %v11271 = vsel %vm731, %v11217, 0.0
  %11272 = vadd.xlane.f32.xlu0 %v11271
  %v11273 = vpop.xlane.xlu0 %11272
  %v11274 = vsel %vm731, %v11222, 0.0
  %11275 = vadd.xlane.f32.xlu0 %v11274
  %v11276 = vpop.xlane.xlu0 %11275
  %v11277 = vsel %vm731, %v11227, 0.0
  %11278 = vadd.xlane.f32.xlu0 %v11277
  %v11279 = vpop.xlane.xlu0 %11278
  %v11280 = vsel %vm731, %v11232, 0.0
  %11281 = vadd.xlane.f32.xlu0 %v11280
  %v11282 = vpop.xlane.xlu0 %11281
  %v11283 = vrcp.pop 16.0
  %v11284 = vmul.f32 %v11237, %v11283
  %v11285 = vmul.f32 %v11240, %v11283
  %v11286 = vmul.f32 %v11243, %v11283
  %v11287 = vmul.f32 %v11246, %v11283
  %v11288 = vmul.f32 %v11249, %v11283
  %v11289 = vmul.f32 %v11252, %v11283
  %v11290 = vmul.f32 %v11255, %v11283
  %v11291 = vmul.f32 %v11258, %v11283
  %v11292 = vmul.f32 %v11261, %v11283
  %v11293 = vmul.f32 %v11264, %v11283
  %v11294 = vmul.f32 %v11267, %v11283
  %v11295 = vmul.f32 %v11270, %v11283
  %v11296 = vmul.f32 %v11273, %v11283
  %v11297 = vmul.f32 %v11276, %v11283
  %v11298 = vmul.f32 %v11279, %v11283
  %v11299 = vmul.f32 %v11282, %v11283
  %v11300 = vmul.f32 %v11157, %v11157
  %v11301 = vmul.f32 %v11162, %v11162
  %v11302 = vmul.f32 %v11167, %v11167
  %v11303 = vmul.f32 %v11172, %v11172
  %v11304 = vmul.f32 %v11177, %v11177
  %v11305 = vmul.f32 %v11182, %v11182
  %v11306 = vmul.f32 %v11187, %v11187
  %v11307 = vmul.f32 %v11192, %v11192
  %v11308 = vmul.f32 %v11197, %v11197
  %v11309 = vmul.f32 %v11202, %v11202
  %v11310 = vmul.f32 %v11207, %v11207
  %v11311 = vmul.f32 %v11212, %v11212
  %v11312 = vmul.f32 %v11217, %v11217
  %v11313 = vmul.f32 %v11222, %v11222
  %v11314 = vmul.f32 %v11227, %v11227
  %v11315 = vmul.f32 %v11232, %v11232
  %v11316 = vsel %vm731, %v11300, 0.0
  %11317 = vadd.xlane.f32.xlu0 %v11316
  %v11318 = vpop.xlane.xlu0 %11317
  %v11319 = vsel %vm731, %v11301, 0.0
  %11320 = vadd.xlane.f32.xlu0 %v11319
  %v11321 = vpop.xlane.xlu0 %11320
  %v11322 = vsel %vm731, %v11302, 0.0
  %11323 = vadd.xlane.f32.xlu0 %v11322
  %v11324 = vpop.xlane.xlu0 %11323
  %v11325 = vsel %vm731, %v11303, 0.0
  %11326 = vadd.xlane.f32.xlu0 %v11325
  %v11327 = vpop.xlane.xlu0 %11326
  %v11328 = vsel %vm731, %v11304, 0.0
  %11329 = vadd.xlane.f32.xlu0 %v11328
  %v11330 = vpop.xlane.xlu0 %11329
  %v11331 = vsel %vm731, %v11305, 0.0
  %11332 = vadd.xlane.f32.xlu0 %v11331
  %v11333 = vpop.xlane.xlu0 %11332
  %v11334 = vsel %vm731, %v11306, 0.0
  %11335 = vadd.xlane.f32.xlu0 %v11334
  %v11336 = vpop.xlane.xlu0 %11335
  %v11337 = vsel %vm731, %v11307, 0.0
  %11338 = vadd.xlane.f32.xlu0 %v11337
  %v11339 = vpop.xlane.xlu0 %11338
  %v11340 = vsel %vm731, %v11308, 0.0
  %11341 = vadd.xlane.f32.xlu0 %v11340
  %v11342 = vpop.xlane.xlu0 %11341
  %v11343 = vsel %vm731, %v11309, 0.0
  %11344 = vadd.xlane.f32.xlu0 %v11343
  %v11345 = vpop.xlane.xlu0 %11344
  %v11346 = vsel %vm731, %v11310, 0.0
  %11347 = vadd.xlane.f32.xlu0 %v11346
  %v11348 = vpop.xlane.xlu0 %11347
  %v11349 = vsel %vm731, %v11311, 0.0
  %11350 = vadd.xlane.f32.xlu0 %v11349
  %v11351 = vpop.xlane.xlu0 %11350
  %v11352 = vsel %vm731, %v11312, 0.0
  %11353 = vadd.xlane.f32.xlu0 %v11352
  %v11354 = vpop.xlane.xlu0 %11353
  %v11355 = vsel %vm731, %v11313, 0.0
  %11356 = vadd.xlane.f32.xlu0 %v11355
  %v11357 = vpop.xlane.xlu0 %11356
  %v11358 = vsel %vm731, %v11314, 0.0
  %11359 = vadd.xlane.f32.xlu0 %v11358
  %v11360 = vpop.xlane.xlu0 %11359
  %v11361 = vsel %vm731, %v11315, 0.0
  %11362 = vadd.xlane.f32.xlu0 %v11361
  %v11363 = vpop.xlane.xlu0 %11362
  %v11364 = vmul.f32 %v11318, %v11283
  %v11365 = vmul.f32 %v11321, %v11283
  %v11366 = vmul.f32 %v11324, %v11283
  %v11367 = vmul.f32 %v11327, %v11283
  %v11368 = vmul.f32 %v11330, %v11283
  %v11369 = vmul.f32 %v11333, %v11283
  %v11370 = vmul.f32 %v11336, %v11283
  %v11371 = vmul.f32 %v11339, %v11283
  %v11372 = vmul.f32 %v11342, %v11283
  %v11373 = vmul.f32 %v11345, %v11283
  %v11374 = vmul.f32 %v11348, %v11283
  %v11375 = vmul.f32 %v11351, %v11283
  %v11376 = vmul.f32 %v11354, %v11283
  %v11377 = vmul.f32 %v11357, %v11283
  %v11378 = vmul.f32 %v11360, %v11283
  %v11379 = vmul.f32 %v11363, %v11283
  %v11380 = vmul.f32 %v11284, %v11284
  %v11381 = vmul.f32 %v11285, %v11285
  %v11382 = vmul.f32 %v11286, %v11286
  %v11383 = vmul.f32 %v11287, %v11287
  %v11384 = vmul.f32 %v11288, %v11288
  %v11385 = vmul.f32 %v11289, %v11289
  %v11386 = vmul.f32 %v11290, %v11290
  %v11387 = vmul.f32 %v11291, %v11291
  %v11388 = vmul.f32 %v11292, %v11292
  %v11389 = vmul.f32 %v11293, %v11293
  %v11390 = vmul.f32 %v11294, %v11294
  %v11391 = vmul.f32 %v11295, %v11295
  %v11392 = vmul.f32 %v11296, %v11296
  %v11393 = vmul.f32 %v11297, %v11297
  %v11394 = vmul.f32 %v11298, %v11298
  %v11395 = vmul.f32 %v11299, %v11299
  %v11396 = vsub.f32 %v11364, %v11380
  %v11397 = vsub.f32 %v11365, %v11381
  %v11398 = vsub.f32 %v11366, %v11382
  %v11399 = vsub.f32 %v11367, %v11383
  %v11400 = vsub.f32 %v11368, %v11384
  %v11401 = vsub.f32 %v11369, %v11385
  %v11402 = vsub.f32 %v11370, %v11386
  %v11403 = vsub.f32 %v11371, %v11387
  %v11404 = vsub.f32 %v11372, %v11388
  %v11405 = vsub.f32 %v11373, %v11389
  %v11406 = vsub.f32 %v11374, %v11390
  %v11407 = vsub.f32 %v11375, %v11391
  %v11408 = vsub.f32 %v11376, %v11392
  %v11409 = vsub.f32 %v11377, %v11393
  %v11410 = vsub.f32 %v11378, %v11394
  %v11411 = vsub.f32 %v11379, %v11395
  %v11412 = vsub.f32 %v11157, %v11284
  %v11413 = vsub.f32 %v11162, %v11285
  %v11414 = vsub.f32 %v11167, %v11286
  %v11415 = vsub.f32 %v11172, %v11287
  %v11416 = vsub.f32 %v11177, %v11288
  %v11417 = vsub.f32 %v11182, %v11289
  %v11418 = vsub.f32 %v11187, %v11290
  %v11419 = vsub.f32 %v11192, %v11291
  %v11420 = vsub.f32 %v11197, %v11292
  %v11421 = vsub.f32 %v11202, %v11293
  %v11422 = vsub.f32 %v11207, %v11294
  %v11423 = vsub.f32 %v11212, %v11295
  %v11424 = vsub.f32 %v11217, %v11296
  %v11425 = vsub.f32 %v11222, %v11297
  %v11426 = vsub.f32 %v11227, %v11298
  %v11427 = vsub.f32 %v11232, %v11299
  %v11428 = vadd.f32 %v11396, 1e-05
  %v11429 = vadd.f32 %v11397, 1e-05
  %v11430 = vadd.f32 %v11398, 1e-05
  %v11431 = vadd.f32 %v11399, 1e-05
  %v11432 = vadd.f32 %v11400, 1e-05
  %v11433 = vadd.f32 %v11401, 1e-05
  %v11434 = vadd.f32 %v11402, 1e-05
  %v11435 = vadd.f32 %v11403, 1e-05
  %v11436 = vadd.f32 %v11404, 1e-05
  %v11437 = vadd.f32 %v11405, 1e-05
  %v11438 = vadd.f32 %v11406, 1e-05
  %v11439 = vadd.f32 %v11407, 1e-05
  %v11440 = vadd.f32 %v11408, 1e-05
  %v11441 = vadd.f32 %v11409, 1e-05
  %v11442 = vadd.f32 %v11410, 1e-05
  %v11443 = vadd.f32 %v11411, 1e-05
  %v11444 = vrsqrt.pop %v11428
  %v11445 = vrsqrt.pop %v11429
  %v11446 = vrsqrt.pop %v11430
  %v11447 = vrsqrt.pop %v11431
  %v11448 = vrsqrt.pop %v11432
  %v11449 = vrsqrt.pop %v11433
  %v11450 = vrsqrt.pop %v11434
  %v11451 = vrsqrt.pop %v11435
  %v11452 = vrsqrt.pop %v11436
  %v11453 = vrsqrt.pop %v11437
  %v11454 = vrsqrt.pop %v11438
  %v11455 = vrsqrt.pop %v11439
  %v11456 = vrsqrt.pop %v11440
  %v11457 = vrsqrt.pop %v11441
  %v11458 = vrsqrt.pop %v11442
  %v11459 = vrsqrt.pop %v11443
  %v11460 = vmul.f32 %v11412, %v11444
  %v11461 = vmul.f32 %v11413, %v11445
  %v11462 = vmul.f32 %v11414, %v11446
  %v11463 = vmul.f32 %v11415, %v11447
  %v11464 = vmul.f32 %v11416, %v11448
  %v11465 = vmul.f32 %v11417, %v11449
  %v11466 = vmul.f32 %v11418, %v11450
  %v11467 = vmul.f32 %v11419, %v11451
  %v11468 = vmul.f32 %v11420, %v11452
  %v11469 = vmul.f32 %v11421, %v11453
  %v11470 = vmul.f32 %v11422, %v11454
  %v11471 = vmul.f32 %v11423, %v11455
  %v11472 = vmul.f32 %v11424, %v11456
  %v11473 = vmul.f32 %v11425, %v11457
  %v11474 = vmul.f32 %v11426, %v11458
  %v11475 = vmul.f32 %v11427, %v11459
  %11477 = vrot.lane.b32.xlu0 %v11041, 112
  %v11478 = vpop.permute.xlu0 %11477
  %v11480 = vmul.f32 %v11460, %v11478
  %v11481 = vmul.f32 %v11461, %v11478
  %v11482 = vmul.f32 %v11462, %v11478
  %v11483 = vmul.f32 %v11463, %v11478
  %v11484 = vmul.f32 %v11464, %v11478
  %v11485 = vmul.f32 %v11465, %v11478
  %v11486 = vmul.f32 %v11466, %v11478
  %v11487 = vmul.f32 %v11467, %v11478
  %v11488 = vmul.f32 %v11468, %v11478
  %v11489 = vmul.f32 %v11469, %v11478
  %v11490 = vmul.f32 %v11470, %v11478
  %v11491 = vmul.f32 %v11471, %v11478
  %v11492 = vmul.f32 %v11472, %v11478
  %v11493 = vmul.f32 %v11473, %v11478
  %v11494 = vmul.f32 %v11474, %v11478
  %v11495 = vmul.f32 %v11475, %v11478
  %11496 = vrot.lane.b32.xlu0 %v11041, 96
  %v11497 = vpop.permute.xlu0 %11496
  %v11499 = vadd.f32 %v11480, %v11497
  %v11500 = vadd.f32 %v11481, %v11497
  %v11501 = vadd.f32 %v11482, %v11497
  %v11502 = vadd.f32 %v11483, %v11497
  %v11503 = vadd.f32 %v11484, %v11497
  %v11504 = vadd.f32 %v11485, %v11497
  %v11505 = vadd.f32 %v11486, %v11497
  %v11506 = vadd.f32 %v11487, %v11497
  %v11507 = vadd.f32 %v11488, %v11497
  %v11508 = vadd.f32 %v11489, %v11497
  %v11509 = vadd.f32 %v11490, %v11497
  %v11510 = vadd.f32 %v11491, %v11497
  %v11511 = vadd.f32 %v11492, %v11497
  %v11512 = vadd.f32 %v11493, %v11497
  %v11513 = vadd.f32 %v11494, %v11497
  %v11514 = vadd.f32 %v11495, %v11497
  %v11515 = vmax.f32 %v11499, 0.0
  %v11516 = vmax.f32 %v11500, 0.0
  %v11517 = vmax.f32 %v11501, 0.0
  %v11518 = vmax.f32 %v11502, 0.0
  %v11519 = vmax.f32 %v11503, 0.0
  %v11520 = vmax.f32 %v11504, 0.0
  %v11521 = vmax.f32 %v11505, 0.0
  %v11522 = vmax.f32 %v11506, 0.0
  %v11523 = vmax.f32 %v11507, 0.0
  %v11524 = vmax.f32 %v11508, 0.0
  %v11525 = vmax.f32 %v11509, 0.0
  %v11526 = vmax.f32 %v11510, 0.0
  %v11527 = vmax.f32 %v11511, 0.0
  %v11528 = vmax.f32 %v11512, 0.0
  %v11529 = vmax.f32 %v11513, 0.0
  %v11530 = vmax.f32 %v11514, 0.0
  %11531 = vrot.lane.b32.xlu0 %v11041, 80
  %v11532 = vpop.permute.xlu0 %11531
  %v11535 = vsel %vm731, %v11515, 0
  %v11538 = vsel %vm731, %v11516, 0
  %v11541 = vsel %vm731, %v11517, 0
  %v11544 = vsel %vm731, %v11518, 0
  %v11547 = vsel %vm731, %v11519, 0
  %v11550 = vsel %vm731, %v11520, 0
  %v11553 = vsel %vm731, %v11521, 0
  %v11556 = vsel %vm731, %v11522, 0
  %v11559 = vsel %vm731, %v11523, 0
  %v11562 = vsel %vm731, %v11524, 0
  %v11565 = vsel %vm731, %v11525, 0
  %v11568 = vsel %vm731, %v11526, 0
  %v11571 = vsel %vm731, %v11527, 0
  %v11574 = vsel %vm731, %v11528, 0
  %v11577 = vsel %vm731, %v11529, 0
  %v11580 = vsel %vm731, %v11530, 0
  %11582 = vmatprep.subr.mxu0 0.0
  %11583 = vmatpush1.msra.mxu0 %v11035
  %11584 = vmatprep.subr.mxu0 0.0
  %11585 = vmatpush1.msra.mxu0 %v11036
  %11586 = vmatprep.subr.mxu0 0.0
  %11587 = vmatpush1.msra.mxu0 0.0
  %11588 = vmatprep.subr.mxu0 0.0
  %11589 = vmatpush1.msra.mxu0 0.0
  %11590 = vmatprep.subr.mxu0 0.0
  %11591 = vmatpush1.msra.mxu0 0.0
  %11592 = vmatprep.subr.mxu0 0.0
  %11593 = vmatpush1.msra.mxu0 0.0
  %11594 = vmatprep.subr.mxu0 0.0
  %11595 = vmatpush1.msra.mxu0 0.0
  %11596 = vmatprep.subr.mxu0 0.0
  %11597 = vmatpush1.msra.mxu0 0.0
  %11598 = vmatprep.subr.mxu0 0.0
  %11599 = vmatpush1.msra.mxu0 0.0
  %11600 = vmatprep.subr.mxu0 0.0
  %11601 = vmatpush1.msra.mxu0 0.0
  %11602 = vmatprep.subr.mxu0 0.0
  %11603 = vmatpush1.msra.mxu0 0.0
  %11604 = vmatprep.subr.mxu0 0.0
  %11605 = vmatpush1.msra.mxu0 0.0
  %11606 = vmatprep.subr.mxu0 0.0
  %11607 = vmatpush1.msra.mxu0 0.0
  %11608 = vmatprep.subr.mxu0 0.0
  %11609 = vmatpush1.msra.mxu0 0.0
  %11610 = vmatprep.subr.mxu0 0.0
  %11611 = vmatpush1.msra.mxu0 0.0
  %11612 = vmatprep.subr.mxu0 0.0
  %11613 = vmatpush1.msra.mxu0 0.0
  %11614 = vmatprep.subr.mxu0 0.0
  %11615 = vmatpush1.msra.mxu0 0.0
  %11616 = vmatprep.subr.mxu0 0.0
  %11617 = vmatpush1.msra.mxu0 0.0
  %11618 = vmatprep.subr.mxu0 0.0
  %11619 = vmatpush1.msra.mxu0 0.0
  %11620 = vmatprep.subr.mxu0 0.0
  %11621 = vmatpush1.msra.mxu0 0.0
  %11622 = vmatprep.subr.mxu0 0.0
  %11623 = vmatpush1.msra.mxu0 0.0
  %11624 = vmatprep.subr.mxu0 0.0
  %11625 = vmatpush1.msra.mxu0 0.0
  %11626 = vmatprep.subr.mxu0 0.0
  %11627 = vmatpush1.msra.mxu0 0.0
  %11628 = vmatprep.subr.mxu0 0.0
  %11629 = vmatpush1.msra.mxu0 0.0
  %11630 = vmatprep.subr.mxu0 0.0
  %11631 = vmatpush1.msra.mxu0 0.0
  %11632 = vmatprep.subr.mxu0 0.0
  %11633 = vmatpush1.msra.mxu0 0.0
  %11634 = vmatprep.subr.mxu0 0.0
  %11635 = vmatpush1.msra.mxu0 0.0
  %11636 = vmatprep.subr.mxu0 0.0
  %11637 = vmatpush1.msra.mxu0 0.0
  %11638 = vmatprep.subr.mxu0 0.0
  %11639 = vmatpush1.msra.mxu0 0.0
  %11640 = vmatprep.subr.mxu0 0.0
  %11641 = vmatpush1.msra.mxu0 0.0
  %11642 = vmatprep.subr.mxu0 0.0
  %11643 = vmatpush1.msra.mxu0 0.0
  %11644 = vmatprep.subr.mxu0 0.0
  %11645 = vmatpush1.msra.mxu0 0.0
  %11646 = vmatprep.mubr.f32.mxu0 0.0
  %11647 = vmatmul.mubr.f32.gmra.mrb[0].mxu0 %v11535
  %v11648 = vpop.f32.mrb[0].mxu0
  %v11649 = vadd.f32 %v11532, %v11648
  %v11650 = vpop.f32.mrb[0].mxu0
  %11651 = vmatprep.mubr.f32.mxu0 0.0
  %11652 = vmatmul.mubr.f32.gmra.mrb[0].mxu0 %v11538
  %v11653 = vpop.f32.mrb[0].mxu0
  %v11654 = vadd.f32 %v11532, %v11653
  %v11655 = vpop.f32.mrb[0].mxu0
  %11656 = vmatprep.mubr.f32.mxu0 0.0
  %11657 = vmatmul.mubr.f32.gmra.mrb[0].mxu0 %v11541
  %v11658 = vpop.f32.mrb[0].mxu0
  %v11659 = vadd.f32 %v11532, %v11658
  %v11660 = vpop.f32.mrb[0].mxu0
  %11661 = vmatprep.mubr.f32.mxu0 0.0
  %11662 = vmatmul.mubr.f32.gmra.mrb[0].mxu0 %v11544
  %v11663 = vpop.f32.mrb[0].mxu0
  %v11664 = vadd.f32 %v11532, %v11663
  %v11665 = vpop.f32.mrb[0].mxu0
  %11666 = vmatprep.mubr.f32.mxu0 0.0
  %11667 = vmatmul.mubr.f32.gmra.mrb[0].mxu0 %v11547
  %v11668 = vpop.f32.mrb[0].mxu0
  %v11669 = vadd.f32 %v11532, %v11668
  %v11670 = vpop.f32.mrb[0].mxu0
  %11671 = vmatprep.mubr.f32.mxu0 0.0
  %11672 = vmatmul.mubr.f32.gmra.mrb[0].mxu0 %v11550
  %v11673 = vpop.f32.mrb[0].mxu0
  %v11674 = vadd.f32 %v11532, %v11673
  %v11675 = vpop.f32.mrb[0].mxu0
  %11676 = vmatprep.mubr.f32.mxu0 0.0
  %11677 = vmatmul.mubr.f32.gmra.mrb[0].mxu0 %v11553
  %v11678 = vpop.f32.mrb[0].mxu0
  %v11679 = vadd.f32 %v11532, %v11678
  %v11680 = vpop.f32.mrb[0].mxu0
  %11681 = vmatprep.mubr.f32.mxu0 0.0
  %11682 = vmatmul.mubr.f32.gmra.mrb[0].mxu0 %v11556
  %v11683 = vpop.f32.mrb[0].mxu0
  %v11684 = vadd.f32 %v11532, %v11683
  %v11685 = vpop.f32.mrb[0].mxu0
  %11686 = vmatprep.mubr.f32.mxu0 0.0
  %11687 = vmatmul.mubr.f32.gmra.mrb[0].mxu0 %v11559
  %v11688 = vpop.f32.mrb[0].mxu0
  %v11689 = vadd.f32 %v11532, %v11688
  %v11690 = vpop.f32.mrb[0].mxu0
  %11691 = vmatprep.mubr.f32.mxu0 0.0
  %11692 = vmatmul.mubr.f32.gmra.mrb[0].mxu0 %v11562
  %v11693 = vpop.f32.mrb[0].mxu0
  %v11694 = vadd.f32 %v11532, %v11693
  %v11695 = vpop.f32.mrb[0].mxu0
  %11696 = vmatprep.mubr.f32.mxu0 0.0
  %11697 = vmatmul.mubr.f32.gmra.mrb[0].mxu0 %v11565
  %v11698 = vpop.f32.mrb[0].mxu0
  %v11699 = vadd.f32 %v11532, %v11698
  %v11700 = vpop.f32.mrb[0].mxu0
  %11701 = vmatprep.mubr.f32.mxu0 0.0
  %11702 = vmatmul.mubr.f32.gmra.mrb[0].mxu0 %v11568
  %v11703 = vpop.f32.mrb[0].mxu0
  %v11704 = vadd.f32 %v11532, %v11703
  %v11705 = vpop.f32.mrb[0].mxu0
  %11706 = vmatprep.mubr.f32.mxu0 0.0
  %11707 = vmatmul.mubr.f32.gmra.mrb[0].mxu0 %v11571
  %v11708 = vpop.f32.mrb[0].mxu0
  %v11709 = vadd.f32 %v11532, %v11708
  %v11710 = vpop.f32.mrb[0].mxu0
  %11711 = vmatprep.mubr.f32.mxu0 0.0
  %11712 = vmatmul.mubr.f32.gmra.mrb[0].mxu0 %v11574
  %v11713 = vpop.f32.mrb[0].mxu0
  %v11714 = vadd.f32 %v11532, %v11713
  %v11715 = vpop.f32.mrb[0].mxu0
  %11716 = vmatprep.mubr.f32.mxu0 0.0
  %11717 = vmatmul.mubr.f32.gmra.mrb[0].mxu0 %v11577
  %v11718 = vpop.f32.mrb[0].mxu0
  %v11719 = vadd.f32 %v11532, %v11718
  %v11720 = vpop.f32.mrb[0].mxu0
  %11721 = vmatprep.mubr.f32.mxu0 0.0
  %11722 = vmatmul.mubr.f32.gmra.mrb[0].mxu0 %v11580
  %v11723 = vpop.f32.mrb[0].mxu0
  %v11724 = vadd.f32 %v11532, %v11723
  %v11725 = vpop.f32.mrb[0].mxu0
  %11726 = vdwg.mxu0
  %v11727 = vsel %vm2405, %v11649, 0.0
  %11728 = vadd.xlane.f32.xlu0 %v11727
  %v11729 = vpop.xlane.xlu0 %11728
  %v11730 = vsel %vm2405, %v11654, 0.0
  %11731 = vadd.xlane.f32.xlu0 %v11730
  %v11732 = vpop.xlane.xlu0 %11731
  %v11733 = vsel %vm2405, %v11659, 0.0
  %11734 = vadd.xlane.f32.xlu0 %v11733
  %v11735 = vpop.xlane.xlu0 %11734
  %v11736 = vsel %vm2405, %v11664, 0.0
  %11737 = vadd.xlane.f32.xlu0 %v11736
  %v11738 = vpop.xlane.xlu0 %11737
  %v11739 = vsel %vm2405, %v11669, 0.0
  %11740 = vadd.xlane.f32.xlu0 %v11739
  %v11741 = vpop.xlane.xlu0 %11740
  %v11742 = vsel %vm2405, %v11674, 0.0
  %11743 = vadd.xlane.f32.xlu0 %v11742
  %v11744 = vpop.xlane.xlu0 %11743
  %v11745 = vsel %vm2405, %v11679, 0.0
  %11746 = vadd.xlane.f32.xlu0 %v11745
  %v11747 = vpop.xlane.xlu0 %11746
  %v11748 = vsel %vm2405, %v11684, 0.0
  %11749 = vadd.xlane.f32.xlu0 %v11748
  %v11750 = vpop.xlane.xlu0 %11749
  %v11751 = vsel %vm2405, %v11689, 0.0
  %11752 = vadd.xlane.f32.xlu0 %v11751
  %v11753 = vpop.xlane.xlu0 %11752
  %v11754 = vsel %vm2405, %v11694, 0.0
  %11755 = vadd.xlane.f32.xlu0 %v11754
  %v11756 = vpop.xlane.xlu0 %11755
  %v11757 = vsel %vm2405, %v11699, 0.0
  %11758 = vadd.xlane.f32.xlu0 %v11757
  %v11759 = vpop.xlane.xlu0 %11758
  %v11760 = vsel %vm2405, %v11704, 0.0
  %11761 = vadd.xlane.f32.xlu0 %v11760
  %v11762 = vpop.xlane.xlu0 %11761
  %v11763 = vsel %vm2405, %v11709, 0.0
  %11764 = vadd.xlane.f32.xlu0 %v11763
  %v11765 = vpop.xlane.xlu0 %11764
  %v11766 = vsel %vm2405, %v11714, 0.0
  %11767 = vadd.xlane.f32.xlu0 %v11766
  %v11768 = vpop.xlane.xlu0 %11767
  %v11769 = vsel %vm2405, %v11719, 0.0
  %11770 = vadd.xlane.f32.xlu0 %v11769
  %v11771 = vpop.xlane.xlu0 %11770
  %v11772 = vsel %vm2405, %v11724, 0.0
  %11773 = vadd.xlane.f32.xlu0 %v11772
  %v11774 = vpop.xlane.xlu0 %11773
  %v11775 = vrcp.pop 8.0
  %v11776 = vmul.f32 %v11729, %v11775
  %v11777 = vmul.f32 %v11732, %v11775
  %v11778 = vmul.f32 %v11735, %v11775
  %v11779 = vmul.f32 %v11738, %v11775
  %v11780 = vmul.f32 %v11741, %v11775
  %v11781 = vmul.f32 %v11744, %v11775
  %v11782 = vmul.f32 %v11747, %v11775
  %v11783 = vmul.f32 %v11750, %v11775
  %v11784 = vmul.f32 %v11753, %v11775
  %v11785 = vmul.f32 %v11756, %v11775
  %v11786 = vmul.f32 %v11759, %v11775
  %v11787 = vmul.f32 %v11762, %v11775
  %v11788 = vmul.f32 %v11765, %v11775
  %v11789 = vmul.f32 %v11768, %v11775
  %v11790 = vmul.f32 %v11771, %v11775
  %v11791 = vmul.f32 %v11774, %v11775
  %v11792 = vmul.f32 %v11649, %v11649
  %v11793 = vmul.f32 %v11654, %v11654
  %v11794 = vmul.f32 %v11659, %v11659
  %v11795 = vmul.f32 %v11664, %v11664
  %v11796 = vmul.f32 %v11669, %v11669
  %v11797 = vmul.f32 %v11674, %v11674
  %v11798 = vmul.f32 %v11679, %v11679
  %v11799 = vmul.f32 %v11684, %v11684
  %v11800 = vmul.f32 %v11689, %v11689
  %v11801 = vmul.f32 %v11694, %v11694
  %v11802 = vmul.f32 %v11699, %v11699
  %v11803 = vmul.f32 %v11704, %v11704
  %v11804 = vmul.f32 %v11709, %v11709
  %v11805 = vmul.f32 %v11714, %v11714
  %v11806 = vmul.f32 %v11719, %v11719
  %v11807 = vmul.f32 %v11724, %v11724
  %v11808 = vsel %vm2405, %v11792, 0.0
  %11809 = vadd.xlane.f32.xlu0 %v11808
  %v11810 = vpop.xlane.xlu0 %11809
  %v11811 = vsel %vm2405, %v11793, 0.0
  %11812 = vadd.xlane.f32.xlu0 %v11811
  %v11813 = vpop.xlane.xlu0 %11812
  %v11814 = vsel %vm2405, %v11794, 0.0
  %11815 = vadd.xlane.f32.xlu0 %v11814
  %v11816 = vpop.xlane.xlu0 %11815
  %v11817 = vsel %vm2405, %v11795, 0.0
  %11818 = vadd.xlane.f32.xlu0 %v11817
  %v11819 = vpop.xlane.xlu0 %11818
  %v11820 = vsel %vm2405, %v11796, 0.0
  %11821 = vadd.xlane.f32.xlu0 %v11820
  %v11822 = vpop.xlane.xlu0 %11821
  %v11823 = vsel %vm2405, %v11797, 0.0
  %11824 = vadd.xlane.f32.xlu0 %v11823
  %v11825 = vpop.xlane.xlu0 %11824
  %v11826 = vsel %vm2405, %v11798, 0.0
  %11827 = vadd.xlane.f32.xlu0 %v11826
  %v11828 = vpop.xlane.xlu0 %11827
  %v11829 = vsel %vm2405, %v11799, 0.0
  %11830 = vadd.xlane.f32.xlu0 %v11829
  %v11831 = vpop.xlane.xlu0 %11830
  %v11832 = vsel %vm2405, %v11800, 0.0
  %11833 = vadd.xlane.f32.xlu0 %v11832
  %v11834 = vpop.xlane.xlu0 %11833
  %v11835 = vsel %vm2405, %v11801, 0.0
  %11836 = vadd.xlane.f32.xlu0 %v11835
  %v11837 = vpop.xlane.xlu0 %11836
  %v11838 = vsel %vm2405, %v11802, 0.0
  %11839 = vadd.xlane.f32.xlu0 %v11838
  %v11840 = vpop.xlane.xlu0 %11839
  %v11841 = vsel %vm2405, %v11803, 0.0
  %11842 = vadd.xlane.f32.xlu0 %v11841
  %v11843 = vpop.xlane.xlu0 %11842
  %v11844 = vsel %vm2405, %v11804, 0.0
  %11845 = vadd.xlane.f32.xlu0 %v11844
  %v11846 = vpop.xlane.xlu0 %11845
  %v11847 = vsel %vm2405, %v11805, 0.0
  %11848 = vadd.xlane.f32.xlu0 %v11847
  %v11849 = vpop.xlane.xlu0 %11848
  %v11850 = vsel %vm2405, %v11806, 0.0
  %11851 = vadd.xlane.f32.xlu0 %v11850
  %v11852 = vpop.xlane.xlu0 %11851
  %v11853 = vsel %vm2405, %v11807, 0.0
  %11854 = vadd.xlane.f32.xlu0 %v11853
  %v11855 = vpop.xlane.xlu0 %11854
  %v11856 = vmul.f32 %v11810, %v11775
  %v11857 = vmul.f32 %v11813, %v11775
  %v11858 = vmul.f32 %v11816, %v11775
  %v11859 = vmul.f32 %v11819, %v11775
  %v11860 = vmul.f32 %v11822, %v11775
  %v11861 = vmul.f32 %v11825, %v11775
  %v11862 = vmul.f32 %v11828, %v11775
  %v11863 = vmul.f32 %v11831, %v11775
  %v11864 = vmul.f32 %v11834, %v11775
  %v11865 = vmul.f32 %v11837, %v11775
  %v11866 = vmul.f32 %v11840, %v11775
  %v11867 = vmul.f32 %v11843, %v11775
  %v11868 = vmul.f32 %v11846, %v11775
  %v11869 = vmul.f32 %v11849, %v11775
  %v11870 = vmul.f32 %v11852, %v11775
  %v11871 = vmul.f32 %v11855, %v11775
  %v11872 = vmul.f32 %v11776, %v11776
  %v11873 = vmul.f32 %v11777, %v11777
  %v11874 = vmul.f32 %v11778, %v11778
  %v11875 = vmul.f32 %v11779, %v11779
  %v11876 = vmul.f32 %v11780, %v11780
  %v11877 = vmul.f32 %v11781, %v11781
  %v11878 = vmul.f32 %v11782, %v11782
  %v11879 = vmul.f32 %v11783, %v11783
  %v11880 = vmul.f32 %v11784, %v11784
  %v11881 = vmul.f32 %v11785, %v11785
  %v11882 = vmul.f32 %v11786, %v11786
  %v11883 = vmul.f32 %v11787, %v11787
  %v11884 = vmul.f32 %v11788, %v11788
  %v11885 = vmul.f32 %v11789, %v11789
  %v11886 = vmul.f32 %v11790, %v11790
  %v11887 = vmul.f32 %v11791, %v11791
  %v11888 = vsub.f32 %v11856, %v11872
  %v11889 = vsub.f32 %v11857, %v11873
  %v11890 = vsub.f32 %v11858, %v11874
  %v11891 = vsub.f32 %v11859, %v11875
  %v11892 = vsub.f32 %v11860, %v11876
  %v11893 = vsub.f32 %v11861, %v11877
  %v11894 = vsub.f32 %v11862, %v11878
  %v11895 = vsub.f32 %v11863, %v11879
  %v11896 = vsub.f32 %v11864, %v11880
  %v11897 = vsub.f32 %v11865, %v11881
  %v11898 = vsub.f32 %v11866, %v11882
  %v11899 = vsub.f32 %v11867, %v11883
  %v11900 = vsub.f32 %v11868, %v11884
  %v11901 = vsub.f32 %v11869, %v11885
  %v11902 = vsub.f32 %v11870, %v11886
  %v11903 = vsub.f32 %v11871, %v11887
  %v11904 = vsub.f32 %v11649, %v11776
  %v11905 = vsub.f32 %v11654, %v11777
  %v11906 = vsub.f32 %v11659, %v11778
  %v11907 = vsub.f32 %v11664, %v11779
  %v11908 = vsub.f32 %v11669, %v11780
  %v11909 = vsub.f32 %v11674, %v11781
  %v11910 = vsub.f32 %v11679, %v11782
  %v11911 = vsub.f32 %v11684, %v11783
  %v11912 = vsub.f32 %v11689, %v11784
  %v11913 = vsub.f32 %v11694, %v11785
  %v11914 = vsub.f32 %v11699, %v11786
  %v11915 = vsub.f32 %v11704, %v11787
  %v11916 = vsub.f32 %v11709, %v11788
  %v11917 = vsub.f32 %v11714, %v11789
  %v11918 = vsub.f32 %v11719, %v11790
  %v11919 = vsub.f32 %v11724, %v11791
  %v11920 = vadd.f32 %v11888, 1e-05
  %v11921 = vadd.f32 %v11889, 1e-05
  %v11922 = vadd.f32 %v11890, 1e-05
  %v11923 = vadd.f32 %v11891, 1e-05
  %v11924 = vadd.f32 %v11892, 1e-05
  %v11925 = vadd.f32 %v11893, 1e-05
  %v11926 = vadd.f32 %v11894, 1e-05
  %v11927 = vadd.f32 %v11895, 1e-05
  %v11928 = vadd.f32 %v11896, 1e-05
  %v11929 = vadd.f32 %v11897, 1e-05
  %v11930 = vadd.f32 %v11898, 1e-05
  %v11931 = vadd.f32 %v11899, 1e-05
  %v11932 = vadd.f32 %v11900, 1e-05
  %v11933 = vadd.f32 %v11901, 1e-05
  %v11934 = vadd.f32 %v11902, 1e-05
  %v11935 = vadd.f32 %v11903, 1e-05
  %v11936 = vrsqrt.pop %v11920
  %v11937 = vrsqrt.pop %v11921
  %v11938 = vrsqrt.pop %v11922
  %v11939 = vrsqrt.pop %v11923
  %v11940 = vrsqrt.pop %v11924
  %v11941 = vrsqrt.pop %v11925
  %v11942 = vrsqrt.pop %v11926
  %v11943 = vrsqrt.pop %v11927
  %v11944 = vrsqrt.pop %v11928
  %v11945 = vrsqrt.pop %v11929
  %v11946 = vrsqrt.pop %v11930
  %v11947 = vrsqrt.pop %v11931
  %v11948 = vrsqrt.pop %v11932
  %v11949 = vrsqrt.pop %v11933
  %v11950 = vrsqrt.pop %v11934
  %v11951 = vrsqrt.pop %v11935
  %v11952 = vmul.f32 %v11904, %v11936
  %v11953 = vmul.f32 %v11905, %v11937
  %v11954 = vmul.f32 %v11906, %v11938
  %v11955 = vmul.f32 %v11907, %v11939
  %v11956 = vmul.f32 %v11908, %v11940
  %v11957 = vmul.f32 %v11909, %v11941
  %v11958 = vmul.f32 %v11910, %v11942
  %v11959 = vmul.f32 %v11911, %v11943
  %v11960 = vmul.f32 %v11912, %v11944
  %v11961 = vmul.f32 %v11913, %v11945
  %v11962 = vmul.f32 %v11914, %v11946
  %v11963 = vmul.f32 %v11915, %v11947
  %v11964 = vmul.f32 %v11916, %v11948
  %v11965 = vmul.f32 %v11917, %v11949
  %v11966 = vmul.f32 %v11918, %v11950
  %v11967 = vmul.f32 %v11919, %v11951
  %11968 = vrot.lane.b32.xlu0 %v11041, 72
  %v11969 = vpop.permute.xlu0 %11968
  %v11971 = vmul.f32 %v11952, %v11969
  %v11972 = vmul.f32 %v11953, %v11969
  %v11973 = vmul.f32 %v11954, %v11969
  %v11974 = vmul.f32 %v11955, %v11969
  %v11975 = vmul.f32 %v11956, %v11969
  %v11976 = vmul.f32 %v11957, %v11969
  %v11977 = vmul.f32 %v11958, %v11969
  %v11978 = vmul.f32 %v11959, %v11969
  %v11979 = vmul.f32 %v11960, %v11969
  %v11980 = vmul.f32 %v11961, %v11969
  %v11981 = vmul.f32 %v11962, %v11969
  %v11982 = vmul.f32 %v11963, %v11969
  %v11983 = vmul.f32 %v11964, %v11969
  %v11984 = vmul.f32 %v11965, %v11969
  %v11985 = vmul.f32 %v11966, %v11969
  %v11986 = vmul.f32 %v11967, %v11969
  %11987 = vrot.lane.b32.xlu0 %v11041, 64
  %v11988 = vpop.permute.xlu0 %11987
  %v11990 = vadd.f32 %v11971, %v11988
  %v11991 = vadd.f32 %v11972, %v11988
  %v11992 = vadd.f32 %v11973, %v11988
  %v11993 = vadd.f32 %v11974, %v11988
  %v11994 = vadd.f32 %v11975, %v11988
  %v11995 = vadd.f32 %v11976, %v11988
  %v11996 = vadd.f32 %v11977, %v11988
  %v11997 = vadd.f32 %v11978, %v11988
  %v11998 = vadd.f32 %v11979, %v11988
  %v11999 = vadd.f32 %v11980, %v11988
  %v12000 = vadd.f32 %v11981, %v11988
  %v12001 = vadd.f32 %v11982, %v11988
  %v12002 = vadd.f32 %v11983, %v11988
  %v12003 = vadd.f32 %v11984, %v11988
  %v12004 = vadd.f32 %v11985, %v11988
  %v12005 = vadd.f32 %v11986, %v11988
  %v12006 = vmax.f32 %v11990, 0.0
  %v12007 = vmax.f32 %v11991, 0.0
  %v12008 = vmax.f32 %v11992, 0.0
  %v12009 = vmax.f32 %v11993, 0.0
  %v12010 = vmax.f32 %v11994, 0.0
  %v12011 = vmax.f32 %v11995, 0.0
  %v12012 = vmax.f32 %v11996, 0.0
  %v12013 = vmax.f32 %v11997, 0.0
  %v12014 = vmax.f32 %v11998, 0.0
  %v12015 = vmax.f32 %v11999, 0.0
  %v12016 = vmax.f32 %v12000, 0.0
  %v12017 = vmax.f32 %v12001, 0.0
  %v12018 = vmax.f32 %v12002, 0.0
  %v12019 = vmax.f32 %v12003, 0.0
  %v12020 = vmax.f32 %v12004, 0.0
  %v12021 = vmax.f32 %v12005, 0.0
  %v12022 = vlaneseq
  %v12023 = vshrl.u32 %v12022, 7
  %v12024 = vsub.s32 2, %v12023
  %v12025 = vrot.slane %v44, %v12024
  %v12027 = vsel %vm2405, %v12006, 0
  %v12030 = vsel %vm2405, %v12007, 0
  %v12033 = vsel %vm2405, %v12008, 0
  %v12036 = vsel %vm2405, %v12009, 0
  %v12039 = vsel %vm2405, %v12010, 0
  %v12042 = vsel %vm2405, %v12011, 0
  %v12045 = vsel %vm2405, %v12012, 0
  %v12048 = vsel %vm2405, %v12013, 0
  %v12051 = vsel %vm2405, %v12014, 0
  %v12054 = vsel %vm2405, %v12015, 0
  %v12057 = vsel %vm2405, %v12016, 0
  %v12060 = vsel %vm2405, %v12017, 0
  %v12063 = vsel %vm2405, %v12018, 0
  %v12066 = vsel %vm2405, %v12019, 0
  %v12069 = vsel %vm2405, %v12020, 0
  %v12072 = vsel %vm2405, %v12021, 0
  %12074 = vmatprep.subr.mxu0 0.0
  %12075 = vmatpush1.msra.mxu0 %v11037
  %12076 = vmatprep.subr.mxu0 0.0
  %12077 = vmatpush1.msra.mxu0 0.0
  %12078 = vmatprep.subr.mxu0 0.0
  %12079 = vmatpush1.msra.mxu0 0.0
  %12080 = vmatprep.subr.mxu0 0.0
  %12081 = vmatpush1.msra.mxu0 0.0
  %12082 = vmatprep.subr.mxu0 0.0
  %12083 = vmatpush1.msra.mxu0 0.0
  %12084 = vmatprep.subr.mxu0 0.0
  %12085 = vmatpush1.msra.mxu0 0.0
  %12086 = vmatprep.subr.mxu0 0.0
  %12087 = vmatpush1.msra.mxu0 0.0
  %12088 = vmatprep.subr.mxu0 0.0
  %12089 = vmatpush1.msra.mxu0 0.0
  %12090 = vmatprep.subr.mxu0 0.0
  %12091 = vmatpush1.msra.mxu0 0.0
  %12092 = vmatprep.subr.mxu0 0.0
  %12093 = vmatpush1.msra.mxu0 0.0
  %12094 = vmatprep.subr.mxu0 0.0
  %12095 = vmatpush1.msra.mxu0 0.0
  %12096 = vmatprep.subr.mxu0 0.0
  %12097 = vmatpush1.msra.mxu0 0.0
  %12098 = vmatprep.subr.mxu0 0.0
  %12099 = vmatpush1.msra.mxu0 0.0
  %12100 = vmatprep.subr.mxu0 0.0
  %12101 = vmatpush1.msra.mxu0 0.0
  %12102 = vmatprep.subr.mxu0 0.0
  %12103 = vmatpush1.msra.mxu0 0.0
  %12104 = vmatprep.subr.mxu0 0.0
  %12105 = vmatpush1.msra.mxu0 0.0
  %12106 = vmatprep.subr.mxu0 0.0
  %12107 = vmatpush1.msra.mxu0 0.0
  %12108 = vmatprep.subr.mxu0 0.0
  %12109 = vmatpush1.msra.mxu0 0.0
  %12110 = vmatprep.subr.mxu0 0.0
  %12111 = vmatpush1.msra.mxu0 0.0
  %12112 = vmatprep.subr.mxu0 0.0
  %12113 = vmatpush1.msra.mxu0 0.0
  %12114 = vmatprep.subr.mxu0 0.0
  %12115 = vmatpush1.msra.mxu0 0.0
  %12116 = vmatprep.subr.mxu0 0.0
  %12117 = vmatpush1.msra.mxu0 0.0
  %12118 = vmatprep.subr.mxu0 0.0
  %12119 = vmatpush1.msra.mxu0 0.0
  %12120 = vmatprep.subr.mxu0 0.0
  %12121 = vmatpush1.msra.mxu0 0.0
  %12122 = vmatprep.subr.mxu0 0.0
  %12123 = vmatpush1.msra.mxu0 0.0
  %12124 = vmatprep.subr.mxu0 0.0
  %12125 = vmatpush1.msra.mxu0 0.0
  %12126 = vmatprep.subr.mxu0 0.0
  %12127 = vmatpush1.msra.mxu0 0.0
  %12128 = vmatprep.subr.mxu0 0.0
  %12129 = vmatpush1.msra.mxu0 0.0
  %12130 = vmatprep.subr.mxu0 0.0
  %12131 = vmatpush1.msra.mxu0 0.0
  %12132 = vmatprep.subr.mxu0 0.0
  %12133 = vmatpush1.msra.mxu0 0.0
  %12134 = vmatprep.subr.mxu0 0.0
  %12135 = vmatpush1.msra.mxu0 0.0
  %12136 = vmatprep.subr.mxu0 0.0
  %12137 = vmatpush1.msra.mxu0 0.0
  %12138 = vmatprep.mubr.f32.mxu0 0.0
  %12139 = vmatmul.mubr.f32.gmra.mrb[0].mxu0 %v12027
  %v12140 = vpop.f32.mrb[0].mxu0
  %v12141 = vadd.f32 %v12025, %v12140
  %v12142 = vpop.f32.mrb[0].mxu0
  %12143 = vmatprep.mubr.f32.mxu0 0.0
  %12144 = vmatmul.mubr.f32.gmra.mrb[0].mxu0 %v12030
  %v12145 = vpop.f32.mrb[0].mxu0
  %v12146 = vadd.f32 %v12025, %v12145
  %v12147 = vpop.f32.mrb[0].mxu0
  %12148 = vmatprep.mubr.f32.mxu0 0.0
  %12149 = vmatmul.mubr.f32.gmra.mrb[0].mxu0 %v12033
  %v12150 = vpop.f32.mrb[0].mxu0
  %v12151 = vadd.f32 %v12025, %v12150
  %v12152 = vpop.f32.mrb[0].mxu0
  %12153 = vmatprep.mubr.f32.mxu0 0.0
  %12154 = vmatmul.mubr.f32.gmra.mrb[0].mxu0 %v12036
  %v12155 = vpop.f32.mrb[0].mxu0
  %v12156 = vadd.f32 %v12025, %v12155
  %v12157 = vpop.f32.mrb[0].mxu0
  %12158 = vmatprep.mubr.f32.mxu0 0.0
  %12159 = vmatmul.mubr.f32.gmra.mrb[0].mxu0 %v12039
  %v12160 = vpop.f32.mrb[0].mxu0
  %v12161 = vadd.f32 %v12025, %v12160
  %v12162 = vpop.f32.mrb[0].mxu0
  %12163 = vmatprep.mubr.f32.mxu0 0.0
  %12164 = vmatmul.mubr.f32.gmra.mrb[0].mxu0 %v12042
  %v12165 = vpop.f32.mrb[0].mxu0
  %v12166 = vadd.f32 %v12025, %v12165
  %v12167 = vpop.f32.mrb[0].mxu0
  %12168 = vmatprep.mubr.f32.mxu0 0.0
  %12169 = vmatmul.mubr.f32.gmra.mrb[0].mxu0 %v12045
  %v12170 = vpop.f32.mrb[0].mxu0
  %v12171 = vadd.f32 %v12025, %v12170
  %v12172 = vpop.f32.mrb[0].mxu0
  %12173 = vmatprep.mubr.f32.mxu0 0.0
  %12174 = vmatmul.mubr.f32.gmra.mrb[0].mxu0 %v12048
  %v12175 = vpop.f32.mrb[0].mxu0
  %v12176 = vadd.f32 %v12025, %v12175
  %v12177 = vpop.f32.mrb[0].mxu0
  %12178 = vmatprep.mubr.f32.mxu0 0.0
  %12179 = vmatmul.mubr.f32.gmra.mrb[0].mxu0 %v12051
  %v12180 = vpop.f32.mrb[0].mxu0
  %v12181 = vadd.f32 %v12025, %v12180
  %v12182 = vpop.f32.mrb[0].mxu0
  %12183 = vmatprep.mubr.f32.mxu0 0.0
  %12184 = vmatmul.mubr.f32.gmra.mrb[0].mxu0 %v12054
  %v12185 = vpop.f32.mrb[0].mxu0
  %v12186 = vadd.f32 %v12025, %v12185
  %v12187 = vpop.f32.mrb[0].mxu0
  %12188 = vmatprep.mubr.f32.mxu0 0.0
  %12189 = vmatmul.mubr.f32.gmra.mrb[0].mxu0 %v12057
  %v12190 = vpop.f32.mrb[0].mxu0
  %v12191 = vadd.f32 %v12025, %v12190
  %v12192 = vpop.f32.mrb[0].mxu0
  %12193 = vmatprep.mubr.f32.mxu0 0.0
  %12194 = vmatmul.mubr.f32.gmra.mrb[0].mxu0 %v12060
  %v12195 = vpop.f32.mrb[0].mxu0
  %v12196 = vadd.f32 %v12025, %v12195
  %v12197 = vpop.f32.mrb[0].mxu0
  %12198 = vmatprep.mubr.f32.mxu0 0.0
  %12199 = vmatmul.mubr.f32.gmra.mrb[0].mxu0 %v12063
  %v12200 = vpop.f32.mrb[0].mxu0
  %v12201 = vadd.f32 %v12025, %v12200
  %v12202 = vpop.f32.mrb[0].mxu0
  %12203 = vmatprep.mubr.f32.mxu0 0.0
  %12204 = vmatmul.mubr.f32.gmra.mrb[0].mxu0 %v12066
  %v12205 = vpop.f32.mrb[0].mxu0
  %v12206 = vadd.f32 %v12025, %v12205
  %v12207 = vpop.f32.mrb[0].mxu0
  %12208 = vmatprep.mubr.f32.mxu0 0.0
  %12209 = vmatmul.mubr.f32.gmra.mrb[0].mxu0 %v12069
  %v12210 = vpop.f32.mrb[0].mxu0
  %v12211 = vadd.f32 %v12025, %v12210
  %v12212 = vpop.f32.mrb[0].mxu0
  %12213 = vmatprep.mubr.f32.mxu0 0.0
  %12214 = vmatmul.mubr.f32.gmra.mrb[0].mxu0 %v12072
  %v12215 = vpop.f32.mrb[0].mxu0
  %v12216 = vadd.f32 %v12025, %v12215
  %v12217 = vpop.f32.mrb[0].mxu0
  %12218 = vdwg.mxu0
  %12219 = vst [vmem:[%s13] sm:$0xff] %v12141
  %12220 = vst [vmem:[%s13 + $0x8] sm:$0xff] %v12146
  %12221 = vst [vmem:[%s13 + $0x10] sm:$0xff] %v12151
  %12222 = vst [vmem:[%s13 + $0x18] sm:$0xff] %v12156
  %12223 = vst [vmem:[%s13 + $0x20] sm:$0xff] %v12161
  %12224 = vst [vmem:[%s13 + $0x28] sm:$0xff] %v12166
  %12225 = vst [vmem:[%s13 + $0x30] sm:$0xff] %v12171
  %12226 = vst [vmem:[%s13 + $0x38] sm:$0xff] %v12176
  %12227 = vst [vmem:[%s13 + $0x40] sm:$0xff] %v12181
  %12228 = vst [vmem:[%s13 + $0x48] sm:$0xff] %v12186
  %12229 = vst [vmem:[%s13 + $0x50] sm:$0xff] %v12191
  %12230 = vst [vmem:[%s13 + $0x58] sm:$0xff] %v12196
  %12231 = vst [vmem:[%s13 + $0x60] sm:$0xff] %v12201
  %12232 = vst [vmem:[%s13 + $0x68] sm:$0xff] %v12206
  %12233 = vst [vmem:[%s13 + $0x70] sm:$0xff] %v12211
  %12234 = vst [vmem:[%s13 + $0x78] sm:$0xff] %v12216
  // Predicated region
  $region54: #{_gps_forward.1} parent=0 // pred_check
    _
  $region55: #{_gps_forward.1} parent=0 // pred_check_branch
    %12236 = sbr.rel (0) target = $region57
  $region56: #{_gps_forward.1} parent=0 // pred_region
    _
  $region57: #{_gps_forward.1} parent=0 // pred_fallthru
    _
  // Predicated region
  $region58: #{_gps_forward.1} parent=0 // pred_check
    _
  $region59: #{_gps_forward.1} parent=0 // pred_check_branch
    %12238 = sbr.rel (0) target = $region61
  $region60: #{_gps_forward.1} parent=0 // pred_region
    _
  $region61: #{_gps_forward.1} parent=0 // pred_fallthru
    _

</llo_original>
